<compile_context>
chip_gen: v7x
topology: tpu7x:2x2x1
jax: 0.10.0
libtpu: 0.0.40
codegen_flags: <defaults>
</compile_context>

<pallas_src>
import functools

import jax
import jax.numpy as jnp
from jax.experimental import pallas as pl
from jax.experimental.pallas import tpu as pltpu


# --------------------------- Pallas matmul kernels ---------------------------

def _mm_T_kernel(w_ref, a_ref, b_ref, o_ref, *, relu):
    # out_T (Cout, TM) = W (Cout, K) @ A_T (K, TM) + bias (Cout, 1); lanes = TM.
    acc = jnp.dot(w_ref[...], a_ref[...], preferred_element_type=jnp.float32)
    acc = acc + b_ref[...]
    if relu:
        acc = jnp.maximum(acc, 0.0)
    o_ref[...] = acc


def matmul_bias_T(w, a_T, bias, relu=False):
    """out_T (Cout, M) = w (Cout, K) @ a_T (K, M) + bias[:, None].  Lane-dense on M."""
    Cout, K = w.shape
    M = a_T.shape[1]
    TMc = 512 if (M > 512 and M % 512 == 0) else M   # whole-M block when it fits
    return pl.pallas_call(
        functools.partial(_mm_T_kernel, relu=relu),
        out_shape=jax.ShapeDtypeStruct((Cout, M), jnp.float32),
        grid=(M // TMc,),
        in_specs=[pl.BlockSpec((Cout, K), lambda i: (0, 0)),
                  pl.BlockSpec((K, TMc), lambda i: (0, i)),
                  pl.BlockSpec((Cout, 1), lambda i: (0, 0))],
        out_specs=pl.BlockSpec((Cout, TMc), lambda i: (0, i)),
        compiler_params=pltpu.CompilerParams(dimension_semantics=("parallel",)),
    )(w, a_T, bias.reshape(Cout, 1))


def _mm_kernel(a_ref, w_ref, b_ref, o_ref, *, relu):
    acc = jnp.dot(a_ref[...], w_ref[...], preferred_element_type=jnp.float32)
    acc = acc + b_ref[...]
    if relu:
        acc = jnp.maximum(acc, 0.0)
    o_ref[...] = acc


def matmul_bias(a, w_T, bias, relu=False):
    """out (M, Cout) = a (M, K) @ w_T (K, Cout) + bias.  Lane-dense on Cout.

    Used only for the strided tail convs where Cout=128 >> M."""
    M, K = a.shape
    Cout = w_T.shape[1]
    return pl.pallas_call(
        functools.partial(_mm_kernel, relu=relu),
        out_shape=jax.ShapeDtypeStruct((M, Cout), jnp.float32),
        grid=(1,),
        in_specs=[pl.BlockSpec((M, K), lambda i: (0, 0)),
                  pl.BlockSpec((K, Cout), lambda i: (0, 0)),
                  pl.BlockSpec((1, Cout), lambda i: (0, 0))],
        out_specs=pl.BlockSpec((M, Cout), lambda i: (0, 0)),
        compiler_params=pltpu.CompilerParams(dimension_semantics=("parallel",)),
    )(a, w_T, bias.reshape(1, Cout))


# ----------------- fused attention kernel (conv + dyn-agg + struc) -----------

def _fused_attn_kernel(se_ref, sr_unf_ref, srx_ref, w_ref, b_ref, chag_ref,
                       chag_t_ref, att_ref, msg_ref, *, use_struc):
    C = srx_ref.shape[1]
    N = srx_ref.shape[2]
    se_unf = se_ref[0, 0]                  # (9, C, N)  tap axis is a leading axis
    sr_unf = sr_unf_ref[0, 0]              # (9, C, N)
    srx = srx_ref[0]                       # (C, N)
    se_flat = se_unf.reshape(9 * C, N)     # (9C, N), K order = (tap, cin)
    sr_flat = sr_unf.reshape(9 * C, N)

    # Fused kernel_prediction / kernel_se / kernel_sr 3x3 convs on the MXU.
    dyw = (jnp.dot(w_ref[0, 0], se_flat, preferred_element_type=jnp.float32)
           + jnp.dot(w_ref[0, 1], sr_flat, preferred_element_type=jnp.float32)
           + b_ref[0, 0])                  # (9, N)
    kse = (jnp.dot(w_ref[0, 2], se_flat, preferred_element_type=jnp.float32)
           + b_ref[0, 1])                  # (9, N)
    ksr = (jnp.dot(w_ref[0, 3], sr_flat, preferred_element_type=jnp.float32)
           + b_ref[0, 2])                  # (9, N)

    # Per-pixel dynamic 3x3 aggregation: pure VPU adds over (C, N) tiles.
    A = jnp.sum(dyw[:, None, :] * se_unf, axis=0)      # (C, N)
    t2 = jnp.sum(kse[:, None, :] * se_unf, axis=0)
    t3 = jnp.sum(ksr[:, None, :] * sr_unf, axis=0)
    att = srx * A + t2 + t3

    if use_struc:
        # struc_att as two MXU matmuls: out = att * (chag^T @ sigmoid(chag @ att))
        chag = chag_ref[0, 0]              # (R, C)
        chag_t = chag_t_ref[0, 0]          # (C, R)
        sp = jnp.dot(chag, att, preferred_element_type=jnp.float32)       # (R, N)
        spg = jax.nn.sigmoid(sp)
        wmix = jnp.dot(chag_t, spg, preferred_element_type=jnp.float32)   # (C, N)
        att_s = att * wmix
    else:
        att_s = att

    att_ref[0, 0] = att_s
    msg_ref[0, 0] = att_s * A


def fused_attention(se_unf, sr_unf, srx, w_pack, b_pack, chag, use_struc=True):
    """One Pallas call for all 3 dilations x B batch elements of an
    AttentionGatedMSG module.  Returns (struc_att, message), each (3, B, C, N)."""
    D, B, _, C, N = se_unf.shape
    R = chag.shape[2]
    chag_t = jnp.transpose(chag, (0, 1, 3, 2))

    spec_unf = pl.BlockSpec((1, 1, 9, C, N), lambda d, b: (d, b, 0, 0, 0))
    spec_cn = pl.BlockSpec((1, C, N), lambda d, b: (b, 0, 0))
    spec_w = pl.BlockSpec((1, 4, 9, 9 * C), lambda d, b: (d, 0, 0, 0))
    spec_b = pl.BlockSpec((1, 3, 9, 1), lambda d, b: (d, 0, 0, 0))
    spec_ch = pl.BlockSpec((1, 1, R, C), lambda d, b: (d, b, 0, 0))
    spec_cht = pl.BlockSpec((1, 1, C, R), lambda d, b: (d, b, 0, 0))
    spec_out = pl.BlockSpec((1, 1, C, N), lambda d, b: (d, b, 0, 0))

    return pl.pallas_call(
        functools.partial(_fused_attn_kernel, use_struc=use_struc),
        out_shape=(jax.ShapeDtypeStruct((D, B, C, N), jnp.float32),
                   jax.ShapeDtypeStruct((D, B, C, N), jnp.float32)),
        grid=(D, B),
        in_specs=[spec_unf, spec_unf, spec_cn, spec_w, spec_b, spec_ch, spec_cht],
        out_specs=(spec_out, spec_out),
        compiler_params=pltpu.CompilerParams(
            dimension_semantics=("parallel", "parallel")),
    )(se_unf, sr_unf, srx, w_pack, b_pack, chag, chag_t)


# --------------------------- glue (plain JAX) --------------------------------

def unfold3x3(x, dilation, padding, stride=1):
    """torch.nn.functional.unfold for kernel 3 -> (B, C, 9, Hout, Wout)."""
    B, C, H, W = x.shape
    k = 3
    Hout = (H + 2 * padding - dilation * (k - 1) - 1) // stride + 1
    Wout = (W + 2 * padding - dilation * (k - 1) - 1) // stride + 1
    xp = jnp.pad(x, ((0, 0), (0, 0), (padding, padding), (padding, padding)))
    taps = []
    for ki in range(k):
        for kj in range(k):
            hs, ws = ki * dilation, kj * dilation
            taps.append(xp[:, :, hs:hs + stride * (Hout - 1) + 1:stride,
                           ws:ws + stride * (Wout - 1) + 1:stride])
    return jnp.stack(taps, axis=2)


def unfold_taps(x, dilation):
    """unfold (kernel 3, stride 1, padding=dilation) -> (B, 9, C, H*W)."""
    B, C, H, W = x.shape
    xp = jnp.pad(x, ((0, 0), (0, 0), (dilation, dilation), (dilation, dilation)))
    taps = []
    for ki in range(3):
        for kj in range(3):
            hs, ws = ki * dilation, kj * dilation
            taps.append(xp[:, :, hs:hs + H, ws:ws + W])
    return jnp.stack(taps, axis=1).reshape(B, 9, C, H * W)


def conv2d(x, w, b=None, stride=1, dilation=1, padding=0, relu=False, bn=None):
    """NCHW conv (3x3 or 1x1) via im2col + Pallas matmul (bias/BN/ReLU fused).

    Picks the GEMM orientation that keeps the lane (last) dim of the output
    block dense: transposed (lane = M) when M >= Cout, else standard (lane = Cout)."""
    Cout, Cin, kh, kw = w.shape
    B, C, H, W = x.shape
    w_mat = w.reshape(Cout, Cin * kh * kw)
    bias = b if b is not None else jnp.zeros((Cout,), jnp.float32)
    if bn is not None:
        gamma, beta, mean, var, eps = bn
        scale = gamma / jnp.sqrt(var + eps)
        w_mat = w_mat * scale[:, None]
        bias = (bias - mean) * scale + beta

    if kh == 1:
        Hout, Wout = H, W
        unf = None
    else:
        unf = unfold3x3(x, dilation, padding, stride)    # (B, C, 9, Hout, Wout)
        Hout, Wout = unf.shape[3], unf.shape[4]
    M = B * Hout * Wout
    K = Cin * kh * kw

    if M >= Cout:
        if kh == 1:
            a_T = jnp.transpose(x, (1, 0, 2, 3)).reshape(K, M)
        else:
            a_T = jnp.transpose(unf, (1, 2, 0, 3, 4)).reshape(K, M)
        out_T = matmul_bias_T(w_mat, a_T, bias, relu=relu)
        return jnp.transpose(out_T.reshape(Cout, B, Hout, Wout), (1, 0, 2, 3))
    else:
        if kh == 1:
            a = jnp.transpose(x, (0, 2, 3, 1)).reshape(M, K)
        else:
            a = jnp.transpose(unf, (0, 3, 4, 1, 2)).reshape(M, K)
        out = matmul_bias(a, jnp.transpose(w_mat), bias, relu=relu)
        return jnp.transpose(out.reshape(B, Hout, Wout, Cout), (0, 3, 1, 2))


def conv_bn_relu(x, w, bn):
    return conv2d(x, w, None, stride=1, dilation=1, padding=1, relu=True, bn=bn)


def upsample_nearest(x, size):
    B, C, H, W = x.shape
    h, w = size
    assert h % H == 0 and w % W == 0, "integer-factor nearest upsample only"
    x = jnp.repeat(x, h // H, axis=2)
    return jnp.repeat(x, w // W, axis=3)


# --------------------------- model ------------------------------------------

def _prep_fused_weights(p, C):
    """Pack kp/kse/ksr conv weights per dilation into (3, 4, 9, 9C) with K order
    (tap, cin), plus biases (3, 3, 9, 1).  Index 0/1 = kp se/sr halves, 2 = kse, 3 = ksr."""
    def rearr(w):   # (9, C, 3, 3) -> (9, 9*C), K order (tap, cin)
        return jnp.transpose(w.reshape(9, C, 9), (0, 2, 1)).reshape(9, 9 * C)

    w_list, b_list = [], []
    for i in (1, 2, 3):
        wkp = p[f'kp{i}_w']                      # (9, 2C, 3, 3), channels [se | sr]
        w_pack = jnp.stack([rearr(wkp[:, :C]), rearr(wkp[:, C:]),
                            rearr(p[f'kse{i}_w']), rearr(p[f'ksr{i}_w'])], axis=0)
        b_pack = jnp.stack([p[f'kp{i}_b'], p[f'kse{i}_b'], p[f'ksr{i}_b']],
                           axis=0)[..., None]    # (3, 9, 1)
        w_list.append(w_pack)
        b_list.append(b_pack)
    return jnp.stack(w_list, axis=0), jnp.stack(b_list, axis=0)


def attention_gated_msg(p, sr, se, key, rank=3):
    """AttentionGatedMSG.forward(sr, se) -> (message_f, attention_map_1)."""
    B, C, H, W = sr.shape
    N = H * W
    dilations = (1, 4, 8)

    se_unf = jnp.stack([unfold_taps(se, d) for d in dilations], axis=0)  # (3,B,9,C,N)
    sr_unf = jnp.stack([unfold_taps(sr, d) for d in dilations], axis=0)
    w_pack, b_pack = _prep_fused_weights(p, C)

    # TODO(synk): torch.randn CUDA stream in struc_att is not reproducible;
    # use a deterministic jax.random stream instead.
    r = max(rank, 1)
    chw = jax.random.normal(key, (3, B, r, C), jnp.float32)
    chag = jax.nn.softmax(chw, axis=-1)          # softmax over channels (torch dim=1)

    att_s, msg = fused_attention(se_unf, sr_unf, sr.reshape(B, C, N),
                                 w_pack, b_pack, chag, use_struc=(rank > 0))

    msg_cat = jnp.transpose(msg, (1, 0, 2, 3)).reshape(B, 3 * C, H, W)
    message_f = conv2d(msg_cat, p['comb_w'], p['comb_b'], relu=True)     # 1x1 conv + ReLU
    att_map_1 = att_s[0].reshape(B, C, H, W)
    return message_f, att_map_1


def attention_graph_cond_kernel_4(params, c1, c2, c3, c4, key, rank=3):
    feats = [
        conv_bn_relu(c4, params['conv5_w'], params['conv5_bn']),
        conv_bn_relu(c3, params['conv4_w'], params['conv4_bn']),
        conv_bn_relu(c2, params['conv3_w'], params['conv3_bn']),
        conv_bn_relu(c1, params['conv4_w'], params['conv4_bn']),  # torch reuses conv4 on c1
    ]
    B = c1.shape[0]
    h, w = feats[3].shape[2], feats[3].shape[3]
    feats[2] = upsample_nearest(feats[2], (h, w))
    feats[1] = upsample_nearest(feats[1], (h, w))
    feats[0] = upsample_nearest(feats[0], (h, w))

    k2535, k45, k55 = jax.random.split(key, 3)
    # NOTE: the torch forward uses attention_MSG_35 for both the "25" and "35"
    # paths -> identical weights, so stack the two calls along the batch dim.
    sr_st = jnp.concatenate([feats[0], feats[0]], axis=0)
    se_st = jnp.concatenate([feats[3], feats[2]], axis=0)
    att2535, _ = attention_gated_msg(params['msg35'], sr_st, se_st, k2535, rank)
    att25, att35 = att2535[:B], att2535[B:]
    att45, _ = attention_gated_msg(params['msg45'], feats[0], feats[1], k45, rank)
    att55, _ = attention_gated_msg(params['msg55'], feats[0], feats[0], k55, rank)

    x = jnp.concatenate([att25, att35, att45, att55, feats[0]], axis=1)
    x = conv2d(x, params['c51_w'], params['c51_b'], stride=2, padding=1,
               relu=True, bn=params['c51_bn'])
    x = conv2d(x, params['c52_w'], params['c52_b'], stride=2, padding=1,
               relu=True, bn=params['c52_bn'])
    x = conv2d(x, params['c53_w'], params['c53_b'], stride=2, padding=1,
               relu=True, bn=params['c53_bn'])
    return x


# --------------------------- deterministic params ----------------------------

def init_params(key, ms_featmaps, width):
    keys = iter(jax.random.split(key, 256))

    def w_init(shape):
        return jax.random.normal(next(keys), shape, jnp.float32) * 0.05

    def b_init(shape):
        return jnp.zeros(shape, jnp.float32)

    def bn_init(c):
        # eval-mode BatchNorm with default running stats
        return (jnp.ones((c,), jnp.float32), jnp.zeros((c,), jnp.float32),
                jnp.zeros((c,), jnp.float32), jnp.ones((c,), jnp.float32), 1e-5)

    def msg_params():
        p = {}
        for i in (1, 2, 3):
            p[f'kp{i}_w'] = w_init((9, 2 * width, 3, 3)); p[f'kp{i}_b'] = b_init((9,))
            p[f'kse{i}_w'] = w_init((9, width, 3, 3)); p[f'kse{i}_b'] = b_init((9,))
            p[f'ksr{i}_w'] = w_init((9, width, 3, 3)); p[f'ksr{i}_b'] = b_init((9,))
        p['comb_w'] = w_init((width, 3 * width, 1, 1)); p['comb_b'] = b_init((width,))
        return p

    return {
        'conv5_w': w_init((width, ms_featmaps[-1], 3, 3)), 'conv5_bn': bn_init(width),
        'conv4_w': w_init((width, ms_featmaps[-2], 3, 3)), 'conv4_bn': bn_init(width),
        'conv3_w': w_init((width, ms_featmaps[-3], 3, 3)), 'conv3_bn': bn_init(width),
        'conv2_w': w_init((width, ms_featmaps[-4], 3, 3)), 'conv2_bn': bn_init(width),  # unused (as in torch)
        'msg25': msg_params(), 'msg35': msg_params(),
        'msg45': msg_params(), 'msg55': msg_params(),
        'c51_w': w_init((6 * width, 5 * width, 3, 3)), 'c51_b': b_init((6 * width,)),
        'c51_bn': bn_init(6 * width),
        'c52_w': w_init((8 * width, 6 * width, 3, 3)), 'c52_b': b_init((8 * width,)),
        'c52_bn': bn_init(8 * width),
        'c53_w': w_init((8 * width, 8 * width, 3, 3)), 'c53_b': b_init((8 * width,)),
        'c53_bn': bn_init(8 * width),
    }


# --------------------------- main --------------------------------------------

if __name__ == "__main__":
    width = 16
    ms_featmaps = [4, 8, 12, 16]
    B = 2
    key = jax.random.PRNGKey(0)
    kp, kc1, kc2, kc3, kc4, kfwd = jax.random.split(key, 6)
    params = init_params(kp, ms_featmaps, width)

    # c1 must have ms_featmaps[-2] channels because the torch forward applies conv4 to it.
    c1 = jax.random.normal(kc1, (B, ms_featmaps[-2], 16, 16), jnp.float32)
    c2 = jax.random.normal(kc2, (B, ms_featmaps[-3], 8, 8), jnp.float32)
    c3 = jax.random.normal(kc3, (B, ms_featmaps[-2], 8, 8), jnp.float32)
    c4 = jax.random.normal(kc4, (B, ms_featmaps[-1], 4, 4), jnp.float32)

    fwd = jax.jit(lambda p, a, b, c, d, k:
                  attention_graph_cond_kernel_4(p, a, b, c, d, k, rank=3))
    out = fwd(params, c1, c2, c3, c4, kfwd)
    jax.block_until_ready(out)
    assert out.shape == (B, 8 * width, 2, 2), out.shape
    print("KERNEL_OK")
</pallas_src>

<mosaic_0001>
module attributes {stable_mosaic.version = 11 : i64} {
  func.func @_mm_T_kernel(%arg0: i32, %arg1: memref<16x72xf32, #tpu.memory_space<vmem>>, %arg2: memref<72x128xf32, #tpu.memory_space<vmem>>, %arg3: memref<16x1xf32, #tpu.memory_space<vmem>>, %arg4: memref<16x128xf32, #tpu.memory_space<vmem>>) attributes {dimension_semantics = [#tpu.dimension_semantics<parallel>], iteration_bounds = array<i64: 1>, scalar_prefetch = 0 : i64, scratch_operands = 0 : i64, tpu.core_type = #tpu.core_type<tc>, window_params = [{pipeline_mode = #tpu.pipeline_mode<synchronous>, transform_indices = @transform_0, window_bounds = array<i64: 16, 72>}, {transform_indices = @transform_1, window_bounds = array<i64: 72, 128>}, {pipeline_mode = #tpu.pipeline_mode<synchronous>, transform_indices = @transform_2, window_bounds = array<i64: 16, 1>}, {transform_indices = @transform_3, window_bounds = array<i64: 16, 128>}]} {
    %c0 = arith.constant 0 : index
    %c0_0 = arith.constant 0 : index
    %0 = vector.load %arg1[%c0, %c0_0] : memref<16x72xf32, #tpu.memory_space<vmem>>, vector<16x72xf32>
    %c0_1 = arith.constant 0 : index
    %c0_2 = arith.constant 0 : index
    %1 = vector.load %arg2[%c0_1, %c0_2] : memref<72x128xf32, #tpu.memory_space<vmem>>, vector<72x128xf32>
    %cst = arith.constant dense<0.000000e+00> : vector<16x128xf32>
    %2 = tpu.matmul %0, %1, %cst {dimension_numbers = #tpu.dot_dimension_numbers<[1], [0], [0], [1], [0, 0, 1, 1], [], []>} : vector<16x72xf32>, vector<72x128xf32>, vector<16x128xf32> -> vector<16x128xf32>
    %c0_3 = arith.constant 0 : index
    %c0_4 = arith.constant 0 : index
    %3 = vector.load %arg3[%c0_3, %c0_4] : memref<16x1xf32, #tpu.memory_space<vmem>>, vector<16x1xf32>
    %4 = vector.broadcast %3 : vector<16x1xf32> to vector<16x128xf32>
    %5 = arith.addf %2, %4 : vector<16x128xf32>
    %cst_5 = arith.constant 0.000000e+00 : f32
    %6 = vector.broadcast %cst_5 : f32 to vector<16x128xf32>
    %7 = arith.maximumf %5, %6 : vector<16x128xf32>
    %c0_6 = arith.constant 0 : index
    %c0_7 = arith.constant 0 : index
    %8 = vector.load %arg4[%c0_6, %c0_7] : memref<16x128xf32, #tpu.memory_space<vmem>>, vector<16x128xf32>
    tpu.vector_store %arg4[%c0_6, %c0_7], %7 {strides = array<i32>} : memref<16x128xf32, #tpu.memory_space<vmem>>, vector<16x128xf32>,
    return
  }
  func.func @transform_0(%arg0: i32) -> (i32, i32) {
    %c0_i32 = arith.constant 0 : i32
    %c0_i32_0 = arith.constant 0 : i32
    %c0_i32_1 = arith.constant 0 : i32
    return %c0_i32, %c0_i32_0 : i32, i32
  }
  func.func @transform_1(%arg0: i32) -> (i32, i32) {
    %c0_i32 = arith.constant 0 : i32
    %c0_i32_0 = arith.constant 0 : i32
    return %c0_i32, %arg0 : i32, i32
  }
  func.func @transform_2(%arg0: i32) -> (i32, i32) {
    %c0_i32 = arith.constant 0 : i32
    %c0_i32_0 = arith.constant 0 : i32
    %c0_i32_1 = arith.constant 0 : i32
    return %c0_i32, %c0_i32_0 : i32, i32
  }
  func.func @transform_3(%arg0: i32) -> (i32, i32) {
    %c0_i32 = arith.constant 0 : i32
    %c0_i32_0 = arith.constant 0 : i32
    return %c0_i32, %arg0 : i32, i32
  }
}

module attributes {stable_mosaic.version = 11 : i64} {
  func.func @_mm_T_kernel(%arg0: i32, %arg1: memref<16x108xf32, #tpu.memory_space<vmem>>, %arg2: memref<108x512xf32, #tpu.memory_space<vmem>>, %arg3: memref<16x1xf32, #tpu.memory_space<vmem>>, %arg4: memref<16x512xf32, #tpu.memory_space<vmem>>) attributes {dimension_semantics = [#tpu.dimension_semantics<parallel>], iteration_bounds = array<i64: 1>, scalar_prefetch = 0 : i64, scratch_operands = 0 : i64, tpu.core_type = #tpu.core_type<tc>, window_params = [{pipeline_mode = #tpu.pipeline_mode<synchronous>, transform_indices = @transform_0, window_bounds = array<i64: 16, 108>}, {transform_indices = @transform_1, window_bounds = array<i64: 108, 512>}, {pipeline_mode = #tpu.pipeline_mode<synchronous>, transform_indices = @transform_2, window_bounds = array<i64: 16, 1>}, {transform_indices = @transform_3, window_bounds = array<i64: 16, 512>}]} {
    %c0 = arith.constant 0 : index
    %c0_0 = arith.constant 0 : index
    %0 = vector.load %arg1[%c0, %c0_0] : memref<16x108xf32, #tpu.memory_space<vmem>>, vector<16x108xf32>
    %c0_1 = arith.constant 0 : index
    %c0_2 = arith.constant 0 : index
    %1 = vector.load %arg2[%c0_1, %c0_2] : memref<108x512xf32, #tpu.memory_space<vmem>>, vector<108x512xf32>
    %cst = arith.constant dense<0.000000e+00> : vector<16x512xf32>
    %2 = tpu.matmul %0, %1, %cst {dimension_numbers = #tpu.dot_dimension_numbers<[1], [0], [0], [1], [0, 0, 1, 1], [], []>} : vector<16x108xf32>, vector<108x512xf32>, vector<16x512xf32> -> vector<16x512xf32>
    %c0_3 = arith.constant 0 : index
    %c0_4 = arith.constant 0 : index
    %3 = vector.load %arg3[%c0_3, %c0_4] : memref<16x1xf32, #tpu.memory_space<vmem>>, vector<16x1xf32>
    %4 = vector.broadcast %3 : vector<16x1xf32> to vector<16x512xf32>
    %5 = arith.addf %2, %4 : vector<16x512xf32>
    %cst_5 = arith.constant 0.000000e+00 : f32
    %6 = vector.broadcast %cst_5 : f32 to vector<16x512xf32>
    %7 = arith.maximumf %5, %6 : vector<16x512xf32>
    %c0_6 = arith.constant 0 : index
    %c0_7 = arith.constant 0 : index
    %8 = vector.load %arg4[%c0_6, %c0_7] : memref<16x512xf32, #tpu.memory_space<vmem>>, vector<16x512xf32>
    tpu.vector_store %arg4[%c0_6, %c0_7], %7 {strides = array<i32>} : memref<16x512xf32, #tpu.memory_space<vmem>>, vector<16x512xf32>,
    return
  }
  func.func @transform_0(%arg0: i32) -> (i32, i32) {
    %c0_i32 = arith.constant 0 : i32
    %c0_i32_0 = arith.constant 0 : i32
    %c0_i32_1 = arith.constant 0 : i32
    return %c0_i32, %c0_i32_0 : i32, i32
  }
  func.func @transform_1(%arg0: i32) -> (i32, i32) {
    %c0_i32 = arith.constant 0 : i32
    %c0_i32_0 = arith.constant 0 : i32
    return %c0_i32, %arg0 : i32, i32
  }
  func.func @transform_2(%arg0: i32) -> (i32, i32) {
    %c0_i32 = arith.constant 0 : i32
    %c0_i32_0 = arith.constant 0 : i32
    %c0_i32_1 = arith.constant 0 : i32
    return %c0_i32, %c0_i32_0 : i32, i32
  }
  func.func @transform_3(%arg0: i32) -> (i32, i32) {
    %c0_i32 = arith.constant 0 : i32
    %c0_i32_0 = arith.constant 0 : i32
    return %c0_i32, %arg0 : i32, i32
  }
}

module attributes {stable_mosaic.version = 11 : i64} {
  func.func @_mm_T_kernel(%arg0: i32, %arg1: memref<16x144xf32, #tpu.memory_space<vmem>>, %arg2: memref<144x32xf32, #tpu.memory_space<vmem>>, %arg3: memref<16x1xf32, #tpu.memory_space<vmem>>, %arg4: memref<16x32xf32, #tpu.memory_space<vmem>>) attributes {dimension_semantics = [#tpu.dimension_semantics<parallel>], iteration_bounds = array<i64: 1>, scalar_prefetch = 0 : i64, scratch_operands = 0 : i64, tpu.core_type = #tpu.core_type<tc>, window_params = [{pipeline_mode = #tpu.pipeline_mode<synchronous>, transform_indices = @transform_0, window_bounds = array<i64: 16, 144>}, {transform_indices = @transform_1, window_bounds = array<i64: 144, 32>}, {pipeline_mode = #tpu.pipeline_mode<synchronous>, transform_indices = @transform_2, window_bounds = array<i64: 16, 1>}, {transform_indices = @transform_3, window_bounds = array<i64: 16, 32>}]} {
    %c0 = arith.constant 0 : index
    %c0_0 = arith.constant 0 : index
    %0 = vector.load %arg1[%c0, %c0_0] : memref<16x144xf32, #tpu.memory_space<vmem>>, vector<16x144xf32>
    %c0_1 = arith.constant 0 : index
    %c0_2 = arith.constant 0 : index
    %1 = vector.load %arg2[%c0_1, %c0_2] : memref<144x32xf32, #tpu.memory_space<vmem>>, vector<144x32xf32>
    %cst = arith.constant dense<0.000000e+00> : vector<16x32xf32>
    %2 = tpu.matmul %0, %1, %cst {dimension_numbers = #tpu.dot_dimension_numbers<[1], [0], [0], [1], [0, 0, 1, 1], [], []>} : vector<16x144xf32>, vector<144x32xf32>, vector<16x32xf32> -> vector<16x32xf32>
    %c0_3 = arith.constant 0 : index
    %c0_4 = arith.constant 0 : index
    %3 = vector.load %arg3[%c0_3, %c0_4] : memref<16x1xf32, #tpu.memory_space<vmem>>, vector<16x1xf32>
    %4 = vector.broadcast %3 : vector<16x1xf32> to vector<16x32xf32>
    %5 = arith.addf %2, %4 : vector<16x32xf32>
    %cst_5 = arith.constant 0.000000e+00 : f32
    %6 = vector.broadcast %cst_5 : f32 to vector<16x32xf32>
    %7 = arith.maximumf %5, %6 : vector<16x32xf32>
    %c0_6 = arith.constant 0 : index
    %c0_7 = arith.constant 0 : index
    %8 = vector.load %arg4[%c0_6, %c0_7] : memref<16x32xf32, #tpu.memory_space<vmem>>, vector<16x32xf32>
    tpu.vector_store %arg4[%c0_6, %c0_7], %7 {strides = array<i32>} : memref<16x32xf32, #tpu.memory_space<vmem>>, vector<16x32xf32>,
    return
  }
  func.func @transform_0(%arg0: i32) -> (i32, i32) {
    %c0_i32 = arith.constant 0 : i32
    %c0_i32_0 = arith.constant 0 : i32
    %c0_i32_1 = arith.constant 0 : i32
    return %c0_i32, %c0_i32_0 : i32, i32
  }
  func.func @transform_1(%arg0: i32) -> (i32, i32) {
    %c0_i32 = arith.constant 0 : i32
    %c0_i32_0 = arith.constant 0 : i32
    return %c0_i32, %arg0 : i32, i32
  }
  func.func @transform_2(%arg0: i32) -> (i32, i32) {
    %c0_i32 = arith.constant 0 : i32
    %c0_i32_0 = arith.constant 0 : i32
    %c0_i32_1 = arith.constant 0 : i32
    return %c0_i32, %c0_i32_0 : i32, i32
  }
  func.func @transform_3(%arg0: i32) -> (i32, i32) {
    %c0_i32 = arith.constant 0 : i32
    %c0_i32_0 = arith.constant 0 : i32
    return %c0_i32, %arg0 : i32, i32
  }
}

module attributes {stable_mosaic.version = 11 : i64} {
  func.func @_fused_attn_kernel(%arg0: i32, %arg1: i32, %arg2: memref<1x1x9x16x256xf32, #tpu.memory_space<vmem>>, %arg3: memref<1x1x9x16x256xf32, #tpu.memory_space<vmem>>, %arg4: memref<1x16x256xf32, #tpu.memory_space<vmem>>, %arg5: memref<1x4x9x144xf32, #tpu.memory_space<vmem>>, %arg6: memref<1x3x9x1xf32, #tpu.memory_space<vmem>>, %arg7: memref<1x1x3x16xf32, #tpu.memory_space<vmem>>, %arg8: memref<1x1x16x3xf32, #tpu.memory_space<vmem>>, %arg9: memref<1x1x16x256xf32, #tpu.memory_space<vmem>>, %arg10: memref<1x1x16x256xf32, #tpu.memory_space<vmem>>) attributes {dimension_semantics = [#tpu.dimension_semantics<parallel>, #tpu.dimension_semantics<parallel>], iteration_bounds = array<i64: 3, 4>, scalar_prefetch = 0 : i64, scratch_operands = 0 : i64, tpu.core_type = #tpu.core_type<tc>, window_params = [{transform_indices = @transform_0, window_bounds = array<i64: 1, 1, 9, 16, 256>}, {transform_indices = @transform_1, window_bounds = array<i64: 1, 1, 9, 16, 256>}, {transform_indices = @transform_2, window_bounds = array<i64: 1, 16, 256>}, {transform_indices = @transform_3, window_bounds = array<i64: 1, 4, 9, 144>}, {transform_indices = @transform_4, window_bounds = array<i64: 1, 3, 9, 1>}, {transform_indices = @transform_5, window_bounds = array<i64: 1, 1, 3, 16>}, {transform_indices = @transform_6, window_bounds = array<i64: 1, 1, 16, 3>}, {transform_indices = @transform_7, window_bounds = array<i64: 1, 1, 16, 256>}, {transform_indices = @transform_8, window_bounds = array<i64: 1, 1, 16, 256>}]} {
    %c0 = arith.constant 0 : index
    %c0_0 = arith.constant 0 : index
    %c0_1 = arith.constant 0 : index
    %c0_2 = arith.constant 0 : index
    %c0_3 = arith.constant 0 : index
    %0 = vector.load %arg2[%c0, %c0_0, %c0_1, %c0_2, %c0_3] : memref<1x1x9x16x256xf32, #tpu.memory_space<vmem>>, vector<1x1x9x16x256xf32>
    %1 = vector.shape_cast %0 : vector<1x1x9x16x256xf32> to vector<9x16x256xf32>
    %c0_4 = arith.constant 0 : index
    %c0_5 = arith.constant 0 : index
    %c0_6 = arith.constant 0 : index
    %c0_7 = arith.constant 0 : index
    %c0_8 = arith.constant 0 : index
    %2 = vector.load %arg3[%c0_4, %c0_5, %c0_6, %c0_7, %c0_8] : memref<1x1x9x16x256xf32, #tpu.memory_space<vmem>>, vector<1x1x9x16x256xf32>
    %3 = vector.shape_cast %2 : vector<1x1x9x16x256xf32> to vector<9x16x256xf32>
    %c0_9 = arith.constant 0 : index
    %c0_10 = arith.constant 0 : index
    %c0_11 = arith.constant 0 : index
    %4 = vector.load %arg4[%c0_9, %c0_10, %c0_11] : memref<1x16x256xf32, #tpu.memory_space<vmem>>, vector<1x16x256xf32>
    %5 = vector.shape_cast %4 : vector<1x16x256xf32> to vector<16x256xf32>
    %6 = vector.shape_cast %1 : vector<9x16x256xf32> to vector<144x256xf32>
    %7 = vector.shape_cast %3 : vector<9x16x256xf32> to vector<144x256xf32>
    %c0_12 = arith.constant 0 : index
    %c0_13 = arith.constant 0 : index
    %c0_14 = arith.constant 0 : index
    %c0_15 = arith.constant 0 : index
    %8 = vector.load %arg5[%c0_12, %c0_13, %c0_14, %c0_15] : memref<1x4x9x144xf32, #tpu.memory_space<vmem>>, vector<1x1x9x144xf32>
    %9 = vector.shape_cast %8 : vector<1x1x9x144xf32> to vector<9x144xf32>
    %cst = arith.constant dense<0.000000e+00> : vector<9x256xf32>
    %10 = tpu.matmul %9, %6, %cst {dimension_numbers = #tpu.dot_dimension_numbers<[1], [0], [0], [1], [0, 0, 1, 1], [], []>} : vector<9x144xf32>, vector<144x256xf32>, vector<9x256xf32> -> vector<9x256xf32>
    %c0_16 = arith.constant 0 : index
    %c1 = arith.constant 1 : index
    %c0_17 = arith.constant 0 : index
    %c0_18 = arith.constant 0 : index
    %11 = vector.load %arg5[%c0_16, %c1, %c0_17, %c0_18] : memref<1x4x9x144xf32, #tpu.memory_space<vmem>>, vector<1x1x9x144xf32>
    %12 = vector.shape_cast %11 : vector<1x1x9x144xf32> to vector<9x144xf32>
    %cst_19 = arith.constant dense<0.000000e+00> : vector<9x256xf32>
    %13 = tpu.matmul %12, %7, %cst_19 {dimension_numbers = #tpu.dot_dimension_numbers<[1], [0], [0], [1], [0, 0, 1, 1], [], []>} : vector<9x144xf32>, vector<144x256xf32>, vector<9x256xf32> -> vector<9x256xf32>
    %14 = arith.addf %10, %13 : vector<9x256xf32>
    %c0_20 = arith.constant 0 : index
    %c0_21 = arith.constant 0 : index
    %c0_22 = arith.constant 0 : index
    %c0_23 = arith.constant 0 : index
    %15 = vector.load %arg6[%c0_20, %c0_21, %c0_22, %c0_23] : memref<1x3x9x1xf32, #tpu.memory_space<vmem>>, vector<1x1x9x1xf32>
    %16 = vector.shape_cast %15 : vector<1x1x9x1xf32> to vector<9x1xf32>
    %17 = vector.broadcast %16 : vector<9x1xf32> to vector<9x256xf32>
    %18 = arith.addf %14, %17 : vector<9x256xf32>
    %c0_24 = arith.constant 0 : index
    %c2 = arith.constant 2 : index
    %c0_25 = arith.constant 0 : index
    %c0_26 = arith.constant 0 : index
    %19 = vector.load %arg5[%c0_24, %c2, %c0_25, %c0_26] : memref<1x4x9x144xf32, #tpu.memory_space<vmem>>, vector<1x1x9x144xf32>
    %20 = vector.shape_cast %19 : vector<1x1x9x144xf32> to vector<9x144xf32>
    %cst_27 = arith.constant dense<0.000000e+00> : vector<9x256xf32>
    %21 = tpu.matmul %20, %6, %cst_27 {dimension_numbers = #tpu.dot_dimension_numbers<[1], [0], [0], [1], [0, 0, 1, 1], [], []>} : vector<9x144xf32>, vector<144x256xf32>, vector<9x256xf32> -> vector<9x256xf32>
    %c0_28 = arith.constant 0 : index
    %c1_29 = arith.constant 1 : index
    %c0_30 = arith.constant 0 : index
    %c0_31 = arith.constant 0 : index
    %22 = vector.load %arg6[%c0_28, %c1_29, %c0_30, %c0_31] : memref<1x3x9x1xf32, #tpu.memory_space<vmem>>, vector<1x1x9x1xf32>
    %23 = vector.shape_cast %22 : vector<1x1x9x1xf32> to vector<9x1xf32>
    %24 = vector.broadcast %23 : vector<9x1xf32> to vector<9x256xf32>
    %25 = arith.addf %21, %24 : vector<9x256xf32>
    %c0_32 = arith.constant 0 : index
    %c3 = arith.constant 3 : index
    %c0_33 = arith.constant 0 : index
    %c0_34 = arith.constant 0 : index
    %26 = vector.load %arg5[%c0_32, %c3, %c0_33, %c0_34] : memref<1x4x9x144xf32, #tpu.memory_space<vmem>>, vector<1x1x9x144xf32>
    %27 = vector.shape_cast %26 : vector<1x1x9x144xf32> to vector<9x144xf32>
    %cst_35 = arith.constant dense<0.000000e+00> : vector<9x256xf32>
    %28 = tpu.matmul %27, %7, %cst_35 {dimension_numbers = #tpu.dot_dimension_numbers<[1], [0], [0], [1], [0, 0, 1, 1], [], []>} : vector<9x144xf32>, vector<144x256xf32>, vector<9x256xf32> -> vector<9x256xf32>
    %c0_36 = arith.constant 0 : index
    %c2_37 = arith.constant 2 : index
    %c0_38 = arith.constant 0 : index
    %c0_39 = arith.constant 0 : index
    %29 = vector.load %arg6[%c0_36, %c2_37, %c0_38, %c0_39] : memref<1x3x9x1xf32, #tpu.memory_space<vmem>>, vector<1x1x9x1xf32>
    %30 = vector.shape_cast %29 : vector<1x1x9x1xf32> to vector<9x1xf32>
    %31 = vector.broadcast %30 : vector<9x1xf32> to vector<9x256xf32>
    %32 = arith.addf %28, %31 : vector<9x256xf32>
    %33 = vector.shape_cast %18 : vector<9x256xf32> to vector<9x1x256xf32>
    %34 = vector.broadcast %33 : vector<9x1x256xf32> to vector<9x16x256xf32>
    %35 = arith.mulf %34, %1 : vector<9x16x256xf32>
    %cst_40 = arith.constant dense<0.000000e+00> : vector<16x256xf32>
    %36 = vector.multi_reduction <add>, %35, %cst_40 [0] : vector<9x16x256xf32> to vector<16x256xf32>
    %37 = vector.shape_cast %25 : vector<9x256xf32> to vector<9x1x256xf32>
    %38 = vector.broadcast %37 : vector<9x1x256xf32> to vector<9x16x256xf32>
    %39 = arith.mulf %38, %1 : vector<9x16x256xf32>
    %cst_41 = arith.constant dense<0.000000e+00> : vector<16x256xf32>
    %40 = vector.multi_reduction <add>, %39, %cst_41 [0] : vector<9x16x256xf32> to vector<16x256xf32>
    %41 = vector.shape_cast %32 : vector<9x256xf32> to vector<9x1x256xf32>
    %42 = vector.broadcast %41 : vector<9x1x256xf32> to vector<9x16x256xf32>
    %43 = arith.mulf %42, %3 : vector<9x16x256xf32>
    %cst_42 = arith.constant dense<0.000000e+00> : vector<16x256xf32>
    %44 = vector.multi_reduction <add>, %43, %cst_42 [0] : vector<9x16x256xf32> to vector<16x256xf32>
    %45 = arith.mulf %5, %36 : vector<16x256xf32>
    %46 = arith.addf %45, %40 : vector<16x256xf32>
    %47 = arith.addf %46, %44 : vector<16x256xf32>
    %c0_43 = arith.constant 0 : index
    %c0_44 = arith.constant 0 : index
    %c0_45 = arith.constant 0 : index
    %c0_46 = arith.constant 0 : index
    %48 = vector.load %arg7[%c0_43, %c0_44, %c0_45, %c0_46] : memref<1x1x3x16xf32, #tpu.memory_space<vmem>>, vector<1x1x3x16xf32>
    %49 = vector.shape_cast %48 : vector<1x1x3x16xf32> to vector<3x16xf32>
    %c0_47 = arith.constant 0 : index
    %c0_48 = arith.constant 0 : index
    %c0_49 = arith.constant 0 : index
    %c0_50 = arith.constant 0 : index
    %50 = vector.load %arg8[%c0_47, %c0_48, %c0_49, %c0_50] : memref<1x1x16x3xf32, #tpu.memory_space<vmem>>, vector<1x1x16x3xf32>
    %51 = vector.shape_cast %50 : vector<1x1x16x3xf32> to vector<16x3xf32>
    %cst_51 = arith.constant dense<0.000000e+00> : vector<3x256xf32>
    %52 = tpu.matmul %49, %47, %cst_51 {dimension_numbers = #tpu.dot_dimension_numbers<[1], [0], [0], [1], [0, 0, 1, 1], [], []>} : vector<3x16xf32>, vector<16x256xf32>, vector<3x256xf32> -> vector<3x256xf32>
    %53 = arith.negf %52 : vector<3x256xf32>
    %54 = math.exp %53 : vector<3x256xf32>
    %cst_52 = arith.constant 1.000000e+00 : f32
    %55 = vector.broadcast %cst_52 : f32 to vector<3x256xf32>
    %56 = arith.addf %55, %54 : vector<3x256xf32>
    %57 = arith.divf %55, %56 : vector<3x256xf32>
    %cst_53 = arith.constant dense<0.000000e+00> : vector<16x256xf32>
    %58 = tpu.matmul %51, %57, %cst_53 {dimension_numbers = #tpu.dot_dimension_numbers<[1], [0], [0], [1], [0, 0, 1, 1], [], []>} : vector<16x3xf32>, vector<3x256xf32>, vector<16x256xf32> -> vector<16x256xf32>
    %59 = arith.mulf %47, %58 : vector<16x256xf32>
    %c0_54 = arith.constant 0 : index
    %c0_55 = arith.constant 0 : index
    %c0_56 = arith.constant 0 : index
    %c0_57 = arith.constant 0 : index
    %60 = vector.load %arg9[%c0_54, %c0_55, %c0_56, %c0_57] : memref<1x1x16x256xf32, #tpu.memory_space<vmem>>, vector<1x1x16x256xf32>
    %61 = vector.shape_cast %60 : vector<1x1x16x256xf32> to vector<16x256xf32>
    %62 = vector.shape_cast %59 : vector<16x256xf32> to vector<1x1x16x256xf32>
    tpu.vector_store %arg9[%c0_54, %c0_55, %c0_56, %c0_57], %62 {strides = array<i32>} : memref<1x1x16x256xf32, #tpu.memory_space<vmem>>, vector<1x1x16x256xf32>,
    %63 = arith.mulf %59, %36 : vector<16x256xf32>
    %c0_58 = arith.constant 0 : index
    %c0_59 = arith.constant 0 : index
    %c0_60 = arith.constant 0 : index
    %c0_61 = arith.constant 0 : index
    %64 = vector.load %arg10[%c0_58, %c0_59, %c0_60, %c0_61] : memref<1x1x16x256xf32, #tpu.memory_space<vmem>>, vector<1x1x16x256xf32>
    %65 = vector.shape_cast %64 : vector<1x1x16x256xf32> to vector<16x256xf32>
    %66 = vector.shape_cast %63 : vector<16x256xf32> to vector<1x1x16x256xf32>
    tpu.vector_store %arg10[%c0_58, %c0_59, %c0_60, %c0_61], %66 {strides = array<i32>} : memref<1x1x16x256xf32, #tpu.memory_space<vmem>>, vector<1x1x16x256xf32>,
    return
  }
  func.func @transform_0(%arg0: i32, %arg1: i32) -> (i32, i32, i32, i32, i32) {
    %c0_i32 = arith.constant 0 : i32
    %c0_i32_0 = arith.constant 0 : i32
    %c0_i32_1 = arith.constant 0 : i32
    %c0_i32_2 = arith.constant 0 : i32
    return %arg0, %arg1, %c0_i32, %c0_i32_0, %c0_i32_1 : i32, i32, i32, i32, i32
  }
  func.func @transform_1(%arg0: i32, %arg1: i32) -> (i32, i32, i32, i32, i32) {
    %c0_i32 = arith.constant 0 : i32
    %c0_i32_0 = arith.constant 0 : i32
    %c0_i32_1 = arith.constant 0 : i32
    %c0_i32_2 = arith.constant 0 : i32
    return %arg0, %arg1, %c0_i32, %c0_i32_0, %c0_i32_1 : i32, i32, i32, i32, i32
  }
  func.func @transform_2(%arg0: i32, %arg1: i32) -> (i32, i32, i32) {
    %c0_i32 = arith.constant 0 : i32
    %c0_i32_0 = arith.constant 0 : i32
    %c0_i32_1 = arith.constant 0 : i32
    return %arg1, %c0_i32, %c0_i32_0 : i32, i32, i32
  }
  func.func @transform_3(%arg0: i32, %arg1: i32) -> (i32, i32, i32, i32) {
    %c0_i32 = arith.constant 0 : i32
    %c0_i32_0 = arith.constant 0 : i32
    %c0_i32_1 = arith.constant 0 : i32
    %c0_i32_2 = arith.constant 0 : i32
    return %arg0, %c0_i32, %c0_i32_0, %c0_i32_1 : i32, i32, i32, i32
  }
  func.func @transform_4(%arg0: i32, %arg1: i32) -> (i32, i32, i32, i32) {
    %c0_i32 = arith.constant 0 : i32
    %c0_i32_0 = arith.constant 0 : i32
    %c0_i32_1 = arith.constant 0 : i32
    %c0_i32_2 = arith.constant 0 : i32
    return %arg0, %c0_i32, %c0_i32_0, %c0_i32_1 : i32, i32, i32, i32
  }
  func.func @transform_5(%arg0: i32, %arg1: i32) -> (i32, i32, i32, i32) {
    %c0_i32 = arith.constant 0 : i32
    %c0_i32_0 = arith.constant 0 : i32
    %c0_i32_1 = arith.constant 0 : i32
    return %arg0, %arg1, %c0_i32, %c0_i32_0 : i32, i32, i32, i32
  }
  func.func @transform_6(%arg0: i32, %arg1: i32) -> (i32, i32, i32, i32) {
    %c0_i32 = arith.constant 0 : i32
    %c0_i32_0 = arith.constant 0 : i32
    %c0_i32_1 = arith.constant 0 : i32
    return %arg0, %arg1, %c0_i32, %c0_i32_0 : i32, i32, i32, i32
  }
  func.func @transform_7(%arg0: i32, %arg1: i32) -> (i32, i32, i32, i32) {
    %c0_i32 = arith.constant 0 : i32
    %c0_i32_0 = arith.constant 0 : i32
    %c0_i32_1 = arith.constant 0 : i32
    return %arg0, %arg1, %c0_i32, %c0_i32_0 : i32, i32, i32, i32
  }
  func.func @transform_8(%arg0: i32, %arg1: i32) -> (i32, i32, i32, i32) {
    %c0_i32 = arith.constant 0 : i32
    %c0_i32_0 = arith.constant 0 : i32
    %c0_i32_1 = arith.constant 0 : i32
    return %arg0, %arg1, %c0_i32, %c0_i32_0 : i32, i32, i32, i32
  }
}

module attributes {stable_mosaic.version = 11 : i64} {
  func.func @_mm_T_kernel(%arg0: i32, %arg1: memref<16x48xf32, #tpu.memory_space<vmem>>, %arg2: memref<48x512xf32, #tpu.memory_space<vmem>>, %arg3: memref<16x1xf32, #tpu.memory_space<vmem>>, %arg4: memref<16x512xf32, #tpu.memory_space<vmem>>) attributes {dimension_semantics = [#tpu.dimension_semantics<parallel>], iteration_bounds = array<i64: 2>, scalar_prefetch = 0 : i64, scratch_operands = 0 : i64, tpu.core_type = #tpu.core_type<tc>, window_params = [{pipeline_mode = #tpu.pipeline_mode<synchronous>, transform_indices = @transform_0, window_bounds = array<i64: 16, 48>}, {transform_indices = @transform_1, window_bounds = array<i64: 48, 512>}, {pipeline_mode = #tpu.pipeline_mode<synchronous>, transform_indices = @transform_2, window_bounds = array<i64: 16, 1>}, {transform_indices = @transform_3, window_bounds = array<i64: 16, 512>}]} {
    %c0 = arith.constant 0 : index
    %c0_0 = arith.constant 0 : index
    %0 = vector.load %arg1[%c0, %c0_0] : memref<16x48xf32, #tpu.memory_space<vmem>>, vector<16x48xf32>
    %c0_1 = arith.constant 0 : index
    %c0_2 = arith.constant 0 : index
    %1 = vector.load %arg2[%c0_1, %c0_2] : memref<48x512xf32, #tpu.memory_space<vmem>>, vector<48x512xf32>
    %cst = arith.constant dense<0.000000e+00> : vector<16x512xf32>
    %2 = tpu.matmul %0, %1, %cst {dimension_numbers = #tpu.dot_dimension_numbers<[1], [0], [0], [1], [0, 0, 1, 1], [], []>} : vector<16x48xf32>, vector<48x512xf32>, vector<16x512xf32> -> vector<16x512xf32>
    %c0_3 = arith.constant 0 : index
    %c0_4 = arith.constant 0 : index
    %3 = vector.load %arg3[%c0_3, %c0_4] : memref<16x1xf32, #tpu.memory_space<vmem>>, vector<16x1xf32>
    %4 = vector.broadcast %3 : vector<16x1xf32> to vector<16x512xf32>
    %5 = arith.addf %2, %4 : vector<16x512xf32>
    %cst_5 = arith.constant 0.000000e+00 : f32
    %6 = vector.broadcast %cst_5 : f32 to vector<16x512xf32>
    %7 = arith.maximumf %5, %6 : vector<16x512xf32>
    %c0_6 = arith.constant 0 : index
    %c0_7 = arith.constant 0 : index
    %8 = vector.load %arg4[%c0_6, %c0_7] : memref<16x512xf32, #tpu.memory_space<vmem>>, vector<16x512xf32>
    tpu.vector_store %arg4[%c0_6, %c0_7], %7 {strides = array<i32>} : memref<16x512xf32, #tpu.memory_space<vmem>>, vector<16x512xf32>,
    return
  }
  func.func @transform_0(%arg0: i32) -> (i32, i32) {
    %c0_i32 = arith.constant 0 : i32
    %c0_i32_0 = arith.constant 0 : i32
    %c0_i32_1 = arith.constant 0 : i32
    return %c0_i32, %c0_i32_0 : i32, i32
  }
  func.func @transform_1(%arg0: i32) -> (i32, i32) {
    %c0_i32 = arith.constant 0 : i32
    %c0_i32_0 = arith.constant 0 : i32
    return %c0_i32, %arg0 : i32, i32
  }
  func.func @transform_2(%arg0: i32) -> (i32, i32) {
    %c0_i32 = arith.constant 0 : i32
    %c0_i32_0 = arith.constant 0 : i32
    %c0_i32_1 = arith.constant 0 : i32
    return %c0_i32, %c0_i32_0 : i32, i32
  }
  func.func @transform_3(%arg0: i32) -> (i32, i32) {
    %c0_i32 = arith.constant 0 : i32
    %c0_i32_0 = arith.constant 0 : i32
    return %c0_i32, %arg0 : i32, i32
  }
}

module attributes {stable_mosaic.version = 11 : i64} {
  func.func @_mm_T_kernel(%arg0: i32, %arg1: memref<16x108xf32, #tpu.memory_space<vmem>>, %arg2: memref<108x128xf32, #tpu.memory_space<vmem>>, %arg3: memref<16x1xf32, #tpu.memory_space<vmem>>, %arg4: memref<16x128xf32, #tpu.memory_space<vmem>>) attributes {dimension_semantics = [#tpu.dimension_semantics<parallel>], iteration_bounds = array<i64: 1>, scalar_prefetch = 0 : i64, scratch_operands = 0 : i64, tpu.core_type = #tpu.core_type<tc>, window_params = [{pipeline_mode = #tpu.pipeline_mode<synchronous>, transform_indices = @transform_0, window_bounds = array<i64: 16, 108>}, {transform_indices = @transform_1, window_bounds = array<i64: 108, 128>}, {pipeline_mode = #tpu.pipeline_mode<synchronous>, transform_indices = @transform_2, window_bounds = array<i64: 16, 1>}, {transform_indices = @transform_3, window_bounds = array<i64: 16, 128>}]} {
    %c0 = arith.constant 0 : index
    %c0_0 = arith.constant 0 : index
    %0 = vector.load %arg1[%c0, %c0_0] : memref<16x108xf32, #tpu.memory_space<vmem>>, vector<16x108xf32>
    %c0_1 = arith.constant 0 : index
    %c0_2 = arith.constant 0 : index
    %1 = vector.load %arg2[%c0_1, %c0_2] : memref<108x128xf32, #tpu.memory_space<vmem>>, vector<108x128xf32>
    %cst = arith.constant dense<0.000000e+00> : vector<16x128xf32>
    %2 = tpu.matmul %0, %1, %cst {dimension_numbers = #tpu.dot_dimension_numbers<[1], [0], [0], [1], [0, 0, 1, 1], [], []>} : vector<16x108xf32>, vector<108x128xf32>, vector<16x128xf32> -> vector<16x128xf32>
    %c0_3 = arith.constant 0 : index
    %c0_4 = arith.constant 0 : index
    %3 = vector.load %arg3[%c0_3, %c0_4] : memref<16x1xf32, #tpu.memory_space<vmem>>, vector<16x1xf32>
    %4 = vector.broadcast %3 : vector<16x1xf32> to vector<16x128xf32>
    %5 = arith.addf %2, %4 : vector<16x128xf32>
    %cst_5 = arith.constant 0.000000e+00 : f32
    %6 = vector.broadcast %cst_5 : f32 to vector<16x128xf32>
    %7 = arith.maximumf %5, %6 : vector<16x128xf32>
    %c0_6 = arith.constant 0 : index
    %c0_7 = arith.constant 0 : index
    %8 = vector.load %arg4[%c0_6, %c0_7] : memref<16x128xf32, #tpu.memory_space<vmem>>, vector<16x128xf32>
    tpu.vector_store %arg4[%c0_6, %c0_7], %7 {strides = array<i32>} : memref<16x128xf32, #tpu.memory_space<vmem>>, vector<16x128xf32>,
    return
  }
  func.func @transform_0(%arg0: i32) -> (i32, i32) {
    %c0_i32 = arith.constant 0 : i32
    %c0_i32_0 = arith.constant 0 : i32
    %c0_i32_1 = arith.constant 0 : i32
    return %c0_i32, %c0_i32_0 : i32, i32
  }
  func.func @transform_1(%arg0: i32) -> (i32, i32) {
    %c0_i32 = arith.constant 0 : i32
    %c0_i32_0 = arith.constant 0 : i32
    return %c0_i32, %arg0 : i32, i32
  }
  func.func @transform_2(%arg0: i32) -> (i32, i32) {
    %c0_i32 = arith.constant 0 : i32
    %c0_i32_0 = arith.constant 0 : i32
    %c0_i32_1 = arith.constant 0 : i32
    return %c0_i32, %c0_i32_0 : i32, i32
  }
  func.func @transform_3(%arg0: i32) -> (i32, i32) {
    %c0_i32 = arith.constant 0 : i32
    %c0_i32_0 = arith.constant 0 : i32
    return %c0_i32, %arg0 : i32, i32
  }
}

module attributes {stable_mosaic.version = 11 : i64} {
  func.func @_fused_attn_kernel(%arg0: i32, %arg1: i32, %arg2: memref<1x1x9x16x256xf32, #tpu.memory_space<vmem>>, %arg3: memref<1x1x9x16x256xf32, #tpu.memory_space<vmem>>, %arg4: memref<1x16x256xf32, #tpu.memory_space<vmem>>, %arg5: memref<1x4x9x144xf32, #tpu.memory_space<vmem>>, %arg6: memref<1x3x9x1xf32, #tpu.memory_space<vmem>>, %arg7: memref<1x1x3x16xf32, #tpu.memory_space<vmem>>, %arg8: memref<1x1x16x3xf32, #tpu.memory_space<vmem>>, %arg9: memref<1x1x16x256xf32, #tpu.memory_space<vmem>>, %arg10: memref<1x1x16x256xf32, #tpu.memory_space<vmem>>) attributes {dimension_semantics = [#tpu.dimension_semantics<parallel>, #tpu.dimension_semantics<parallel>], iteration_bounds = array<i64: 3, 2>, scalar_prefetch = 0 : i64, scratch_operands = 0 : i64, tpu.core_type = #tpu.core_type<tc>, window_params = [{transform_indices = @transform_0, window_bounds = array<i64: 1, 1, 9, 16, 256>}, {transform_indices = @transform_1, window_bounds = array<i64: 1, 1, 9, 16, 256>}, {transform_indices = @transform_2, window_bounds = array<i64: 1, 16, 256>}, {transform_indices = @transform_3, window_bounds = array<i64: 1, 4, 9, 144>}, {transform_indices = @transform_4, window_bounds = array<i64: 1, 3, 9, 1>}, {transform_indices = @transform_5, window_bounds = array<i64: 1, 1, 3, 16>}, {transform_indices = @transform_6, window_bounds = array<i64: 1, 1, 16, 3>}, {transform_indices = @transform_7, window_bounds = array<i64: 1, 1, 16, 256>}, {transform_indices = @transform_8, window_bounds = array<i64: 1, 1, 16, 256>}]} {
    %c0 = arith.constant 0 : index
    %c0_0 = arith.constant 0 : index
    %c0_1 = arith.constant 0 : index
    %c0_2 = arith.constant 0 : index
    %c0_3 = arith.constant 0 : index
    %0 = vector.load %arg2[%c0, %c0_0, %c0_1, %c0_2, %c0_3] : memref<1x1x9x16x256xf32, #tpu.memory_space<vmem>>, vector<1x1x9x16x256xf32>
    %1 = vector.shape_cast %0 : vector<1x1x9x16x256xf32> to vector<9x16x256xf32>
    %c0_4 = arith.constant 0 : index
    %c0_5 = arith.constant 0 : index
    %c0_6 = arith.constant 0 : index
    %c0_7 = arith.constant 0 : index
    %c0_8 = arith.constant 0 : index
    %2 = vector.load %arg3[%c0_4, %c0_5, %c0_6, %c0_7, %c0_8] : memref<1x1x9x16x256xf32, #tpu.memory_space<vmem>>, vector<1x1x9x16x256xf32>
    %3 = vector.shape_cast %2 : vector<1x1x9x16x256xf32> to vector<9x16x256xf32>
    %c0_9 = arith.constant 0 : index
    %c0_10 = arith.constant 0 : index
    %c0_11 = arith.constant 0 : index
    %4 = vector.load %arg4[%c0_9, %c0_10, %c0_11] : memref<1x16x256xf32, #tpu.memory_space<vmem>>, vector<1x16x256xf32>
    %5 = vector.shape_cast %4 : vector<1x16x256xf32> to vector<16x256xf32>
    %6 = vector.shape_cast %1 : vector<9x16x256xf32> to vector<144x256xf32>
    %7 = vector.shape_cast %3 : vector<9x16x256xf32> to vector<144x256xf32>
    %c0_12 = arith.constant 0 : index
    %c0_13 = arith.constant 0 : index
    %c0_14 = arith.constant 0 : index
    %c0_15 = arith.constant 0 : index
    %8 = vector.load %arg5[%c0_12, %c0_13, %c0_14, %c0_15] : memref<1x4x9x144xf32, #tpu.memory_space<vmem>>, vector<1x1x9x144xf32>
    %9 = vector.shape_cast %8 : vector<1x1x9x144xf32> to vector<9x144xf32>
    %cst = arith.constant dense<0.000000e+00> : vector<9x256xf32>
    %10 = tpu.matmul %9, %6, %cst {dimension_numbers = #tpu.dot_dimension_numbers<[1], [0], [0], [1], [0, 0, 1, 1], [], []>} : vector<9x144xf32>, vector<144x256xf32>, vector<9x256xf32> -> vector<9x256xf32>
    %c0_16 = arith.constant 0 : index
    %c1 = arith.constant 1 : index
    %c0_17 = arith.constant 0 : index
    %c0_18 = arith.constant 0 : index
    %11 = vector.load %arg5[%c0_16, %c1, %c0_17, %c0_18] : memref<1x4x9x144xf32, #tpu.memory_space<vmem>>, vector<1x1x9x144xf32>
    %12 = vector.shape_cast %11 : vector<1x1x9x144xf32> to vector<9x144xf32>
    %cst_19 = arith.constant dense<0.000000e+00> : vector<9x256xf32>
    %13 = tpu.matmul %12, %7, %cst_19 {dimension_numbers = #tpu.dot_dimension_numbers<[1], [0], [0], [1], [0, 0, 1, 1], [], []>} : vector<9x144xf32>, vector<144x256xf32>, vector<9x256xf32> -> vector<9x256xf32>
    %14 = arith.addf %10, %13 : vector<9x256xf32>
    %c0_20 = arith.constant 0 : index
    %c0_21 = arith.constant 0 : index
    %c0_22 = arith.constant 0 : index
    %c0_23 = arith.constant 0 : index
    %15 = vector.load %arg6[%c0_20, %c0_21, %c0_22, %c0_23] : memref<1x3x9x1xf32, #tpu.memory_space<vmem>>, vector<1x1x9x1xf32>
    %16 = vector.shape_cast %15 : vector<1x1x9x1xf32> to vector<9x1xf32>
    %17 = vector.broadcast %16 : vector<9x1xf32> to vector<9x256xf32>
    %18 = arith.addf %14, %17 : vector<9x256xf32>
    %c0_24 = arith.constant 0 : index
    %c2 = arith.constant 2 : index
    %c0_25 = arith.constant 0 : index
    %c0_26 = arith.constant 0 : index
    %19 = vector.load %arg5[%c0_24, %c2, %c0_25, %c0_26] : memref<1x4x9x144xf32, #tpu.memory_space<vmem>>, vector<1x1x9x144xf32>
    %20 = vector.shape_cast %19 : vector<1x1x9x144xf32> to vector<9x144xf32>
    %cst_27 = arith.constant dense<0.000000e+00> : vector<9x256xf32>
    %21 = tpu.matmul %20, %6, %cst_27 {dimension_numbers = #tpu.dot_dimension_numbers<[1], [0], [0], [1], [0, 0, 1, 1], [], []>} : vector<9x144xf32>, vector<144x256xf32>, vector<9x256xf32> -> vector<9x256xf32>
    %c0_28 = arith.constant 0 : index
    %c1_29 = arith.constant 1 : index
    %c0_30 = arith.constant 0 : index
    %c0_31 = arith.constant 0 : index
    %22 = vector.load %arg6[%c0_28, %c1_29, %c0_30, %c0_31] : memref<1x3x9x1xf32, #tpu.memory_space<vmem>>, vector<1x1x9x1xf32>
    %23 = vector.shape_cast %22 : vector<1x1x9x1xf32> to vector<9x1xf32>
    %24 = vector.broadcast %23 : vector<9x1xf32> to vector<9x256xf32>
    %25 = arith.addf %21, %24 : vector<9x256xf32>
    %c0_32 = arith.constant 0 : index
    %c3 = arith.constant 3 : index
    %c0_33 = arith.constant 0 : index
    %c0_34 = arith.constant 0 : index
    %26 = vector.load %arg5[%c0_32, %c3, %c0_33, %c0_34] : memref<1x4x9x144xf32, #tpu.memory_space<vmem>>, vector<1x1x9x144xf32>
    %27 = vector.shape_cast %26 : vector<1x1x9x144xf32> to vector<9x144xf32>
    %cst_35 = arith.constant dense<0.000000e+00> : vector<9x256xf32>
    %28 = tpu.matmul %27, %7, %cst_35 {dimension_numbers = #tpu.dot_dimension_numbers<[1], [0], [0], [1], [0, 0, 1, 1], [], []>} : vector<9x144xf32>, vector<144x256xf32>, vector<9x256xf32> -> vector<9x256xf32>
    %c0_36 = arith.constant 0 : index
    %c2_37 = arith.constant 2 : index
    %c0_38 = arith.constant 0 : index
    %c0_39 = arith.constant 0 : index
    %29 = vector.load %arg6[%c0_36, %c2_37, %c0_38, %c0_39] : memref<1x3x9x1xf32, #tpu.memory_space<vmem>>, vector<1x1x9x1xf32>
    %30 = vector.shape_cast %29 : vector<1x1x9x1xf32> to vector<9x1xf32>
    %31 = vector.broadcast %30 : vector<9x1xf32> to vector<9x256xf32>
    %32 = arith.addf %28, %31 : vector<9x256xf32>
    %33 = vector.shape_cast %18 : vector<9x256xf32> to vector<9x1x256xf32>
    %34 = vector.broadcast %33 : vector<9x1x256xf32> to vector<9x16x256xf32>
    %35 = arith.mulf %34, %1 : vector<9x16x256xf32>
    %cst_40 = arith.constant dense<0.000000e+00> : vector<16x256xf32>
    %36 = vector.multi_reduction <add>, %35, %cst_40 [0] : vector<9x16x256xf32> to vector<16x256xf32>
    %37 = vector.shape_cast %25 : vector<9x256xf32> to vector<9x1x256xf32>
    %38 = vector.broadcast %37 : vector<9x1x256xf32> to vector<9x16x256xf32>
    %39 = arith.mulf %38, %1 : vector<9x16x256xf32>
    %cst_41 = arith.constant dense<0.000000e+00> : vector<16x256xf32>
    %40 = vector.multi_reduction <add>, %39, %cst_41 [0] : vector<9x16x256xf32> to vector<16x256xf32>
    %41 = vector.shape_cast %32 : vector<9x256xf32> to vector<9x1x256xf32>
    %42 = vector.broadcast %41 : vector<9x1x256xf32> to vector<9x16x256xf32>
    %43 = arith.mulf %42, %3 : vector<9x16x256xf32>
    %cst_42 = arith.constant dense<0.000000e+00> : vector<16x256xf32>
    %44 = vector.multi_reduction <add>, %43, %cst_42 [0] : vector<9x16x256xf32> to vector<16x256xf32>
    %45 = arith.mulf %5, %36 : vector<16x256xf32>
    %46 = arith.addf %45, %40 : vector<16x256xf32>
    %47 = arith.addf %46, %44 : vector<16x256xf32>
    %c0_43 = arith.constant 0 : index
    %c0_44 = arith.constant 0 : index
    %c0_45 = arith.constant 0 : index
    %c0_46 = arith.constant 0 : index
    %48 = vector.load %arg7[%c0_43, %c0_44, %c0_45, %c0_46] : memref<1x1x3x16xf32, #tpu.memory_space<vmem>>, vector<1x1x3x16xf32>
    %49 = vector.shape_cast %48 : vector<1x1x3x16xf32> to vector<3x16xf32>
    %c0_47 = arith.constant 0 : index
    %c0_48 = arith.constant 0 : index
    %c0_49 = arith.constant 0 : index
    %c0_50 = arith.constant 0 : index
    %50 = vector.load %arg8[%c0_47, %c0_48, %c0_49, %c0_50] : memref<1x1x16x3xf32, #tpu.memory_space<vmem>>, vector<1x1x16x3xf32>
    %51 = vector.shape_cast %50 : vector<1x1x16x3xf32> to vector<16x3xf32>
    %cst_51 = arith.constant dense<0.000000e+00> : vector<3x256xf32>
    %52 = tpu.matmul %49, %47, %cst_51 {dimension_numbers = #tpu.dot_dimension_numbers<[1], [0], [0], [1], [0, 0, 1, 1], [], []>} : vector<3x16xf32>, vector<16x256xf32>, vector<3x256xf32> -> vector<3x256xf32>
    %53 = arith.negf %52 : vector<3x256xf32>
    %54 = math.exp %53 : vector<3x256xf32>
    %cst_52 = arith.constant 1.000000e+00 : f32
    %55 = vector.broadcast %cst_52 : f32 to vector<3x256xf32>
    %56 = arith.addf %55, %54 : vector<3x256xf32>
    %57 = arith.divf %55, %56 : vector<3x256xf32>
    %cst_53 = arith.constant dense<0.000000e+00> : vector<16x256xf32>
    %58 = tpu.matmul %51, %57, %cst_53 {dimension_numbers = #tpu.dot_dimension_numbers<[1], [0], [0], [1], [0, 0, 1, 1], [], []>} : vector<16x3xf32>, vector<3x256xf32>, vector<16x256xf32> -> vector<16x256xf32>
    %59 = arith.mulf %47, %58 : vector<16x256xf32>
    %c0_54 = arith.constant 0 : index
    %c0_55 = arith.constant 0 : index
    %c0_56 = arith.constant 0 : index
    %c0_57 = arith.constant 0 : index
    %60 = vector.load %arg9[%c0_54, %c0_55, %c0_56, %c0_57] : memref<1x1x16x256xf32, #tpu.memory_space<vmem>>, vector<1x1x16x256xf32>
    %61 = vector.shape_cast %60 : vector<1x1x16x256xf32> to vector<16x256xf32>
    %62 = vector.shape_cast %59 : vector<16x256xf32> to vector<1x1x16x256xf32>
    tpu.vector_store %arg9[%c0_54, %c0_55, %c0_56, %c0_57], %62 {strides = array<i32>} : memref<1x1x16x256xf32, #tpu.memory_space<vmem>>, vector<1x1x16x256xf32>,
    %63 = arith.mulf %59, %36 : vector<16x256xf32>
    %c0_58 = arith.constant 0 : index
    %c0_59 = arith.constant 0 : index
    %c0_60 = arith.constant 0 : index
    %c0_61 = arith.constant 0 : index
    %64 = vector.load %arg10[%c0_58, %c0_59, %c0_60, %c0_61] : memref<1x1x16x256xf32, #tpu.memory_space<vmem>>, vector<1x1x16x256xf32>
    %65 = vector.shape_cast %64 : vector<1x1x16x256xf32> to vector<16x256xf32>
    %66 = vector.shape_cast %63 : vector<16x256xf32> to vector<1x1x16x256xf32>
    tpu.vector_store %arg10[%c0_58, %c0_59, %c0_60, %c0_61], %66 {strides = array<i32>} : memref<1x1x16x256xf32, #tpu.memory_space<vmem>>, vector<1x1x16x256xf32>,
    return
  }
  func.func @transform_0(%arg0: i32, %arg1: i32) -> (i32, i32, i32, i32, i32) {
    %c0_i32 = arith.constant 0 : i32
    %c0_i32_0 = arith.constant 0 : i32
    %c0_i32_1 = arith.constant 0 : i32
    %c0_i32_2 = arith.constant 0 : i32
    return %arg0, %arg1, %c0_i32, %c0_i32_0, %c0_i32_1 : i32, i32, i32, i32, i32
  }
  func.func @transform_1(%arg0: i32, %arg1: i32) -> (i32, i32, i32, i32, i32) {
    %c0_i32 = arith.constant 0 : i32
    %c0_i32_0 = arith.constant 0 : i32
    %c0_i32_1 = arith.constant 0 : i32
    %c0_i32_2 = arith.constant 0 : i32
    return %arg0, %arg1, %c0_i32, %c0_i32_0, %c0_i32_1 : i32, i32, i32, i32, i32
  }
  func.func @transform_2(%arg0: i32, %arg1: i32) -> (i32, i32, i32) {
    %c0_i32 = arith.constant 0 : i32
    %c0_i32_0 = arith.constant 0 : i32
    %c0_i32_1 = arith.constant 0 : i32
    return %arg1, %c0_i32, %c0_i32_0 : i32, i32, i32
  }
  func.func @transform_3(%arg0: i32, %arg1: i32) -> (i32, i32, i32, i32) {
    %c0_i32 = arith.constant 0 : i32
    %c0_i32_0 = arith.constant 0 : i32
    %c0_i32_1 = arith.constant 0 : i32
    %c0_i32_2 = arith.constant 0 : i32
    return %arg0, %c0_i32, %c0_i32_0, %c0_i32_1 : i32, i32, i32, i32
  }
  func.func @transform_4(%arg0: i32, %arg1: i32) -> (i32, i32, i32, i32) {
    %c0_i32 = arith.constant 0 : i32
    %c0_i32_0 = arith.constant 0 : i32
    %c0_i32_1 = arith.constant 0 : i32
    %c0_i32_2 = arith.constant 0 : i32
    return %arg0, %c0_i32, %c0_i32_0, %c0_i32_1 : i32, i32, i32, i32
  }
  func.func @transform_5(%arg0: i32, %arg1: i32) -> (i32, i32, i32, i32) {
    %c0_i32 = arith.constant 0 : i32
    %c0_i32_0 = arith.constant 0 : i32
    %c0_i32_1 = arith.constant 0 : i32
    return %arg0, %arg1, %c0_i32, %c0_i32_0 : i32, i32, i32, i32
  }
  func.func @transform_6(%arg0: i32, %arg1: i32) -> (i32, i32, i32, i32) {
    %c0_i32 = arith.constant 0 : i32
    %c0_i32_0 = arith.constant 0 : i32
    %c0_i32_1 = arith.constant 0 : i32
    return %arg0, %arg1, %c0_i32, %c0_i32_0 : i32, i32, i32, i32
  }
  func.func @transform_7(%arg0: i32, %arg1: i32) -> (i32, i32, i32, i32) {
    %c0_i32 = arith.constant 0 : i32
    %c0_i32_0 = arith.constant 0 : i32
    %c0_i32_1 = arith.constant 0 : i32
    return %arg0, %arg1, %c0_i32, %c0_i32_0 : i32, i32, i32, i32
  }
  func.func @transform_8(%arg0: i32, %arg1: i32) -> (i32, i32, i32, i32) {
    %c0_i32 = arith.constant 0 : i32
    %c0_i32_0 = arith.constant 0 : i32
    %c0_i32_1 = arith.constant 0 : i32
    return %arg0, %arg1, %c0_i32, %c0_i32_0 : i32, i32, i32, i32
  }
}

module attributes {stable_mosaic.version = 11 : i64} {
  func.func @_mm_T_kernel(%arg0: i32, %arg1: memref<16x48xf32, #tpu.memory_space<vmem>>, %arg2: memref<48x512xf32, #tpu.memory_space<vmem>>, %arg3: memref<16x1xf32, #tpu.memory_space<vmem>>, %arg4: memref<16x512xf32, #tpu.memory_space<vmem>>) attributes {dimension_semantics = [#tpu.dimension_semantics<parallel>], iteration_bounds = array<i64: 1>, scalar_prefetch = 0 : i64, scratch_operands = 0 : i64, tpu.core_type = #tpu.core_type<tc>, window_params = [{pipeline_mode = #tpu.pipeline_mode<synchronous>, transform_indices = @transform_0, window_bounds = array<i64: 16, 48>}, {transform_indices = @transform_1, window_bounds = array<i64: 48, 512>}, {pipeline_mode = #tpu.pipeline_mode<synchronous>, transform_indices = @transform_2, window_bounds = array<i64: 16, 1>}, {transform_indices = @transform_3, window_bounds = array<i64: 16, 512>}]} {
    %c0 = arith.constant 0 : index
    %c0_0 = arith.constant 0 : index
    %0 = vector.load %arg1[%c0, %c0_0] : memref<16x48xf32, #tpu.memory_space<vmem>>, vector<16x48xf32>
    %c0_1 = arith.constant 0 : index
    %c0_2 = arith.constant 0 : index
    %1 = vector.load %arg2[%c0_1, %c0_2] : memref<48x512xf32, #tpu.memory_space<vmem>>, vector<48x512xf32>
    %cst = arith.constant dense<0.000000e+00> : vector<16x512xf32>
    %2 = tpu.matmul %0, %1, %cst {dimension_numbers = #tpu.dot_dimension_numbers<[1], [0], [0], [1], [0, 0, 1, 1], [], []>} : vector<16x48xf32>, vector<48x512xf32>, vector<16x512xf32> -> vector<16x512xf32>
    %c0_3 = arith.constant 0 : index
    %c0_4 = arith.constant 0 : index
    %3 = vector.load %arg3[%c0_3, %c0_4] : memref<16x1xf32, #tpu.memory_space<vmem>>, vector<16x1xf32>
    %4 = vector.broadcast %3 : vector<16x1xf32> to vector<16x512xf32>
    %5 = arith.addf %2, %4 : vector<16x512xf32>
    %cst_5 = arith.constant 0.000000e+00 : f32
    %6 = vector.broadcast %cst_5 : f32 to vector<16x512xf32>
    %7 = arith.maximumf %5, %6 : vector<16x512xf32>
    %c0_6 = arith.constant 0 : index
    %c0_7 = arith.constant 0 : index
    %8 = vector.load %arg4[%c0_6, %c0_7] : memref<16x512xf32, #tpu.memory_space<vmem>>, vector<16x512xf32>
    tpu.vector_store %arg4[%c0_6, %c0_7], %7 {strides = array<i32>} : memref<16x512xf32, #tpu.memory_space<vmem>>, vector<16x512xf32>,
    return
  }
  func.func @transform_0(%arg0: i32) -> (i32, i32) {
    %c0_i32 = arith.constant 0 : i32
    %c0_i32_0 = arith.constant 0 : i32
    %c0_i32_1 = arith.constant 0 : i32
    return %c0_i32, %c0_i32_0 : i32, i32
  }
  func.func @transform_1(%arg0: i32) -> (i32, i32) {
    %c0_i32 = arith.constant 0 : i32
    %c0_i32_0 = arith.constant 0 : i32
    return %c0_i32, %arg0 : i32, i32
  }
  func.func @transform_2(%arg0: i32) -> (i32, i32) {
    %c0_i32 = arith.constant 0 : i32
    %c0_i32_0 = arith.constant 0 : i32
    %c0_i32_1 = arith.constant 0 : i32
    return %c0_i32, %c0_i32_0 : i32, i32
  }
  func.func @transform_3(%arg0: i32) -> (i32, i32) {
    %c0_i32 = arith.constant 0 : i32
    %c0_i32_0 = arith.constant 0 : i32
    return %c0_i32, %arg0 : i32, i32
  }
}

module attributes {stable_mosaic.version = 11 : i64} {
  func.func @_mm_T_kernel(%arg0: i32, %arg1: memref<96x720xf32, #tpu.memory_space<vmem>>, %arg2: memref<720x128xf32, #tpu.memory_space<vmem>>, %arg3: memref<96x1xf32, #tpu.memory_space<vmem>>, %arg4: memref<96x128xf32, #tpu.memory_space<vmem>>) attributes {dimension_semantics = [#tpu.dimension_semantics<parallel>], iteration_bounds = array<i64: 1>, scalar_prefetch = 0 : i64, scratch_operands = 0 : i64, tpu.core_type = #tpu.core_type<tc>, window_params = [{pipeline_mode = #tpu.pipeline_mode<synchronous>, transform_indices = @transform_0, window_bounds = array<i64: 96, 720>}, {transform_indices = @transform_1, window_bounds = array<i64: 720, 128>}, {pipeline_mode = #tpu.pipeline_mode<synchronous>, transform_indices = @transform_2, window_bounds = array<i64: 96, 1>}, {transform_indices = @transform_3, window_bounds = array<i64: 96, 128>}]} {
    %c0 = arith.constant 0 : index
    %c0_0 = arith.constant 0 : index
    %0 = vector.load %arg1[%c0, %c0_0] : memref<96x720xf32, #tpu.memory_space<vmem>>, vector<96x720xf32>
    %c0_1 = arith.constant 0 : index
    %c0_2 = arith.constant 0 : index
    %1 = vector.load %arg2[%c0_1, %c0_2] : memref<720x128xf32, #tpu.memory_space<vmem>>, vector<720x128xf32>
    %cst = arith.constant dense<0.000000e+00> : vector<96x128xf32>
    %2 = tpu.matmul %0, %1, %cst {dimension_numbers = #tpu.dot_dimension_numbers<[1], [0], [0], [1], [0, 0, 1, 1], [], []>} : vector<96x720xf32>, vector<720x128xf32>, vector<96x128xf32> -> vector<96x128xf32>
    %c0_3 = arith.constant 0 : index
    %c0_4 = arith.constant 0 : index
    %3 = vector.load %arg3[%c0_3, %c0_4] : memref<96x1xf32, #tpu.memory_space<vmem>>, vector<96x1xf32>
    %4 = vector.broadcast %3 : vector<96x1xf32> to vector<96x128xf32>
    %5 = arith.addf %2, %4 : vector<96x128xf32>
    %cst_5 = arith.constant 0.000000e+00 : f32
    %6 = vector.broadcast %cst_5 : f32 to vector<96x128xf32>
    %7 = arith.maximumf %5, %6 : vector<96x128xf32>
    %c0_6 = arith.constant 0 : index
    %c0_7 = arith.constant 0 : index
    %8 = vector.load %arg4[%c0_6, %c0_7] : memref<96x128xf32, #tpu.memory_space<vmem>>, vector<96x128xf32>
    tpu.vector_store %arg4[%c0_6, %c0_7], %7 {strides = array<i32>} : memref<96x128xf32, #tpu.memory_space<vmem>>, vector<96x128xf32>,
    return
  }
  func.func @transform_0(%arg0: i32) -> (i32, i32) {
    %c0_i32 = arith.constant 0 : i32
    %c0_i32_0 = arith.constant 0 : i32
    %c0_i32_1 = arith.constant 0 : i32
    return %c0_i32, %c0_i32_0 : i32, i32
  }
  func.func @transform_1(%arg0: i32) -> (i32, i32) {
    %c0_i32 = arith.constant 0 : i32
    %c0_i32_0 = arith.constant 0 : i32
    return %c0_i32, %arg0 : i32, i32
  }
  func.func @transform_2(%arg0: i32) -> (i32, i32) {
    %c0_i32 = arith.constant 0 : i32
    %c0_i32_0 = arith.constant 0 : i32
    %c0_i32_1 = arith.constant 0 : i32
    return %c0_i32, %c0_i32_0 : i32, i32
  }
  func.func @transform_3(%arg0: i32) -> (i32, i32) {
    %c0_i32 = arith.constant 0 : i32
    %c0_i32_0 = arith.constant 0 : i32
    return %c0_i32, %arg0 : i32, i32
  }
}

module attributes {stable_mosaic.version = 11 : i64} {
  func.func @_mm_kernel(%arg0: i32, %arg1: memref<32x864xf32, #tpu.memory_space<vmem>>, %arg2: memref<864x128xf32, #tpu.memory_space<vmem>>, %arg3: memref<1x128xf32, #tpu.memory_space<vmem>>, %arg4: memref<32x128xf32, #tpu.memory_space<vmem>>) attributes {dimension_semantics = [#tpu.dimension_semantics<parallel>], iteration_bounds = array<i64: 1>, scalar_prefetch = 0 : i64, scratch_operands = 0 : i64, tpu.core_type = #tpu.core_type<tc>, window_params = [{pipeline_mode = #tpu.pipeline_mode<synchronous>, transform_indices = @transform_0, window_bounds = array<i64: 32, 864>}, {pipeline_mode = #tpu.pipeline_mode<synchronous>, transform_indices = @transform_1, window_bounds = array<i64: 864, 128>}, {pipeline_mode = #tpu.pipeline_mode<synchronous>, transform_indices = @transform_2, window_bounds = array<i64: 1, 128>}, {pipeline_mode = #tpu.pipeline_mode<synchronous>, transform_indices = @transform_3, window_bounds = array<i64: 32, 128>}]} {
    %c0 = arith.constant 0 : index
    %c0_0 = arith.constant 0 : index
    %0 = vector.load %arg1[%c0, %c0_0] : memref<32x864xf32, #tpu.memory_space<vmem>>, vector<32x864xf32>
    %c0_1 = arith.constant 0 : index
    %c0_2 = arith.constant 0 : index
    %1 = vector.load %arg2[%c0_1, %c0_2] : memref<864x128xf32, #tpu.memory_space<vmem>>, vector<864x128xf32>
    %cst = arith.constant dense<0.000000e+00> : vector<32x128xf32>
    %2 = tpu.matmul %0, %1, %cst {dimension_numbers = #tpu.dot_dimension_numbers<[1], [0], [0], [1], [0, 0, 1, 1], [], []>} : vector<32x864xf32>, vector<864x128xf32>, vector<32x128xf32> -> vector<32x128xf32>
    %c0_3 = arith.constant 0 : index
    %c0_4 = arith.constant 0 : index
    %3 = vector.load %arg3[%c0_3, %c0_4] : memref<1x128xf32, #tpu.memory_space<vmem>>, vector<1x128xf32>
    %4 = vector.broadcast %3 : vector<1x128xf32> to vector<32x128xf32>
    %5 = arith.addf %2, %4 : vector<32x128xf32>
    %cst_5 = arith.constant 0.000000e+00 : f32
    %6 = vector.broadcast %cst_5 : f32 to vector<32x128xf32>
    %7 = arith.maximumf %5, %6 : vector<32x128xf32>
    %c0_6 = arith.constant 0 : index
    %c0_7 = arith.constant 0 : index
    %8 = vector.load %arg4[%c0_6, %c0_7] : memref<32x128xf32, #tpu.memory_space<vmem>>, vector<32x128xf32>
    tpu.vector_store %arg4[%c0_6, %c0_7], %7 {strides = array<i32>} : memref<32x128xf32, #tpu.memory_space<vmem>>, vector<32x128xf32>,
    return
  }
  func.func @transform_0(%arg0: i32) -> (i32, i32) {
    %c0_i32 = arith.constant 0 : i32
    %c0_i32_0 = arith.constant 0 : i32
    %c0_i32_1 = arith.constant 0 : i32
    return %c0_i32, %c0_i32_0 : i32, i32
  }
  func.func @transform_1(%arg0: i32) -> (i32, i32) {
    %c0_i32 = arith.constant 0 : i32
    %c0_i32_0 = arith.constant 0 : i32
    %c0_i32_1 = arith.constant 0 : i32
    return %c0_i32, %c0_i32_0 : i32, i32
  }
  func.func @transform_2(%arg0: i32) -> (i32, i32) {
    %c0_i32 = arith.constant 0 : i32
    %c0_i32_0 = arith.constant 0 : i32
    %c0_i32_1 = arith.constant 0 : i32
    return %c0_i32, %c0_i32_0 : i32, i32
  }
  func.func @transform_3(%arg0: i32) -> (i32, i32) {
    %c0_i32 = arith.constant 0 : i32
    %c0_i32_0 = arith.constant 0 : i32
    %c0_i32_1 = arith.constant 0 : i32
    return %c0_i32, %c0_i32_0 : i32, i32
  }
}

module attributes {stable_mosaic.version = 11 : i64} {
  func.func @_mm_kernel(%arg0: i32, %arg1: memref<8x1152xf32, #tpu.memory_space<vmem>>, %arg2: memref<1152x128xf32, #tpu.memory_space<vmem>>, %arg3: memref<1x128xf32, #tpu.memory_space<vmem>>, %arg4: memref<8x128xf32, #tpu.memory_space<vmem>>) attributes {dimension_semantics = [#tpu.dimension_semantics<parallel>], iteration_bounds = array<i64: 1>, scalar_prefetch = 0 : i64, scratch_operands = 0 : i64, tpu.core_type = #tpu.core_type<tc>, window_params = [{pipeline_mode = #tpu.pipeline_mode<synchronous>, transform_indices = @transform_0, window_bounds = array<i64: 8, 1152>}, {pipeline_mode = #tpu.pipeline_mode<synchronous>, transform_indices = @transform_1, window_bounds = array<i64: 1152, 128>}, {pipeline_mode = #tpu.pipeline_mode<synchronous>, transform_indices = @transform_2, window_bounds = array<i64: 1, 128>}, {pipeline_mode = #tpu.pipeline_mode<synchronous>, transform_indices = @transform_3, window_bounds = array<i64: 8, 128>}]} {
    %c0 = arith.constant 0 : index
    %c0_0 = arith.constant 0 : index
    %0 = vector.load %arg1[%c0, %c0_0] : memref<8x1152xf32, #tpu.memory_space<vmem>>, vector<8x1152xf32>
    %c0_1 = arith.constant 0 : index
    %c0_2 = arith.constant 0 : index
    %1 = vector.load %arg2[%c0_1, %c0_2] : memref<1152x128xf32, #tpu.memory_space<vmem>>, vector<1152x128xf32>
    %cst = arith.constant dense<0.000000e+00> : vector<8x128xf32>
    %2 = tpu.matmul %0, %1, %cst {dimension_numbers = #tpu.dot_dimension_numbers<[1], [0], [0], [1], [0, 0, 1, 1], [], []>} : vector<8x1152xf32>, vector<1152x128xf32>, vector<8x128xf32> -> vector<8x128xf32>
    %c0_3 = arith.constant 0 : index
    %c0_4 = arith.constant 0 : index
    %3 = vector.load %arg3[%c0_3, %c0_4] : memref<1x128xf32, #tpu.memory_space<vmem>>, vector<1x128xf32>
    %4 = vector.broadcast %3 : vector<1x128xf32> to vector<8x128xf32>
    %5 = arith.addf %2, %4 : vector<8x128xf32>
    %cst_5 = arith.constant 0.000000e+00 : f32
    %6 = vector.broadcast %cst_5 : f32 to vector<8x128xf32>
    %7 = arith.maximumf %5, %6 : vector<8x128xf32>
    %c0_6 = arith.constant 0 : index
    %c0_7 = arith.constant 0 : index
    %8 = vector.load %arg4[%c0_6, %c0_7] : memref<8x128xf32, #tpu.memory_space<vmem>>, vector<8x128xf32>
    tpu.vector_store %arg4[%c0_6, %c0_7], %7 {strides = array<i32>} : memref<8x128xf32, #tpu.memory_space<vmem>>, vector<8x128xf32>,
    return
  }
  func.func @transform_0(%arg0: i32) -> (i32, i32) {
    %c0_i32 = arith.constant 0 : i32
    %c0_i32_0 = arith.constant 0 : i32
    %c0_i32_1 = arith.constant 0 : i32
    return %c0_i32, %c0_i32_0 : i32, i32
  }
  func.func @transform_1(%arg0: i32) -> (i32, i32) {
    %c0_i32 = arith.constant 0 : i32
    %c0_i32_0 = arith.constant 0 : i32
    %c0_i32_1 = arith.constant 0 : i32
    return %c0_i32, %c0_i32_0 : i32, i32
  }
  func.func @transform_2(%arg0: i32) -> (i32, i32) {
    %c0_i32 = arith.constant 0 : i32
    %c0_i32_0 = arith.constant 0 : i32
    %c0_i32_1 = arith.constant 0 : i32
    return %c0_i32, %c0_i32_0 : i32, i32
  }
  func.func @transform_3(%arg0: i32) -> (i32, i32) {
    %c0_i32 = arith.constant 0 : i32
    %c0_i32_0 = arith.constant 0 : i32
    %c0_i32_1 = arith.constant 0 : i32
    return %c0_i32, %c0_i32_0 : i32, i32
  }
}

</mosaic_0001>

<llo_original>
// kernel: _lambda_.14
$region0: #{_lambda_.14}
  #allocation0 [shape = 'u32[]', space=smem, size = 0x4, offset = 0x4, fixed_abs, tag = 'smem constant byte address 0x4 - core index']
  #allocation1 [shape = 'u32[144,128]{1,0:T(1,128)}', space=vmem, size = 0x12000, scoped, tag = 'internal scratch']
  %s0 = inlined_call_operand.vmem [shape: f32[16,72], index: 0, kind: input, shape index: {}]
  %s1 = inlined_call_operand.vmem [shape: f32[72,128], index: 1, kind: input, shape index: {}]
  %s2 = inlined_call_operand.vmem [shape: f32[16,1], index: 2, kind: input, shape index: {}]
  %s3 = inlined_call_operand.vmem [shape: f32[16,128], index: 3, kind: output, shape index: {}]
  %s4 = sld [smem:[#allocation0]]
  $region22: #{_lambda_.14} parent=0
    _
  %s6 = ssub.s32 1, %s4
  %s7 = scalar_select 0, %s6, %s4
  // Predicated region
  $region2: #{_lambda_.14} parent=0 // pred_check
    _
  $region3: #{_lambda_.14} parent=0 // pred_check_branch
    %9 = sbr.rel (0) target = $region5
  $region4: #{_lambda_.14} parent=0 // pred_region
    _
  $region5: #{_lambda_.14} parent=0 // pred_fallthru
    _
  // Predicated region
  $region6: #{_lambda_.14} parent=0 // pred_check
    _
  $region7: #{_lambda_.14} parent=0 // pred_check_branch
    %11 = sbr.rel (0) target = $region9
  $region8: #{_lambda_.14} parent=0 // pred_region
    _
  $region9: #{_lambda_.14} parent=0 // pred_fallthru
    _
  // Predicated region
  $region10: #{_lambda_.14} parent=0 // pred_check
    _
  $region11: #{_lambda_.14} parent=0 // pred_check_branch
    %13 = sbr.rel (0) target = $region13
  $region12: #{_lambda_.14} parent=0 // pred_region
    _
  $region13: #{_lambda_.14} parent=0 // pred_fallthru
    _
  %v14 = vld [vmem:[%s0] sm:$0xff]
  %v15 = vld [vmem:[%s0 + $0x8] sm:$0xff]
  %v16 = vld [vmem:[%s1] sm:$0xff]
  %v17 = vld [vmem:[%s1 + $0x8] sm:$0xff]
  %v18 = vld [vmem:[%s1 + $0x10] sm:$0xff]
  %v19 = vld [vmem:[%s1 + $0x18] sm:$0xff]
  %v20 = vld [vmem:[%s1 + $0x20] sm:$0xff]
  %v21 = vld [vmem:[%s1 + $0x28] sm:$0xff]
  %v22 = vld [vmem:[%s1 + $0x30] sm:$0xff]
  %v23 = vld [vmem:[%s1 + $0x38] sm:$0xff]
  %v24 = vld [vmem:[%s1 + $0x40] sm:$0xff]
  %v25 = vld [vmem:[%s2] sm:$0xff]
  %v26 = vld [vmem:[%s2 + $0x8] sm:$0xff]
  %28 = vset.pattern.permute.xlu0 0
  %29 = vperm.xlu0 %28, %v25
  %v30 = vpop.permute.xlu0 %29
  %33 = vset.pattern.permute.xlu0 0
  %34 = vperm.xlu0 %33, %v26
  %v35 = vpop.permute.xlu0 %34
  %vm37 = vcmask 588800
  %v39 = vsel %vm37, %v14, 0
  %v42 = vsel %vm37, %v15, 0
  %44 = vmatprep.subr.mxu0 0.0
  %45 = vmatpush1.msra.mxu0 %v16
  %46 = vmatprep.subr.mxu0 0.0
  %47 = vmatpush1.msra.mxu0 %v17
  %48 = vmatprep.subr.mxu0 0.0
  %49 = vmatpush1.msra.mxu0 %v18
  %50 = vmatprep.subr.mxu0 0.0
  %51 = vmatpush1.msra.mxu0 %v19
  %52 = vmatprep.subr.mxu0 0.0
  %53 = vmatpush1.msra.mxu0 %v20
  %54 = vmatprep.subr.mxu0 0.0
  %55 = vmatpush1.msra.mxu0 %v21
  %56 = vmatprep.subr.mxu0 0.0
  %57 = vmatpush1.msra.mxu0 %v22
  %58 = vmatprep.subr.mxu0 0.0
  %59 = vmatpush1.msra.mxu0 %v23
  %60 = vmatprep.subr.mxu0 0.0
  %61 = vmatpush1.msra.mxu0 %v24
  %62 = vmatprep.subr.mxu0 0.0
  %63 = vmatpush1.msra.mxu0 0.0
  %64 = vmatprep.subr.mxu0 0.0
  %65 = vmatpush1.msra.mxu0 0.0
  %66 = vmatprep.subr.mxu0 0.0
  %67 = vmatpush1.msra.mxu0 0.0
  %68 = vmatprep.subr.mxu0 0.0
  %69 = vmatpush1.msra.mxu0 0.0
  %70 = vmatprep.subr.mxu0 0.0
  %71 = vmatpush1.msra.mxu0 0.0
  %72 = vmatprep.subr.mxu0 0.0
  %73 = vmatpush1.msra.mxu0 0.0
  %74 = vmatprep.subr.mxu0 0.0
  %75 = vmatpush1.msra.mxu0 0.0
  %76 = vmatprep.subr.mxu0 0.0
  %77 = vmatpush1.msra.mxu0 0.0
  %78 = vmatprep.subr.mxu0 0.0
  %79 = vmatpush1.msra.mxu0 0.0
  %80 = vmatprep.subr.mxu0 0.0
  %81 = vmatpush1.msra.mxu0 0.0
  %82 = vmatprep.subr.mxu0 0.0
  %83 = vmatpush1.msra.mxu0 0.0
  %84 = vmatprep.subr.mxu0 0.0
  %85 = vmatpush1.msra.mxu0 0.0
  %86 = vmatprep.subr.mxu0 0.0
  %87 = vmatpush1.msra.mxu0 0.0
  %88 = vmatprep.subr.mxu0 0.0
  %89 = vmatpush1.msra.mxu0 0.0
  %90 = vmatprep.subr.mxu0 0.0
  %91 = vmatpush1.msra.mxu0 0.0
  %92 = vmatprep.subr.mxu0 0.0
  %93 = vmatpush1.msra.mxu0 0.0
  %94 = vmatprep.subr.mxu0 0.0
  %95 = vmatpush1.msra.mxu0 0.0
  %96 = vmatprep.subr.mxu0 0.0
  %97 = vmatpush1.msra.mxu0 0.0
  %98 = vmatprep.subr.mxu0 0.0
  %99 = vmatpush1.msra.mxu0 0.0
  %100 = vmatprep.subr.mxu0 0.0
  %101 = vmatpush1.msra.mxu0 0.0
  %102 = vmatprep.subr.mxu0 0.0
  %103 = vmatpush1.msra.mxu0 0.0
  %104 = vmatprep.subr.mxu0 0.0
  %105 = vmatpush1.msra.mxu0 0.0
  %106 = vmatprep.subr.mxu0 0.0
  %107 = vmatpush1.msra.mxu0 0.0
  %108 = vmatprep.mubr.f32.mxu0 0.0
  %109 = vmatmul.mubr.f32.gmra.mrb[0].mxu0 %v39
  %v110 = vpop.f32.mrb[0].mxu0
  %v111 = vadd.f32 %v30, %v110
  %v112 = vpop.f32.mrb[0].mxu0
  %113 = vmatprep.mubr.f32.mxu0 0.0
  %114 = vmatmul.mubr.f32.gmra.mrb[0].mxu0 %v42
  %v115 = vpop.f32.mrb[0].mxu0
  %v116 = vadd.f32 %v35, %v115
  %v117 = vpop.f32.mrb[0].mxu0
  %118 = vdwg.mxu0
  %v119 = vmax.f32 %v111, 0.0
  %v120 = vmax.f32 %v116, 0.0
  %121 = vst [vmem:[%s3] sm:$0xff] %v119
  %122 = vst [vmem:[%s3 + $0x8] sm:$0xff] %v120
  // Predicated region
  $region14: #{_lambda_.14} parent=0 // pred_check
    _
  $region15: #{_lambda_.14} parent=0 // pred_check_branch
    %124 = sbr.rel (0) target = $region17
  $region16: #{_lambda_.14} parent=0 // pred_region
    _
  $region17: #{_lambda_.14} parent=0 // pred_fallthru
    _
  // Predicated region
  $region18: #{_lambda_.14} parent=0 // pred_check
    _
  $region19: #{_lambda_.14} parent=0 // pred_check_branch
    %126 = sbr.rel (0) target = $region21
  $region20: #{_lambda_.14} parent=0 // pred_region
    _
  $region21: #{_lambda_.14} parent=0 // pred_fallthru
    _

// kernel: _lambda_.13
$region0: #{_lambda_.13}
  #allocation0 [shape = 'u32[]', space=smem, size = 0x4, offset = 0x4, fixed_abs, tag = 'smem constant byte address 0x4 - core index']
  #allocation1 [shape = 'u32[144,128]{1,0:T(1,128)}', space=vmem, size = 0x12000, scoped, tag = 'internal scratch']
  %s0 = inlined_call_operand.vmem [shape: f32[16,108], index: 0, kind: input, shape index: {}]
  %s1 = inlined_call_operand.vmem [shape: f32[108,512], index: 1, kind: input, shape index: {}]
  %s2 = inlined_call_operand.vmem [shape: f32[16,1], index: 2, kind: input, shape index: {}]
  %s3 = inlined_call_operand.vmem [shape: f32[16,512], index: 3, kind: output, shape index: {}]
  %s4 = sld [smem:[#allocation0]]
  $region22: #{_lambda_.13} parent=0
    _
  %s6 = ssub.s32 1, %s4
  %s7 = scalar_select 0, %s6, %s4
  // Predicated region
  $region2: #{_lambda_.13} parent=0 // pred_check
    _
  $region3: #{_lambda_.13} parent=0 // pred_check_branch
    %9 = sbr.rel (0) target = $region5
  $region4: #{_lambda_.13} parent=0 // pred_region
    _
  $region5: #{_lambda_.13} parent=0 // pred_fallthru
    _
  // Predicated region
  $region6: #{_lambda_.13} parent=0 // pred_check
    _
  $region7: #{_lambda_.13} parent=0 // pred_check_branch
    %11 = sbr.rel (0) target = $region9
  $region8: #{_lambda_.13} parent=0 // pred_region
    _
  $region9: #{_lambda_.13} parent=0 // pred_fallthru
    _
  // Predicated region
  $region10: #{_lambda_.13} parent=0 // pred_check
    _
  $region11: #{_lambda_.13} parent=0 // pred_check_branch
    %13 = sbr.rel (0) target = $region13
  $region12: #{_lambda_.13} parent=0 // pred_region
    _
  $region13: #{_lambda_.13} parent=0 // pred_fallthru
    _
  %v14 = vld [vmem:[%s0] sm:$0xff]
  %v15 = vld [vmem:[%s0 + $0x8] sm:$0xff]
  %v16 = vld [vmem:[%s1] sm:$0xff]
  %v17 = vld [vmem:[%s1 + $0x8] sm:$0xff]
  %v18 = vld [vmem:[%s1 + $0x10] sm:$0xff]
  %v19 = vld [vmem:[%s1 + $0x18] sm:$0xff]
  %v20 = vld [vmem:[%s1 + $0x20] sm:$0xff]
  %v21 = vld [vmem:[%s1 + $0x28] sm:$0xff]
  %v22 = vld [vmem:[%s1 + $0x30] sm:$0xff]
  %v23 = vld [vmem:[%s1 + $0x38] sm:$0xff]
  %v24 = vld [vmem:[%s1 + $0x40] sm:$0xff]
  %v25 = vld [vmem:[%s1 + $0x48] sm:$0xff]
  %v26 = vld [vmem:[%s1 + $0x50] sm:$0xff]
  %v27 = vld [vmem:[%s1 + $0x58] sm:$0xff]
  %v28 = vld [vmem:[%s1 + $0x60] sm:$0xff]
  %v29 = vld [vmem:[%s1 + $0x68] sm:$0xff]
  %v30 = vld [vmem:[%s1 + $0x70] sm:$0xff]
  %v31 = vld [vmem:[%s1 + $0x78] sm:$0xff]
  %v32 = vld [vmem:[%s1 + $0x80] sm:$0xff]
  %v33 = vld [vmem:[%s1 + $0x88] sm:$0xff]
  %v34 = vld [vmem:[%s1 + $0x90] sm:$0xff]
  %v35 = vld [vmem:[%s1 + $0x98] sm:$0xff]
  %v36 = vld [vmem:[%s1 + $0xa0] sm:$0xff]
  %v37 = vld [vmem:[%s1 + $0xa8] sm:$0xff]
  %v38 = vld [vmem:[%s1 + $0xb0] sm:$0xff]
  %v39 = vld [vmem:[%s1 + $0xb8] sm:$0xff]
  %v40 = vld [vmem:[%s1 + $0xc0] sm:$0xff]
  %v41 = vld [vmem:[%s1 + $0xc8] sm:$0xff]
  %v42 = vld [vmem:[%s1 + $0xd0] sm:$0xff]
  %v43 = vld [vmem:[%s1 + $0xd8] sm:$0xff]
  %v44 = vld [vmem:[%s1 + $0xe0] sm:$0xff]
  %v45 = vld [vmem:[%s1 + $0xe8] sm:$0xff]
  %v46 = vld [vmem:[%s1 + $0xf0] sm:$0xff]
  %v47 = vld [vmem:[%s1 + $0xf8] sm:$0xff]
  %v48 = vld [vmem:[%s1 + $0x100] sm:$0xff]
  %v49 = vld [vmem:[%s1 + $0x108] sm:$0xff]
  %v50 = vld [vmem:[%s1 + $0x110] sm:$0xff]
  %v51 = vld [vmem:[%s1 + $0x118] sm:$0xff]
  %v52 = vld [vmem:[%s1 + $0x120] sm:$0xff]
  %v53 = vld [vmem:[%s1 + $0x128] sm:$0xff]
  %v54 = vld [vmem:[%s1 + $0x130] sm:$0xff]
  %v55 = vld [vmem:[%s1 + $0x138] sm:$0xff]
  %v56 = vld [vmem:[%s1 + $0x140] sm:$0xff]
  %v57 = vld [vmem:[%s1 + $0x148] sm:$0xff]
  %v58 = vld [vmem:[%s1 + $0x150] sm:$0xff]
  %v59 = vld [vmem:[%s1 + $0x158] sm:$0xff]
  %v60 = vld [vmem:[%s1 + $0x160] sm:$0xff]
  %v61 = vld [vmem:[%s1 + $0x168] sm:$0xff]
  %v62 = vld [vmem:[%s1 + $0x170] sm:$0xff]
  %v63 = vld [vmem:[%s1 + $0x178] sm:$0xff]
  %v64 = vld [vmem:[%s1 + $0x180] sm:$0xff]
  %v65 = vld [vmem:[%s1 + $0x188] sm:$0xff]
  %v66 = vld [vmem:[%s1 + $0x190] sm:$0xff]
  %v67 = vld [vmem:[%s1 + $0x198] sm:$0xff]
  %v68 = vld [vmem:[%s1 + $0x1a0] sm:$0xf]
  %v69 = vld [vmem:[%s1 + $0x1a8] sm:$0xf]
  %v70 = vld [vmem:[%s1 + $0x1b0] sm:$0xf]
  %v71 = vld [vmem:[%s1 + $0x1b8] sm:$0xf]
  %v72 = vld [vmem:[%s2] sm:$0xff]
  %v73 = vld [vmem:[%s2 + $0x8] sm:$0xff]
  %75 = vset.pattern.permute.xlu0 0
  %76 = vperm.xlu0 %75, %v72
  %v77 = vpop.permute.xlu0 %76
  %80 = vset.pattern.permute.xlu0 0
  %81 = vperm.xlu0 %80, %v73
  %v82 = vpop.permute.xlu0 %81
  %vm84 = vcmask 883712
  %v86 = vsel %vm84, %v14, 0
  %v89 = vsel %vm84, %v15, 0
  %vm91 = vcmask 1043456
  %v93 = vsel %vm91, %v68, 0
  %v96 = vsel %vm91, %v69, 0
  %v99 = vsel %vm91, %v70, 0
  %v102 = vsel %vm91, %v71, 0
  %104 = vmatprep.subr.mxu0 %v17
  %105 = vmatpush1.msra.mxu0 %v16
  %106 = vmatprep.subr.mxu0 %v21
  %107 = vmatpush1.msra.mxu0 %v20
  %108 = vmatprep.subr.mxu0 %v25
  %109 = vmatpush1.msra.mxu0 %v24
  %110 = vmatprep.subr.mxu0 %v29
  %111 = vmatpush1.msra.mxu0 %v28
  %112 = vmatprep.subr.mxu0 %v33
  %113 = vmatpush1.msra.mxu0 %v32
  %114 = vmatprep.subr.mxu0 %v37
  %115 = vmatpush1.msra.mxu0 %v36
  %116 = vmatprep.subr.mxu0 %v41
  %117 = vmatpush1.msra.mxu0 %v40
  %118 = vmatprep.subr.mxu0 %v45
  %119 = vmatpush1.msra.mxu0 %v44
  %120 = vmatprep.subr.mxu0 %v49
  %121 = vmatpush1.msra.mxu0 %v48
  %122 = vmatprep.subr.mxu0 %v53
  %123 = vmatpush1.msra.mxu0 %v52
  %124 = vmatprep.subr.mxu0 %v57
  %125 = vmatpush1.msra.mxu0 %v56
  %126 = vmatprep.subr.mxu0 %v61
  %127 = vmatpush1.msra.mxu0 %v60
  %128 = vmatprep.subr.mxu0 %v65
  %129 = vmatpush1.msra.mxu0 %v64
  %130 = vmatprep.subr.mxu0 %v96
  %131 = vmatpush1.msra.mxu0 %v93
  %132 = vmatprep.subr.mxu0 0.0
  %133 = vmatpush1.msra.mxu0 0.0
  %134 = vmatprep.subr.mxu0 0.0
  %135 = vmatpush1.msra.mxu0 0.0
  %136 = vmatprep.subr.mxu0 0.0
  %137 = vmatpush1.msra.mxu0 0.0
  %138 = vmatprep.subr.mxu0 0.0
  %139 = vmatpush1.msra.mxu0 0.0
  %140 = vmatprep.subr.mxu0 0.0
  %141 = vmatpush1.msra.mxu0 0.0
  %142 = vmatprep.subr.mxu0 0.0
  %143 = vmatpush1.msra.mxu0 0.0
  %144 = vmatprep.subr.mxu0 0.0
  %145 = vmatpush1.msra.mxu0 0.0
  %146 = vmatprep.subr.mxu0 0.0
  %147 = vmatpush1.msra.mxu0 0.0
  %148 = vmatprep.subr.mxu0 0.0
  %149 = vmatpush1.msra.mxu0 0.0
  %150 = vmatprep.subr.mxu0 0.0
  %151 = vmatpush1.msra.mxu0 0.0
  %152 = vmatprep.subr.mxu0 0.0
  %153 = vmatpush1.msra.mxu0 0.0
  %154 = vmatprep.subr.mxu0 0.0
  %155 = vmatpush1.msra.mxu0 0.0
  %156 = vmatprep.subr.mxu0 0.0
  %157 = vmatpush1.msra.mxu0 0.0
  %158 = vmatprep.subr.mxu0 0.0
  %159 = vmatpush1.msra.mxu0 0.0
  %160 = vmatprep.subr.mxu0 0.0
  %161 = vmatpush1.msra.mxu0 0.0
  %162 = vmatprep.subr.mxu0 0.0
  %163 = vmatpush1.msra.mxu0 0.0
  %164 = vmatprep.subr.mxu0 0.0
  %165 = vmatpush1.msra.mxu0 0.0
  %166 = vmatprep.subr.mxu0 0.0
  %167 = vmatpush1.msra.mxu0 0.0
  %168 = vmatprep.mubr.f32.mxu0 0.0
  %169 = vmatmul.mubr.f32.gmra.mrb[0].mxu0 %v86
  %v170 = vpop.f32.mrb[0].mxu0
  %v171 = vadd.f32 %v77, %v170
  %v172 = vpop.f32.mrb[0].mxu0
  %v173 = vadd.f32 %v77, %v172
  %174 = vmatprep.mubr.f32.mxu0 0.0
  %175 = vmatmul.mubr.f32.gmra.mrb[0].mxu0 %v89
  %v176 = vpop.f32.mrb[0].mxu0
  %v177 = vadd.f32 %v82, %v176
  %v178 = vpop.f32.mrb[0].mxu0
  %v179 = vadd.f32 %v82, %v178
  %180 = vdwg.mxu0
  %181 = vmatprep.subr.mxu0 %v19
  %182 = vmatpush1.msra.mxu0 %v18
  %183 = vmatprep.subr.mxu0 %v23
  %184 = vmatpush1.msra.mxu0 %v22
  %185 = vmatprep.subr.mxu0 %v27
  %186 = vmatpush1.msra.mxu0 %v26
  %187 = vmatprep.subr.mxu0 %v31
  %188 = vmatpush1.msra.mxu0 %v30
  %189 = vmatprep.subr.mxu0 %v35
  %190 = vmatpush1.msra.mxu0 %v34
  %191 = vmatprep.subr.mxu0 %v39
  %192 = vmatpush1.msra.mxu0 %v38
  %193 = vmatprep.subr.mxu0 %v43
  %194 = vmatpush1.msra.mxu0 %v42
  %195 = vmatprep.subr.mxu0 %v47
  %196 = vmatpush1.msra.mxu0 %v46
  %197 = vmatprep.subr.mxu0 %v51
  %198 = vmatpush1.msra.mxu0 %v50
  %199 = vmatprep.subr.mxu0 %v55
  %200 = vmatpush1.msra.mxu0 %v54
  %201 = vmatprep.subr.mxu0 %v59
  %202 = vmatpush1.msra.mxu0 %v58
  %203 = vmatprep.subr.mxu0 %v63
  %204 = vmatpush1.msra.mxu0 %v62
  %205 = vmatprep.subr.mxu0 %v67
  %206 = vmatpush1.msra.mxu0 %v66
  %207 = vmatprep.subr.mxu0 %v102
  %208 = vmatpush1.msra.mxu0 %v99
  %209 = vmatprep.subr.mxu0 0.0
  %210 = vmatpush1.msra.mxu0 0.0
  %211 = vmatprep.subr.mxu0 0.0
  %212 = vmatpush1.msra.mxu0 0.0
  %213 = vmatprep.subr.mxu0 0.0
  %214 = vmatpush1.msra.mxu0 0.0
  %215 = vmatprep.subr.mxu0 0.0
  %216 = vmatpush1.msra.mxu0 0.0
  %217 = vmatprep.subr.mxu0 0.0
  %218 = vmatpush1.msra.mxu0 0.0
  %219 = vmatprep.subr.mxu0 0.0
  %220 = vmatpush1.msra.mxu0 0.0
  %221 = vmatprep.subr.mxu0 0.0
  %222 = vmatpush1.msra.mxu0 0.0
  %223 = vmatprep.subr.mxu0 0.0
  %224 = vmatpush1.msra.mxu0 0.0
  %225 = vmatprep.subr.mxu0 0.0
  %226 = vmatpush1.msra.mxu0 0.0
  %227 = vmatprep.subr.mxu0 0.0
  %228 = vmatpush1.msra.mxu0 0.0
  %229 = vmatprep.subr.mxu0 0.0
  %230 = vmatpush1.msra.mxu0 0.0
  %231 = vmatprep.subr.mxu0 0.0
  %232 = vmatpush1.msra.mxu0 0.0
  %233 = vmatprep.subr.mxu0 0.0
  %234 = vmatpush1.msra.mxu0 0.0
  %235 = vmatprep.subr.mxu0 0.0
  %236 = vmatpush1.msra.mxu0 0.0
  %237 = vmatprep.subr.mxu0 0.0
  %238 = vmatpush1.msra.mxu0 0.0
  %239 = vmatprep.subr.mxu0 0.0
  %240 = vmatpush1.msra.mxu0 0.0
  %241 = vmatprep.subr.mxu0 0.0
  %242 = vmatpush1.msra.mxu0 0.0
  %243 = vmatprep.subr.mxu0 0.0
  %244 = vmatpush1.msra.mxu0 0.0
  %245 = vmatprep.mubr.f32.mxu0 0.0
  %246 = vmatmul.mubr.f32.gmra.mrb[0].mxu0 %v86
  %v247 = vpop.f32.mrb[0].mxu0
  %v248 = vadd.f32 %v77, %v247
  %v249 = vpop.f32.mrb[0].mxu0
  %v250 = vadd.f32 %v77, %v249
  %251 = vmatprep.mubr.f32.mxu0 0.0
  %252 = vmatmul.mubr.f32.gmra.mrb[0].mxu0 %v89
  %v253 = vpop.f32.mrb[0].mxu0
  %v254 = vadd.f32 %v82, %v253
  %v255 = vpop.f32.mrb[0].mxu0
  %v256 = vadd.f32 %v82, %v255
  %257 = vdwg.mxu0
  %v258 = vmax.f32 %v171, 0.0
  %v259 = vmax.f32 %v173, 0.0
  %v260 = vmax.f32 %v248, 0.0
  %v261 = vmax.f32 %v250, 0.0
  %v262 = vmax.f32 %v177, 0.0
  %v263 = vmax.f32 %v179, 0.0
  %v264 = vmax.f32 %v254, 0.0
  %v265 = vmax.f32 %v256, 0.0
  %266 = vst [vmem:[%s3] sm:$0xff] %v258
  %267 = vst [vmem:[%s3 + $0x8] sm:$0xff] %v259
  %268 = vst [vmem:[%s3 + $0x10] sm:$0xff] %v260
  %269 = vst [vmem:[%s3 + $0x18] sm:$0xff] %v261
  %270 = vst [vmem:[%s3 + $0x20] sm:$0xff] %v262
  %271 = vst [vmem:[%s3 + $0x28] sm:$0xff] %v263
  %272 = vst [vmem:[%s3 + $0x30] sm:$0xff] %v264
  %273 = vst [vmem:[%s3 + $0x38] sm:$0xff] %v265
  // Predicated region
  $region14: #{_lambda_.13} parent=0 // pred_check
    _
  $region15: #{_lambda_.13} parent=0 // pred_check_branch
    %275 = sbr.rel (0) target = $region17
  $region16: #{_lambda_.13} parent=0 // pred_region
    _
  $region17: #{_lambda_.13} parent=0 // pred_fallthru
    _
  // Predicated region
  $region18: #{_lambda_.13} parent=0 // pred_check
    _
  $region19: #{_lambda_.13} parent=0 // pred_check_branch
    %277 = sbr.rel (0) target = $region21
  $region20: #{_lambda_.13} parent=0 // pred_region
    _
  $region21: #{_lambda_.13} parent=0 // pred_fallthru
    _

// kernel: _lambda_.15
$region0: #{_lambda_.15}
  #allocation0 [shape = 'u32[]', space=smem, size = 0x4, offset = 0x4, fixed_abs, tag = 'smem constant byte address 0x4 - core index']
  #allocation1 [shape = 'u32[144,128]{1,0:T(1,128)}', space=vmem, size = 0x12000, scoped, tag = 'internal scratch']
  %s0 = inlined_call_operand.vmem [shape: f32[16,144], index: 0, kind: input, shape index: {}]
  %s1 = inlined_call_operand.vmem [shape: f32[144,32], index: 1, kind: input, shape index: {}]
  %s2 = inlined_call_operand.vmem [shape: f32[16,1], index: 2, kind: input, shape index: {}]
  %s3 = inlined_call_operand.vmem [shape: f32[16,32], index: 3, kind: output, shape index: {}]
  %s4 = sld [smem:[#allocation0]]
  $region22: #{_lambda_.15} parent=0
    _
  %s6 = ssub.s32 1, %s4
  %s7 = scalar_select 0, %s6, %s4
  // Predicated region
  $region2: #{_lambda_.15} parent=0 // pred_check
    _
  $region3: #{_lambda_.15} parent=0 // pred_check_branch
    %9 = sbr.rel (0) target = $region5
  $region4: #{_lambda_.15} parent=0 // pred_region
    _
  $region5: #{_lambda_.15} parent=0 // pred_fallthru
    _
  // Predicated region
  $region6: #{_lambda_.15} parent=0 // pred_check
    _
  $region7: #{_lambda_.15} parent=0 // pred_check_branch
    %11 = sbr.rel (0) target = $region9
  $region8: #{_lambda_.15} parent=0 // pred_region
    _
  $region9: #{_lambda_.15} parent=0 // pred_fallthru
    _
  // Predicated region
  $region10: #{_lambda_.15} parent=0 // pred_check
    _
  $region11: #{_lambda_.15} parent=0 // pred_check_branch
    %13 = sbr.rel (0) target = $region13
  $region12: #{_lambda_.15} parent=0 // pred_region
    _
  $region13: #{_lambda_.15} parent=0 // pred_fallthru
    _
  %v14 = vld [vmem:[%s0] sm:$0xff]
  %v15 = vld [vmem:[%s0 + $0x8] sm:$0xff]
  %v16 = vld [vmem:[%s0 + $0x10] sm:$0xff]
  %v17 = vld [vmem:[%s0 + $0x18] sm:$0xff]
  %v18 = vld [vmem:[%s1] sm:$0xff]
  %v19 = vld [vmem:[%s1 + $0x8] sm:$0xff]
  %v20 = vld [vmem:[%s1 + $0x10] sm:$0xff]
  %v21 = vld [vmem:[%s1 + $0x18] sm:$0xff]
  %v22 = vld [vmem:[%s1 + $0x20] sm:$0xff]
  %v23 = vld [vmem:[%s1 + $0x28] sm:$0xff]
  %v24 = vld [vmem:[%s1 + $0x30] sm:$0xff]
  %v25 = vld [vmem:[%s1 + $0x38] sm:$0xff]
  %v26 = vld [vmem:[%s1 + $0x40] sm:$0xff]
  %v27 = vld [vmem:[%s1 + $0x48] sm:$0xff]
  %v28 = vld [vmem:[%s1 + $0x50] sm:$0xff]
  %v29 = vld [vmem:[%s1 + $0x58] sm:$0xff]
  %v30 = vld [vmem:[%s1 + $0x60] sm:$0xff]
  %v31 = vld [vmem:[%s1 + $0x68] sm:$0xff]
  %v32 = vld [vmem:[%s1 + $0x70] sm:$0xff]
  %v33 = vld [vmem:[%s1 + $0x78] sm:$0xff]
  %v34 = vld [vmem:[%s1 + $0x80] sm:$0xff]
  %v35 = vld [vmem:[%s1 + $0x88] sm:$0xff]
  %v36 = vld [vmem:[%s2] sm:$0xff]
  %v37 = vld [vmem:[%s2 + $0x8] sm:$0xff]
  %39 = vset.pattern.permute.xlu0 0
  %40 = vperm.xlu0 %39, %v36
  %v41 = vpop.permute.xlu0 %40
  %44 = vset.pattern.permute.xlu0 0
  %45 = vperm.xlu0 %44, %v37
  %v46 = vpop.permute.xlu0 %45
  %vm48 = vcmask 130048
  %v50 = vsel %vm48, %v15, 0
  %v53 = vsel %vm48, %v17, 0
  %55 = vmatprep.subr.mxu0 0.0
  %56 = vmatpush1.msra.mxu0 %v18
  %57 = vmatprep.subr.mxu0 0.0
  %58 = vmatpush1.msra.mxu0 %v19
  %59 = vmatprep.subr.mxu0 0.0
  %60 = vmatpush1.msra.mxu0 %v20
  %61 = vmatprep.subr.mxu0 0.0
  %62 = vmatpush1.msra.mxu0 %v21
  %63 = vmatprep.subr.mxu0 0.0
  %64 = vmatpush1.msra.mxu0 %v22
  %65 = vmatprep.subr.mxu0 0.0
  %66 = vmatpush1.msra.mxu0 %v23
  %67 = vmatprep.subr.mxu0 0.0
  %68 = vmatpush1.msra.mxu0 %v24
  %69 = vmatprep.subr.mxu0 0.0
  %70 = vmatpush1.msra.mxu0 %v25
  %71 = vmatprep.subr.mxu0 0.0
  %72 = vmatpush1.msra.mxu0 %v26
  %73 = vmatprep.subr.mxu0 0.0
  %74 = vmatpush1.msra.mxu0 %v27
  %75 = vmatprep.subr.mxu0 0.0
  %76 = vmatpush1.msra.mxu0 %v28
  %77 = vmatprep.subr.mxu0 0.0
  %78 = vmatpush1.msra.mxu0 %v29
  %79 = vmatprep.subr.mxu0 0.0
  %80 = vmatpush1.msra.mxu0 %v30
  %81 = vmatprep.subr.mxu0 0.0
  %82 = vmatpush1.msra.mxu0 %v31
  %83 = vmatprep.subr.mxu0 0.0
  %84 = vmatpush1.msra.mxu0 %v32
  %85 = vmatprep.subr.mxu0 0.0
  %86 = vmatpush1.msra.mxu0 %v33
  %87 = vmatprep.subr.mxu0 0.0
  %88 = vmatpush1.msra.mxu0 %v34
  %89 = vmatprep.subr.mxu0 0.0
  %90 = vmatpush1.msra.mxu0 %v35
  %91 = vmatprep.subr.mxu0 0.0
  %92 = vmatpush1.msra.mxu0 0.0
  %93 = vmatprep.subr.mxu0 0.0
  %94 = vmatpush1.msra.mxu0 0.0
  %95 = vmatprep.subr.mxu0 0.0
  %96 = vmatpush1.msra.mxu0 0.0
  %97 = vmatprep.subr.mxu0 0.0
  %98 = vmatpush1.msra.mxu0 0.0
  %99 = vmatprep.subr.mxu0 0.0
  %100 = vmatpush1.msra.mxu0 0.0
  %101 = vmatprep.subr.mxu0 0.0
  %102 = vmatpush1.msra.mxu0 0.0
  %103 = vmatprep.subr.mxu0 0.0
  %104 = vmatpush1.msra.mxu0 0.0
  %105 = vmatprep.subr.mxu0 0.0
  %106 = vmatpush1.msra.mxu0 0.0
  %107 = vmatprep.subr.mxu0 0.0
  %108 = vmatpush1.msra.mxu0 0.0
  %109 = vmatprep.subr.mxu0 0.0
  %110 = vmatpush1.msra.mxu0 0.0
  %111 = vmatprep.subr.mxu0 0.0
  %112 = vmatpush1.msra.mxu0 0.0
  %113 = vmatprep.subr.mxu0 0.0
  %114 = vmatpush1.msra.mxu0 0.0
  %115 = vmatprep.subr.mxu0 0.0
  %116 = vmatpush1.msra.mxu0 0.0
  %117 = vmatprep.subr.mxu0 0.0
  %118 = vmatpush1.msra.mxu0 0.0
  %119 = vmatprep.mubr.f32.mxu0 %v50
  %120 = vmatmul.mubr.f32.gmra.mrb[0].mxu0 %v14
  %v121 = vpop.f32.mrb[0].mxu0
  %v122 = vadd.f32 %v41, %v121
  %v123 = vpop.f32.mrb[0].mxu0
  %124 = vmatprep.mubr.f32.mxu0 %v53
  %125 = vmatmul.mubr.f32.gmra.mrb[0].mxu0 %v16
  %v126 = vpop.f32.mrb[0].mxu0
  %v127 = vadd.f32 %v46, %v126
  %v128 = vpop.f32.mrb[0].mxu0
  %129 = vdwg.mxu0
  %v130 = vmax.f32 %v122, 0.0
  %v131 = vmax.f32 %v127, 0.0
  %vm132 = vcmask 261120
  %133 = vst.msk [vmem:[%s3] sm:$0xff] %vm132, %v130
  %134 = vst.msk [vmem:[%s3 + $0x8] sm:$0xff] %vm132, %v131
  // Predicated region
  $region14: #{_lambda_.15} parent=0 // pred_check
    _
  $region15: #{_lambda_.15} parent=0 // pred_check_branch
    %136 = sbr.rel (0) target = $region17
  $region16: #{_lambda_.15} parent=0 // pred_region
    _
  $region17: #{_lambda_.15} parent=0 // pred_fallthru
    _
  // Predicated region
  $region18: #{_lambda_.15} parent=0 // pred_check
    _
  $region19: #{_lambda_.15} parent=0 // pred_check_branch
    %138 = sbr.rel (0) target = $region21
  $region20: #{_lambda_.15} parent=0 // pred_region
    _
  $region21: #{_lambda_.15} parent=0 // pred_fallthru
    _

// kernel: _lambda_.16
$region0: #{_lambda_.16}
  #allocation0 [shape = 'u32[]', space=smem, size = 0x4, offset = 0x4, fixed_abs, tag = 'smem constant byte address 0x4 - core index']
  #allocation1 [shape = 'u32[144,128]{1,0:T(1,128)}', space=vmem, size = 0x12000, scoped, tag = 'internal scratch']
  %s0 = inlined_call_operand.vmem [shape: f32[3,4,9,16,256], index: 0, kind: input, shape index: {}]
  %s1 = inlined_call_operand.vmem [shape: f32[3,4,9,16,256], index: 1, kind: input, shape index: {}]
  %s2 = inlined_call_operand.vmem [shape: f32[4,16,256], index: 2, kind: input, shape index: {}]
  %s3 = inlined_call_operand.vmem [shape: f32[3,4,9,144], index: 3, kind: input, shape index: {}]
  %s4 = inlined_call_operand.vmem [shape: f32[3,3,9,1], index: 4, kind: input, shape index: {}]
  %s5 = inlined_call_operand.vmem [shape: f32[3,4,3,16], index: 5, kind: input, shape index: {}]
  %s6 = inlined_call_operand.vmem [shape: f32[3,4,16,3], index: 6, kind: input, shape index: {}]
  %s7 = inlined_call_operand.hbm [shape: f32[3,4,16,256], index: 7, kind: output, shape index: {0}]
  %s8 = inlined_call_operand.vmem [shape: f32[3,4,16,256], index: 8, kind: output, shape index: {1}]
  %9 = xla_tuple %s7, %s8
  %s10 = sld [smem:[#allocation0]]
  $region69: #{_lambda_.16} parent=0
    _
  %s12 = ssub.s32 1, %s10
  %s13 = scalar_select 0, %s12, %s10
  $region1: #{_lambda_.16} parent=0
    #allocation2 [shape = 'u8[32768]{0}', space=vmem, size = 0x8000, scoped, tag = 'output window, operand 0']
    #allocation3 [shape = 's32[2]{0}', space=sflag, size = 0x8, scoped, tag = 'scoped memory for _lambda_.16']
    %14 = vsyncpa [#allocation3], 0
    %s15 = scalar_lea.sflag [#allocation3], 1
    %16 = vsyncpa %s15, 0
    loop: start=0, step=1, limit=14
    $region2: #{_lambda_.16} parent=1 // loop_pre_header
      _
    $region3: #{_lambda_.16} parent=1 // loop_header
      %s18 = sphi 0, %s22
      %p19 = scmp.ge.s32.totalorder %s18, 14
      %s25 = sphi 0, %s37
      %s26 = sphi 0, %s33
      %s27 = sphi 0, %s25
      %s28 = sphi 0, %s26
      %s29 = sphi 0, %s27
      %s30 = sphi 0, %s28
      %s42 = sphi 0, %s44
      %s45 = sphi 0, %s42
      %s46 = sphi 0, %s45
      %s62 = sphi 0, %s46
      %s70 = sphi 0, %s72
      %s73 = sphi 0, %s70
      %s74 = sphi 0, %s73
      %s90 = sphi 0, %s74
      %s96 = sphi 0, %s98
      %s99 = sphi 0, %s96
      %s100 = sphi 0, %s99
      %s116 = sphi 0, %s100
      %s122 = sphi 0, %s124
      %s125 = sphi 0, %s122
      %s126 = sphi 0, %s125
      %s142 = sphi 0, %s126
      %s148 = sphi 0, %s150
      %s151 = sphi 0, %s148
      %s152 = sphi 0, %s151
      %s168 = sphi 0, %s152
      %s176 = sphi 0, %s178
      %s179 = sphi 0, %s176
      %s180 = sphi 0, %s179
      %s196 = sphi 0, %s180
      %s204 = sphi 0, %s206
      %s207 = sphi 0, %s204
      %s208 = sphi 0, %s207
      %s224 = sphi 0, %s208
      %s232 = sphi 0, %s234
      %s235 = sphi 0, %s232
      %s236 = sphi 0, %s235
      %s252 = sphi 0, %s236
      %s260 = sphi 0, %s262
      %s263 = sphi 0, %s260
      %s264 = sphi 0, %s263
      %s280 = sphi 0, %s264
    $region4: #{_lambda_.16} parent=1 // loop_header_branch
      %21 = sbr.rel (%p19) target = $region8
    $region5: #{_lambda_.16} parent=1 // loop_body
      %s23 = ssub.s32 %s18, 1
      %s24 = ssub.s32 %s18, 2
      %s31 = sadd.s32 1, %s26
      %p32 = scmp.ge.s32.totalorder %s31, 4
      %s33 = scalar_select %p32, 0, %s31
      %s34 = sadd.s32 1, %s25
      %s35 = scalar_select %p32, %s34, %s25
      %p36 = scmp.ge.s32.totalorder %s35, 3
      %s37 = scalar_select %p36, 0, %s35
      %s38 = ssub.s32 %s25, %s37
      %s39 = ssub.s32 %s26, %s33
      %s40 = sor.u32 %s38, %s39
      %p41 = scmp.eq.s32.totalorder %s40, 0
      %s43 = sadd.s32 %s42, 1
      %s44 = scalar_select %p41, %s42, %s43
      %p47 = pneg %p41
      %p48 = scmp.eq.s32.totalorder %s18, 11
      %p49 = por %p47, %p48
      %p50 = scmp.ne.s32.totalorder %s42, %s45
      %p51 = scmp.eq.s32.totalorder %s18, 0
      %p52 = por %p50, %p51
      %p53 = scmp.ne.s32.totalorder %s42, %s45
      %p54 = scmp.eq.s32.totalorder %s23, 11
      %p55 = por %p53, %p54
      %p56 = scmp.ne.s32.totalorder %s45, %s46
      %p57 = scmp.eq.s32.totalorder %s23, 0
      %p58 = por %p56, %p57
      %p59 = scmp.ne.s32.totalorder %s45, %s46
      %p60 = scmp.eq.s32.totalorder %s24, 11
      %p61 = por %p59, %p60
      %p63 = scmp.ne.s32.totalorder %s46, %s62
      %p64 = scmp.eq.s32.totalorder %s24, 0
      %p65 = por %p63, %p64
      %s66 = ssub.s32 %s25, %s37
      %s67 = ssub.s32 %s26, %s33
      %s68 = sor.u32 %s66, %s67
      %p69 = scmp.eq.s32.totalorder %s68, 0
      %s71 = sadd.s32 %s70, 1
      %s72 = scalar_select %p69, %s70, %s71
      %p75 = pneg %p69
      %p76 = scmp.eq.s32.totalorder %s18, 11
      %p77 = por %p75, %p76
      %p78 = scmp.ne.s32.totalorder %s70, %s73
      %p79 = scmp.eq.s32.totalorder %s18, 0
      %p80 = por %p78, %p79
      %p81 = scmp.ne.s32.totalorder %s70, %s73
      %p82 = scmp.eq.s32.totalorder %s23, 11
      %p83 = por %p81, %p82
      %p84 = scmp.ne.s32.totalorder %s73, %s74
      %p85 = scmp.eq.s32.totalorder %s23, 0
      %p86 = por %p84, %p85
      %p87 = scmp.ne.s32.totalorder %s73, %s74
      %p88 = scmp.eq.s32.totalorder %s24, 11
      %p89 = por %p87, %p88
      %p91 = scmp.ne.s32.totalorder %s74, %s90
      %p92 = scmp.eq.s32.totalorder %s24, 0
      %p93 = por %p91, %p92
      %s94 = ssub.s32 %s26, %s33
      %p95 = scmp.eq.s32.totalorder %s94, 0
      %s97 = sadd.s32 %s96, 1
      %s98 = scalar_select %p95, %s96, %s97
      %p101 = pneg %p95
      %p102 = scmp.eq.s32.totalorder %s18, 11
      %p103 = por %p101, %p102
      %p104 = scmp.ne.s32.totalorder %s96, %s99
      %p105 = scmp.eq.s32.totalorder %s18, 0
      %p106 = por %p104, %p105
      %p107 = scmp.ne.s32.totalorder %s96, %s99
      %p108 = scmp.eq.s32.totalorder %s23, 11
      %p109 = por %p107, %p108
      %p110 = scmp.ne.s32.totalorder %s99, %s100
      %p111 = scmp.eq.s32.totalorder %s23, 0
      %p112 = por %p110, %p111
      %p113 = scmp.ne.s32.totalorder %s99, %s100
      %p114 = scmp.eq.s32.totalorder %s24, 11
      %p115 = por %p113, %p114
      %p117 = scmp.ne.s32.totalorder %s100, %s116
      %p118 = scmp.eq.s32.totalorder %s24, 0
      %p119 = por %p117, %p118
      %s120 = ssub.s32 %s25, %s37
      %p121 = scmp.eq.s32.totalorder %s120, 0
      %s123 = sadd.s32 %s122, 1
      %s124 = scalar_select %p121, %s122, %s123
      %p127 = pneg %p121
      %p128 = scmp.eq.s32.totalorder %s18, 11
      %p129 = por %p127, %p128
      %p130 = scmp.ne.s32.totalorder %s122, %s125
      %p131 = scmp.eq.s32.totalorder %s18, 0
      %p132 = por %p130, %p131
      %p133 = scmp.ne.s32.totalorder %s122, %s125
      %p134 = scmp.eq.s32.totalorder %s23, 11
      %p135 = por %p133, %p134
      %p136 = scmp.ne.s32.totalorder %s125, %s126
      %p137 = scmp.eq.s32.totalorder %s23, 0
      %p138 = por %p136, %p137
      %p139 = scmp.ne.s32.totalorder %s125, %s126
      %p140 = scmp.eq.s32.totalorder %s24, 11
      %p141 = por %p139, %p140
      %p143 = scmp.ne.s32.totalorder %s126, %s142
      %p144 = scmp.eq.s32.totalorder %s24, 0
      %p145 = por %p143, %p144
      %s146 = ssub.s32 %s25, %s37
      %p147 = scmp.eq.s32.totalorder %s146, 0
      %s149 = sadd.s32 %s148, 1
      %s150 = scalar_select %p147, %s148, %s149
      %p153 = pneg %p147
      %p154 = scmp.eq.s32.totalorder %s18, 11
      %p155 = por %p153, %p154
      %p156 = scmp.ne.s32.totalorder %s148, %s151
      %p157 = scmp.eq.s32.totalorder %s18, 0
      %p158 = por %p156, %p157
      %p159 = scmp.ne.s32.totalorder %s148, %s151
      %p160 = scmp.eq.s32.totalorder %s23, 11
      %p161 = por %p159, %p160
      %p162 = scmp.ne.s32.totalorder %s151, %s152
      %p163 = scmp.eq.s32.totalorder %s23, 0
      %p164 = por %p162, %p163
      %p165 = scmp.ne.s32.totalorder %s151, %s152
      %p166 = scmp.eq.s32.totalorder %s24, 11
      %p167 = por %p165, %p166
      %p169 = scmp.ne.s32.totalorder %s152, %s168
      %p170 = scmp.eq.s32.totalorder %s24, 0
      %p171 = por %p169, %p170
      %s172 = ssub.s32 %s25, %s37
      %s173 = ssub.s32 %s26, %s33
      %s174 = sor.u32 %s172, %s173
      %p175 = scmp.eq.s32.totalorder %s174, 0
      %s177 = sadd.s32 %s176, 1
      %s178 = scalar_select %p175, %s176, %s177
      %p181 = pneg %p175
      %p182 = scmp.eq.s32.totalorder %s18, 11
      %p183 = por %p181, %p182
      %p184 = scmp.ne.s32.totalorder %s176, %s179
      %p185 = scmp.eq.s32.totalorder %s18, 0
      %p186 = por %p184, %p185
      %p187 = scmp.ne.s32.totalorder %s176, %s179
      %p188 = scmp.eq.s32.totalorder %s23, 11
      %p189 = por %p187, %p188
      %p190 = scmp.ne.s32.totalorder %s179, %s180
      %p191 = scmp.eq.s32.totalorder %s23, 0
      %p192 = por %p190, %p191
      %p193 = scmp.ne.s32.totalorder %s179, %s180
      %p194 = scmp.eq.s32.totalorder %s24, 11
      %p195 = por %p193, %p194
      %p197 = scmp.ne.s32.totalorder %s180, %s196
      %p198 = scmp.eq.s32.totalorder %s24, 0
      %p199 = por %p197, %p198
      %s200 = ssub.s32 %s25, %s37
      %s201 = ssub.s32 %s26, %s33
      %s202 = sor.u32 %s200, %s201
      %p203 = scmp.eq.s32.totalorder %s202, 0
      %s205 = sadd.s32 %s204, 1
      %s206 = scalar_select %p203, %s204, %s205
      %p209 = pneg %p203
      %p210 = scmp.eq.s32.totalorder %s18, 11
      %p211 = por %p209, %p210
      %p212 = scmp.ne.s32.totalorder %s204, %s207
      %p213 = scmp.eq.s32.totalorder %s18, 0
      %p214 = por %p212, %p213
      %p215 = scmp.ne.s32.totalorder %s204, %s207
      %p216 = scmp.eq.s32.totalorder %s23, 11
      %p217 = por %p215, %p216
      %p218 = scmp.ne.s32.totalorder %s207, %s208
      %p219 = scmp.eq.s32.totalorder %s23, 0
      %p220 = por %p218, %p219
      %p221 = scmp.ne.s32.totalorder %s207, %s208
      %p222 = scmp.eq.s32.totalorder %s24, 11
      %p223 = por %p221, %p222
      %p225 = scmp.ne.s32.totalorder %s208, %s224
      %p226 = scmp.eq.s32.totalorder %s24, 0
      %p227 = por %p225, %p226
      %s228 = ssub.s32 %s25, %s37
      %s229 = ssub.s32 %s26, %s33
      %s230 = sor.u32 %s228, %s229
      %p231 = scmp.eq.s32.totalorder %s230, 0
      %s233 = sadd.s32 %s232, 1
      %s234 = scalar_select %p231, %s232, %s233
      %p237 = pneg %p231
      %p238 = scmp.eq.s32.totalorder %s18, 11
      %p239 = por %p237, %p238
      %p240 = scmp.ne.s32.totalorder %s232, %s235
      %p241 = scmp.eq.s32.totalorder %s18, 0
      %p242 = por %p240, %p241
      %p243 = scmp.ne.s32.totalorder %s232, %s235
      %p244 = scmp.eq.s32.totalorder %s23, 11
      %p245 = por %p243, %p244
      %p246 = scmp.ne.s32.totalorder %s235, %s236
      %p247 = scmp.eq.s32.totalorder %s23, 0
      %p248 = por %p246, %p247
      %p249 = scmp.ne.s32.totalorder %s235, %s236
      %p250 = scmp.eq.s32.totalorder %s24, 11
      %p251 = por %p249, %p250
      %p253 = scmp.ne.s32.totalorder %s236, %s252
      %p254 = scmp.eq.s32.totalorder %s24, 0
      %p255 = por %p253, %p254
      %s256 = ssub.s32 %s25, %s37
      %s257 = ssub.s32 %s26, %s33
      %s258 = sor.u32 %s256, %s257
      %p259 = scmp.eq.s32.totalorder %s258, 0
      %s261 = sadd.s32 %s260, 1
      %s262 = scalar_select %p259, %s260, %s261
      %p265 = pneg %p259
      %p266 = scmp.eq.s32.totalorder %s18, 11
      %p267 = por %p265, %p266
      %p268 = scmp.ne.s32.totalorder %s260, %s263
      %p269 = scmp.eq.s32.totalorder %s18, 0
      %p270 = por %p268, %p269
      %p271 = scmp.ne.s32.totalorder %s260, %s263
      %p272 = scmp.eq.s32.totalorder %s23, 11
      %p273 = por %p271, %p272
      %p274 = scmp.ne.s32.totalorder %s263, %s264
      %p275 = scmp.eq.s32.totalorder %s23, 0
      %p276 = por %p274, %p275
      %p277 = scmp.ne.s32.totalorder %s263, %s264
      %p278 = scmp.eq.s32.totalorder %s24, 11
      %p279 = por %p277, %p278
      %p281 = scmp.ne.s32.totalorder %s264, %s280
      %p282 = scmp.eq.s32.totalorder %s24, 0
      %p283 = por %p281, %p282
      %p284 = scmp.le.s32.totalorder 1, %s18
      %p285 = scmp.lt.s32.totalorder %s18, 13
      %p286 = pnand %p284, %p285
      %p287 = pneg %p286
      // Predicated region
      $region9: #{_lambda_.16} parent=5 // pred_check
        _
      $region10: #{_lambda_.16} parent=5 // pred_check_branch
        %289 = sbr.rel (%p286) target = $region12
      $region11: #{_lambda_.16} parent=5 // pred_region
        %s290 = ssub.s32 %s18, 1
      $region12: #{_lambda_.16} parent=5 // pred_fallthru
        _
      %p291 = scmp.lt.s32.totalorder %s18, 12
      // Predicated region
      $region13: #{_lambda_.16} parent=5 // pred_check
        %p292 = pneg %p291
      $region14: #{_lambda_.16} parent=5 // pred_check_branch
        %294 = sbr.rel (%p292) target = $region16
      $region15: #{_lambda_.16} parent=5 // pred_region
        // Predicated region
        $region17: #{_lambda_.16} parent=15 // pred_check
          %p295 = pneg %p52
        $region18: #{_lambda_.16} parent=15 // pred_check_branch
          %297 = sbr.rel (%p295) target = $region20
        $region19: #{_lambda_.16} parent=15 // pred_region
          %p298 = scmp.lt.s32.totalorder %s25, 2
          %s299 = scalar_select %p298, %s25, 2
          %p300 = scmp.lt.s32.totalorder %s26, 3
          %s301 = scalar_select %p300, %s26, 3
          %s302 = smul.addr %s301, 36
          %s303 = smul.addr %s299, 144
          %s304 = sadd.s32 %s302, %s303
          %s305 = smul.addr %s304, 8
          %s306 = scalar_lea.vmem %s0, %s305
        $region20: #{_lambda_.16} parent=15 // pred_fallthru
          _
        // Predicated region
        $region21: #{_lambda_.16} parent=15 // pred_check
          %p307 = pneg %p80
        $region22: #{_lambda_.16} parent=15 // pred_check_branch
          %309 = sbr.rel (%p307) target = $region24
        $region23: #{_lambda_.16} parent=15 // pred_region
          %p310 = scmp.lt.s32.totalorder %s25, 2
          %s311 = scalar_select %p310, %s25, 2
          %p312 = scmp.lt.s32.totalorder %s26, 3
          %s313 = scalar_select %p312, %s26, 3
          %s314 = smul.addr %s313, 36
          %s315 = smul.addr %s311, 144
          %s316 = sadd.s32 %s314, %s315
          %s317 = smul.addr %s316, 8
          %s318 = scalar_lea.vmem %s1, %s317
        $region24: #{_lambda_.16} parent=15 // pred_fallthru
          _
        // Predicated region
        $region25: #{_lambda_.16} parent=15 // pred_check
          %p319 = pneg %p106
        $region26: #{_lambda_.16} parent=15 // pred_check_branch
          %321 = sbr.rel (%p319) target = $region28
        $region27: #{_lambda_.16} parent=15 // pred_region
          %p322 = scmp.lt.s32.totalorder %s26, 3
          %s323 = scalar_select %p322, %s26, 3
          %s324 = smul.addr %s323, 4
          %s325 = smul.addr %s324, 8
          %s326 = scalar_lea.vmem %s2, %s325
        $region28: #{_lambda_.16} parent=15 // pred_fallthru
          _
        // Predicated region
        $region29: #{_lambda_.16} parent=15 // pred_check
          %p327 = pneg %p132
        $region30: #{_lambda_.16} parent=15 // pred_check_branch
          %329 = sbr.rel (%p327) target = $region32
        $region31: #{_lambda_.16} parent=15 // pred_region
          %p330 = scmp.lt.s32.totalorder %s25, 2
          %s331 = scalar_select %p330, %s25, 2
          %s332 = smul.addr %s331, 16
          %s333 = smul.addr %s332, 8
          %s334 = scalar_lea.vmem %s3, %s333
        $region32: #{_lambda_.16} parent=15 // pred_fallthru
          _
        // Predicated region
        $region33: #{_lambda_.16} parent=15 // pred_check
          %p335 = pneg %p158
        $region34: #{_lambda_.16} parent=15 // pred_check_branch
          %337 = sbr.rel (%p335) target = $region36
        $region35: #{_lambda_.16} parent=15 // pred_region
          %p338 = scmp.lt.s32.totalorder %s25, 2
          %s339 = scalar_select %p338, %s25, 2
          %s340 = smul.addr %s339, 6
          %s341 = smul.addr %s340, 8
          %s342 = scalar_lea.vmem %s4, %s341
        $region36: #{_lambda_.16} parent=15 // pred_fallthru
          _
        // Predicated region
        $region37: #{_lambda_.16} parent=15 // pred_check
          %p343 = pneg %p186
        $region38: #{_lambda_.16} parent=15 // pred_check_branch
          %345 = sbr.rel (%p343) target = $region40
        $region39: #{_lambda_.16} parent=15 // pred_region
          %p346 = scmp.lt.s32.totalorder %s25, 2
          %s347 = scalar_select %p346, %s25, 2
          %p348 = scmp.lt.s32.totalorder %s26, 3
          %s349 = scalar_select %p348, %s26, 3
          %s350 = smul.addr %s347, 4
          %s351 = sadd.s32 %s349, %s350
          %s352 = smul.addr %s351, 4
          %s353 = scalar_lea.vmem %s5, %s352
        $region40: #{_lambda_.16} parent=15 // pred_fallthru
          _
        // Predicated region
        $region41: #{_lambda_.16} parent=15 // pred_check
          %p354 = pneg %p214
        $region42: #{_lambda_.16} parent=15 // pred_check_branch
          %356 = sbr.rel (%p354) target = $region44
        $region43: #{_lambda_.16} parent=15 // pred_region
          %p357 = scmp.lt.s32.totalorder %s25, 2
          %s358 = scalar_select %p357, %s25, 2
          %p359 = scmp.lt.s32.totalorder %s26, 3
          %s360 = scalar_select %p359, %s26, 3
          %s361 = smul.addr %s360, 2
          %s362 = smul.addr %s358, 8
          %s363 = sadd.s32 %s361, %s362
          %s364 = smul.addr %s363, 8
          %s365 = scalar_lea.vmem %s6, %s364
        $region44: #{_lambda_.16} parent=15 // pred_fallthru
          _
      $region16: #{_lambda_.16} parent=5 // pred_fallthru
        _
      %p366 = scmp.le.s32.totalorder 1, %s18
      %p367 = scmp.lt.s32.totalorder %s18, 13
      %p368 = pnand %p366, %p367
      %p369 = pneg %p368
      // Predicated region
      $region45: #{_lambda_.16} parent=5 // pred_check
        _
      $region46: #{_lambda_.16} parent=5 // pred_check_branch
        %371 = sbr.rel (%p368) target = $region48
      $region47: #{_lambda_.16} parent=5 // pred_region
        %s372 = ssub.s32 %s18, 1
        %p373 = scmp.lt.s32.totalorder %s27, 2
        %s374 = scalar_select %p373, %s27, 2
        %p375 = scmp.lt.s32.totalorder %s28, 3
        %s376 = scalar_select %p375, %s28, 3
        %s377 = smul.addr %s376, 36
        %s378 = smul.addr %s374, 144
        %s379 = sadd.s32 %s377, %s378
        %s380 = smul.addr %s379, 8
        %s381 = scalar_lea.vmem %s0, %s380
        %p382 = pneg %p58
        %p383 = pneg %p55
        %p384 = scmp.lt.s32.totalorder %s27, 2
        %s385 = scalar_select %p384, %s27, 2
        %p386 = scmp.lt.s32.totalorder %s28, 3
        %s387 = scalar_select %p386, %s28, 3
        %s388 = smul.addr %s387, 36
        %s389 = smul.addr %s385, 144
        %s390 = sadd.s32 %s388, %s389
        %s391 = smul.addr %s390, 8
        %s392 = scalar_lea.vmem %s1, %s391
        %p393 = pneg %p86
        %p394 = pneg %p83
        %p395 = scmp.lt.s32.totalorder %s28, 3
        %s396 = scalar_select %p395, %s28, 3
        %s397 = smul.addr %s396, 4
        %s398 = smul.addr %s397, 8
        %s399 = scalar_lea.vmem %s2, %s398
        %p400 = pneg %p112
        %p401 = pneg %p109
        %p402 = scmp.lt.s32.totalorder %s27, 2
        %s403 = scalar_select %p402, %s27, 2
        %s404 = smul.addr %s403, 16
        %s405 = smul.addr %s404, 8
        %s406 = scalar_lea.vmem %s3, %s405
        %p407 = pneg %p138
        %p408 = pneg %p135
        %p409 = scmp.lt.s32.totalorder %s27, 2
        %s410 = scalar_select %p409, %s27, 2
        %s411 = smul.addr %s410, 6
        %s412 = smul.addr %s411, 8
        %s413 = scalar_lea.vmem %s4, %s412
        %p414 = pneg %p164
        %p415 = pneg %p161
        %p416 = scmp.lt.s32.totalorder %s27, 2
        %s417 = scalar_select %p416, %s27, 2
        %p418 = scmp.lt.s32.totalorder %s28, 3
        %s419 = scalar_select %p418, %s28, 3
        %s420 = smul.addr %s417, 4
        %s421 = sadd.s32 %s419, %s420
        %s422 = smul.addr %s421, 4
        %s423 = scalar_lea.vmem %s5, %s422
        %p424 = pneg %p192
        %p425 = pneg %p189
        %p426 = scmp.lt.s32.totalorder %s27, 2
        %s427 = scalar_select %p426, %s27, 2
        %p428 = scmp.lt.s32.totalorder %s28, 3
        %s429 = scalar_select %p428, %s28, 3
        %s430 = smul.addr %s429, 2
        %s431 = smul.addr %s427, 8
        %s432 = sadd.s32 %s430, %s431
        %s433 = smul.addr %s432, 8
        %s434 = scalar_lea.vmem %s6, %s433
        %p435 = pneg %p220
        %p436 = pneg %p217
        %p437 = pneg %p248
        %p438 = pneg %p245
        %s439 = sand.u32 %s235, 1
        %s440 = scalar_lea.sflag [#allocation3], %s439
        %s441 = sand.u32 %s235, 1
        %s442 = smul.addr %s441, 32
        %s443 = scalar_lea.vmem [#allocation2], %s442
        %p444 = pneg %p276
        %p445 = pneg %p273
        %p446 = scmp.lt.s32.totalorder %s27, 2
        %s447 = scalar_select %p446, %s27, 2
        %p448 = scmp.lt.s32.totalorder %s28, 3
        %s449 = scalar_select %p448, %s28, 3
        %s450 = smul.addr %s449, 4
        %s451 = smul.addr %s447, 16
        %s452 = sadd.s32 %s450, %s451
        %s453 = smul.addr %s452, 8
        %s454 = scalar_lea.vmem %s8, %s453
        %p455 = scmp.lt.s32.totalorder %s27, 2
        %s456 = scalar_select %p455, %s27, 2
        %p457 = scmp.lt.s32.totalorder %s28, 3
        %s458 = scalar_select %p457, %s28, 3
        %s459 = smul.addr %s458, 36
        %s460 = smul.addr %s456, 144
        %s461 = sadd.s32 %s459, %s460
        %s462 = smul.addr %s461, 8
        %s463 = scalar_lea.vmem %s0, %s462
        %p464 = scmp.lt.s32.totalorder %s27, 2
        %s465 = scalar_select %p464, %s27, 2
        %p466 = scmp.lt.s32.totalorder %s28, 3
        %s467 = scalar_select %p466, %s28, 3
        %s468 = smul.addr %s467, 36
        %s469 = smul.addr %s465, 144
        %s470 = sadd.s32 %s468, %s469
        %s471 = smul.addr %s470, 8
        %s472 = scalar_lea.vmem %s1, %s471
        %p473 = scmp.lt.s32.totalorder %s28, 3
        %s474 = scalar_select %p473, %s28, 3
        %s475 = smul.addr %s474, 4
        %s476 = smul.addr %s475, 8
        %s477 = scalar_lea.vmem %s2, %s476
        %p478 = scmp.lt.s32.totalorder %s27, 2
        %s479 = scalar_select %p478, %s27, 2
        %s480 = smul.addr %s479, 16
        %s481 = smul.addr %s480, 8
        %s482 = scalar_lea.vmem %s3, %s481
        %p483 = scmp.lt.s32.totalorder %s27, 2
        %s484 = scalar_select %p483, %s27, 2
        %s485 = smul.addr %s484, 6
        %s486 = smul.addr %s485, 8
        %s487 = scalar_lea.vmem %s4, %s486
        %p488 = scmp.lt.s32.totalorder %s27, 2
        %s489 = scalar_select %p488, %s27, 2
        %p490 = scmp.lt.s32.totalorder %s28, 3
        %s491 = scalar_select %p490, %s28, 3
        %s492 = smul.addr %s489, 4
        %s493 = sadd.s32 %s491, %s492
        %s494 = smul.addr %s493, 4
        %s495 = scalar_lea.vmem %s5, %s494
        %p496 = scmp.lt.s32.totalorder %s27, 2
        %s497 = scalar_select %p496, %s27, 2
        %p498 = scmp.lt.s32.totalorder %s28, 3
        %s499 = scalar_select %p498, %s28, 3
        %s500 = smul.addr %s499, 2
        %s501 = smul.addr %s497, 8
        %s502 = sadd.s32 %s500, %s501
        %s503 = smul.addr %s502, 8
        %s504 = scalar_lea.vmem %s6, %s503
        %p505 = scmp.lt.s32.totalorder %s27, 2
        %s506 = scalar_select %p505, %s27, 2
        %p507 = scmp.lt.s32.totalorder %s28, 3
        %s508 = scalar_select %p507, %s28, 3
        %s509 = smul.addr %s508, 4
        %s510 = smul.addr %s506, 16
        %s511 = sadd.s32 %s509, %s510
        %s512 = smul.addr %s511, 8
        %s513 = scalar_lea.vmem %s8, %s512
        %v514 = vld [vmem:[%s463] sm:$0xff]
        %v515 = vld [vmem:[%s463 + $0x8] sm:$0xff]
        %v516 = vld [vmem:[%s463 + $0x10] sm:$0xff]
        %v517 = vld [vmem:[%s463 + $0x18] sm:$0xff]
        %v518 = vld [vmem:[%s463 + $0x20] sm:$0xff]
        %v519 = vld [vmem:[%s463 + $0x28] sm:$0xff]
        %v520 = vld [vmem:[%s463 + $0x30] sm:$0xff]
        %v521 = vld [vmem:[%s463 + $0x38] sm:$0xff]
        %v522 = vld [vmem:[%s463 + $0x40] sm:$0xff]
        %v523 = vld [vmem:[%s463 + $0x48] sm:$0xff]
        %v524 = vld [vmem:[%s463 + $0x50] sm:$0xff]
        %v525 = vld [vmem:[%s463 + $0x58] sm:$0xff]
        %v526 = vld [vmem:[%s463 + $0x60] sm:$0xff]
        %v527 = vld [vmem:[%s463 + $0x68] sm:$0xff]
        %v528 = vld [vmem:[%s463 + $0x70] sm:$0xff]
        %v529 = vld [vmem:[%s463 + $0x78] sm:$0xff]
        %v530 = vld [vmem:[%s463 + $0x80] sm:$0xff]
        %v531 = vld [vmem:[%s463 + $0x88] sm:$0xff]
        %v532 = vld [vmem:[%s463 + $0x90] sm:$0xff]
        %v533 = vld [vmem:[%s463 + $0x98] sm:$0xff]
        %v534 = vld [vmem:[%s463 + $0xa0] sm:$0xff]
        %v535 = vld [vmem:[%s463 + $0xa8] sm:$0xff]
        %v536 = vld [vmem:[%s463 + $0xb0] sm:$0xff]
        %v537 = vld [vmem:[%s463 + $0xb8] sm:$0xff]
        %v538 = vld [vmem:[%s463 + $0xc0] sm:$0xff]
        %v539 = vld [vmem:[%s463 + $0xc8] sm:$0xff]
        %v540 = vld [vmem:[%s463 + $0xd0] sm:$0xff]
        %v541 = vld [vmem:[%s463 + $0xd8] sm:$0xff]
        %v542 = vld [vmem:[%s463 + $0xe0] sm:$0xff]
        %v543 = vld [vmem:[%s463 + $0xe8] sm:$0xff]
        %v544 = vld [vmem:[%s463 + $0xf0] sm:$0xff]
        %v545 = vld [vmem:[%s463 + $0xf8] sm:$0xff]
        %v546 = vld [vmem:[%s463 + $0x100] sm:$0xff]
        %v547 = vld [vmem:[%s463 + $0x108] sm:$0xff]
        %v548 = vld [vmem:[%s463 + $0x110] sm:$0xff]
        %v549 = vld [vmem:[%s463 + $0x118] sm:$0xff]
        %v550 = vld [vmem:[%s472] sm:$0xff]
        %v551 = vld [vmem:[%s472 + $0x8] sm:$0xff]
        %v552 = vld [vmem:[%s472 + $0x10] sm:$0xff]
        %v553 = vld [vmem:[%s472 + $0x18] sm:$0xff]
        %v554 = vld [vmem:[%s472 + $0x20] sm:$0xff]
        %v555 = vld [vmem:[%s472 + $0x28] sm:$0xff]
        %v556 = vld [vmem:[%s472 + $0x30] sm:$0xff]
        %v557 = vld [vmem:[%s472 + $0x38] sm:$0xff]
        %v558 = vld [vmem:[%s472 + $0x40] sm:$0xff]
        %v559 = vld [vmem:[%s472 + $0x48] sm:$0xff]
        %v560 = vld [vmem:[%s472 + $0x50] sm:$0xff]
        %v561 = vld [vmem:[%s472 + $0x58] sm:$0xff]
        %v562 = vld [vmem:[%s472 + $0x60] sm:$0xff]
        %v563 = vld [vmem:[%s472 + $0x68] sm:$0xff]
        %v564 = vld [vmem:[%s472 + $0x70] sm:$0xff]
        %v565 = vld [vmem:[%s472 + $0x78] sm:$0xff]
        %v566 = vld [vmem:[%s472 + $0x80] sm:$0xff]
        %v567 = vld [vmem:[%s472 + $0x88] sm:$0xff]
        %v568 = vld [vmem:[%s472 + $0x90] sm:$0xff]
        %v569 = vld [vmem:[%s472 + $0x98] sm:$0xff]
        %v570 = vld [vmem:[%s472 + $0xa0] sm:$0xff]
        %v571 = vld [vmem:[%s472 + $0xa8] sm:$0xff]
        %v572 = vld [vmem:[%s472 + $0xb0] sm:$0xff]
        %v573 = vld [vmem:[%s472 + $0xb8] sm:$0xff]
        %v574 = vld [vmem:[%s472 + $0xc0] sm:$0xff]
        %v575 = vld [vmem:[%s472 + $0xc8] sm:$0xff]
        %v576 = vld [vmem:[%s472 + $0xd0] sm:$0xff]
        %v577 = vld [vmem:[%s472 + $0xd8] sm:$0xff]
        %v578 = vld [vmem:[%s472 + $0xe0] sm:$0xff]
        %v579 = vld [vmem:[%s472 + $0xe8] sm:$0xff]
        %v580 = vld [vmem:[%s472 + $0xf0] sm:$0xff]
        %v581 = vld [vmem:[%s472 + $0xf8] sm:$0xff]
        %v582 = vld [vmem:[%s472 + $0x100] sm:$0xff]
        %v583 = vld [vmem:[%s472 + $0x108] sm:$0xff]
        %v584 = vld [vmem:[%s472 + $0x110] sm:$0xff]
        %v585 = vld [vmem:[%s472 + $0x118] sm:$0xff]
        %v586 = vld [vmem:[%s477] sm:$0xff]
        %v587 = vld [vmem:[%s477 + $0x8] sm:$0xff]
        %v588 = vld [vmem:[%s477 + $0x10] sm:$0xff]
        %v589 = vld [vmem:[%s477 + $0x18] sm:$0xff]
        %v590 = vld [vmem:[%s482] sm:$0xff]
        %v591 = vld [vmem:[%s482 + $0x8] sm:$0xff]
        %v592 = vld [vmem:[%s482 + $0x10] sm:$0x1]
        %v593 = vld [vmem:[%s482 + $0x18] sm:$0x1]
        %s594 = scalar_lea.vmem %s482, 32
        %v595 = vld [vmem:[%s594] sm:$0xff]
        %v596 = vld [vmem:[%s594 + $0x8] sm:$0xff]
        %v597 = vld [vmem:[%s594 + $0x10] sm:$0x1]
        %v598 = vld [vmem:[%s594 + $0x18] sm:$0x1]
        %vm599 = vcmask 130048
        %v601 = vsel %vm599, %v596, 0
        %v604 = vsel %vm599, %v598, 0
        %606 = vmatprep.subr.mxu0 %v551
        %607 = vmatpush1.msra.mxu0 %v550
        %608 = vmatprep.subr.mxu0 %v553
        %609 = vmatpush1.msra.mxu0 %v552
        %610 = vmatprep.subr.mxu0 %v555
        %611 = vmatpush1.msra.mxu0 %v554
        %612 = vmatprep.subr.mxu0 %v557
        %613 = vmatpush1.msra.mxu0 %v556
        %614 = vmatprep.subr.mxu0 %v559
        %615 = vmatpush1.msra.mxu0 %v558
        %616 = vmatprep.subr.mxu0 %v561
        %617 = vmatpush1.msra.mxu0 %v560
        %618 = vmatprep.subr.mxu0 %v563
        %619 = vmatpush1.msra.mxu0 %v562
        %620 = vmatprep.subr.mxu0 %v565
        %621 = vmatpush1.msra.mxu0 %v564
        %622 = vmatprep.subr.mxu0 %v567
        %623 = vmatpush1.msra.mxu0 %v566
        %624 = vmatprep.subr.mxu0 %v569
        %625 = vmatpush1.msra.mxu0 %v568
        %626 = vmatprep.subr.mxu0 %v571
        %627 = vmatpush1.msra.mxu0 %v570
        %628 = vmatprep.subr.mxu0 %v573
        %629 = vmatpush1.msra.mxu0 %v572
        %630 = vmatprep.subr.mxu0 %v575
        %631 = vmatpush1.msra.mxu0 %v574
        %632 = vmatprep.subr.mxu0 %v577
        %633 = vmatpush1.msra.mxu0 %v576
        %634 = vmatprep.subr.mxu0 %v579
        %635 = vmatpush1.msra.mxu0 %v578
        %636 = vmatprep.subr.mxu0 %v581
        %637 = vmatpush1.msra.mxu0 %v580
        %638 = vmatprep.subr.mxu0 %v583
        %639 = vmatpush1.msra.mxu0 %v582
        %640 = vmatprep.subr.mxu0 %v585
        %641 = vmatpush1.msra.mxu0 %v584
        %642 = vmatprep.subr.mxu0 0.0
        %643 = vmatpush1.msra.mxu0 0.0
        %644 = vmatprep.subr.mxu0 0.0
        %645 = vmatpush1.msra.mxu0 0.0
        %646 = vmatprep.subr.mxu0 0.0
        %647 = vmatpush1.msra.mxu0 0.0
        %648 = vmatprep.subr.mxu0 0.0
        %649 = vmatpush1.msra.mxu0 0.0
        %650 = vmatprep.subr.mxu0 0.0
        %651 = vmatpush1.msra.mxu0 0.0
        %652 = vmatprep.subr.mxu0 0.0
        %653 = vmatpush1.msra.mxu0 0.0
        %654 = vmatprep.subr.mxu0 0.0
        %655 = vmatpush1.msra.mxu0 0.0
        %656 = vmatprep.subr.mxu0 0.0
        %657 = vmatpush1.msra.mxu0 0.0
        %658 = vmatprep.subr.mxu0 0.0
        %659 = vmatpush1.msra.mxu0 0.0
        %660 = vmatprep.subr.mxu0 0.0
        %661 = vmatpush1.msra.mxu0 0.0
        %662 = vmatprep.subr.mxu0 0.0
        %663 = vmatpush1.msra.mxu0 0.0
        %664 = vmatprep.subr.mxu0 0.0
        %665 = vmatpush1.msra.mxu0 0.0
        %666 = vmatprep.subr.mxu0 0.0
        %667 = vmatpush1.msra.mxu0 0.0
        %668 = vmatprep.subr.mxu0 0.0
        %669 = vmatpush1.msra.mxu0 0.0
        %670 = vmatprep.mubr.f32.mxu0 %v601
        %671 = vmatmul.mubr.f32.gmra.mrb[0].mxu0 %v595
        %v672 = vpop.f32.mrb[0].mxu0
        %v673 = vadd.f32 0.0, %v672
        %v674 = vpop.f32.mrb[0].mxu0
        %v675 = vadd.f32 0.0, %v674
        %676 = vmatprep.mubr.f32.mxu0 %v604
        %677 = vmatmul.mubr.f32.gmra.mrb[0].mxu0 %v597
        %v678 = vpop.f32.mrb[0].mxu0
        %v679 = vadd.f32 0.0, %v678
        %v680 = vpop.f32.mrb[0].mxu0
        %v681 = vadd.f32 0.0, %v680
        %682 = vdwg.mxu0
        %v684 = vsel %vm599, %v591, 0
        %v687 = vsel %vm599, %v593, 0
        %689 = vmatprep.subr.mxu0 %v515
        %690 = vmatpush1.msra.mxu0 %v514
        %691 = vmatprep.subr.mxu0 %v517
        %692 = vmatpush1.msra.mxu0 %v516
        %693 = vmatprep.subr.mxu0 %v519
        %694 = vmatpush1.msra.mxu0 %v518
        %695 = vmatprep.subr.mxu0 %v521
        %696 = vmatpush1.msra.mxu0 %v520
        %697 = vmatprep.subr.mxu0 %v523
        %698 = vmatpush1.msra.mxu0 %v522
        %699 = vmatprep.subr.mxu0 %v525
        %700 = vmatpush1.msra.mxu0 %v524
        %701 = vmatprep.subr.mxu0 %v527
        %702 = vmatpush1.msra.mxu0 %v526
        %703 = vmatprep.subr.mxu0 %v529
        %704 = vmatpush1.msra.mxu0 %v528
        %705 = vmatprep.subr.mxu0 %v531
        %706 = vmatpush1.msra.mxu0 %v530
        %707 = vmatprep.subr.mxu0 %v533
        %708 = vmatpush1.msra.mxu0 %v532
        %709 = vmatprep.subr.mxu0 %v535
        %710 = vmatpush1.msra.mxu0 %v534
        %711 = vmatprep.subr.mxu0 %v537
        %712 = vmatpush1.msra.mxu0 %v536
        %713 = vmatprep.subr.mxu0 %v539
        %714 = vmatpush1.msra.mxu0 %v538
        %715 = vmatprep.subr.mxu0 %v541
        %716 = vmatpush1.msra.mxu0 %v540
        %717 = vmatprep.subr.mxu0 %v543
        %718 = vmatpush1.msra.mxu0 %v542
        %719 = vmatprep.subr.mxu0 %v545
        %720 = vmatpush1.msra.mxu0 %v544
        %721 = vmatprep.subr.mxu0 %v547
        %722 = vmatpush1.msra.mxu0 %v546
        %723 = vmatprep.subr.mxu0 %v549
        %724 = vmatpush1.msra.mxu0 %v548
        %725 = vmatprep.subr.mxu0 0.0
        %726 = vmatpush1.msra.mxu0 0.0
        %727 = vmatprep.subr.mxu0 0.0
        %728 = vmatpush1.msra.mxu0 0.0
        %729 = vmatprep.subr.mxu0 0.0
        %730 = vmatpush1.msra.mxu0 0.0
        %731 = vmatprep.subr.mxu0 0.0
        %732 = vmatpush1.msra.mxu0 0.0
        %733 = vmatprep.subr.mxu0 0.0
        %734 = vmatpush1.msra.mxu0 0.0
        %735 = vmatprep.subr.mxu0 0.0
        %736 = vmatpush1.msra.mxu0 0.0
        %737 = vmatprep.subr.mxu0 0.0
        %738 = vmatpush1.msra.mxu0 0.0
        %739 = vmatprep.subr.mxu0 0.0
        %740 = vmatpush1.msra.mxu0 0.0
        %741 = vmatprep.subr.mxu0 0.0
        %742 = vmatpush1.msra.mxu0 0.0
        %743 = vmatprep.subr.mxu0 0.0
        %744 = vmatpush1.msra.mxu0 0.0
        %745 = vmatprep.subr.mxu0 0.0
        %746 = vmatpush1.msra.mxu0 0.0
        %747 = vmatprep.subr.mxu0 0.0
        %748 = vmatpush1.msra.mxu0 0.0
        %749 = vmatprep.subr.mxu0 0.0
        %750 = vmatpush1.msra.mxu0 0.0
        %751 = vmatprep.subr.mxu0 0.0
        %752 = vmatpush1.msra.mxu0 0.0
        %753 = vmatprep.mubr.f32.mxu0 %v684
        %754 = vmatmul.mubr.f32.gmra.mrb[0].mxu0 %v590
        %v755 = vpop.f32.mrb[0].mxu0
        %v756 = vadd.f32 %v673, %v755
        %v757 = vpop.f32.mrb[0].mxu0
        %v758 = vadd.f32 %v675, %v757
        %759 = vmatprep.mubr.f32.mxu0 %v687
        %760 = vmatmul.mubr.f32.gmra.mrb[0].mxu0 %v592
        %v761 = vpop.f32.mrb[0].mxu0
        %v762 = vadd.f32 %v679, %v761
        %v763 = vpop.f32.mrb[0].mxu0
        %v764 = vadd.f32 %v681, %v763
        %765 = vdwg.mxu0
        %v766 = vld [vmem:[%s487] sm:$0xff]
        %v767 = vld [vmem:[%s487 + $0x8] sm:$0x1]
        %769 = vset.pattern.permute.xlu0 0
        %770 = vperm.xlu0 %769, %v766
        %v771 = vpop.permute.xlu0 %770
        %774 = vset.pattern.permute.xlu0 0
        %775 = vperm.xlu0 %774, %v767
        %v776 = vpop.permute.xlu0 %775
        %v778 = vadd.f32 %v756, %v771
        %v779 = vadd.f32 %v758, %v771
        %v780 = vadd.f32 %v762, %v776
        %v781 = vadd.f32 %v764, %v776
        %s782 = scalar_lea.vmem %s482, 64
        %v783 = vld [vmem:[%s782] sm:$0xff]
        %v784 = vld [vmem:[%s782 + $0x8] sm:$0xff]
        %v785 = vld [vmem:[%s782 + $0x10] sm:$0x1]
        %v786 = vld [vmem:[%s782 + $0x18] sm:$0x1]
        %s787 = scalar_lea.vmem %s487, 16
        %v788 = vld [vmem:[%s787] sm:$0xff]
        %v789 = vld [vmem:[%s787 + $0x8] sm:$0x1]
        %791 = vset.pattern.permute.xlu0 0
        %792 = vperm.xlu0 %791, %v788
        %v793 = vpop.permute.xlu0 %792
        %796 = vset.pattern.permute.xlu0 0
        %797 = vperm.xlu0 %796, %v789
        %v798 = vpop.permute.xlu0 %797
        %v801 = vsel %vm599, %v784, 0
        %v804 = vsel %vm599, %v786, 0
        %806 = vmatprep.subr.mxu0 %v515
        %807 = vmatpush1.msra.mxu0 %v514
        %808 = vmatprep.subr.mxu0 %v517
        %809 = vmatpush1.msra.mxu0 %v516
        %810 = vmatprep.subr.mxu0 %v519
        %811 = vmatpush1.msra.mxu0 %v518
        %812 = vmatprep.subr.mxu0 %v521
        %813 = vmatpush1.msra.mxu0 %v520
        %814 = vmatprep.subr.mxu0 %v523
        %815 = vmatpush1.msra.mxu0 %v522
        %816 = vmatprep.subr.mxu0 %v525
        %817 = vmatpush1.msra.mxu0 %v524
        %818 = vmatprep.subr.mxu0 %v527
        %819 = vmatpush1.msra.mxu0 %v526
        %820 = vmatprep.subr.mxu0 %v529
        %821 = vmatpush1.msra.mxu0 %v528
        %822 = vmatprep.subr.mxu0 %v531
        %823 = vmatpush1.msra.mxu0 %v530
        %824 = vmatprep.subr.mxu0 %v533
        %825 = vmatpush1.msra.mxu0 %v532
        %826 = vmatprep.subr.mxu0 %v535
        %827 = vmatpush1.msra.mxu0 %v534
        %828 = vmatprep.subr.mxu0 %v537
        %829 = vmatpush1.msra.mxu0 %v536
        %830 = vmatprep.subr.mxu0 %v539
        %831 = vmatpush1.msra.mxu0 %v538
        %832 = vmatprep.subr.mxu0 %v541
        %833 = vmatpush1.msra.mxu0 %v540
        %834 = vmatprep.subr.mxu0 %v543
        %835 = vmatpush1.msra.mxu0 %v542
        %836 = vmatprep.subr.mxu0 %v545
        %837 = vmatpush1.msra.mxu0 %v544
        %838 = vmatprep.subr.mxu0 %v547
        %839 = vmatpush1.msra.mxu0 %v546
        %840 = vmatprep.subr.mxu0 %v549
        %841 = vmatpush1.msra.mxu0 %v548
        %842 = vmatprep.subr.mxu0 0.0
        %843 = vmatpush1.msra.mxu0 0.0
        %844 = vmatprep.subr.mxu0 0.0
        %845 = vmatpush1.msra.mxu0 0.0
        %846 = vmatprep.subr.mxu0 0.0
        %847 = vmatpush1.msra.mxu0 0.0
        %848 = vmatprep.subr.mxu0 0.0
        %849 = vmatpush1.msra.mxu0 0.0
        %850 = vmatprep.subr.mxu0 0.0
        %851 = vmatpush1.msra.mxu0 0.0
        %852 = vmatprep.subr.mxu0 0.0
        %853 = vmatpush1.msra.mxu0 0.0
        %854 = vmatprep.subr.mxu0 0.0
        %855 = vmatpush1.msra.mxu0 0.0
        %856 = vmatprep.subr.mxu0 0.0
        %857 = vmatpush1.msra.mxu0 0.0
        %858 = vmatprep.subr.mxu0 0.0
        %859 = vmatpush1.msra.mxu0 0.0
        %860 = vmatprep.subr.mxu0 0.0
        %861 = vmatpush1.msra.mxu0 0.0
        %862 = vmatprep.subr.mxu0 0.0
        %863 = vmatpush1.msra.mxu0 0.0
        %864 = vmatprep.subr.mxu0 0.0
        %865 = vmatpush1.msra.mxu0 0.0
        %866 = vmatprep.subr.mxu0 0.0
        %867 = vmatpush1.msra.mxu0 0.0
        %868 = vmatprep.subr.mxu0 0.0
        %869 = vmatpush1.msra.mxu0 0.0
        %870 = vmatprep.mubr.f32.mxu0 %v801
        %871 = vmatmul.mubr.f32.gmra.mrb[0].mxu0 %v783
        %v872 = vpop.f32.mrb[0].mxu0
        %v873 = vadd.f32 %v793, %v872
        %v874 = vpop.f32.mrb[0].mxu0
        %v875 = vadd.f32 %v793, %v874
        %876 = vmatprep.mubr.f32.mxu0 %v804
        %877 = vmatmul.mubr.f32.gmra.mrb[0].mxu0 %v785
        %v878 = vpop.f32.mrb[0].mxu0
        %v879 = vadd.f32 %v798, %v878
        %v880 = vpop.f32.mrb[0].mxu0
        %v881 = vadd.f32 %v798, %v880
        %882 = vdwg.mxu0
        %s883 = scalar_lea.vmem %s482, 96
        %v884 = vld [vmem:[%s883] sm:$0xff]
        %v885 = vld [vmem:[%s883 + $0x8] sm:$0xff]
        %v886 = vld [vmem:[%s883 + $0x10] sm:$0x1]
        %v887 = vld [vmem:[%s883 + $0x18] sm:$0x1]
        %s888 = scalar_lea.vmem %s487, 32
        %v889 = vld [vmem:[%s888] sm:$0xff]
        %v890 = vld [vmem:[%s888 + $0x8] sm:$0x1]
        %892 = vset.pattern.permute.xlu0 0
        %893 = vperm.xlu0 %892, %v889
        %v894 = vpop.permute.xlu0 %893
        %897 = vset.pattern.permute.xlu0 0
        %898 = vperm.xlu0 %897, %v890
        %v899 = vpop.permute.xlu0 %898
        %v902 = vsel %vm599, %v885, 0
        %v905 = vsel %vm599, %v887, 0
        %907 = vmatprep.subr.mxu0 %v551
        %908 = vmatpush1.msra.mxu0 %v550
        %909 = vmatprep.subr.mxu0 %v553
        %910 = vmatpush1.msra.mxu0 %v552
        %911 = vmatprep.subr.mxu0 %v555
        %912 = vmatpush1.msra.mxu0 %v554
        %913 = vmatprep.subr.mxu0 %v557
        %914 = vmatpush1.msra.mxu0 %v556
        %915 = vmatprep.subr.mxu0 %v559
        %916 = vmatpush1.msra.mxu0 %v558
        %917 = vmatprep.subr.mxu0 %v561
        %918 = vmatpush1.msra.mxu0 %v560
        %919 = vmatprep.subr.mxu0 %v563
        %920 = vmatpush1.msra.mxu0 %v562
        %921 = vmatprep.subr.mxu0 %v565
        %922 = vmatpush1.msra.mxu0 %v564
        %923 = vmatprep.subr.mxu0 %v567
        %924 = vmatpush1.msra.mxu0 %v566
        %925 = vmatprep.subr.mxu0 %v569
        %926 = vmatpush1.msra.mxu0 %v568
        %927 = vmatprep.subr.mxu0 %v571
        %928 = vmatpush1.msra.mxu0 %v570
        %929 = vmatprep.subr.mxu0 %v573
        %930 = vmatpush1.msra.mxu0 %v572
        %931 = vmatprep.subr.mxu0 %v575
        %932 = vmatpush1.msra.mxu0 %v574
        %933 = vmatprep.subr.mxu0 %v577
        %934 = vmatpush1.msra.mxu0 %v576
        %935 = vmatprep.subr.mxu0 %v579
        %936 = vmatpush1.msra.mxu0 %v578
        %937 = vmatprep.subr.mxu0 %v581
        %938 = vmatpush1.msra.mxu0 %v580
        %939 = vmatprep.subr.mxu0 %v583
        %940 = vmatpush1.msra.mxu0 %v582
        %941 = vmatprep.subr.mxu0 %v585
        %942 = vmatpush1.msra.mxu0 %v584
        %943 = vmatprep.subr.mxu0 0.0
        %944 = vmatpush1.msra.mxu0 0.0
        %945 = vmatprep.subr.mxu0 0.0
        %946 = vmatpush1.msra.mxu0 0.0
        %947 = vmatprep.subr.mxu0 0.0
        %948 = vmatpush1.msra.mxu0 0.0
        %949 = vmatprep.subr.mxu0 0.0
        %950 = vmatpush1.msra.mxu0 0.0
        %951 = vmatprep.subr.mxu0 0.0
        %952 = vmatpush1.msra.mxu0 0.0
        %953 = vmatprep.subr.mxu0 0.0
        %954 = vmatpush1.msra.mxu0 0.0
        %955 = vmatprep.subr.mxu0 0.0
        %956 = vmatpush1.msra.mxu0 0.0
        %957 = vmatprep.subr.mxu0 0.0
        %958 = vmatpush1.msra.mxu0 0.0
        %959 = vmatprep.subr.mxu0 0.0
        %960 = vmatpush1.msra.mxu0 0.0
        %961 = vmatprep.subr.mxu0 0.0
        %962 = vmatpush1.msra.mxu0 0.0
        %963 = vmatprep.subr.mxu0 0.0
        %964 = vmatpush1.msra.mxu0 0.0
        %965 = vmatprep.subr.mxu0 0.0
        %966 = vmatpush1.msra.mxu0 0.0
        %967 = vmatprep.subr.mxu0 0.0
        %968 = vmatpush1.msra.mxu0 0.0
        %969 = vmatprep.subr.mxu0 0.0
        %970 = vmatpush1.msra.mxu0 0.0
        %971 = vmatprep.mubr.f32.mxu0 %v902
        %972 = vmatmul.mubr.f32.gmra.mrb[0].mxu0 %v884
        %v973 = vpop.f32.mrb[0].mxu0
        %v974 = vadd.f32 %v894, %v973
        %v975 = vpop.f32.mrb[0].mxu0
        %v976 = vadd.f32 %v894, %v975
        %977 = vmatprep.mubr.f32.mxu0 %v905
        %978 = vmatmul.mubr.f32.gmra.mrb[0].mxu0 %v886
        %v979 = vpop.f32.mrb[0].mxu0
        %v980 = vadd.f32 %v899, %v979
        %v981 = vpop.f32.mrb[0].mxu0
        %v982 = vadd.f32 %v899, %v981
        %983 = vdwg.mxu0
        %v988 = vcombine.low %v778, %v779
        %v989 = vcombine.high %v778, %v779
        %v991 = vunpack.c.l.s4 1966171168
        %v992 = vunpack.c.0.s8 %v991
        %v993 = vlaneseq
        %v994 = vshrl.u32 %v993, 7
        %v995 = vsub.s32 %v992, %v994
        %v996 = vrot.slane %v988, %v995
        %v998 = vunpack.c.l.s4 1966171168
        %v999 = vunpack.c.0.s8 %v998
        %v1000 = vlaneseq
        %v1001 = vshrl.u32 %v1000, 7
        %v1002 = vsub.s32 %v999, %v1001
        %v1003 = vrot.slane %v989, %v1002
        %v1004 = vcombine.high %v996, %v996
        %v1005 = vcombine.high %v1003, %v1003
        %v1007 = vunpack.c.l.s4 1966171168
        %v1008 = vunpack.c.0.s8 %v1007
        %v1009 = vlaneseq
        %v1010 = vshrl.u32 %v1009, 7
        %v1011 = vsub.s32 %v1008, %v1010
        %v1012 = vrot.slane %v996, %v1011
        %v1014 = vunpack.c.l.s4 1966171168
        %v1015 = vunpack.c.0.s8 %v1014
        %v1016 = vlaneseq
        %v1017 = vshrl.u32 %v1016, 7
        %v1018 = vsub.s32 %v1015, %v1017
        %v1019 = vrot.slane %v1003, %v1018
        %v1021 = vunpack.c.l.s4 1966171168
        %v1022 = vunpack.c.0.s8 %v1021
        %v1023 = vlaneseq
        %v1024 = vshrl.u32 %v1023, 7
        %v1025 = vsub.s32 %v1022, %v1024
        %v1026 = vrot.slane %v1004, %v1025
        %v1028 = vunpack.c.l.s4 1966171168
        %v1029 = vunpack.c.0.s8 %v1028
        %v1030 = vlaneseq
        %v1031 = vshrl.u32 %v1030, 7
        %v1032 = vsub.s32 %v1029, %v1031
        %v1033 = vrot.slane %v1005, %v1032
        %v1034 = vcombine.high %v1012, %v1012
        %v1035 = vcombine.high %v1019, %v1019
        %v1036 = vcombine.high %v1026, %v1026
        %v1037 = vcombine.high %v1033, %v1033
        %v1038 = vcombine.low %v780, %v781
        %v1040 = vunpack.c.l.s4 1966171168
        %v1041 = vunpack.c.0.s8 %v1040
        %v1042 = vlaneseq
        %v1043 = vshrl.u32 %v1042, 7
        %v1044 = vsub.s32 %v1041, %v1043
        %v1045 = vrot.slane %v1038, %v1044
        %v1047 = vunpack.c.l.s4 1966171168
        %v1048 = vunpack.c.0.s8 %v1047
        %v1049 = vlaneseq
        %v1050 = vshrl.u32 %v1049, 7
        %v1051 = vsub.s32 %v1048, %v1050
        %v1052 = vrot.slane %v1045, %v1051
        %v1053 = vlaneseq
        %v1054 = vshrl.u32 %v1053, 7
        %v1055 = vsub.s32 0, %v1054
        %v1056 = vrot.slane %v1012, %v1055
        %v1057 = vlaneseq
        %v1058 = vshrl.u32 %v1057, 7
        %v1059 = vsub.s32 1, %v1058
        %v1060 = vrot.slane %v1012, %v1059
        %v1061 = vlaneseq
        %v1062 = vshrl.u32 %v1061, 7
        %v1063 = vsub.s32 0, %v1062
        %v1064 = vrot.slane %v1026, %v1063
        %v1065 = vlaneseq
        %v1066 = vshrl.u32 %v1065, 7
        %v1067 = vsub.s32 1, %v1066
        %v1068 = vrot.slane %v1026, %v1067
        %v1069 = vlaneseq
        %v1070 = vshrl.u32 %v1069, 7
        %v1071 = vsub.s32 0, %v1070
        %v1072 = vrot.slane %v1034, %v1071
        %v1073 = vlaneseq
        %v1074 = vshrl.u32 %v1073, 7
        %v1075 = vsub.s32 1, %v1074
        %v1076 = vrot.slane %v1034, %v1075
        %v1077 = vlaneseq
        %v1078 = vshrl.u32 %v1077, 7
        %v1079 = vsub.s32 0, %v1078
        %v1080 = vrot.slane %v1036, %v1079
        %v1081 = vlaneseq
        %v1082 = vshrl.u32 %v1081, 7
        %v1083 = vsub.s32 1, %v1082
        %v1084 = vrot.slane %v1036, %v1083
        %v1085 = vlaneseq
        %v1086 = vshrl.u32 %v1085, 7
        %v1087 = vsub.s32 0, %v1086
        %v1088 = vrot.slane %v1019, %v1087
        %v1089 = vlaneseq
        %v1090 = vshrl.u32 %v1089, 7
        %v1091 = vsub.s32 1, %v1090
        %v1092 = vrot.slane %v1019, %v1091
        %v1093 = vlaneseq
        %v1094 = vshrl.u32 %v1093, 7
        %v1095 = vsub.s32 0, %v1094
        %v1096 = vrot.slane %v1033, %v1095
        %v1097 = vlaneseq
        %v1098 = vshrl.u32 %v1097, 7
        %v1099 = vsub.s32 1, %v1098
        %v1100 = vrot.slane %v1033, %v1099
        %v1101 = vlaneseq
        %v1102 = vshrl.u32 %v1101, 7
        %v1103 = vsub.s32 0, %v1102
        %v1104 = vrot.slane %v1035, %v1103
        %v1105 = vlaneseq
        %v1106 = vshrl.u32 %v1105, 7
        %v1107 = vsub.s32 1, %v1106
        %v1108 = vrot.slane %v1035, %v1107
        %v1109 = vlaneseq
        %v1110 = vshrl.u32 %v1109, 7
        %v1111 = vsub.s32 0, %v1110
        %v1112 = vrot.slane %v1037, %v1111
        %v1113 = vlaneseq
        %v1114 = vshrl.u32 %v1113, 7
        %v1115 = vsub.s32 1, %v1114
        %v1116 = vrot.slane %v1037, %v1115
        %v1117 = vlaneseq
        %v1118 = vshrl.u32 %v1117, 7
        %v1119 = vsub.s32 0, %v1118
        %v1120 = vrot.slane %v1052, %v1119
        %v1121 = vlaneseq
        %v1122 = vshrl.u32 %v1121, 7
        %v1123 = vsub.s32 1, %v1122
        %v1124 = vrot.slane %v1052, %v1123
        %v1143 = vmul.f32 %v1056, %v514
        %v1144 = vmul.f32 %v1060, %v515
        %v1145 = vmul.f32 %v1056, %v516
        %v1146 = vmul.f32 %v1060, %v517
        %v1147 = vmul.f32 %v1064, %v518
        %v1148 = vmul.f32 %v1068, %v519
        %v1149 = vmul.f32 %v1064, %v520
        %v1150 = vmul.f32 %v1068, %v521
        %v1151 = vmul.f32 %v1072, %v522
        %v1152 = vmul.f32 %v1076, %v523
        %v1153 = vmul.f32 %v1072, %v524
        %v1154 = vmul.f32 %v1076, %v525
        %v1155 = vmul.f32 %v1080, %v526
        %v1156 = vmul.f32 %v1084, %v527
        %v1157 = vmul.f32 %v1080, %v528
        %v1158 = vmul.f32 %v1084, %v529
        %v1159 = vmul.f32 %v1088, %v530
        %v1160 = vmul.f32 %v1092, %v531
        %v1161 = vmul.f32 %v1088, %v532
        %v1162 = vmul.f32 %v1092, %v533
        %v1163 = vmul.f32 %v1096, %v534
        %v1164 = vmul.f32 %v1100, %v535
        %v1165 = vmul.f32 %v1096, %v536
        %v1166 = vmul.f32 %v1100, %v537
        %v1167 = vmul.f32 %v1104, %v538
        %v1168 = vmul.f32 %v1108, %v539
        %v1169 = vmul.f32 %v1104, %v540
        %v1170 = vmul.f32 %v1108, %v541
        %v1171 = vmul.f32 %v1112, %v542
        %v1172 = vmul.f32 %v1116, %v543
        %v1173 = vmul.f32 %v1112, %v544
        %v1174 = vmul.f32 %v1116, %v545
        %v1175 = vmul.f32 %v1120, %v546
        %v1176 = vmul.f32 %v1124, %v547
        %v1177 = vmul.f32 %v1120, %v548
        %v1178 = vmul.f32 %v1124, %v549
        %v1179 = vadd.f32 %v1143, %v1147
        %v1180 = vadd.f32 %v1179, %v1151
        %v1181 = vadd.f32 %v1180, %v1155
        %v1182 = vadd.f32 %v1181, %v1159
        %v1183 = vadd.f32 %v1182, %v1163
        %v1184 = vadd.f32 %v1183, %v1167
        %v1185 = vadd.f32 %v1184, %v1171
        %v1186 = vadd.f32 %v1185, %v1175
        %v1187 = vadd.f32 %v1144, %v1148
        %v1188 = vadd.f32 %v1187, %v1152
        %v1189 = vadd.f32 %v1188, %v1156
        %v1190 = vadd.f32 %v1189, %v1160
        %v1191 = vadd.f32 %v1190, %v1164
        %v1192 = vadd.f32 %v1191, %v1168
        %v1193 = vadd.f32 %v1192, %v1172
        %v1194 = vadd.f32 %v1193, %v1176
        %v1195 = vadd.f32 %v1145, %v1149
        %v1196 = vadd.f32 %v1195, %v1153
        %v1197 = vadd.f32 %v1196, %v1157
        %v1198 = vadd.f32 %v1197, %v1161
        %v1199 = vadd.f32 %v1198, %v1165
        %v1200 = vadd.f32 %v1199, %v1169
        %v1201 = vadd.f32 %v1200, %v1173
        %v1202 = vadd.f32 %v1201, %v1177
        %v1203 = vadd.f32 %v1146, %v1150
        %v1204 = vadd.f32 %v1203, %v1154
        %v1205 = vadd.f32 %v1204, %v1158
        %v1206 = vadd.f32 %v1205, %v1162
        %v1207 = vadd.f32 %v1206, %v1166
        %v1208 = vadd.f32 %v1207, %v1170
        %v1209 = vadd.f32 %v1208, %v1174
        %v1210 = vadd.f32 %v1209, %v1178
        %v1215 = vcombine.low %v873, %v875
        %v1216 = vcombine.high %v873, %v875
        %v1218 = vunpack.c.l.s4 1966171168
        %v1219 = vunpack.c.0.s8 %v1218
        %v1220 = vlaneseq
        %v1221 = vshrl.u32 %v1220, 7
        %v1222 = vsub.s32 %v1219, %v1221
        %v1223 = vrot.slane %v1215, %v1222
        %v1225 = vunpack.c.l.s4 1966171168
        %v1226 = vunpack.c.0.s8 %v1225
        %v1227 = vlaneseq
        %v1228 = vshrl.u32 %v1227, 7
        %v1229 = vsub.s32 %v1226, %v1228
        %v1230 = vrot.slane %v1216, %v1229
        %v1231 = vcombine.high %v1223, %v1223
        %v1232 = vcombine.high %v1230, %v1230
        %v1234 = vunpack.c.l.s4 1966171168
        %v1235 = vunpack.c.0.s8 %v1234
        %v1236 = vlaneseq
        %v1237 = vshrl.u32 %v1236, 7
        %v1238 = vsub.s32 %v1235, %v1237
        %v1239 = vrot.slane %v1223, %v1238
        %v1241 = vunpack.c.l.s4 1966171168
        %v1242 = vunpack.c.0.s8 %v1241
        %v1243 = vlaneseq
        %v1244 = vshrl.u32 %v1243, 7
        %v1245 = vsub.s32 %v1242, %v1244
        %v1246 = vrot.slane %v1230, %v1245
        %v1248 = vunpack.c.l.s4 1966171168
        %v1249 = vunpack.c.0.s8 %v1248
        %v1250 = vlaneseq
        %v1251 = vshrl.u32 %v1250, 7
        %v1252 = vsub.s32 %v1249, %v1251
        %v1253 = vrot.slane %v1231, %v1252
        %v1255 = vunpack.c.l.s4 1966171168
        %v1256 = vunpack.c.0.s8 %v1255
        %v1257 = vlaneseq
        %v1258 = vshrl.u32 %v1257, 7
        %v1259 = vsub.s32 %v1256, %v1258
        %v1260 = vrot.slane %v1232, %v1259
        %v1261 = vcombine.high %v1239, %v1239
        %v1262 = vcombine.high %v1246, %v1246
        %v1263 = vcombine.high %v1253, %v1253
        %v1264 = vcombine.high %v1260, %v1260
        %v1265 = vcombine.low %v879, %v881
        %v1267 = vunpack.c.l.s4 1966171168
        %v1268 = vunpack.c.0.s8 %v1267
        %v1269 = vlaneseq
        %v1270 = vshrl.u32 %v1269, 7
        %v1271 = vsub.s32 %v1268, %v1270
        %v1272 = vrot.slane %v1265, %v1271
        %v1274 = vunpack.c.l.s4 1966171168
        %v1275 = vunpack.c.0.s8 %v1274
        %v1276 = vlaneseq
        %v1277 = vshrl.u32 %v1276, 7
        %v1278 = vsub.s32 %v1275, %v1277
        %v1279 = vrot.slane %v1272, %v1278
        %v1280 = vlaneseq
        %v1281 = vshrl.u32 %v1280, 7
        %v1282 = vsub.s32 0, %v1281
        %v1283 = vrot.slane %v1239, %v1282
        %v1284 = vlaneseq
        %v1285 = vshrl.u32 %v1284, 7
        %v1286 = vsub.s32 1, %v1285
        %v1287 = vrot.slane %v1239, %v1286
        %v1288 = vlaneseq
        %v1289 = vshrl.u32 %v1288, 7
        %v1290 = vsub.s32 0, %v1289
        %v1291 = vrot.slane %v1253, %v1290
        %v1292 = vlaneseq
        %v1293 = vshrl.u32 %v1292, 7
        %v1294 = vsub.s32 1, %v1293
        %v1295 = vrot.slane %v1253, %v1294
        %v1296 = vlaneseq
        %v1297 = vshrl.u32 %v1296, 7
        %v1298 = vsub.s32 0, %v1297
        %v1299 = vrot.slane %v1261, %v1298
        %v1300 = vlaneseq
        %v1301 = vshrl.u32 %v1300, 7
        %v1302 = vsub.s32 1, %v1301
        %v1303 = vrot.slane %v1261, %v1302
        %v1304 = vlaneseq
        %v1305 = vshrl.u32 %v1304, 7
        %v1306 = vsub.s32 0, %v1305
        %v1307 = vrot.slane %v1263, %v1306
        %v1308 = vlaneseq
        %v1309 = vshrl.u32 %v1308, 7
        %v1310 = vsub.s32 1, %v1309
        %v1311 = vrot.slane %v1263, %v1310
        %v1312 = vlaneseq
        %v1313 = vshrl.u32 %v1312, 7
        %v1314 = vsub.s32 0, %v1313
        %v1315 = vrot.slane %v1246, %v1314
        %v1316 = vlaneseq
        %v1317 = vshrl.u32 %v1316, 7
        %v1318 = vsub.s32 1, %v1317
        %v1319 = vrot.slane %v1246, %v1318
        %v1320 = vlaneseq
        %v1321 = vshrl.u32 %v1320, 7
        %v1322 = vsub.s32 0, %v1321
        %v1323 = vrot.slane %v1260, %v1322
        %v1324 = vlaneseq
        %v1325 = vshrl.u32 %v1324, 7
        %v1326 = vsub.s32 1, %v1325
        %v1327 = vrot.slane %v1260, %v1326
        %v1328 = vlaneseq
        %v1329 = vshrl.u32 %v1328, 7
        %v1330 = vsub.s32 0, %v1329
        %v1331 = vrot.slane %v1262, %v1330
        %v1332 = vlaneseq
        %v1333 = vshrl.u32 %v1332, 7
        %v1334 = vsub.s32 1, %v1333
        %v1335 = vrot.slane %v1262, %v1334
        %v1336 = vlaneseq
        %v1337 = vshrl.u32 %v1336, 7
        %v1338 = vsub.s32 0, %v1337
        %v1339 = vrot.slane %v1264, %v1338
        %v1340 = vlaneseq
        %v1341 = vshrl.u32 %v1340, 7
        %v1342 = vsub.s32 1, %v1341
        %v1343 = vrot.slane %v1264, %v1342
        %v1344 = vlaneseq
        %v1345 = vshrl.u32 %v1344, 7
        %v1346 = vsub.s32 0, %v1345
        %v1347 = vrot.slane %v1279, %v1346
        %v1348 = vlaneseq
        %v1349 = vshrl.u32 %v1348, 7
        %v1350 = vsub.s32 1, %v1349
        %v1351 = vrot.slane %v1279, %v1350
        %v1370 = vmul.f32 %v1283, %v514
        %v1371 = vmul.f32 %v1287, %v515
        %v1372 = vmul.f32 %v1283, %v516
        %v1373 = vmul.f32 %v1287, %v517
        %v1374 = vmul.f32 %v1291, %v518
        %v1375 = vmul.f32 %v1295, %v519
        %v1376 = vmul.f32 %v1291, %v520
        %v1377 = vmul.f32 %v1295, %v521
        %v1378 = vmul.f32 %v1299, %v522
        %v1379 = vmul.f32 %v1303, %v523
        %v1380 = vmul.f32 %v1299, %v524
        %v1381 = vmul.f32 %v1303, %v525
        %v1382 = vmul.f32 %v1307, %v526
        %v1383 = vmul.f32 %v1311, %v527
        %v1384 = vmul.f32 %v1307, %v528
        %v1385 = vmul.f32 %v1311, %v529
        %v1386 = vmul.f32 %v1315, %v530
        %v1387 = vmul.f32 %v1319, %v531
        %v1388 = vmul.f32 %v1315, %v532
        %v1389 = vmul.f32 %v1319, %v533
        %v1390 = vmul.f32 %v1323, %v534
        %v1391 = vmul.f32 %v1327, %v535
        %v1392 = vmul.f32 %v1323, %v536
        %v1393 = vmul.f32 %v1327, %v537
        %v1394 = vmul.f32 %v1331, %v538
        %v1395 = vmul.f32 %v1335, %v539
        %v1396 = vmul.f32 %v1331, %v540
        %v1397 = vmul.f32 %v1335, %v541
        %v1398 = vmul.f32 %v1339, %v542
        %v1399 = vmul.f32 %v1343, %v543
        %v1400 = vmul.f32 %v1339, %v544
        %v1401 = vmul.f32 %v1343, %v545
        %v1402 = vmul.f32 %v1347, %v546
        %v1403 = vmul.f32 %v1351, %v547
        %v1404 = vmul.f32 %v1347, %v548
        %v1405 = vmul.f32 %v1351, %v549
        %v1406 = vadd.f32 %v1370, %v1374
        %v1407 = vadd.f32 %v1406, %v1378
        %v1408 = vadd.f32 %v1407, %v1382
        %v1409 = vadd.f32 %v1408, %v1386
        %v1410 = vadd.f32 %v1409, %v1390
        %v1411 = vadd.f32 %v1410, %v1394
        %v1412 = vadd.f32 %v1411, %v1398
        %v1413 = vadd.f32 %v1412, %v1402
        %v1414 = vadd.f32 %v1371, %v1375
        %v1415 = vadd.f32 %v1414, %v1379
        %v1416 = vadd.f32 %v1415, %v1383
        %v1417 = vadd.f32 %v1416, %v1387
        %v1418 = vadd.f32 %v1417, %v1391
        %v1419 = vadd.f32 %v1418, %v1395
        %v1420 = vadd.f32 %v1419, %v1399
        %v1421 = vadd.f32 %v1420, %v1403
        %v1422 = vadd.f32 %v1372, %v1376
        %v1423 = vadd.f32 %v1422, %v1380
        %v1424 = vadd.f32 %v1423, %v1384
        %v1425 = vadd.f32 %v1424, %v1388
        %v1426 = vadd.f32 %v1425, %v1392
        %v1427 = vadd.f32 %v1426, %v1396
        %v1428 = vadd.f32 %v1427, %v1400
        %v1429 = vadd.f32 %v1428, %v1404
        %v1430 = vadd.f32 %v1373, %v1377
        %v1431 = vadd.f32 %v1430, %v1381
        %v1432 = vadd.f32 %v1431, %v1385
        %v1433 = vadd.f32 %v1432, %v1389
        %v1434 = vadd.f32 %v1433, %v1393
        %v1435 = vadd.f32 %v1434, %v1397
        %v1436 = vadd.f32 %v1435, %v1401
        %v1437 = vadd.f32 %v1436, %v1405
        %v1442 = vcombine.low %v974, %v976
        %v1443 = vcombine.high %v974, %v976
        %v1445 = vunpack.c.l.s4 1966171168
        %v1446 = vunpack.c.0.s8 %v1445
        %v1447 = vlaneseq
        %v1448 = vshrl.u32 %v1447, 7
        %v1449 = vsub.s32 %v1446, %v1448
        %v1450 = vrot.slane %v1442, %v1449
        %v1452 = vunpack.c.l.s4 1966171168
        %v1453 = vunpack.c.0.s8 %v1452
        %v1454 = vlaneseq
        %v1455 = vshrl.u32 %v1454, 7
        %v1456 = vsub.s32 %v1453, %v1455
        %v1457 = vrot.slane %v1443, %v1456
        %v1458 = vcombine.high %v1450, %v1450
        %v1459 = vcombine.high %v1457, %v1457
        %v1461 = vunpack.c.l.s4 1966171168
        %v1462 = vunpack.c.0.s8 %v1461
        %v1463 = vlaneseq
        %v1464 = vshrl.u32 %v1463, 7
        %v1465 = vsub.s32 %v1462, %v1464
        %v1466 = vrot.slane %v1450, %v1465
        %v1468 = vunpack.c.l.s4 1966171168
        %v1469 = vunpack.c.0.s8 %v1468
        %v1470 = vlaneseq
        %v1471 = vshrl.u32 %v1470, 7
        %v1472 = vsub.s32 %v1469, %v1471
        %v1473 = vrot.slane %v1457, %v1472
        %v1475 = vunpack.c.l.s4 1966171168
        %v1476 = vunpack.c.0.s8 %v1475
        %v1477 = vlaneseq
        %v1478 = vshrl.u32 %v1477, 7
        %v1479 = vsub.s32 %v1476, %v1478
        %v1480 = vrot.slane %v1458, %v1479
        %v1482 = vunpack.c.l.s4 1966171168
        %v1483 = vunpack.c.0.s8 %v1482
        %v1484 = vlaneseq
        %v1485 = vshrl.u32 %v1484, 7
        %v1486 = vsub.s32 %v1483, %v1485
        %v1487 = vrot.slane %v1459, %v1486
        %v1488 = vcombine.high %v1466, %v1466
        %v1489 = vcombine.high %v1473, %v1473
        %v1490 = vcombine.high %v1480, %v1480
        %v1491 = vcombine.high %v1487, %v1487
        %v1492 = vcombine.low %v980, %v982
        %v1494 = vunpack.c.l.s4 1966171168
        %v1495 = vunpack.c.0.s8 %v1494
        %v1496 = vlaneseq
        %v1497 = vshrl.u32 %v1496, 7
        %v1498 = vsub.s32 %v1495, %v1497
        %v1499 = vrot.slane %v1492, %v1498
        %v1501 = vunpack.c.l.s4 1966171168
        %v1502 = vunpack.c.0.s8 %v1501
        %v1503 = vlaneseq
        %v1504 = vshrl.u32 %v1503, 7
        %v1505 = vsub.s32 %v1502, %v1504
        %v1506 = vrot.slane %v1499, %v1505
        %v1507 = vlaneseq
        %v1508 = vshrl.u32 %v1507, 7
        %v1509 = vsub.s32 0, %v1508
        %v1510 = vrot.slane %v1466, %v1509
        %v1511 = vlaneseq
        %v1512 = vshrl.u32 %v1511, 7
        %v1513 = vsub.s32 1, %v1512
        %v1514 = vrot.slane %v1466, %v1513
        %v1515 = vlaneseq
        %v1516 = vshrl.u32 %v1515, 7
        %v1517 = vsub.s32 0, %v1516
        %v1518 = vrot.slane %v1480, %v1517
        %v1519 = vlaneseq
        %v1520 = vshrl.u32 %v1519, 7
        %v1521 = vsub.s32 1, %v1520
        %v1522 = vrot.slane %v1480, %v1521
        %v1523 = vlaneseq
        %v1524 = vshrl.u32 %v1523, 7
        %v1525 = vsub.s32 0, %v1524
        %v1526 = vrot.slane %v1488, %v1525
        %v1527 = vlaneseq
        %v1528 = vshrl.u32 %v1527, 7
        %v1529 = vsub.s32 1, %v1528
        %v1530 = vrot.slane %v1488, %v1529
        %v1531 = vlaneseq
        %v1532 = vshrl.u32 %v1531, 7
        %v1533 = vsub.s32 0, %v1532
        %v1534 = vrot.slane %v1490, %v1533
        %v1535 = vlaneseq
        %v1536 = vshrl.u32 %v1535, 7
        %v1537 = vsub.s32 1, %v1536
        %v1538 = vrot.slane %v1490, %v1537
        %v1539 = vlaneseq
        %v1540 = vshrl.u32 %v1539, 7
        %v1541 = vsub.s32 0, %v1540
        %v1542 = vrot.slane %v1473, %v1541
        %v1543 = vlaneseq
        %v1544 = vshrl.u32 %v1543, 7
        %v1545 = vsub.s32 1, %v1544
        %v1546 = vrot.slane %v1473, %v1545
        %v1547 = vlaneseq
        %v1548 = vshrl.u32 %v1547, 7
        %v1549 = vsub.s32 0, %v1548
        %v1550 = vrot.slane %v1487, %v1549
        %v1551 = vlaneseq
        %v1552 = vshrl.u32 %v1551, 7
        %v1553 = vsub.s32 1, %v1552
        %v1554 = vrot.slane %v1487, %v1553
        %v1555 = vlaneseq
        %v1556 = vshrl.u32 %v1555, 7
        %v1557 = vsub.s32 0, %v1556
        %v1558 = vrot.slane %v1489, %v1557
        %v1559 = vlaneseq
        %v1560 = vshrl.u32 %v1559, 7
        %v1561 = vsub.s32 1, %v1560
        %v1562 = vrot.slane %v1489, %v1561
        %v1563 = vlaneseq
        %v1564 = vshrl.u32 %v1563, 7
        %v1565 = vsub.s32 0, %v1564
        %v1566 = vrot.slane %v1491, %v1565
        %v1567 = vlaneseq
        %v1568 = vshrl.u32 %v1567, 7
        %v1569 = vsub.s32 1, %v1568
        %v1570 = vrot.slane %v1491, %v1569
        %v1571 = vlaneseq
        %v1572 = vshrl.u32 %v1571, 7
        %v1573 = vsub.s32 0, %v1572
        %v1574 = vrot.slane %v1506, %v1573
        %v1575 = vlaneseq
        %v1576 = vshrl.u32 %v1575, 7
        %v1577 = vsub.s32 1, %v1576
        %v1578 = vrot.slane %v1506, %v1577
        %v1597 = vmul.f32 %v1510, %v550
        %v1598 = vmul.f32 %v1514, %v551
        %v1599 = vmul.f32 %v1510, %v552
        %v1600 = vmul.f32 %v1514, %v553
        %v1601 = vmul.f32 %v1518, %v554
        %v1602 = vmul.f32 %v1522, %v555
        %v1603 = vmul.f32 %v1518, %v556
        %v1604 = vmul.f32 %v1522, %v557
        %v1605 = vmul.f32 %v1526, %v558
        %v1606 = vmul.f32 %v1530, %v559
        %v1607 = vmul.f32 %v1526, %v560
        %v1608 = vmul.f32 %v1530, %v561
        %v1609 = vmul.f32 %v1534, %v562
        %v1610 = vmul.f32 %v1538, %v563
        %v1611 = vmul.f32 %v1534, %v564
        %v1612 = vmul.f32 %v1538, %v565
        %v1613 = vmul.f32 %v1542, %v566
        %v1614 = vmul.f32 %v1546, %v567
        %v1615 = vmul.f32 %v1542, %v568
        %v1616 = vmul.f32 %v1546, %v569
        %v1617 = vmul.f32 %v1550, %v570
        %v1618 = vmul.f32 %v1554, %v571
        %v1619 = vmul.f32 %v1550, %v572
        %v1620 = vmul.f32 %v1554, %v573
        %v1621 = vmul.f32 %v1558, %v574
        %v1622 = vmul.f32 %v1562, %v575
        %v1623 = vmul.f32 %v1558, %v576
        %v1624 = vmul.f32 %v1562, %v577
        %v1625 = vmul.f32 %v1566, %v578
        %v1626 = vmul.f32 %v1570, %v579
        %v1627 = vmul.f32 %v1566, %v580
        %v1628 = vmul.f32 %v1570, %v581
        %v1629 = vmul.f32 %v1574, %v582
        %v1630 = vmul.f32 %v1578, %v583
        %v1631 = vmul.f32 %v1574, %v584
        %v1632 = vmul.f32 %v1578, %v585
        %v1633 = vadd.f32 %v1597, %v1601
        %v1634 = vadd.f32 %v1633, %v1605
        %v1635 = vadd.f32 %v1634, %v1609
        %v1636 = vadd.f32 %v1635, %v1613
        %v1637 = vadd.f32 %v1636, %v1617
        %v1638 = vadd.f32 %v1637, %v1621
        %v1639 = vadd.f32 %v1638, %v1625
        %v1640 = vadd.f32 %v1639, %v1629
        %v1641 = vadd.f32 %v1598, %v1602
        %v1642 = vadd.f32 %v1641, %v1606
        %v1643 = vadd.f32 %v1642, %v1610
        %v1644 = vadd.f32 %v1643, %v1614
        %v1645 = vadd.f32 %v1644, %v1618
        %v1646 = vadd.f32 %v1645, %v1622
        %v1647 = vadd.f32 %v1646, %v1626
        %v1648 = vadd.f32 %v1647, %v1630
        %v1649 = vadd.f32 %v1599, %v1603
        %v1650 = vadd.f32 %v1649, %v1607
        %v1651 = vadd.f32 %v1650, %v1611
        %v1652 = vadd.f32 %v1651, %v1615
        %v1653 = vadd.f32 %v1652, %v1619
        %v1654 = vadd.f32 %v1653, %v1623
        %v1655 = vadd.f32 %v1654, %v1627
        %v1656 = vadd.f32 %v1655, %v1631
        %v1657 = vadd.f32 %v1600, %v1604
        %v1658 = vadd.f32 %v1657, %v1608
        %v1659 = vadd.f32 %v1658, %v1612
        %v1660 = vadd.f32 %v1659, %v1616
        %v1661 = vadd.f32 %v1660, %v1620
        %v1662 = vadd.f32 %v1661, %v1624
        %v1663 = vadd.f32 %v1662, %v1628
        %v1664 = vadd.f32 %v1663, %v1632
        %v1665 = vmul.f32 %v586, %v1186
        %v1666 = vmul.f32 %v587, %v1194
        %v1667 = vmul.f32 %v588, %v1202
        %v1668 = vmul.f32 %v589, %v1210
        %v1669 = vadd.f32 %v1665, %v1413
        %v1670 = vadd.f32 %v1666, %v1421
        %v1671 = vadd.f32 %v1667, %v1429
        %v1672 = vadd.f32 %v1668, %v1437
        %v1673 = vadd.f32 %v1669, %v1640
        %v1674 = vadd.f32 %v1670, %v1648
        %v1675 = vadd.f32 %v1671, %v1656
        %v1676 = vadd.f32 %v1672, %v1664
        %v1677 = vld [vmem:[%s495] sm:$0x7]
        %v1678 = vld [vmem:[%s504] sm:$0xff]
        %v1679 = vld [vmem:[%s504 + $0x8] sm:$0xff]
        %v1681 = vsel %vm599, %v1677, 0
        %1683 = vmatprep.subr.mxu0 %v1674
        %1684 = vmatpush1.msra.mxu0 %v1673
        %1685 = vmatprep.subr.mxu0 %v1676
        %1686 = vmatpush1.msra.mxu0 %v1675
        %1687 = vmatprep.subr.mxu0 0.0
        %1688 = vmatpush1.msra.mxu0 0.0
        %1689 = vmatprep.subr.mxu0 0.0
        %1690 = vmatpush1.msra.mxu0 0.0
        %1691 = vmatprep.subr.mxu0 0.0
        %1692 = vmatpush1.msra.mxu0 0.0
        %1693 = vmatprep.subr.mxu0 0.0
        %1694 = vmatpush1.msra.mxu0 0.0
        %1695 = vmatprep.subr.mxu0 0.0
        %1696 = vmatpush1.msra.mxu0 0.0
        %1697 = vmatprep.subr.mxu0 0.0
        %1698 = vmatpush1.msra.mxu0 0.0
        %1699 = vmatprep.subr.mxu0 0.0
        %1700 = vmatpush1.msra.mxu0 0.0
        %1701 = vmatprep.subr.mxu0 0.0
        %1702 = vmatpush1.msra.mxu0 0.0
        %1703 = vmatprep.subr.mxu0 0.0
        %1704 = vmatpush1.msra.mxu0 0.0
        %1705 = vmatprep.subr.mxu0 0.0
        %1706 = vmatpush1.msra.mxu0 0.0
        %1707 = vmatprep.subr.mxu0 0.0
        %1708 = vmatpush1.msra.mxu0 0.0
        %1709 = vmatprep.subr.mxu0 0.0
        %1710 = vmatpush1.msra.mxu0 0.0
        %1711 = vmatprep.subr.mxu0 0.0
        %1712 = vmatpush1.msra.mxu0 0.0
        %1713 = vmatprep.subr.mxu0 0.0
        %1714 = vmatpush1.msra.mxu0 0.0
        %1715 = vmatprep.subr.mxu0 0.0
        %1716 = vmatpush1.msra.mxu0 0.0
        %1717 = vmatprep.subr.mxu0 0.0
        %1718 = vmatpush1.msra.mxu0 0.0
        %1719 = vmatprep.subr.mxu0 0.0
        %1720 = vmatpush1.msra.mxu0 0.0
        %1721 = vmatprep.subr.mxu0 0.0
        %1722 = vmatpush1.msra.mxu0 0.0
        %1723 = vmatprep.subr.mxu0 0.0
        %1724 = vmatpush1.msra.mxu0 0.0
        %1725 = vmatprep.subr.mxu0 0.0
        %1726 = vmatpush1.msra.mxu0 0.0
        %1727 = vmatprep.subr.mxu0 0.0
        %1728 = vmatpush1.msra.mxu0 0.0
        %1729 = vmatprep.subr.mxu0 0.0
        %1730 = vmatpush1.msra.mxu0 0.0
        %1731 = vmatprep.subr.mxu0 0.0
        %1732 = vmatpush1.msra.mxu0 0.0
        %1733 = vmatprep.subr.mxu0 0.0
        %1734 = vmatpush1.msra.mxu0 0.0
        %1735 = vmatprep.subr.mxu0 0.0
        %1736 = vmatpush1.msra.mxu0 0.0
        %1737 = vmatprep.subr.mxu0 0.0
        %1738 = vmatpush1.msra.mxu0 0.0
        %1739 = vmatprep.subr.mxu0 0.0
        %1740 = vmatpush1.msra.mxu0 0.0
        %1741 = vmatprep.subr.mxu0 0.0
        %1742 = vmatpush1.msra.mxu0 0.0
        %1743 = vmatprep.subr.mxu0 0.0
        %1744 = vmatpush1.msra.mxu0 0.0
        %1745 = vmatprep.subr.mxu0 0.0
        %1746 = vmatpush1.msra.mxu0 0.0
        %1747 = vmatprep.mubr.f32.mxu0 0.0
        %1748 = vmatmul.mubr.f32.gmra.mrb[0].mxu0 %v1681
        %v1749 = vpop.f32.mrb[0].mxu0
        %v1750 = vadd.f32 0.0, %v1749
        %v1751 = vpop.f32.mrb[0].mxu0
        %v1752 = vadd.f32 0.0, %v1751
        %1753 = vdwg.mxu0
        %v1754 = vxor.u32 %v1750, 2147483648
        %v1755 = vxor.u32 %v1752, 2147483648
        %v1756 = vmul.f32 %v1754, 1.442695
        %v1757 = vpow.pop %v1756
        %v1758 = vmul.f32 %v1755, 1.442695
        %v1759 = vpow.pop %v1758
        %v1760 = vadd.f32 %v1757, 1.0
        %v1761 = vadd.f32 %v1759, 1.0
        %v1762 = vrcp.pop %v1760
        %v1763 = vmul.f32 1.0, %v1762
        %v1764 = vrcp.pop %v1761
        %v1765 = vmul.f32 1.0, %v1764
        %vm1766 = vcmask 23552
        %v1768 = vsel %vm1766, %v1678, 0
        %v1771 = vsel %vm1766, %v1679, 0
        %vm1773 = vcmask 1042432
        %v1775 = vsel %vm1773, %v1763, 0
        %v1778 = vsel %vm1773, %v1765, 0
        %1780 = vmatprep.subr.mxu0 %v1778
        %1781 = vmatpush1.msra.mxu0 %v1775
        %1782 = vmatprep.subr.mxu0 0.0
        %1783 = vmatpush1.msra.mxu0 0.0
        %1784 = vmatprep.subr.mxu0 0.0
        %1785 = vmatpush1.msra.mxu0 0.0
        %1786 = vmatprep.subr.mxu0 0.0
        %1787 = vmatpush1.msra.mxu0 0.0
        %1788 = vmatprep.subr.mxu0 0.0
        %1789 = vmatpush1.msra.mxu0 0.0
        %1790 = vmatprep.subr.mxu0 0.0
        %1791 = vmatpush1.msra.mxu0 0.0
        %1792 = vmatprep.subr.mxu0 0.0
        %1793 = vmatpush1.msra.mxu0 0.0
        %1794 = vmatprep.subr.mxu0 0.0
        %1795 = vmatpush1.msra.mxu0 0.0
        %1796 = vmatprep.subr.mxu0 0.0
        %1797 = vmatpush1.msra.mxu0 0.0
        %1798 = vmatprep.subr.mxu0 0.0
        %1799 = vmatpush1.msra.mxu0 0.0
        %1800 = vmatprep.subr.mxu0 0.0
        %1801 = vmatpush1.msra.mxu0 0.0
        %1802 = vmatprep.subr.mxu0 0.0
        %1803 = vmatpush1.msra.mxu0 0.0
        %1804 = vmatprep.subr.mxu0 0.0
        %1805 = vmatpush1.msra.mxu0 0.0
        %1806 = vmatprep.subr.mxu0 0.0
        %1807 = vmatpush1.msra.mxu0 0.0
        %1808 = vmatprep.subr.mxu0 0.0
        %1809 = vmatpush1.msra.mxu0 0.0
        %1810 = vmatprep.subr.mxu0 0.0
        %1811 = vmatpush1.msra.mxu0 0.0
        %1812 = vmatprep.subr.mxu0 0.0
        %1813 = vmatpush1.msra.mxu0 0.0
        %1814 = vmatprep.subr.mxu0 0.0
        %1815 = vmatpush1.msra.mxu0 0.0
        %1816 = vmatprep.subr.mxu0 0.0
        %1817 = vmatpush1.msra.mxu0 0.0
        %1818 = vmatprep.subr.mxu0 0.0
        %1819 = vmatpush1.msra.mxu0 0.0
        %1820 = vmatprep.subr.mxu0 0.0
        %1821 = vmatpush1.msra.mxu0 0.0
        %1822 = vmatprep.subr.mxu0 0.0
        %1823 = vmatpush1.msra.mxu0 0.0
        %1824 = vmatprep.subr.mxu0 0.0
        %1825 = vmatpush1.msra.mxu0 0.0
        %1826 = vmatprep.subr.mxu0 0.0
        %1827 = vmatpush1.msra.mxu0 0.0
        %1828 = vmatprep.subr.mxu0 0.0
        %1829 = vmatpush1.msra.mxu0 0.0
        %1830 = vmatprep.subr.mxu0 0.0
        %1831 = vmatpush1.msra.mxu0 0.0
        %1832 = vmatprep.subr.mxu0 0.0
        %1833 = vmatpush1.msra.mxu0 0.0
        %1834 = vmatprep.subr.mxu0 0.0
        %1835 = vmatpush1.msra.mxu0 0.0
        %1836 = vmatprep.subr.mxu0 0.0
        %1837 = vmatpush1.msra.mxu0 0.0
        %1838 = vmatprep.subr.mxu0 0.0
        %1839 = vmatpush1.msra.mxu0 0.0
        %1840 = vmatprep.subr.mxu0 0.0
        %1841 = vmatpush1.msra.mxu0 0.0
        %1842 = vmatprep.subr.mxu0 0.0
        %1843 = vmatpush1.msra.mxu0 0.0
        %1844 = vmatprep.mubr.f32.mxu0 0.0
        %1845 = vmatmul.mubr.f32.gmra.mrb[0].mxu0 %v1768
        %v1846 = vpop.f32.mrb[0].mxu0
        %v1847 = vadd.f32 0.0, %v1846
        %v1848 = vpop.f32.mrb[0].mxu0
        %v1849 = vadd.f32 0.0, %v1848
        %1850 = vmatprep.mubr.f32.mxu0 0.0
        %1851 = vmatmul.mubr.f32.gmra.mrb[0].mxu0 %v1771
        %v1852 = vpop.f32.mrb[0].mxu0
        %v1853 = vadd.f32 0.0, %v1852
        %v1854 = vpop.f32.mrb[0].mxu0
        %v1855 = vadd.f32 0.0, %v1854
        %1856 = vdwg.mxu0
        %v1857 = vmul.f32 %v1673, %v1847
        %v1858 = vmul.f32 %v1674, %v1849
        %v1859 = vmul.f32 %v1675, %v1853
        %v1860 = vmul.f32 %v1676, %v1855
        %1861 = vst [vmem:[%s443] sm:$0xff] %v1857
        %1862 = vst [vmem:[%s443 + $0x8] sm:$0xff] %v1858
        %1863 = vst [vmem:[%s443 + $0x10] sm:$0xff] %v1859
        %1864 = vst [vmem:[%s443 + $0x18] sm:$0xff] %v1860
        %v1865 = vmul.f32 %v1857, %v1186
        %v1866 = vmul.f32 %v1858, %v1194
        %v1867 = vmul.f32 %v1859, %v1202
        %v1868 = vmul.f32 %v1860, %v1210
        %1869 = vst [vmem:[%s513] sm:$0xff] %v1865
        %1870 = vst [vmem:[%s513 + $0x8] sm:$0xff] %v1866
        %1871 = vst [vmem:[%s513 + $0x10] sm:$0xff] %v1867
        %1872 = vst [vmem:[%s513 + $0x18] sm:$0xff] %v1868
        %s1873 = sand.u32 %s235, 1
        %s1874 = scalar_lea.sflag [#allocation3], %s1873
        %s1875 = sand.u32 %s235, 1
        %s1876 = smul.addr %s1875, 32
        %s1877 = scalar_lea.vmem [#allocation2], %s1876
        %p1878 = scmp.lt.s32.totalorder %s27, 2
        %s1879 = scalar_select %p1878, %s27, 2
        %p1880 = scmp.lt.s32.totalorder %s28, 3
        %s1881 = scalar_select %p1880, %s28, 3
        %s1882 = smul.addr %s1881, 4
        %s1883 = smul.addr %s1879, 16
        %s1884 = sadd.s32 %s1882, %s1883
        %s1885 = smul.addr %s1884, 8
        %s1886 = scalar_lea.vmem %s8, %s1885
        // Predicated region
        $region49: #{_lambda_.16} parent=47 // pred_check
          %p1887 = pneg %p245
        $region50: #{_lambda_.16} parent=47 // pred_check_branch
          %1889 = sbr.rel (%p1887) target = $region52
        $region51: #{_lambda_.16} parent=47 // pred_region
          %s1891 = ssub.s32 512, 512
          %1892 = vsyncadd %s1874, %s1891
          %s1893 = smul.addr %s28, 4
          %s1894 = smul.addr %s27, 16
          %s1895 = sadd.s32 %s1893, %s1894
          %s1896 = smul.addr %s1895, 128
          %s1897 = scalar_lea.hbm %s7, %s1896
          %s1898 = sshll.u32 %s1877, 4
          %s1899 = int_to_ptr.vmem [resolvable:$true] %s1898
          %1904 = dma.vmem_to_hbm [thread:$0]  %s1899, 512, %s1897, %s1874, 256, 256, 16
        $region52: #{_lambda_.16} parent=47 // pred_fallthru
          _
        // Predicated region
        $region53: #{_lambda_.16} parent=47 // pred_check
          %p1905 = pneg %p273
        $region54: #{_lambda_.16} parent=47 // pred_check_branch
          %1907 = sbr.rel (%p1905) target = $region56
        $region55: #{_lambda_.16} parent=47 // pred_region
          _
        $region56: #{_lambda_.16} parent=47 // pred_fallthru
          _
      $region48: #{_lambda_.16} parent=5 // pred_fallthru
        _
      %p1908 = scmp.le.s32.totalorder 2, %s18
      // Predicated region
      $region57: #{_lambda_.16} parent=5 // pred_check
        %p1909 = pneg %p1908
      $region58: #{_lambda_.16} parent=5 // pred_check_branch
        %1911 = sbr.rel (%p1909) target = $region60
      $region59: #{_lambda_.16} parent=5 // pred_region
        %s1912 = ssub.s32 %s18, 2
        // Predicated region
        $region61: #{_lambda_.16} parent=59 // pred_check
          %p1913 = pneg %p251
        $region62: #{_lambda_.16} parent=59 // pred_check_branch
          %1915 = sbr.rel (%p1913) target = $region64
        $region63: #{_lambda_.16} parent=59 // pred_region
          %s1916 = sand.u32 %s236, 1
          %s1917 = scalar_lea.sflag [#allocation3], %s1916
          %s1918 = sand.u32 %s236, 1
          %s1919 = smul.addr %s1918, 32
          %s1920 = scalar_lea.vmem [#allocation2], %s1919
          %1921 = dma.done %s1917, 512
        $region64: #{_lambda_.16} parent=59 // pred_fallthru
          _
        // Predicated region
        $region65: #{_lambda_.16} parent=59 // pred_check
          %p1922 = pneg %p279
        $region66: #{_lambda_.16} parent=59 // pred_check_branch
          %1924 = sbr.rel (%p1922) target = $region68
        $region67: #{_lambda_.16} parent=59 // pred_region
          %p1925 = scmp.lt.s32.totalorder %s29, 2
          %s1926 = scalar_select %p1925, %s29, 2
          %p1927 = scmp.lt.s32.totalorder %s30, 3
          %s1928 = scalar_select %p1927, %s30, 3
          %s1929 = smul.addr %s1928, 4
          %s1930 = smul.addr %s1926, 16
          %s1931 = sadd.s32 %s1929, %s1930
          %s1932 = smul.addr %s1931, 8
          %s1933 = scalar_lea.vmem %s8, %s1932
        $region68: #{_lambda_.16} parent=59 // pred_fallthru
          _
      $region60: #{_lambda_.16} parent=5 // pred_fallthru
        _
    $region6: #{_lambda_.16} parent=1 // loop_footer
      %s22 = sadd.s32 1, %s18
    $region7: #{_lambda_.16} parent=1 // loop_footer_branch
      %17 = sbr.rel target = $region3
    $region8: #{_lambda_.16} parent=1 // loop_exit
      _
    %1934 = vsyncpa [#allocation3], 1
    %s1935 = scalar_lea.sflag [#allocation3], 1
    %1936 = vsyncpa %s1935, 1

// kernel: _lambda_.17
$region0: #{_lambda_.17}
  #allocation0 [shape = 'u32[]', space=smem, size = 0x4, offset = 0x4, fixed_abs, tag = 'smem constant byte address 0x4 - core index']
  #allocation1 [shape = 'u32[144,128]{1,0:T(1,128)}', space=vmem, size = 0x12000, scoped, tag = 'internal scratch']
  %s0 = inlined_call_operand.vmem [shape: f32[16,48], index: 0, kind: input, shape index: {}]
  %s1 = inlined_call_operand.vmem [shape: f32[48,1024], index: 1, kind: input, shape index: {}]
  %s2 = inlined_call_operand.vmem [shape: f32[16,1], index: 2, kind: input, shape index: {}]
  %s3 = inlined_call_operand.vmem [shape: f32[16,1024], index: 3, kind: output, shape index: {}]
  %s4 = sld [smem:[#allocation0]]
  $region87: #{_lambda_.17} parent=0
    _
  %s6 = ssub.s32 1, %s4
  %s7 = scalar_select 0, %s6, %s4
  $region1: #{_lambda_.17} parent=0
    #allocation2 [shape = 'u8[196608]{0}', space=vmem, size = 0x30000, scoped, tag = 'input window, operand 1']
    #allocation3 [shape = 'u8[65536]{0}', space=vmem, size = 0x10000, scoped, tag = 'output window, operand 0']
    loop: start=0, step=1, limit=4
    $region2: #{_lambda_.17} parent=1 // loop_pre_header
      _
    $region3: #{_lambda_.17} parent=1 // loop_header
      %s9 = sphi 0, %s13
      %p10 = scmp.ge.s32.totalorder %s9, 4
      %s17 = sphi 0, %s17
      %s19 = sphi 0, %s17
      %s20 = sphi 0, %s19
      %s34 = sphi 0, %s20
      %s40 = sphi 0, %s42
      %s43 = sphi 0, %s40
      %s44 = sphi 0, %s43
      %s60 = sphi 0, %s44
      %s64 = sphi 0, %s64
      %s66 = sphi 0, %s64
      %s67 = sphi 0, %s66
      %s81 = sphi 0, %s67
      %s87 = sphi 0, %s89
      %s90 = sphi 0, %s87
      %s91 = sphi 0, %s90
      %s107 = sphi 0, %s91
    $region4: #{_lambda_.17} parent=1 // loop_header_branch
      %12 = sbr.rel (%p10) target = $region8
    $region5: #{_lambda_.17} parent=1 // loop_body
      %s14 = ssub.s32 %s9, 1
      %s15 = ssub.s32 %s9, 2
      %s16 = sadd.s32 %s9, 1
      %s18 = sadd.s32 %s17, 1
      %p21 = scmp.eq.s32.totalorder %s9, 1
      %p22 = scmp.ne.s32.totalorder %s17, %s19
      %p23 = scmp.eq.s32.totalorder %s9, 0
      %p24 = por %p22, %p23
      %p25 = scmp.ne.s32.totalorder %s17, %s19
      %p26 = scmp.eq.s32.totalorder %s14, 1
      %p27 = por %p25, %p26
      %p28 = scmp.ne.s32.totalorder %s19, %s20
      %p29 = scmp.eq.s32.totalorder %s14, 0
      %p30 = por %p28, %p29
      %p31 = scmp.ne.s32.totalorder %s19, %s20
      %p32 = scmp.eq.s32.totalorder %s15, 1
      %p33 = por %p31, %p32
      %p35 = scmp.ne.s32.totalorder %s20, %s34
      %p36 = scmp.eq.s32.totalorder %s15, 0
      %p37 = por %p35, %p36
      %s38 = ssub.s32 %s9, %s16
      %p39 = scmp.eq.s32.totalorder %s38, 0
      %s41 = sadd.s32 %s40, 1
      %s42 = scalar_select %p39, %s40, %s41
      %p45 = pneg %p39
      %p46 = scmp.eq.s32.totalorder %s9, 1
      %p47 = por %p45, %p46
      %p48 = scmp.ne.s32.totalorder %s40, %s43
      %p49 = scmp.eq.s32.totalorder %s9, 0
      %p50 = por %p48, %p49
      %p51 = scmp.ne.s32.totalorder %s40, %s43
      %p52 = scmp.eq.s32.totalorder %s14, 1
      %p53 = por %p51, %p52
      %p54 = scmp.ne.s32.totalorder %s43, %s44
      %p55 = scmp.eq.s32.totalorder %s14, 0
      %p56 = por %p54, %p55
      %p57 = scmp.ne.s32.totalorder %s43, %s44
      %p58 = scmp.eq.s32.totalorder %s15, 1
      %p59 = por %p57, %p58
      %p61 = scmp.ne.s32.totalorder %s44, %s60
      %p62 = scmp.eq.s32.totalorder %s15, 0
      %p63 = por %p61, %p62
      %s65 = sadd.s32 %s64, 1
      %p68 = scmp.eq.s32.totalorder %s9, 1
      %p69 = scmp.ne.s32.totalorder %s64, %s66
      %p70 = scmp.eq.s32.totalorder %s9, 0
      %p71 = por %p69, %p70
      %p72 = scmp.ne.s32.totalorder %s64, %s66
      %p73 = scmp.eq.s32.totalorder %s14, 1
      %p74 = por %p72, %p73
      %p75 = scmp.ne.s32.totalorder %s66, %s67
      %p76 = scmp.eq.s32.totalorder %s14, 0
      %p77 = por %p75, %p76
      %p78 = scmp.ne.s32.totalorder %s66, %s67
      %p79 = scmp.eq.s32.totalorder %s15, 1
      %p80 = por %p78, %p79
      %p82 = scmp.ne.s32.totalorder %s67, %s81
      %p83 = scmp.eq.s32.totalorder %s15, 0
      %p84 = por %p82, %p83
      %s85 = ssub.s32 %s9, %s16
      %p86 = scmp.eq.s32.totalorder %s85, 0
      %s88 = sadd.s32 %s87, 1
      %s89 = scalar_select %p86, %s87, %s88
      %p92 = pneg %p86
      %p93 = scmp.eq.s32.totalorder %s9, 1
      %p94 = por %p92, %p93
      %p95 = scmp.ne.s32.totalorder %s87, %s90
      %p96 = scmp.eq.s32.totalorder %s9, 0
      %p97 = por %p95, %p96
      %p98 = scmp.ne.s32.totalorder %s87, %s90
      %p99 = scmp.eq.s32.totalorder %s14, 1
      %p100 = por %p98, %p99
      %p101 = scmp.ne.s32.totalorder %s90, %s91
      %p102 = scmp.eq.s32.totalorder %s14, 0
      %p103 = por %p101, %p102
      %p104 = scmp.ne.s32.totalorder %s90, %s91
      %p105 = scmp.eq.s32.totalorder %s15, 1
      %p106 = por %p104, %p105
      %p108 = scmp.ne.s32.totalorder %s91, %s107
      %p109 = scmp.eq.s32.totalorder %s15, 0
      %p110 = por %p108, %p109
      %p111 = scmp.le.s32.totalorder 1, %s9
      %p112 = scmp.lt.s32.totalorder %s9, 3
      %p113 = pnand %p111, %p112
      %p114 = pneg %p113
      // Predicated region
      $region9: #{_lambda_.17} parent=5 // pred_check
        _
      $region10: #{_lambda_.17} parent=5 // pred_check_branch
        %116 = sbr.rel (%p113) target = $region12
      $region11: #{_lambda_.17} parent=5 // pred_region
        %s117 = ssub.s32 %s9, 1
        // Predicated region
        $region13: #{_lambda_.17} parent=11 // pred_check
          %p118 = pneg %p30
        $region14: #{_lambda_.17} parent=11 // pred_check_branch
          %120 = sbr.rel (%p118) target = $region16
        $region15: #{_lambda_.17} parent=11 // pred_region
          _
        $region16: #{_lambda_.17} parent=11 // pred_fallthru
          _
        // Predicated region
        $region17: #{_lambda_.17} parent=11 // pred_check
          %p121 = pneg %p77
        $region18: #{_lambda_.17} parent=11 // pred_check_branch
          %123 = sbr.rel (%p121) target = $region20
        $region19: #{_lambda_.17} parent=11 // pred_region
          _
        $region20: #{_lambda_.17} parent=11 // pred_fallthru
          _
      $region12: #{_lambda_.17} parent=5 // pred_fallthru
        _
      %p124 = scmp.lt.s32.totalorder %s9, 2
      // Predicated region
      $region21: #{_lambda_.17} parent=5 // pred_check
        %p125 = pneg %p124
      $region22: #{_lambda_.17} parent=5 // pred_check_branch
        %127 = sbr.rel (%p125) target = $region24
      $region23: #{_lambda_.17} parent=5 // pred_region
        // Predicated region
        $region25: #{_lambda_.17} parent=23 // pred_check
          %p128 = pneg %p50
        $region26: #{_lambda_.17} parent=23 // pred_check_branch
          %130 = sbr.rel (%p128) target = $region28
        $region27: #{_lambda_.17} parent=23 // pred_region
          %s131 = sand.u32 %s40, 1
          %s132 = sand.u32 %s40, 1
          %s133 = smul.addr %s132, 192
          %s134 = scalar_lea.vmem [#allocation2], %s133
          %s135 = smul.u32 4, %s9
          %s136 = smul.addr %s135, 8
          %s137 = scalar_lea.vmem %s1, %s136
          // Predicated region
          $region29: #{_lambda_.17} parent=27 // pred_check
            _
          $region30: #{_lambda_.17} parent=27 // pred_check_branch
            %139 = sbr.rel (0) target = $region32
          $region31: #{_lambda_.17} parent=27 // pred_region
            // Predicated region
            $region33: #{_lambda_.17} parent=31 // pred_check
              _
            $region34: #{_lambda_.17} parent=31 // pred_check_branch
              %141 = sbr.rel (0) target = $region36
            $region35: #{_lambda_.17} parent=31 // pred_region
              loop: start=0, step=1, limit=1
              $region37: #{_lambda_.17} parent=35 // loop_pre_header
                _
              $region38: #{_lambda_.17} parent=35 // loop_header
                %s143 = sphi 0, %s147
                %p144 = scmp.ge.s32.totalorder %s143, 1
                %s148 = sphi %s137, %s137
                %s149 = sphi %s134, %s134
              $region39: #{_lambda_.17} parent=35 // loop_header_branch
                %146 = sbr.rel (%p144) target = $region43
              $region40: #{_lambda_.17} parent=35 // loop_body
                %v150 = vld [vmem:[%s148] sm:$0xff]
                %151 = vst [vmem:[%s149] sm:$0xff] %v150
                %v152 = vld [vmem:[%s148 + $0x8] sm:$0xff]
                %153 = vst [vmem:[%s149 + $0x8] sm:$0xff] %v152
                %v154 = vld [vmem:[%s148 + $0x10] sm:$0xff]
                %155 = vst [vmem:[%s149 + $0x10] sm:$0xff] %v154
                %v156 = vld [vmem:[%s148 + $0x18] sm:$0xff]
                %157 = vst [vmem:[%s149 + $0x18] sm:$0xff] %v156
                %v158 = vld [vmem:[%s148 + $0x40] sm:$0xff]
                %159 = vst [vmem:[%s149 + $0x20] sm:$0xff] %v158
                %v160 = vld [vmem:[%s148 + $0x48] sm:$0xff]
                %161 = vst [vmem:[%s149 + $0x28] sm:$0xff] %v160
                %v162 = vld [vmem:[%s148 + $0x50] sm:$0xff]
                %163 = vst [vmem:[%s149 + $0x30] sm:$0xff] %v162
                %v164 = vld [vmem:[%s148 + $0x58] sm:$0xff]
                %165 = vst [vmem:[%s149 + $0x38] sm:$0xff] %v164
                %v166 = vld [vmem:[%s148 + $0x80] sm:$0xff]
                %167 = vst [vmem:[%s149 + $0x40] sm:$0xff] %v166
                %v168 = vld [vmem:[%s148 + $0x88] sm:$0xff]
                %169 = vst [vmem:[%s149 + $0x48] sm:$0xff] %v168
                %v170 = vld [vmem:[%s148 + $0x90] sm:$0xff]
                %171 = vst [vmem:[%s149 + $0x50] sm:$0xff] %v170
                %v172 = vld [vmem:[%s148 + $0x98] sm:$0xff]
                %173 = vst [vmem:[%s149 + $0x58] sm:$0xff] %v172
                %v174 = vld [vmem:[%s148 + $0xc0] sm:$0xff]
                %175 = vst [vmem:[%s149 + $0x60] sm:$0xff] %v174
                %v176 = vld [vmem:[%s148 + $0xc8] sm:$0xff]
                %177 = vst [vmem:[%s149 + $0x68] sm:$0xff] %v176
                %v178 = vld [vmem:[%s148 + $0xd0] sm:$0xff]
                %179 = vst [vmem:[%s149 + $0x70] sm:$0xff] %v178
                %v180 = vld [vmem:[%s148 + $0xd8] sm:$0xff]
                %181 = vst [vmem:[%s149 + $0x78] sm:$0xff] %v180
                %v182 = vld [vmem:[%s148 + $0x100] sm:$0xff]
                %183 = vst [vmem:[%s149 + $0x80] sm:$0xff] %v182
                %v184 = vld [vmem:[%s148 + $0x108] sm:$0xff]
                %185 = vst [vmem:[%s149 + $0x88] sm:$0xff] %v184
                %v186 = vld [vmem:[%s148 + $0x110] sm:$0xff]
                %187 = vst [vmem:[%s149 + $0x90] sm:$0xff] %v186
                %v188 = vld [vmem:[%s148 + $0x118] sm:$0xff]
                %189 = vst [vmem:[%s149 + $0x98] sm:$0xff] %v188
                %v190 = vld [vmem:[%s148 + $0x140] sm:$0xff]
                %191 = vst [vmem:[%s149 + $0xa0] sm:$0xff] %v190
                %v192 = vld [vmem:[%s148 + $0x148] sm:$0xff]
                %193 = vst [vmem:[%s149 + $0xa8] sm:$0xff] %v192
                %v194 = vld [vmem:[%s148 + $0x150] sm:$0xff]
                %195 = vst [vmem:[%s149 + $0xb0] sm:$0xff] %v194
                %v196 = vld [vmem:[%s148 + $0x158] sm:$0xff]
                %197 = vst [vmem:[%s149 + $0xb8] sm:$0xff] %v196
              $region41: #{_lambda_.17} parent=35 // loop_footer
                %s147 = sadd.s32 1, %s143
              $region42: #{_lambda_.17} parent=35 // loop_footer_branch
                %142 = sbr.rel target = $region38
              $region43: #{_lambda_.17} parent=35 // loop_exit
                _
            $region36: #{_lambda_.17} parent=31 // pred_fallthru
              _
            // Predicated region
            $region44: #{_lambda_.17} parent=31 // pred_check
              _
            $region45: #{_lambda_.17} parent=31 // pred_check_branch
              %199 = sbr.rel target = $region47
            $region46: #{_lambda_.17} parent=31 // pred_region
              _
            $region47: #{_lambda_.17} parent=31 // pred_fallthru
              _
          $region32: #{_lambda_.17} parent=27 // pred_fallthru
            _
          %200 = vnop
        $region28: #{_lambda_.17} parent=23 // pred_fallthru
          _
      $region24: #{_lambda_.17} parent=5 // pred_fallthru
        _
      %p201 = scmp.le.s32.totalorder 1, %s9
      %p202 = scmp.lt.s32.totalorder %s9, 3
      %p203 = pnand %p201, %p202
      %p204 = pneg %p203
      // Predicated region
      $region48: #{_lambda_.17} parent=5 // pred_check
        _
      $region49: #{_lambda_.17} parent=5 // pred_check_branch
        %206 = sbr.rel (%p203) target = $region51
      $region50: #{_lambda_.17} parent=5 // pred_region
        %s207 = ssub.s32 %s9, 1
        %s208 = sand.u32 %s43, 1
        %s209 = sand.u32 %s43, 1
        %s210 = smul.addr %s209, 192
        %s211 = scalar_lea.vmem [#allocation2], %s210
        // Predicated region
        $region52: #{_lambda_.17} parent=50 // pred_check
          %p212 = pneg %p56
        $region53: #{_lambda_.17} parent=50 // pred_check_branch
          %214 = sbr.rel (%p212) target = $region55
        $region54: #{_lambda_.17} parent=50 // pred_region
          _
        $region55: #{_lambda_.17} parent=50 // pred_fallthru
          _
        %p215 = pneg %p30
        %p216 = pneg %p27
        %s217 = sand.u32 %s43, 1
        %s218 = sand.u32 %s43, 1
        %s219 = smul.addr %s218, 192
        %s220 = scalar_lea.vmem [#allocation2], %s219
        %p221 = pneg %p56
        %p222 = pneg %p53
        %p223 = pneg %p77
        %p224 = pneg %p74
        %p225 = pneg %p103
        %p226 = pneg %p100
        %s227 = sand.u32 %s90, 1
        %s228 = sand.u32 %s90, 1
        %s229 = smul.addr %s228, 64
        %s230 = scalar_lea.vmem [#allocation3], %s229
        %s231 = smul.u32 4, %s14
        %s232 = smul.u32 4, %s14
        %v233 = vld [vmem:[%s0] sm:$0xff]
        %v234 = vld [vmem:[%s0 + $0x8] sm:$0xff]
        %v235 = vld [vmem:[%s211] sm:$0xff]
        %v236 = vld [vmem:[%s211 + $0x8] sm:$0xff]
        %v237 = vld [vmem:[%s211 + $0x10] sm:$0xff]
        %v238 = vld [vmem:[%s211 + $0x18] sm:$0xff]
        %v239 = vld [vmem:[%s211 + $0x20] sm:$0xff]
        %v240 = vld [vmem:[%s211 + $0x28] sm:$0xff]
        %v241 = vld [vmem:[%s211 + $0x30] sm:$0xff]
        %v242 = vld [vmem:[%s211 + $0x38] sm:$0xff]
        %v243 = vld [vmem:[%s211 + $0x40] sm:$0xff]
        %v244 = vld [vmem:[%s211 + $0x48] sm:$0xff]
        %v245 = vld [vmem:[%s211 + $0x50] sm:$0xff]
        %v246 = vld [vmem:[%s211 + $0x58] sm:$0xff]
        %v247 = vld [vmem:[%s211 + $0x60] sm:$0xff]
        %v248 = vld [vmem:[%s211 + $0x68] sm:$0xff]
        %v249 = vld [vmem:[%s211 + $0x70] sm:$0xff]
        %v250 = vld [vmem:[%s211 + $0x78] sm:$0xff]
        %v251 = vld [vmem:[%s211 + $0x80] sm:$0xff]
        %v252 = vld [vmem:[%s211 + $0x88] sm:$0xff]
        %v253 = vld [vmem:[%s211 + $0x90] sm:$0xff]
        %v254 = vld [vmem:[%s211 + $0x98] sm:$0xff]
        %v255 = vld [vmem:[%s211 + $0xa0] sm:$0xff]
        %v256 = vld [vmem:[%s211 + $0xa8] sm:$0xff]
        %v257 = vld [vmem:[%s211 + $0xb0] sm:$0xff]
        %v258 = vld [vmem:[%s211 + $0xb8] sm:$0xff]
        %v259 = vld [vmem:[%s2] sm:$0xff]
        %v260 = vld [vmem:[%s2 + $0x8] sm:$0xff]
        %262 = vset.pattern.permute.xlu0 0
        %263 = vperm.xlu0 %262, %v259
        %v264 = vpop.permute.xlu0 %263
        %267 = vset.pattern.permute.xlu0 0
        %268 = vperm.xlu0 %267, %v260
        %v269 = vpop.permute.xlu0 %268
        %vm271 = vcmask 392192
        %v273 = vsel %vm271, %v233, 0
        %v276 = vsel %vm271, %v234, 0
        %278 = vmatprep.subr.mxu0 %v236
        %279 = vmatpush1.msra.mxu0 %v235
        %280 = vmatprep.subr.mxu0 %v240
        %281 = vmatpush1.msra.mxu0 %v239
        %282 = vmatprep.subr.mxu0 %v244
        %283 = vmatpush1.msra.mxu0 %v243
        %284 = vmatprep.subr.mxu0 %v248
        %285 = vmatpush1.msra.mxu0 %v247
        %286 = vmatprep.subr.mxu0 %v252
        %287 = vmatpush1.msra.mxu0 %v251
        %288 = vmatprep.subr.mxu0 %v256
        %289 = vmatpush1.msra.mxu0 %v255
        %290 = vmatprep.subr.mxu0 0.0
        %291 = vmatpush1.msra.mxu0 0.0
        %292 = vmatprep.subr.mxu0 0.0
        %293 = vmatpush1.msra.mxu0 0.0
        %294 = vmatprep.subr.mxu0 0.0
        %295 = vmatpush1.msra.mxu0 0.0
        %296 = vmatprep.subr.mxu0 0.0
        %297 = vmatpush1.msra.mxu0 0.0
        %298 = vmatprep.subr.mxu0 0.0
        %299 = vmatpush1.msra.mxu0 0.0
        %300 = vmatprep.subr.mxu0 0.0
        %301 = vmatpush1.msra.mxu0 0.0
        %302 = vmatprep.subr.mxu0 0.0
        %303 = vmatpush1.msra.mxu0 0.0
        %304 = vmatprep.subr.mxu0 0.0
        %305 = vmatpush1.msra.mxu0 0.0
        %306 = vmatprep.subr.mxu0 0.0
        %307 = vmatpush1.msra.mxu0 0.0
        %308 = vmatprep.subr.mxu0 0.0
        %309 = vmatpush1.msra.mxu0 0.0
        %310 = vmatprep.subr.mxu0 0.0
        %311 = vmatpush1.msra.mxu0 0.0
        %312 = vmatprep.subr.mxu0 0.0
        %313 = vmatpush1.msra.mxu0 0.0
        %314 = vmatprep.subr.mxu0 0.0
        %315 = vmatpush1.msra.mxu0 0.0
        %316 = vmatprep.subr.mxu0 0.0
        %317 = vmatpush1.msra.mxu0 0.0
        %318 = vmatprep.subr.mxu0 0.0
        %319 = vmatpush1.msra.mxu0 0.0
        %320 = vmatprep.subr.mxu0 0.0
        %321 = vmatpush1.msra.mxu0 0.0
        %322 = vmatprep.subr.mxu0 0.0
        %323 = vmatpush1.msra.mxu0 0.0
        %324 = vmatprep.subr.mxu0 0.0
        %325 = vmatpush1.msra.mxu0 0.0
        %326 = vmatprep.subr.mxu0 0.0
        %327 = vmatpush1.msra.mxu0 0.0
        %328 = vmatprep.subr.mxu0 0.0
        %329 = vmatpush1.msra.mxu0 0.0
        %330 = vmatprep.subr.mxu0 0.0
        %331 = vmatpush1.msra.mxu0 0.0
        %332 = vmatprep.subr.mxu0 0.0
        %333 = vmatpush1.msra.mxu0 0.0
        %334 = vmatprep.subr.mxu0 0.0
        %335 = vmatpush1.msra.mxu0 0.0
        %336 = vmatprep.subr.mxu0 0.0
        %337 = vmatpush1.msra.mxu0 0.0
        %338 = vmatprep.subr.mxu0 0.0
        %339 = vmatpush1.msra.mxu0 0.0
        %340 = vmatprep.subr.mxu0 0.0
        %341 = vmatpush1.msra.mxu0 0.0
        %342 = vmatprep.mubr.f32.mxu0 0.0
        %343 = vmatmul.mubr.f32.gmra.mrb[0].mxu0 %v273
        %v344 = vpop.f32.mrb[0].mxu0
        %v345 = vadd.f32 %v264, %v344
        %v346 = vpop.f32.mrb[0].mxu0
        %v347 = vadd.f32 %v264, %v346
        %348 = vmatprep.mubr.f32.mxu0 0.0
        %349 = vmatmul.mubr.f32.gmra.mrb[0].mxu0 %v276
        %v350 = vpop.f32.mrb[0].mxu0
        %v351 = vadd.f32 %v269, %v350
        %v352 = vpop.f32.mrb[0].mxu0
        %v353 = vadd.f32 %v269, %v352
        %354 = vdwg.mxu0
        %355 = vmatprep.subr.mxu0 %v238
        %356 = vmatpush1.msra.mxu0 %v237
        %357 = vmatprep.subr.mxu0 %v242
        %358 = vmatpush1.msra.mxu0 %v241
        %359 = vmatprep.subr.mxu0 %v246
        %360 = vmatpush1.msra.mxu0 %v245
        %361 = vmatprep.subr.mxu0 %v250
        %362 = vmatpush1.msra.mxu0 %v249
        %363 = vmatprep.subr.mxu0 %v254
        %364 = vmatpush1.msra.mxu0 %v253
        %365 = vmatprep.subr.mxu0 %v258
        %366 = vmatpush1.msra.mxu0 %v257
        %367 = vmatprep.subr.mxu0 0.0
        %368 = vmatpush1.msra.mxu0 0.0
        %369 = vmatprep.subr.mxu0 0.0
        %370 = vmatpush1.msra.mxu0 0.0
        %371 = vmatprep.subr.mxu0 0.0
        %372 = vmatpush1.msra.mxu0 0.0
        %373 = vmatprep.subr.mxu0 0.0
        %374 = vmatpush1.msra.mxu0 0.0
        %375 = vmatprep.subr.mxu0 0.0
        %376 = vmatpush1.msra.mxu0 0.0
        %377 = vmatprep.subr.mxu0 0.0
        %378 = vmatpush1.msra.mxu0 0.0
        %379 = vmatprep.subr.mxu0 0.0
        %380 = vmatpush1.msra.mxu0 0.0
        %381 = vmatprep.subr.mxu0 0.0
        %382 = vmatpush1.msra.mxu0 0.0
        %383 = vmatprep.subr.mxu0 0.0
        %384 = vmatpush1.msra.mxu0 0.0
        %385 = vmatprep.subr.mxu0 0.0
        %386 = vmatpush1.msra.mxu0 0.0
        %387 = vmatprep.subr.mxu0 0.0
        %388 = vmatpush1.msra.mxu0 0.0
        %389 = vmatprep.subr.mxu0 0.0
        %390 = vmatpush1.msra.mxu0 0.0
        %391 = vmatprep.subr.mxu0 0.0
        %392 = vmatpush1.msra.mxu0 0.0
        %393 = vmatprep.subr.mxu0 0.0
        %394 = vmatpush1.msra.mxu0 0.0
        %395 = vmatprep.subr.mxu0 0.0
        %396 = vmatpush1.msra.mxu0 0.0
        %397 = vmatprep.subr.mxu0 0.0
        %398 = vmatpush1.msra.mxu0 0.0
        %399 = vmatprep.subr.mxu0 0.0
        %400 = vmatpush1.msra.mxu0 0.0
        %401 = vmatprep.subr.mxu0 0.0
        %402 = vmatpush1.msra.mxu0 0.0
        %403 = vmatprep.subr.mxu0 0.0
        %404 = vmatpush1.msra.mxu0 0.0
        %405 = vmatprep.subr.mxu0 0.0
        %406 = vmatpush1.msra.mxu0 0.0
        %407 = vmatprep.subr.mxu0 0.0
        %408 = vmatpush1.msra.mxu0 0.0
        %409 = vmatprep.subr.mxu0 0.0
        %410 = vmatpush1.msra.mxu0 0.0
        %411 = vmatprep.subr.mxu0 0.0
        %412 = vmatpush1.msra.mxu0 0.0
        %413 = vmatprep.subr.mxu0 0.0
        %414 = vmatpush1.msra.mxu0 0.0
        %415 = vmatprep.subr.mxu0 0.0
        %416 = vmatpush1.msra.mxu0 0.0
        %417 = vmatprep.subr.mxu0 0.0
        %418 = vmatpush1.msra.mxu0 0.0
        %419 = vmatprep.mubr.f32.mxu0 0.0
        %420 = vmatmul.mubr.f32.gmra.mrb[0].mxu0 %v273
        %v421 = vpop.f32.mrb[0].mxu0
        %v422 = vadd.f32 %v264, %v421
        %v423 = vpop.f32.mrb[0].mxu0
        %v424 = vadd.f32 %v264, %v423
        %425 = vmatprep.mubr.f32.mxu0 0.0
        %426 = vmatmul.mubr.f32.gmra.mrb[0].mxu0 %v276
        %v427 = vpop.f32.mrb[0].mxu0
        %v428 = vadd.f32 %v269, %v427
        %v429 = vpop.f32.mrb[0].mxu0
        %v430 = vadd.f32 %v269, %v429
        %431 = vdwg.mxu0
        %v432 = vmax.f32 %v345, 0.0
        %v433 = vmax.f32 %v347, 0.0
        %v434 = vmax.f32 %v422, 0.0
        %v435 = vmax.f32 %v424, 0.0
        %v436 = vmax.f32 %v351, 0.0
        %v437 = vmax.f32 %v353, 0.0
        %v438 = vmax.f32 %v428, 0.0
        %v439 = vmax.f32 %v430, 0.0
        %440 = vst [vmem:[%s230] sm:$0xff] %v432
        %441 = vst [vmem:[%s230 + $0x8] sm:$0xff] %v433
        %442 = vst [vmem:[%s230 + $0x10] sm:$0xff] %v434
        %443 = vst [vmem:[%s230 + $0x18] sm:$0xff] %v435
        %444 = vst [vmem:[%s230 + $0x20] sm:$0xff] %v436
        %445 = vst [vmem:[%s230 + $0x28] sm:$0xff] %v437
        %446 = vst [vmem:[%s230 + $0x30] sm:$0xff] %v438
        %447 = vst [vmem:[%s230 + $0x38] sm:$0xff] %v439
        %s448 = sand.u32 %s90, 1
        %s449 = sand.u32 %s90, 1
        %s450 = smul.addr %s449, 64
        %s451 = scalar_lea.vmem [#allocation3], %s450
        // Predicated region
        $region56: #{_lambda_.17} parent=50 // pred_check
          %p452 = pneg %p100
        $region57: #{_lambda_.17} parent=50 // pred_check_branch
          %454 = sbr.rel (%p452) target = $region59
        $region58: #{_lambda_.17} parent=50 // pred_region
          %s455 = smul.u32 4, %s14
          %s456 = smul.addr %s455, 8
          %s457 = scalar_lea.vmem %s3, %s456
          // Predicated region
          $region60: #{_lambda_.17} parent=58 // pred_check
            _
          $region61: #{_lambda_.17} parent=58 // pred_check_branch
            %459 = sbr.rel (0) target = $region63
          $region62: #{_lambda_.17} parent=58 // pred_region
            // Predicated region
            $region64: #{_lambda_.17} parent=62 // pred_check
              _
            $region65: #{_lambda_.17} parent=62 // pred_check_branch
              %461 = sbr.rel (0) target = $region67
            $region66: #{_lambda_.17} parent=62 // pred_region
              loop: start=0, step=1, limit=1
              $region68: #{_lambda_.17} parent=66 // loop_pre_header
                _
              $region69: #{_lambda_.17} parent=66 // loop_header
                %s463 = sphi 0, %s467
                %p464 = scmp.ge.s32.totalorder %s463, 1
                %s468 = sphi %s451, %s451
                %s469 = sphi %s457, %s457
              $region70: #{_lambda_.17} parent=66 // loop_header_branch
                %466 = sbr.rel (%p464) target = $region74
              $region71: #{_lambda_.17} parent=66 // loop_body
                %v470 = vld [vmem:[%s468] sm:$0xff]
                %471 = vst [vmem:[%s469] sm:$0xff] %v470
                %v472 = vld [vmem:[%s468 + $0x8] sm:$0xff]
                %473 = vst [vmem:[%s469 + $0x8] sm:$0xff] %v472
                %v474 = vld [vmem:[%s468 + $0x10] sm:$0xff]
                %475 = vst [vmem:[%s469 + $0x10] sm:$0xff] %v474
                %v476 = vld [vmem:[%s468 + $0x18] sm:$0xff]
                %477 = vst [vmem:[%s469 + $0x18] sm:$0xff] %v476
                %v478 = vld [vmem:[%s468 + $0x20] sm:$0xff]
                %479 = vst [vmem:[%s469 + $0x40] sm:$0xff] %v478
                %v480 = vld [vmem:[%s468 + $0x28] sm:$0xff]
                %481 = vst [vmem:[%s469 + $0x48] sm:$0xff] %v480
                %v482 = vld [vmem:[%s468 + $0x30] sm:$0xff]
                %483 = vst [vmem:[%s469 + $0x50] sm:$0xff] %v482
                %v484 = vld [vmem:[%s468 + $0x38] sm:$0xff]
                %485 = vst [vmem:[%s469 + $0x58] sm:$0xff] %v484
              $region72: #{_lambda_.17} parent=66 // loop_footer
                %s467 = sadd.s32 1, %s463
              $region73: #{_lambda_.17} parent=66 // loop_footer_branch
                %462 = sbr.rel target = $region69
              $region74: #{_lambda_.17} parent=66 // loop_exit
                _
            $region67: #{_lambda_.17} parent=62 // pred_fallthru
              _
            // Predicated region
            $region75: #{_lambda_.17} parent=62 // pred_check
              _
            $region76: #{_lambda_.17} parent=62 // pred_check_branch
              %487 = sbr.rel target = $region78
            $region77: #{_lambda_.17} parent=62 // pred_region
              _
            $region78: #{_lambda_.17} parent=62 // pred_fallthru
              _
          $region63: #{_lambda_.17} parent=58 // pred_fallthru
            _
          %488 = vnop
        $region59: #{_lambda_.17} parent=50 // pred_fallthru
          _
      $region51: #{_lambda_.17} parent=5 // pred_fallthru
        _
      %p489 = scmp.le.s32.totalorder 2, %s9
      // Predicated region
      $region79: #{_lambda_.17} parent=5 // pred_check
        %p490 = pneg %p489
      $region80: #{_lambda_.17} parent=5 // pred_check_branch
        %492 = sbr.rel (%p490) target = $region82
      $region81: #{_lambda_.17} parent=5 // pred_region
        %s493 = ssub.s32 %s9, 2
        // Predicated region
        $region83: #{_lambda_.17} parent=81 // pred_check
          %p494 = pneg %p106
        $region84: #{_lambda_.17} parent=81 // pred_check_branch
          %496 = sbr.rel (%p494) target = $region86
        $region85: #{_lambda_.17} parent=81 // pred_region
          %s497 = sand.u32 %s91, 1
          %s498 = sand.u32 %s91, 1
          %s499 = smul.addr %s498, 64
          %s500 = scalar_lea.vmem [#allocation3], %s499
        $region86: #{_lambda_.17} parent=81 // pred_fallthru
          _
      $region82: #{_lambda_.17} parent=5 // pred_fallthru
        _
    $region6: #{_lambda_.17} parent=1 // loop_footer
      %s13 = sadd.s32 1, %s9
    $region7: #{_lambda_.17} parent=1 // loop_footer_branch
      %8 = sbr.rel target = $region3
    $region8: #{_lambda_.17} parent=1 // loop_exit
      _

// kernel: _lambda_.18
$region0: #{_lambda_.18}
  #allocation0 [shape = 'u32[]', space=smem, size = 0x4, offset = 0x4, fixed_abs, tag = 'smem constant byte address 0x4 - core index']
  #allocation1 [shape = 'u32[144,128]{1,0:T(1,128)}', space=vmem, size = 0x12000, scoped, tag = 'internal scratch']
  %s0 = inlined_call_operand.vmem [shape: f32[16,108], index: 0, kind: input, shape index: {}]
  %s1 = inlined_call_operand.vmem [shape: f32[108,128], index: 1, kind: input, shape index: {}]
  %s2 = inlined_call_operand.vmem [shape: f32[16,1], index: 2, kind: input, shape index: {}]
  %s3 = inlined_call_operand.vmem [shape: f32[16,128], index: 3, kind: output, shape index: {}]
  %s4 = sld [smem:[#allocation0]]
  $region22: #{_lambda_.18} parent=0
    _
  %s6 = ssub.s32 1, %s4
  %s7 = scalar_select 0, %s6, %s4
  // Predicated region
  $region2: #{_lambda_.18} parent=0 // pred_check
    _
  $region3: #{_lambda_.18} parent=0 // pred_check_branch
    %9 = sbr.rel (0) target = $region5
  $region4: #{_lambda_.18} parent=0 // pred_region
    _
  $region5: #{_lambda_.18} parent=0 // pred_fallthru
    _
  // Predicated region
  $region6: #{_lambda_.18} parent=0 // pred_check
    _
  $region7: #{_lambda_.18} parent=0 // pred_check_branch
    %11 = sbr.rel (0) target = $region9
  $region8: #{_lambda_.18} parent=0 // pred_region
    _
  $region9: #{_lambda_.18} parent=0 // pred_fallthru
    _
  // Predicated region
  $region10: #{_lambda_.18} parent=0 // pred_check
    _
  $region11: #{_lambda_.18} parent=0 // pred_check_branch
    %13 = sbr.rel (0) target = $region13
  $region12: #{_lambda_.18} parent=0 // pred_region
    _
  $region13: #{_lambda_.18} parent=0 // pred_fallthru
    _
  %v14 = vld [vmem:[%s0] sm:$0xff]
  %v15 = vld [vmem:[%s0 + $0x8] sm:$0xff]
  %v16 = vld [vmem:[%s1] sm:$0xff]
  %v17 = vld [vmem:[%s1 + $0x8] sm:$0xff]
  %v18 = vld [vmem:[%s1 + $0x10] sm:$0xff]
  %v19 = vld [vmem:[%s1 + $0x18] sm:$0xff]
  %v20 = vld [vmem:[%s1 + $0x20] sm:$0xff]
  %v21 = vld [vmem:[%s1 + $0x28] sm:$0xff]
  %v22 = vld [vmem:[%s1 + $0x30] sm:$0xff]
  %v23 = vld [vmem:[%s1 + $0x38] sm:$0xff]
  %v24 = vld [vmem:[%s1 + $0x40] sm:$0xff]
  %v25 = vld [vmem:[%s1 + $0x48] sm:$0xff]
  %v26 = vld [vmem:[%s1 + $0x50] sm:$0xff]
  %v27 = vld [vmem:[%s1 + $0x58] sm:$0xff]
  %v28 = vld [vmem:[%s1 + $0x60] sm:$0xff]
  %v29 = vld [vmem:[%s1 + $0x68] sm:$0xf]
  %v30 = vld [vmem:[%s2] sm:$0xff]
  %v31 = vld [vmem:[%s2 + $0x8] sm:$0xff]
  %33 = vset.pattern.permute.xlu0 0
  %34 = vperm.xlu0 %33, %v30
  %v35 = vpop.permute.xlu0 %34
  %38 = vset.pattern.permute.xlu0 0
  %39 = vperm.xlu0 %38, %v31
  %v40 = vpop.permute.xlu0 %39
  %vm42 = vcmask 883712
  %v44 = vsel %vm42, %v14, 0
  %v47 = vsel %vm42, %v15, 0
  %vm49 = vcmask 1043456
  %v51 = vsel %vm49, %v29, 0
  %53 = vmatprep.subr.mxu0 0.0
  %54 = vmatpush1.msra.mxu0 %v16
  %55 = vmatprep.subr.mxu0 0.0
  %56 = vmatpush1.msra.mxu0 %v17
  %57 = vmatprep.subr.mxu0 0.0
  %58 = vmatpush1.msra.mxu0 %v18
  %59 = vmatprep.subr.mxu0 0.0
  %60 = vmatpush1.msra.mxu0 %v19
  %61 = vmatprep.subr.mxu0 0.0
  %62 = vmatpush1.msra.mxu0 %v20
  %63 = vmatprep.subr.mxu0 0.0
  %64 = vmatpush1.msra.mxu0 %v21
  %65 = vmatprep.subr.mxu0 0.0
  %66 = vmatpush1.msra.mxu0 %v22
  %67 = vmatprep.subr.mxu0 0.0
  %68 = vmatpush1.msra.mxu0 %v23
  %69 = vmatprep.subr.mxu0 0.0
  %70 = vmatpush1.msra.mxu0 %v24
  %71 = vmatprep.subr.mxu0 0.0
  %72 = vmatpush1.msra.mxu0 %v25
  %73 = vmatprep.subr.mxu0 0.0
  %74 = vmatpush1.msra.mxu0 %v26
  %75 = vmatprep.subr.mxu0 0.0
  %76 = vmatpush1.msra.mxu0 %v27
  %77 = vmatprep.subr.mxu0 0.0
  %78 = vmatpush1.msra.mxu0 %v28
  %79 = vmatprep.subr.mxu0 0.0
  %80 = vmatpush1.msra.mxu0 %v51
  %81 = vmatprep.subr.mxu0 0.0
  %82 = vmatpush1.msra.mxu0 0.0
  %83 = vmatprep.subr.mxu0 0.0
  %84 = vmatpush1.msra.mxu0 0.0
  %85 = vmatprep.subr.mxu0 0.0
  %86 = vmatpush1.msra.mxu0 0.0
  %87 = vmatprep.subr.mxu0 0.0
  %88 = vmatpush1.msra.mxu0 0.0
  %89 = vmatprep.subr.mxu0 0.0
  %90 = vmatpush1.msra.mxu0 0.0
  %91 = vmatprep.subr.mxu0 0.0
  %92 = vmatpush1.msra.mxu0 0.0
  %93 = vmatprep.subr.mxu0 0.0
  %94 = vmatpush1.msra.mxu0 0.0
  %95 = vmatprep.subr.mxu0 0.0
  %96 = vmatpush1.msra.mxu0 0.0
  %97 = vmatprep.subr.mxu0 0.0
  %98 = vmatpush1.msra.mxu0 0.0
  %99 = vmatprep.subr.mxu0 0.0
  %100 = vmatpush1.msra.mxu0 0.0
  %101 = vmatprep.subr.mxu0 0.0
  %102 = vmatpush1.msra.mxu0 0.0
  %103 = vmatprep.subr.mxu0 0.0
  %104 = vmatpush1.msra.mxu0 0.0
  %105 = vmatprep.subr.mxu0 0.0
  %106 = vmatpush1.msra.mxu0 0.0
  %107 = vmatprep.subr.mxu0 0.0
  %108 = vmatpush1.msra.mxu0 0.0
  %109 = vmatprep.subr.mxu0 0.0
  %110 = vmatpush1.msra.mxu0 0.0
  %111 = vmatprep.subr.mxu0 0.0
  %112 = vmatpush1.msra.mxu0 0.0
  %113 = vmatprep.subr.mxu0 0.0
  %114 = vmatpush1.msra.mxu0 0.0
  %115 = vmatprep.subr.mxu0 0.0
  %116 = vmatpush1.msra.mxu0 0.0
  %117 = vmatprep.mubr.f32.mxu0 0.0
  %118 = vmatmul.mubr.f32.gmra.mrb[0].mxu0 %v44
  %v119 = vpop.f32.mrb[0].mxu0
  %v120 = vadd.f32 %v35, %v119
  %v121 = vpop.f32.mrb[0].mxu0
  %122 = vmatprep.mubr.f32.mxu0 0.0
  %123 = vmatmul.mubr.f32.gmra.mrb[0].mxu0 %v47
  %v124 = vpop.f32.mrb[0].mxu0
  %v125 = vadd.f32 %v40, %v124
  %v126 = vpop.f32.mrb[0].mxu0
  %127 = vdwg.mxu0
  %v128 = vmax.f32 %v120, 0.0
  %v129 = vmax.f32 %v125, 0.0
  %130 = vst [vmem:[%s3] sm:$0xff] %v128
  %131 = vst [vmem:[%s3 + $0x8] sm:$0xff] %v129
  // Predicated region
  $region14: #{_lambda_.18} parent=0 // pred_check
    _
  $region15: #{_lambda_.18} parent=0 // pred_check_branch
    %133 = sbr.rel (0) target = $region17
  $region16: #{_lambda_.18} parent=0 // pred_region
    _
  $region17: #{_lambda_.18} parent=0 // pred_fallthru
    _
  // Predicated region
  $region18: #{_lambda_.18} parent=0 // pred_check
    _
  $region19: #{_lambda_.18} parent=0 // pred_check_branch
    %135 = sbr.rel (0) target = $region21
  $region20: #{_lambda_.18} parent=0 // pred_region
    _
  $region21: #{_lambda_.18} parent=0 // pred_fallthru
    _

// kernel: _lambda_.19
$region0: #{_lambda_.19}
  #allocation0 [shape = 'u32[]', space=smem, size = 0x4, offset = 0x4, fixed_abs, tag = 'smem constant byte address 0x4 - core index']
  #allocation1 [shape = 'u32[144,128]{1,0:T(1,128)}', space=vmem, size = 0x12000, scoped, tag = 'internal scratch']
  %s0 = inlined_call_operand.vmem [shape: f32[3,2,9,16,256], index: 0, kind: input, shape index: {}, may-alias: {0,1}]
  %s1 = inlined_call_operand.vmem [shape: f32[3,2,9,16,256], index: 1, kind: input, shape index: {}, may-alias: {0,1}]
  %s2 = inlined_call_operand.vmem [shape: f32[2,16,256], index: 2, kind: input, shape index: {}]
  %s3 = inlined_call_operand.vmem [shape: f32[3,4,9,144], index: 3, kind: input, shape index: {}]
  %s4 = inlined_call_operand.vmem [shape: f32[3,3,9,1], index: 4, kind: input, shape index: {}]
  %s5 = inlined_call_operand.vmem [shape: f32[3,2,3,16], index: 5, kind: input, shape index: {}]
  %s6 = inlined_call_operand.vmem [shape: f32[3,2,16,3], index: 6, kind: input, shape index: {}]
  %s7 = inlined_call_operand.hbm [shape: f32[3,2,16,256], index: 7, kind: output, shape index: {0}]
  %s8 = inlined_call_operand.vmem [shape: f32[3,2,16,256], index: 8, kind: output, shape index: {1}]
  %9 = xla_tuple %s7, %s8
  %s10 = sld [smem:[#allocation0]]
  $region69: #{_lambda_.19} parent=0
    _
  %s12 = ssub.s32 1, %s10
  %s13 = scalar_select 0, %s12, %s10
  $region1: #{_lambda_.19} parent=0
    #allocation2 [shape = 'u8[32768]{0}', space=vmem, size = 0x8000, scoped, tag = 'output window, operand 0']
    #allocation3 [shape = 's32[2]{0}', space=sflag, size = 0x8, scoped, tag = 'scoped memory for _lambda_.19']
    %14 = vsyncpa [#allocation3], 0
    %s15 = scalar_lea.sflag [#allocation3], 1
    %16 = vsyncpa %s15, 0
    loop: start=0, step=1, limit=8
    $region2: #{_lambda_.19} parent=1 // loop_pre_header
      _
    $region3: #{_lambda_.19} parent=1 // loop_header
      %s18 = sphi 0, %s22
      %p19 = scmp.ge.s32.totalorder %s18, 8
      %s25 = sphi 0, %s37
      %s26 = sphi 0, %s33
      %s27 = sphi 0, %s25
      %s28 = sphi 0, %s26
      %s29 = sphi 0, %s27
      %s30 = sphi 0, %s28
      %s42 = sphi 0, %s44
      %s45 = sphi 0, %s42
      %s46 = sphi 0, %s45
      %s62 = sphi 0, %s46
      %s70 = sphi 0, %s72
      %s73 = sphi 0, %s70
      %s74 = sphi 0, %s73
      %s90 = sphi 0, %s74
      %s96 = sphi 0, %s98
      %s99 = sphi 0, %s96
      %s100 = sphi 0, %s99
      %s116 = sphi 0, %s100
      %s122 = sphi 0, %s124
      %s125 = sphi 0, %s122
      %s126 = sphi 0, %s125
      %s142 = sphi 0, %s126
      %s148 = sphi 0, %s150
      %s151 = sphi 0, %s148
      %s152 = sphi 0, %s151
      %s168 = sphi 0, %s152
      %s176 = sphi 0, %s178
      %s179 = sphi 0, %s176
      %s180 = sphi 0, %s179
      %s196 = sphi 0, %s180
      %s204 = sphi 0, %s206
      %s207 = sphi 0, %s204
      %s208 = sphi 0, %s207
      %s224 = sphi 0, %s208
      %s232 = sphi 0, %s234
      %s235 = sphi 0, %s232
      %s236 = sphi 0, %s235
      %s252 = sphi 0, %s236
      %s260 = sphi 0, %s262
      %s263 = sphi 0, %s260
      %s264 = sphi 0, %s263
      %s280 = sphi 0, %s264
    $region4: #{_lambda_.19} parent=1 // loop_header_branch
      %21 = sbr.rel (%p19) target = $region8
    $region5: #{_lambda_.19} parent=1 // loop_body
      %s23 = ssub.s32 %s18, 1
      %s24 = ssub.s32 %s18, 2
      %s31 = sadd.s32 1, %s26
      %p32 = scmp.ge.s32.totalorder %s31, 2
      %s33 = scalar_select %p32, 0, %s31
      %s34 = sadd.s32 1, %s25
      %s35 = scalar_select %p32, %s34, %s25
      %p36 = scmp.ge.s32.totalorder %s35, 3
      %s37 = scalar_select %p36, 0, %s35
      %s38 = ssub.s32 %s25, %s37
      %s39 = ssub.s32 %s26, %s33
      %s40 = sor.u32 %s38, %s39
      %p41 = scmp.eq.s32.totalorder %s40, 0
      %s43 = sadd.s32 %s42, 1
      %s44 = scalar_select %p41, %s42, %s43
      %p47 = pneg %p41
      %p48 = scmp.eq.s32.totalorder %s18, 5
      %p49 = por %p47, %p48
      %p50 = scmp.ne.s32.totalorder %s42, %s45
      %p51 = scmp.eq.s32.totalorder %s18, 0
      %p52 = por %p50, %p51
      %p53 = scmp.ne.s32.totalorder %s42, %s45
      %p54 = scmp.eq.s32.totalorder %s23, 5
      %p55 = por %p53, %p54
      %p56 = scmp.ne.s32.totalorder %s45, %s46
      %p57 = scmp.eq.s32.totalorder %s23, 0
      %p58 = por %p56, %p57
      %p59 = scmp.ne.s32.totalorder %s45, %s46
      %p60 = scmp.eq.s32.totalorder %s24, 5
      %p61 = por %p59, %p60
      %p63 = scmp.ne.s32.totalorder %s46, %s62
      %p64 = scmp.eq.s32.totalorder %s24, 0
      %p65 = por %p63, %p64
      %s66 = ssub.s32 %s25, %s37
      %s67 = ssub.s32 %s26, %s33
      %s68 = sor.u32 %s66, %s67
      %p69 = scmp.eq.s32.totalorder %s68, 0
      %s71 = sadd.s32 %s70, 1
      %s72 = scalar_select %p69, %s70, %s71
      %p75 = pneg %p69
      %p76 = scmp.eq.s32.totalorder %s18, 5
      %p77 = por %p75, %p76
      %p78 = scmp.ne.s32.totalorder %s70, %s73
      %p79 = scmp.eq.s32.totalorder %s18, 0
      %p80 = por %p78, %p79
      %p81 = scmp.ne.s32.totalorder %s70, %s73
      %p82 = scmp.eq.s32.totalorder %s23, 5
      %p83 = por %p81, %p82
      %p84 = scmp.ne.s32.totalorder %s73, %s74
      %p85 = scmp.eq.s32.totalorder %s23, 0
      %p86 = por %p84, %p85
      %p87 = scmp.ne.s32.totalorder %s73, %s74
      %p88 = scmp.eq.s32.totalorder %s24, 5
      %p89 = por %p87, %p88
      %p91 = scmp.ne.s32.totalorder %s74, %s90
      %p92 = scmp.eq.s32.totalorder %s24, 0
      %p93 = por %p91, %p92
      %s94 = ssub.s32 %s26, %s33
      %p95 = scmp.eq.s32.totalorder %s94, 0
      %s97 = sadd.s32 %s96, 1
      %s98 = scalar_select %p95, %s96, %s97
      %p101 = pneg %p95
      %p102 = scmp.eq.s32.totalorder %s18, 5
      %p103 = por %p101, %p102
      %p104 = scmp.ne.s32.totalorder %s96, %s99
      %p105 = scmp.eq.s32.totalorder %s18, 0
      %p106 = por %p104, %p105
      %p107 = scmp.ne.s32.totalorder %s96, %s99
      %p108 = scmp.eq.s32.totalorder %s23, 5
      %p109 = por %p107, %p108
      %p110 = scmp.ne.s32.totalorder %s99, %s100
      %p111 = scmp.eq.s32.totalorder %s23, 0
      %p112 = por %p110, %p111
      %p113 = scmp.ne.s32.totalorder %s99, %s100
      %p114 = scmp.eq.s32.totalorder %s24, 5
      %p115 = por %p113, %p114
      %p117 = scmp.ne.s32.totalorder %s100, %s116
      %p118 = scmp.eq.s32.totalorder %s24, 0
      %p119 = por %p117, %p118
      %s120 = ssub.s32 %s25, %s37
      %p121 = scmp.eq.s32.totalorder %s120, 0
      %s123 = sadd.s32 %s122, 1
      %s124 = scalar_select %p121, %s122, %s123
      %p127 = pneg %p121
      %p128 = scmp.eq.s32.totalorder %s18, 5
      %p129 = por %p127, %p128
      %p130 = scmp.ne.s32.totalorder %s122, %s125
      %p131 = scmp.eq.s32.totalorder %s18, 0
      %p132 = por %p130, %p131
      %p133 = scmp.ne.s32.totalorder %s122, %s125
      %p134 = scmp.eq.s32.totalorder %s23, 5
      %p135 = por %p133, %p134
      %p136 = scmp.ne.s32.totalorder %s125, %s126
      %p137 = scmp.eq.s32.totalorder %s23, 0
      %p138 = por %p136, %p137
      %p139 = scmp.ne.s32.totalorder %s125, %s126
      %p140 = scmp.eq.s32.totalorder %s24, 5
      %p141 = por %p139, %p140
      %p143 = scmp.ne.s32.totalorder %s126, %s142
      %p144 = scmp.eq.s32.totalorder %s24, 0
      %p145 = por %p143, %p144
      %s146 = ssub.s32 %s25, %s37
      %p147 = scmp.eq.s32.totalorder %s146, 0
      %s149 = sadd.s32 %s148, 1
      %s150 = scalar_select %p147, %s148, %s149
      %p153 = pneg %p147
      %p154 = scmp.eq.s32.totalorder %s18, 5
      %p155 = por %p153, %p154
      %p156 = scmp.ne.s32.totalorder %s148, %s151
      %p157 = scmp.eq.s32.totalorder %s18, 0
      %p158 = por %p156, %p157
      %p159 = scmp.ne.s32.totalorder %s148, %s151
      %p160 = scmp.eq.s32.totalorder %s23, 5
      %p161 = por %p159, %p160
      %p162 = scmp.ne.s32.totalorder %s151, %s152
      %p163 = scmp.eq.s32.totalorder %s23, 0
      %p164 = por %p162, %p163
      %p165 = scmp.ne.s32.totalorder %s151, %s152
      %p166 = scmp.eq.s32.totalorder %s24, 5
      %p167 = por %p165, %p166
      %p169 = scmp.ne.s32.totalorder %s152, %s168
      %p170 = scmp.eq.s32.totalorder %s24, 0
      %p171 = por %p169, %p170
      %s172 = ssub.s32 %s25, %s37
      %s173 = ssub.s32 %s26, %s33
      %s174 = sor.u32 %s172, %s173
      %p175 = scmp.eq.s32.totalorder %s174, 0
      %s177 = sadd.s32 %s176, 1
      %s178 = scalar_select %p175, %s176, %s177
      %p181 = pneg %p175
      %p182 = scmp.eq.s32.totalorder %s18, 5
      %p183 = por %p181, %p182
      %p184 = scmp.ne.s32.totalorder %s176, %s179
      %p185 = scmp.eq.s32.totalorder %s18, 0
      %p186 = por %p184, %p185
      %p187 = scmp.ne.s32.totalorder %s176, %s179
      %p188 = scmp.eq.s32.totalorder %s23, 5
      %p189 = por %p187, %p188
      %p190 = scmp.ne.s32.totalorder %s179, %s180
      %p191 = scmp.eq.s32.totalorder %s23, 0
      %p192 = por %p190, %p191
      %p193 = scmp.ne.s32.totalorder %s179, %s180
      %p194 = scmp.eq.s32.totalorder %s24, 5
      %p195 = por %p193, %p194
      %p197 = scmp.ne.s32.totalorder %s180, %s196
      %p198 = scmp.eq.s32.totalorder %s24, 0
      %p199 = por %p197, %p198
      %s200 = ssub.s32 %s25, %s37
      %s201 = ssub.s32 %s26, %s33
      %s202 = sor.u32 %s200, %s201
      %p203 = scmp.eq.s32.totalorder %s202, 0
      %s205 = sadd.s32 %s204, 1
      %s206 = scalar_select %p203, %s204, %s205
      %p209 = pneg %p203
      %p210 = scmp.eq.s32.totalorder %s18, 5
      %p211 = por %p209, %p210
      %p212 = scmp.ne.s32.totalorder %s204, %s207
      %p213 = scmp.eq.s32.totalorder %s18, 0
      %p214 = por %p212, %p213
      %p215 = scmp.ne.s32.totalorder %s204, %s207
      %p216 = scmp.eq.s32.totalorder %s23, 5
      %p217 = por %p215, %p216
      %p218 = scmp.ne.s32.totalorder %s207, %s208
      %p219 = scmp.eq.s32.totalorder %s23, 0
      %p220 = por %p218, %p219
      %p221 = scmp.ne.s32.totalorder %s207, %s208
      %p222 = scmp.eq.s32.totalorder %s24, 5
      %p223 = por %p221, %p222
      %p225 = scmp.ne.s32.totalorder %s208, %s224
      %p226 = scmp.eq.s32.totalorder %s24, 0
      %p227 = por %p225, %p226
      %s228 = ssub.s32 %s25, %s37
      %s229 = ssub.s32 %s26, %s33
      %s230 = sor.u32 %s228, %s229
      %p231 = scmp.eq.s32.totalorder %s230, 0
      %s233 = sadd.s32 %s232, 1
      %s234 = scalar_select %p231, %s232, %s233
      %p237 = pneg %p231
      %p238 = scmp.eq.s32.totalorder %s18, 5
      %p239 = por %p237, %p238
      %p240 = scmp.ne.s32.totalorder %s232, %s235
      %p241 = scmp.eq.s32.totalorder %s18, 0
      %p242 = por %p240, %p241
      %p243 = scmp.ne.s32.totalorder %s232, %s235
      %p244 = scmp.eq.s32.totalorder %s23, 5
      %p245 = por %p243, %p244
      %p246 = scmp.ne.s32.totalorder %s235, %s236
      %p247 = scmp.eq.s32.totalorder %s23, 0
      %p248 = por %p246, %p247
      %p249 = scmp.ne.s32.totalorder %s235, %s236
      %p250 = scmp.eq.s32.totalorder %s24, 5
      %p251 = por %p249, %p250
      %p253 = scmp.ne.s32.totalorder %s236, %s252
      %p254 = scmp.eq.s32.totalorder %s24, 0
      %p255 = por %p253, %p254
      %s256 = ssub.s32 %s25, %s37
      %s257 = ssub.s32 %s26, %s33
      %s258 = sor.u32 %s256, %s257
      %p259 = scmp.eq.s32.totalorder %s258, 0
      %s261 = sadd.s32 %s260, 1
      %s262 = scalar_select %p259, %s260, %s261
      %p265 = pneg %p259
      %p266 = scmp.eq.s32.totalorder %s18, 5
      %p267 = por %p265, %p266
      %p268 = scmp.ne.s32.totalorder %s260, %s263
      %p269 = scmp.eq.s32.totalorder %s18, 0
      %p270 = por %p268, %p269
      %p271 = scmp.ne.s32.totalorder %s260, %s263
      %p272 = scmp.eq.s32.totalorder %s23, 5
      %p273 = por %p271, %p272
      %p274 = scmp.ne.s32.totalorder %s263, %s264
      %p275 = scmp.eq.s32.totalorder %s23, 0
      %p276 = por %p274, %p275
      %p277 = scmp.ne.s32.totalorder %s263, %s264
      %p278 = scmp.eq.s32.totalorder %s24, 5
      %p279 = por %p277, %p278
      %p281 = scmp.ne.s32.totalorder %s264, %s280
      %p282 = scmp.eq.s32.totalorder %s24, 0
      %p283 = por %p281, %p282
      %p284 = scmp.le.s32.totalorder 1, %s18
      %p285 = scmp.lt.s32.totalorder %s18, 7
      %p286 = pnand %p284, %p285
      %p287 = pneg %p286
      // Predicated region
      $region9: #{_lambda_.19} parent=5 // pred_check
        _
      $region10: #{_lambda_.19} parent=5 // pred_check_branch
        %289 = sbr.rel (%p286) target = $region12
      $region11: #{_lambda_.19} parent=5 // pred_region
        %s290 = ssub.s32 %s18, 1
      $region12: #{_lambda_.19} parent=5 // pred_fallthru
        _
      %p291 = scmp.lt.s32.totalorder %s18, 6
      // Predicated region
      $region13: #{_lambda_.19} parent=5 // pred_check
        %p292 = pneg %p291
      $region14: #{_lambda_.19} parent=5 // pred_check_branch
        %294 = sbr.rel (%p292) target = $region16
      $region15: #{_lambda_.19} parent=5 // pred_region
        // Predicated region
        $region17: #{_lambda_.19} parent=15 // pred_check
          %p295 = pneg %p52
        $region18: #{_lambda_.19} parent=15 // pred_check_branch
          %297 = sbr.rel (%p295) target = $region20
        $region19: #{_lambda_.19} parent=15 // pred_region
          %p298 = scmp.lt.s32.totalorder %s25, 2
          %s299 = scalar_select %p298, %s25, 2
          %p300 = scmp.lt.s32.totalorder %s26, 1
          %s301 = scalar_select %p300, %s26, 1
          %s302 = smul.addr %s301, 36
          %s303 = smul.addr %s299, 72
          %s304 = sadd.s32 %s302, %s303
          %s305 = smul.addr %s304, 8
          %s306 = scalar_lea.vmem %s0, %s305
        $region20: #{_lambda_.19} parent=15 // pred_fallthru
          _
        // Predicated region
        $region21: #{_lambda_.19} parent=15 // pred_check
          %p307 = pneg %p80
        $region22: #{_lambda_.19} parent=15 // pred_check_branch
          %309 = sbr.rel (%p307) target = $region24
        $region23: #{_lambda_.19} parent=15 // pred_region
          %p310 = scmp.lt.s32.totalorder %s25, 2
          %s311 = scalar_select %p310, %s25, 2
          %p312 = scmp.lt.s32.totalorder %s26, 1
          %s313 = scalar_select %p312, %s26, 1
          %s314 = smul.addr %s313, 36
          %s315 = smul.addr %s311, 72
          %s316 = sadd.s32 %s314, %s315
          %s317 = smul.addr %s316, 8
          %s318 = scalar_lea.vmem %s1, %s317
        $region24: #{_lambda_.19} parent=15 // pred_fallthru
          _
        // Predicated region
        $region25: #{_lambda_.19} parent=15 // pred_check
          %p319 = pneg %p106
        $region26: #{_lambda_.19} parent=15 // pred_check_branch
          %321 = sbr.rel (%p319) target = $region28
        $region27: #{_lambda_.19} parent=15 // pred_region
          %p322 = scmp.lt.s32.totalorder %s26, 1
          %s323 = scalar_select %p322, %s26, 1
          %s324 = smul.addr %s323, 4
          %s325 = smul.addr %s324, 8
          %s326 = scalar_lea.vmem %s2, %s325
        $region28: #{_lambda_.19} parent=15 // pred_fallthru
          _
        // Predicated region
        $region29: #{_lambda_.19} parent=15 // pred_check
          %p327 = pneg %p132
        $region30: #{_lambda_.19} parent=15 // pred_check_branch
          %329 = sbr.rel (%p327) target = $region32
        $region31: #{_lambda_.19} parent=15 // pred_region
          %p330 = scmp.lt.s32.totalorder %s25, 2
          %s331 = scalar_select %p330, %s25, 2
          %s332 = smul.addr %s331, 16
          %s333 = smul.addr %s332, 8
          %s334 = scalar_lea.vmem %s3, %s333
        $region32: #{_lambda_.19} parent=15 // pred_fallthru
          _
        // Predicated region
        $region33: #{_lambda_.19} parent=15 // pred_check
          %p335 = pneg %p158
        $region34: #{_lambda_.19} parent=15 // pred_check_branch
          %337 = sbr.rel (%p335) target = $region36
        $region35: #{_lambda_.19} parent=15 // pred_region
          %p338 = scmp.lt.s32.totalorder %s25, 2
          %s339 = scalar_select %p338, %s25, 2
          %s340 = smul.addr %s339, 6
          %s341 = smul.addr %s340, 8
          %s342 = scalar_lea.vmem %s4, %s341
        $region36: #{_lambda_.19} parent=15 // pred_fallthru
          _
        // Predicated region
        $region37: #{_lambda_.19} parent=15 // pred_check
          %p343 = pneg %p186
        $region38: #{_lambda_.19} parent=15 // pred_check_branch
          %345 = sbr.rel (%p343) target = $region40
        $region39: #{_lambda_.19} parent=15 // pred_region
          %p346 = scmp.lt.s32.totalorder %s25, 2
          %s347 = scalar_select %p346, %s25, 2
          %p348 = scmp.lt.s32.totalorder %s26, 1
          %s349 = scalar_select %p348, %s26, 1
          %s350 = smul.addr %s347, 2
          %s351 = sadd.s32 %s349, %s350
          %s352 = smul.addr %s351, 4
          %s353 = scalar_lea.vmem %s5, %s352
        $region40: #{_lambda_.19} parent=15 // pred_fallthru
          _
        // Predicated region
        $region41: #{_lambda_.19} parent=15 // pred_check
          %p354 = pneg %p214
        $region42: #{_lambda_.19} parent=15 // pred_check_branch
          %356 = sbr.rel (%p354) target = $region44
        $region43: #{_lambda_.19} parent=15 // pred_region
          %p357 = scmp.lt.s32.totalorder %s25, 2
          %s358 = scalar_select %p357, %s25, 2
          %p359 = scmp.lt.s32.totalorder %s26, 1
          %s360 = scalar_select %p359, %s26, 1
          %s361 = smul.addr %s360, 2
          %s362 = smul.addr %s358, 4
          %s363 = sadd.s32 %s361, %s362
          %s364 = smul.addr %s363, 8
          %s365 = scalar_lea.vmem %s6, %s364
        $region44: #{_lambda_.19} parent=15 // pred_fallthru
          _
      $region16: #{_lambda_.19} parent=5 // pred_fallthru
        _
      %p366 = scmp.le.s32.totalorder 1, %s18
      %p367 = scmp.lt.s32.totalorder %s18, 7
      %p368 = pnand %p366, %p367
      %p369 = pneg %p368
      // Predicated region
      $region45: #{_lambda_.19} parent=5 // pred_check
        _
      $region46: #{_lambda_.19} parent=5 // pred_check_branch
        %371 = sbr.rel (%p368) target = $region48
      $region47: #{_lambda_.19} parent=5 // pred_region
        %s372 = ssub.s32 %s18, 1
        %p373 = scmp.lt.s32.totalorder %s27, 2
        %s374 = scalar_select %p373, %s27, 2
        %p375 = scmp.lt.s32.totalorder %s28, 1
        %s376 = scalar_select %p375, %s28, 1
        %s377 = smul.addr %s376, 36
        %s378 = smul.addr %s374, 72
        %s379 = sadd.s32 %s377, %s378
        %s380 = smul.addr %s379, 8
        %s381 = scalar_lea.vmem %s0, %s380
        %p382 = pneg %p58
        %p383 = pneg %p55
        %p384 = scmp.lt.s32.totalorder %s27, 2
        %s385 = scalar_select %p384, %s27, 2
        %p386 = scmp.lt.s32.totalorder %s28, 1
        %s387 = scalar_select %p386, %s28, 1
        %s388 = smul.addr %s387, 36
        %s389 = smul.addr %s385, 72
        %s390 = sadd.s32 %s388, %s389
        %s391 = smul.addr %s390, 8
        %s392 = scalar_lea.vmem %s1, %s391
        %p393 = pneg %p86
        %p394 = pneg %p83
        %p395 = scmp.lt.s32.totalorder %s28, 1
        %s396 = scalar_select %p395, %s28, 1
        %s397 = smul.addr %s396, 4
        %s398 = smul.addr %s397, 8
        %s399 = scalar_lea.vmem %s2, %s398
        %p400 = pneg %p112
        %p401 = pneg %p109
        %p402 = scmp.lt.s32.totalorder %s27, 2
        %s403 = scalar_select %p402, %s27, 2
        %s404 = smul.addr %s403, 16
        %s405 = smul.addr %s404, 8
        %s406 = scalar_lea.vmem %s3, %s405
        %p407 = pneg %p138
        %p408 = pneg %p135
        %p409 = scmp.lt.s32.totalorder %s27, 2
        %s410 = scalar_select %p409, %s27, 2
        %s411 = smul.addr %s410, 6
        %s412 = smul.addr %s411, 8
        %s413 = scalar_lea.vmem %s4, %s412
        %p414 = pneg %p164
        %p415 = pneg %p161
        %p416 = scmp.lt.s32.totalorder %s27, 2
        %s417 = scalar_select %p416, %s27, 2
        %p418 = scmp.lt.s32.totalorder %s28, 1
        %s419 = scalar_select %p418, %s28, 1
        %s420 = smul.addr %s417, 2
        %s421 = sadd.s32 %s419, %s420
        %s422 = smul.addr %s421, 4
        %s423 = scalar_lea.vmem %s5, %s422
        %p424 = pneg %p192
        %p425 = pneg %p189
        %p426 = scmp.lt.s32.totalorder %s27, 2
        %s427 = scalar_select %p426, %s27, 2
        %p428 = scmp.lt.s32.totalorder %s28, 1
        %s429 = scalar_select %p428, %s28, 1
        %s430 = smul.addr %s429, 2
        %s431 = smul.addr %s427, 4
        %s432 = sadd.s32 %s430, %s431
        %s433 = smul.addr %s432, 8
        %s434 = scalar_lea.vmem %s6, %s433
        %p435 = pneg %p220
        %p436 = pneg %p217
        %p437 = pneg %p248
        %p438 = pneg %p245
        %s439 = sand.u32 %s235, 1
        %s440 = scalar_lea.sflag [#allocation3], %s439
        %s441 = sand.u32 %s235, 1
        %s442 = smul.addr %s441, 32
        %s443 = scalar_lea.vmem [#allocation2], %s442
        %p444 = pneg %p276
        %p445 = pneg %p273
        %p446 = scmp.lt.s32.totalorder %s27, 2
        %s447 = scalar_select %p446, %s27, 2
        %p448 = scmp.lt.s32.totalorder %s28, 1
        %s449 = scalar_select %p448, %s28, 1
        %s450 = smul.addr %s449, 4
        %s451 = smul.addr %s447, 8
        %s452 = sadd.s32 %s450, %s451
        %s453 = smul.addr %s452, 8
        %s454 = scalar_lea.vmem %s8, %s453
        %p455 = scmp.lt.s32.totalorder %s27, 2
        %s456 = scalar_select %p455, %s27, 2
        %p457 = scmp.lt.s32.totalorder %s28, 1
        %s458 = scalar_select %p457, %s28, 1
        %s459 = smul.addr %s458, 36
        %s460 = smul.addr %s456, 72
        %s461 = sadd.s32 %s459, %s460
        %s462 = smul.addr %s461, 8
        %s463 = scalar_lea.vmem %s0, %s462
        %p464 = scmp.lt.s32.totalorder %s27, 2
        %s465 = scalar_select %p464, %s27, 2
        %p466 = scmp.lt.s32.totalorder %s28, 1
        %s467 = scalar_select %p466, %s28, 1
        %s468 = smul.addr %s467, 36
        %s469 = smul.addr %s465, 72
        %s470 = sadd.s32 %s468, %s469
        %s471 = smul.addr %s470, 8
        %s472 = scalar_lea.vmem %s1, %s471
        %p473 = scmp.lt.s32.totalorder %s28, 1
        %s474 = scalar_select %p473, %s28, 1
        %s475 = smul.addr %s474, 4
        %s476 = smul.addr %s475, 8
        %s477 = scalar_lea.vmem %s2, %s476
        %p478 = scmp.lt.s32.totalorder %s27, 2
        %s479 = scalar_select %p478, %s27, 2
        %s480 = smul.addr %s479, 16
        %s481 = smul.addr %s480, 8
        %s482 = scalar_lea.vmem %s3, %s481
        %p483 = scmp.lt.s32.totalorder %s27, 2
        %s484 = scalar_select %p483, %s27, 2
        %s485 = smul.addr %s484, 6
        %s486 = smul.addr %s485, 8
        %s487 = scalar_lea.vmem %s4, %s486
        %p488 = scmp.lt.s32.totalorder %s27, 2
        %s489 = scalar_select %p488, %s27, 2
        %p490 = scmp.lt.s32.totalorder %s28, 1
        %s491 = scalar_select %p490, %s28, 1
        %s492 = smul.addr %s489, 2
        %s493 = sadd.s32 %s491, %s492
        %s494 = smul.addr %s493, 4
        %s495 = scalar_lea.vmem %s5, %s494
        %p496 = scmp.lt.s32.totalorder %s27, 2
        %s497 = scalar_select %p496, %s27, 2
        %p498 = scmp.lt.s32.totalorder %s28, 1
        %s499 = scalar_select %p498, %s28, 1
        %s500 = smul.addr %s499, 2
        %s501 = smul.addr %s497, 4
        %s502 = sadd.s32 %s500, %s501
        %s503 = smul.addr %s502, 8
        %s504 = scalar_lea.vmem %s6, %s503
        %p505 = scmp.lt.s32.totalorder %s27, 2
        %s506 = scalar_select %p505, %s27, 2
        %p507 = scmp.lt.s32.totalorder %s28, 1
        %s508 = scalar_select %p507, %s28, 1
        %s509 = smul.addr %s508, 4
        %s510 = smul.addr %s506, 8
        %s511 = sadd.s32 %s509, %s510
        %s512 = smul.addr %s511, 8
        %s513 = scalar_lea.vmem %s8, %s512
        %v514 = vld [vmem:[%s463] sm:$0xff]
        %v515 = vld [vmem:[%s463 + $0x8] sm:$0xff]
        %v516 = vld [vmem:[%s463 + $0x10] sm:$0xff]
        %v517 = vld [vmem:[%s463 + $0x18] sm:$0xff]
        %v518 = vld [vmem:[%s463 + $0x20] sm:$0xff]
        %v519 = vld [vmem:[%s463 + $0x28] sm:$0xff]
        %v520 = vld [vmem:[%s463 + $0x30] sm:$0xff]
        %v521 = vld [vmem:[%s463 + $0x38] sm:$0xff]
        %v522 = vld [vmem:[%s463 + $0x40] sm:$0xff]
        %v523 = vld [vmem:[%s463 + $0x48] sm:$0xff]
        %v524 = vld [vmem:[%s463 + $0x50] sm:$0xff]
        %v525 = vld [vmem:[%s463 + $0x58] sm:$0xff]
        %v526 = vld [vmem:[%s463 + $0x60] sm:$0xff]
        %v527 = vld [vmem:[%s463 + $0x68] sm:$0xff]
        %v528 = vld [vmem:[%s463 + $0x70] sm:$0xff]
        %v529 = vld [vmem:[%s463 + $0x78] sm:$0xff]
        %v530 = vld [vmem:[%s463 + $0x80] sm:$0xff]
        %v531 = vld [vmem:[%s463 + $0x88] sm:$0xff]
        %v532 = vld [vmem:[%s463 + $0x90] sm:$0xff]
        %v533 = vld [vmem:[%s463 + $0x98] sm:$0xff]
        %v534 = vld [vmem:[%s463 + $0xa0] sm:$0xff]
        %v535 = vld [vmem:[%s463 + $0xa8] sm:$0xff]
        %v536 = vld [vmem:[%s463 + $0xb0] sm:$0xff]
        %v537 = vld [vmem:[%s463 + $0xb8] sm:$0xff]
        %v538 = vld [vmem:[%s463 + $0xc0] sm:$0xff]
        %v539 = vld [vmem:[%s463 + $0xc8] sm:$0xff]
        %v540 = vld [vmem:[%s463 + $0xd0] sm:$0xff]
        %v541 = vld [vmem:[%s463 + $0xd8] sm:$0xff]
        %v542 = vld [vmem:[%s463 + $0xe0] sm:$0xff]
        %v543 = vld [vmem:[%s463 + $0xe8] sm:$0xff]
        %v544 = vld [vmem:[%s463 + $0xf0] sm:$0xff]
        %v545 = vld [vmem:[%s463 + $0xf8] sm:$0xff]
        %v546 = vld [vmem:[%s463 + $0x100] sm:$0xff]
        %v547 = vld [vmem:[%s463 + $0x108] sm:$0xff]
        %v548 = vld [vmem:[%s463 + $0x110] sm:$0xff]
        %v549 = vld [vmem:[%s463 + $0x118] sm:$0xff]
        %v550 = vld [vmem:[%s472] sm:$0xff]
        %v551 = vld [vmem:[%s472 + $0x8] sm:$0xff]
        %v552 = vld [vmem:[%s472 + $0x10] sm:$0xff]
        %v553 = vld [vmem:[%s472 + $0x18] sm:$0xff]
        %v554 = vld [vmem:[%s472 + $0x20] sm:$0xff]
        %v555 = vld [vmem:[%s472 + $0x28] sm:$0xff]
        %v556 = vld [vmem:[%s472 + $0x30] sm:$0xff]
        %v557 = vld [vmem:[%s472 + $0x38] sm:$0xff]
        %v558 = vld [vmem:[%s472 + $0x40] sm:$0xff]
        %v559 = vld [vmem:[%s472 + $0x48] sm:$0xff]
        %v560 = vld [vmem:[%s472 + $0x50] sm:$0xff]
        %v561 = vld [vmem:[%s472 + $0x58] sm:$0xff]
        %v562 = vld [vmem:[%s472 + $0x60] sm:$0xff]
        %v563 = vld [vmem:[%s472 + $0x68] sm:$0xff]
        %v564 = vld [vmem:[%s472 + $0x70] sm:$0xff]
        %v565 = vld [vmem:[%s472 + $0x78] sm:$0xff]
        %v566 = vld [vmem:[%s472 + $0x80] sm:$0xff]
        %v567 = vld [vmem:[%s472 + $0x88] sm:$0xff]
        %v568 = vld [vmem:[%s472 + $0x90] sm:$0xff]
        %v569 = vld [vmem:[%s472 + $0x98] sm:$0xff]
        %v570 = vld [vmem:[%s472 + $0xa0] sm:$0xff]
        %v571 = vld [vmem:[%s472 + $0xa8] sm:$0xff]
        %v572 = vld [vmem:[%s472 + $0xb0] sm:$0xff]
        %v573 = vld [vmem:[%s472 + $0xb8] sm:$0xff]
        %v574 = vld [vmem:[%s472 + $0xc0] sm:$0xff]
        %v575 = vld [vmem:[%s472 + $0xc8] sm:$0xff]
        %v576 = vld [vmem:[%s472 + $0xd0] sm:$0xff]
        %v577 = vld [vmem:[%s472 + $0xd8] sm:$0xff]
        %v578 = vld [vmem:[%s472 + $0xe0] sm:$0xff]
        %v579 = vld [vmem:[%s472 + $0xe8] sm:$0xff]
        %v580 = vld [vmem:[%s472 + $0xf0] sm:$0xff]
        %v581 = vld [vmem:[%s472 + $0xf8] sm:$0xff]
        %v582 = vld [vmem:[%s472 + $0x100] sm:$0xff]
        %v583 = vld [vmem:[%s472 + $0x108] sm:$0xff]
        %v584 = vld [vmem:[%s472 + $0x110] sm:$0xff]
        %v585 = vld [vmem:[%s472 + $0x118] sm:$0xff]
        %v586 = vld [vmem:[%s477] sm:$0xff]
        %v587 = vld [vmem:[%s477 + $0x8] sm:$0xff]
        %v588 = vld [vmem:[%s477 + $0x10] sm:$0xff]
        %v589 = vld [vmem:[%s477 + $0x18] sm:$0xff]
        %v590 = vld [vmem:[%s482] sm:$0xff]
        %v591 = vld [vmem:[%s482 + $0x8] sm:$0xff]
        %v592 = vld [vmem:[%s482 + $0x10] sm:$0x1]
        %v593 = vld [vmem:[%s482 + $0x18] sm:$0x1]
        %s594 = scalar_lea.vmem %s482, 32
        %v595 = vld [vmem:[%s594] sm:$0xff]
        %v596 = vld [vmem:[%s594 + $0x8] sm:$0xff]
        %v597 = vld [vmem:[%s594 + $0x10] sm:$0x1]
        %v598 = vld [vmem:[%s594 + $0x18] sm:$0x1]
        %vm599 = vcmask 130048
        %v601 = vsel %vm599, %v596, 0
        %v604 = vsel %vm599, %v598, 0
        %606 = vmatprep.subr.mxu0 %v551
        %607 = vmatpush1.msra.mxu0 %v550
        %608 = vmatprep.subr.mxu0 %v553
        %609 = vmatpush1.msra.mxu0 %v552
        %610 = vmatprep.subr.mxu0 %v555
        %611 = vmatpush1.msra.mxu0 %v554
        %612 = vmatprep.subr.mxu0 %v557
        %613 = vmatpush1.msra.mxu0 %v556
        %614 = vmatprep.subr.mxu0 %v559
        %615 = vmatpush1.msra.mxu0 %v558
        %616 = vmatprep.subr.mxu0 %v561
        %617 = vmatpush1.msra.mxu0 %v560
        %618 = vmatprep.subr.mxu0 %v563
        %619 = vmatpush1.msra.mxu0 %v562
        %620 = vmatprep.subr.mxu0 %v565
        %621 = vmatpush1.msra.mxu0 %v564
        %622 = vmatprep.subr.mxu0 %v567
        %623 = vmatpush1.msra.mxu0 %v566
        %624 = vmatprep.subr.mxu0 %v569
        %625 = vmatpush1.msra.mxu0 %v568
        %626 = vmatprep.subr.mxu0 %v571
        %627 = vmatpush1.msra.mxu0 %v570
        %628 = vmatprep.subr.mxu0 %v573
        %629 = vmatpush1.msra.mxu0 %v572
        %630 = vmatprep.subr.mxu0 %v575
        %631 = vmatpush1.msra.mxu0 %v574
        %632 = vmatprep.subr.mxu0 %v577
        %633 = vmatpush1.msra.mxu0 %v576
        %634 = vmatprep.subr.mxu0 %v579
        %635 = vmatpush1.msra.mxu0 %v578
        %636 = vmatprep.subr.mxu0 %v581
        %637 = vmatpush1.msra.mxu0 %v580
        %638 = vmatprep.subr.mxu0 %v583
        %639 = vmatpush1.msra.mxu0 %v582
        %640 = vmatprep.subr.mxu0 %v585
        %641 = vmatpush1.msra.mxu0 %v584
        %642 = vmatprep.subr.mxu0 0.0
        %643 = vmatpush1.msra.mxu0 0.0
        %644 = vmatprep.subr.mxu0 0.0
        %645 = vmatpush1.msra.mxu0 0.0
        %646 = vmatprep.subr.mxu0 0.0
        %647 = vmatpush1.msra.mxu0 0.0
        %648 = vmatprep.subr.mxu0 0.0
        %649 = vmatpush1.msra.mxu0 0.0
        %650 = vmatprep.subr.mxu0 0.0
        %651 = vmatpush1.msra.mxu0 0.0
        %652 = vmatprep.subr.mxu0 0.0
        %653 = vmatpush1.msra.mxu0 0.0
        %654 = vmatprep.subr.mxu0 0.0
        %655 = vmatpush1.msra.mxu0 0.0
        %656 = vmatprep.subr.mxu0 0.0
        %657 = vmatpush1.msra.mxu0 0.0
        %658 = vmatprep.subr.mxu0 0.0
        %659 = vmatpush1.msra.mxu0 0.0
        %660 = vmatprep.subr.mxu0 0.0
        %661 = vmatpush1.msra.mxu0 0.0
        %662 = vmatprep.subr.mxu0 0.0
        %663 = vmatpush1.msra.mxu0 0.0
        %664 = vmatprep.subr.mxu0 0.0
        %665 = vmatpush1.msra.mxu0 0.0
        %666 = vmatprep.subr.mxu0 0.0
        %667 = vmatpush1.msra.mxu0 0.0
        %668 = vmatprep.subr.mxu0 0.0
        %669 = vmatpush1.msra.mxu0 0.0
        %670 = vmatprep.mubr.f32.mxu0 %v601
        %671 = vmatmul.mubr.f32.gmra.mrb[0].mxu0 %v595
        %v672 = vpop.f32.mrb[0].mxu0
        %v673 = vadd.f32 0.0, %v672
        %v674 = vpop.f32.mrb[0].mxu0
        %v675 = vadd.f32 0.0, %v674
        %676 = vmatprep.mubr.f32.mxu0 %v604
        %677 = vmatmul.mubr.f32.gmra.mrb[0].mxu0 %v597
        %v678 = vpop.f32.mrb[0].mxu0
        %v679 = vadd.f32 0.0, %v678
        %v680 = vpop.f32.mrb[0].mxu0
        %v681 = vadd.f32 0.0, %v680
        %682 = vdwg.mxu0
        %v684 = vsel %vm599, %v591, 0
        %v687 = vsel %vm599, %v593, 0
        %689 = vmatprep.subr.mxu0 %v515
        %690 = vmatpush1.msra.mxu0 %v514
        %691 = vmatprep.subr.mxu0 %v517
        %692 = vmatpush1.msra.mxu0 %v516
        %693 = vmatprep.subr.mxu0 %v519
        %694 = vmatpush1.msra.mxu0 %v518
        %695 = vmatprep.subr.mxu0 %v521
        %696 = vmatpush1.msra.mxu0 %v520
        %697 = vmatprep.subr.mxu0 %v523
        %698 = vmatpush1.msra.mxu0 %v522
        %699 = vmatprep.subr.mxu0 %v525
        %700 = vmatpush1.msra.mxu0 %v524
        %701 = vmatprep.subr.mxu0 %v527
        %702 = vmatpush1.msra.mxu0 %v526
        %703 = vmatprep.subr.mxu0 %v529
        %704 = vmatpush1.msra.mxu0 %v528
        %705 = vmatprep.subr.mxu0 %v531
        %706 = vmatpush1.msra.mxu0 %v530
        %707 = vmatprep.subr.mxu0 %v533
        %708 = vmatpush1.msra.mxu0 %v532
        %709 = vmatprep.subr.mxu0 %v535
        %710 = vmatpush1.msra.mxu0 %v534
        %711 = vmatprep.subr.mxu0 %v537
        %712 = vmatpush1.msra.mxu0 %v536
        %713 = vmatprep.subr.mxu0 %v539
        %714 = vmatpush1.msra.mxu0 %v538
        %715 = vmatprep.subr.mxu0 %v541
        %716 = vmatpush1.msra.mxu0 %v540
        %717 = vmatprep.subr.mxu0 %v543
        %718 = vmatpush1.msra.mxu0 %v542
        %719 = vmatprep.subr.mxu0 %v545
        %720 = vmatpush1.msra.mxu0 %v544
        %721 = vmatprep.subr.mxu0 %v547
        %722 = vmatpush1.msra.mxu0 %v546
        %723 = vmatprep.subr.mxu0 %v549
        %724 = vmatpush1.msra.mxu0 %v548
        %725 = vmatprep.subr.mxu0 0.0
        %726 = vmatpush1.msra.mxu0 0.0
        %727 = vmatprep.subr.mxu0 0.0
        %728 = vmatpush1.msra.mxu0 0.0
        %729 = vmatprep.subr.mxu0 0.0
        %730 = vmatpush1.msra.mxu0 0.0
        %731 = vmatprep.subr.mxu0 0.0
        %732 = vmatpush1.msra.mxu0 0.0
        %733 = vmatprep.subr.mxu0 0.0
        %734 = vmatpush1.msra.mxu0 0.0
        %735 = vmatprep.subr.mxu0 0.0
        %736 = vmatpush1.msra.mxu0 0.0
        %737 = vmatprep.subr.mxu0 0.0
        %738 = vmatpush1.msra.mxu0 0.0
        %739 = vmatprep.subr.mxu0 0.0
        %740 = vmatpush1.msra.mxu0 0.0
        %741 = vmatprep.subr.mxu0 0.0
        %742 = vmatpush1.msra.mxu0 0.0
        %743 = vmatprep.subr.mxu0 0.0
        %744 = vmatpush1.msra.mxu0 0.0
        %745 = vmatprep.subr.mxu0 0.0
        %746 = vmatpush1.msra.mxu0 0.0
        %747 = vmatprep.subr.mxu0 0.0
        %748 = vmatpush1.msra.mxu0 0.0
        %749 = vmatprep.subr.mxu0 0.0
        %750 = vmatpush1.msra.mxu0 0.0
        %751 = vmatprep.subr.mxu0 0.0
        %752 = vmatpush1.msra.mxu0 0.0
        %753 = vmatprep.mubr.f32.mxu0 %v684
        %754 = vmatmul.mubr.f32.gmra.mrb[0].mxu0 %v590
        %v755 = vpop.f32.mrb[0].mxu0
        %v756 = vadd.f32 %v673, %v755
        %v757 = vpop.f32.mrb[0].mxu0
        %v758 = vadd.f32 %v675, %v757
        %759 = vmatprep.mubr.f32.mxu0 %v687
        %760 = vmatmul.mubr.f32.gmra.mrb[0].mxu0 %v592
        %v761 = vpop.f32.mrb[0].mxu0
        %v762 = vadd.f32 %v679, %v761
        %v763 = vpop.f32.mrb[0].mxu0
        %v764 = vadd.f32 %v681, %v763
        %765 = vdwg.mxu0
        %v766 = vld [vmem:[%s487] sm:$0xff]
        %v767 = vld [vmem:[%s487 + $0x8] sm:$0x1]
        %769 = vset.pattern.permute.xlu0 0
        %770 = vperm.xlu0 %769, %v766
        %v771 = vpop.permute.xlu0 %770
        %774 = vset.pattern.permute.xlu0 0
        %775 = vperm.xlu0 %774, %v767
        %v776 = vpop.permute.xlu0 %775
        %v778 = vadd.f32 %v756, %v771
        %v779 = vadd.f32 %v758, %v771
        %v780 = vadd.f32 %v762, %v776
        %v781 = vadd.f32 %v764, %v776
        %s782 = scalar_lea.vmem %s482, 64
        %v783 = vld [vmem:[%s782] sm:$0xff]
        %v784 = vld [vmem:[%s782 + $0x8] sm:$0xff]
        %v785 = vld [vmem:[%s782 + $0x10] sm:$0x1]
        %v786 = vld [vmem:[%s782 + $0x18] sm:$0x1]
        %s787 = scalar_lea.vmem %s487, 16
        %v788 = vld [vmem:[%s787] sm:$0xff]
        %v789 = vld [vmem:[%s787 + $0x8] sm:$0x1]
        %791 = vset.pattern.permute.xlu0 0
        %792 = vperm.xlu0 %791, %v788
        %v793 = vpop.permute.xlu0 %792
        %796 = vset.pattern.permute.xlu0 0
        %797 = vperm.xlu0 %796, %v789
        %v798 = vpop.permute.xlu0 %797
        %v801 = vsel %vm599, %v784, 0
        %v804 = vsel %vm599, %v786, 0
        %806 = vmatprep.subr.mxu0 %v515
        %807 = vmatpush1.msra.mxu0 %v514
        %808 = vmatprep.subr.mxu0 %v517
        %809 = vmatpush1.msra.mxu0 %v516
        %810 = vmatprep.subr.mxu0 %v519
        %811 = vmatpush1.msra.mxu0 %v518
        %812 = vmatprep.subr.mxu0 %v521
        %813 = vmatpush1.msra.mxu0 %v520
        %814 = vmatprep.subr.mxu0 %v523
        %815 = vmatpush1.msra.mxu0 %v522
        %816 = vmatprep.subr.mxu0 %v525
        %817 = vmatpush1.msra.mxu0 %v524
        %818 = vmatprep.subr.mxu0 %v527
        %819 = vmatpush1.msra.mxu0 %v526
        %820 = vmatprep.subr.mxu0 %v529
        %821 = vmatpush1.msra.mxu0 %v528
        %822 = vmatprep.subr.mxu0 %v531
        %823 = vmatpush1.msra.mxu0 %v530
        %824 = vmatprep.subr.mxu0 %v533
        %825 = vmatpush1.msra.mxu0 %v532
        %826 = vmatprep.subr.mxu0 %v535
        %827 = vmatpush1.msra.mxu0 %v534
        %828 = vmatprep.subr.mxu0 %v537
        %829 = vmatpush1.msra.mxu0 %v536
        %830 = vmatprep.subr.mxu0 %v539
        %831 = vmatpush1.msra.mxu0 %v538
        %832 = vmatprep.subr.mxu0 %v541
        %833 = vmatpush1.msra.mxu0 %v540
        %834 = vmatprep.subr.mxu0 %v543
        %835 = vmatpush1.msra.mxu0 %v542
        %836 = vmatprep.subr.mxu0 %v545
        %837 = vmatpush1.msra.mxu0 %v544
        %838 = vmatprep.subr.mxu0 %v547
        %839 = vmatpush1.msra.mxu0 %v546
        %840 = vmatprep.subr.mxu0 %v549
        %841 = vmatpush1.msra.mxu0 %v548
        %842 = vmatprep.subr.mxu0 0.0
        %843 = vmatpush1.msra.mxu0 0.0
        %844 = vmatprep.subr.mxu0 0.0
        %845 = vmatpush1.msra.mxu0 0.0
        %846 = vmatprep.subr.mxu0 0.0
        %847 = vmatpush1.msra.mxu0 0.0
        %848 = vmatprep.subr.mxu0 0.0
        %849 = vmatpush1.msra.mxu0 0.0
        %850 = vmatprep.subr.mxu0 0.0
        %851 = vmatpush1.msra.mxu0 0.0
        %852 = vmatprep.subr.mxu0 0.0
        %853 = vmatpush1.msra.mxu0 0.0
        %854 = vmatprep.subr.mxu0 0.0
        %855 = vmatpush1.msra.mxu0 0.0
        %856 = vmatprep.subr.mxu0 0.0
        %857 = vmatpush1.msra.mxu0 0.0
        %858 = vmatprep.subr.mxu0 0.0
        %859 = vmatpush1.msra.mxu0 0.0
        %860 = vmatprep.subr.mxu0 0.0
        %861 = vmatpush1.msra.mxu0 0.0
        %862 = vmatprep.subr.mxu0 0.0
        %863 = vmatpush1.msra.mxu0 0.0
        %864 = vmatprep.subr.mxu0 0.0
        %865 = vmatpush1.msra.mxu0 0.0
        %866 = vmatprep.subr.mxu0 0.0
        %867 = vmatpush1.msra.mxu0 0.0
        %868 = vmatprep.subr.mxu0 0.0
        %869 = vmatpush1.msra.mxu0 0.0
        %870 = vmatprep.mubr.f32.mxu0 %v801
        %871 = vmatmul.mubr.f32.gmra.mrb[0].mxu0 %v783
        %v872 = vpop.f32.mrb[0].mxu0
        %v873 = vadd.f32 %v793, %v872
        %v874 = vpop.f32.mrb[0].mxu0
        %v875 = vadd.f32 %v793, %v874
        %876 = vmatprep.mubr.f32.mxu0 %v804
        %877 = vmatmul.mubr.f32.gmra.mrb[0].mxu0 %v785
        %v878 = vpop.f32.mrb[0].mxu0
        %v879 = vadd.f32 %v798, %v878
        %v880 = vpop.f32.mrb[0].mxu0
        %v881 = vadd.f32 %v798, %v880
        %882 = vdwg.mxu0
        %s883 = scalar_lea.vmem %s482, 96
        %v884 = vld [vmem:[%s883] sm:$0xff]
        %v885 = vld [vmem:[%s883 + $0x8] sm:$0xff]
        %v886 = vld [vmem:[%s883 + $0x10] sm:$0x1]
        %v887 = vld [vmem:[%s883 + $0x18] sm:$0x1]
        %s888 = scalar_lea.vmem %s487, 32
        %v889 = vld [vmem:[%s888] sm:$0xff]
        %v890 = vld [vmem:[%s888 + $0x8] sm:$0x1]
        %892 = vset.pattern.permute.xlu0 0
        %893 = vperm.xlu0 %892, %v889
        %v894 = vpop.permute.xlu0 %893
        %897 = vset.pattern.permute.xlu0 0
        %898 = vperm.xlu0 %897, %v890
        %v899 = vpop.permute.xlu0 %898
        %v902 = vsel %vm599, %v885, 0
        %v905 = vsel %vm599, %v887, 0
        %907 = vmatprep.subr.mxu0 %v551
        %908 = vmatpush1.msra.mxu0 %v550
        %909 = vmatprep.subr.mxu0 %v553
        %910 = vmatpush1.msra.mxu0 %v552
        %911 = vmatprep.subr.mxu0 %v555
        %912 = vmatpush1.msra.mxu0 %v554
        %913 = vmatprep.subr.mxu0 %v557
        %914 = vmatpush1.msra.mxu0 %v556
        %915 = vmatprep.subr.mxu0 %v559
        %916 = vmatpush1.msra.mxu0 %v558
        %917 = vmatprep.subr.mxu0 %v561
        %918 = vmatpush1.msra.mxu0 %v560
        %919 = vmatprep.subr.mxu0 %v563
        %920 = vmatpush1.msra.mxu0 %v562
        %921 = vmatprep.subr.mxu0 %v565
        %922 = vmatpush1.msra.mxu0 %v564
        %923 = vmatprep.subr.mxu0 %v567
        %924 = vmatpush1.msra.mxu0 %v566
        %925 = vmatprep.subr.mxu0 %v569
        %926 = vmatpush1.msra.mxu0 %v568
        %927 = vmatprep.subr.mxu0 %v571
        %928 = vmatpush1.msra.mxu0 %v570
        %929 = vmatprep.subr.mxu0 %v573
        %930 = vmatpush1.msra.mxu0 %v572
        %931 = vmatprep.subr.mxu0 %v575
        %932 = vmatpush1.msra.mxu0 %v574
        %933 = vmatprep.subr.mxu0 %v577
        %934 = vmatpush1.msra.mxu0 %v576
        %935 = vmatprep.subr.mxu0 %v579
        %936 = vmatpush1.msra.mxu0 %v578
        %937 = vmatprep.subr.mxu0 %v581
        %938 = vmatpush1.msra.mxu0 %v580
        %939 = vmatprep.subr.mxu0 %v583
        %940 = vmatpush1.msra.mxu0 %v582
        %941 = vmatprep.subr.mxu0 %v585
        %942 = vmatpush1.msra.mxu0 %v584
        %943 = vmatprep.subr.mxu0 0.0
        %944 = vmatpush1.msra.mxu0 0.0
        %945 = vmatprep.subr.mxu0 0.0
        %946 = vmatpush1.msra.mxu0 0.0
        %947 = vmatprep.subr.mxu0 0.0
        %948 = vmatpush1.msra.mxu0 0.0
        %949 = vmatprep.subr.mxu0 0.0
        %950 = vmatpush1.msra.mxu0 0.0
        %951 = vmatprep.subr.mxu0 0.0
        %952 = vmatpush1.msra.mxu0 0.0
        %953 = vmatprep.subr.mxu0 0.0
        %954 = vmatpush1.msra.mxu0 0.0
        %955 = vmatprep.subr.mxu0 0.0
        %956 = vmatpush1.msra.mxu0 0.0
        %957 = vmatprep.subr.mxu0 0.0
        %958 = vmatpush1.msra.mxu0 0.0
        %959 = vmatprep.subr.mxu0 0.0
        %960 = vmatpush1.msra.mxu0 0.0
        %961 = vmatprep.subr.mxu0 0.0
        %962 = vmatpush1.msra.mxu0 0.0
        %963 = vmatprep.subr.mxu0 0.0
        %964 = vmatpush1.msra.mxu0 0.0
        %965 = vmatprep.subr.mxu0 0.0
        %966 = vmatpush1.msra.mxu0 0.0
        %967 = vmatprep.subr.mxu0 0.0
        %968 = vmatpush1.msra.mxu0 0.0
        %969 = vmatprep.subr.mxu0 0.0
        %970 = vmatpush1.msra.mxu0 0.0
        %971 = vmatprep.mubr.f32.mxu0 %v902
        %972 = vmatmul.mubr.f32.gmra.mrb[0].mxu0 %v884
        %v973 = vpop.f32.mrb[0].mxu0
        %v974 = vadd.f32 %v894, %v973
        %v975 = vpop.f32.mrb[0].mxu0
        %v976 = vadd.f32 %v894, %v975
        %977 = vmatprep.mubr.f32.mxu0 %v905
        %978 = vmatmul.mubr.f32.gmra.mrb[0].mxu0 %v886
        %v979 = vpop.f32.mrb[0].mxu0
        %v980 = vadd.f32 %v899, %v979
        %v981 = vpop.f32.mrb[0].mxu0
        %v982 = vadd.f32 %v899, %v981
        %983 = vdwg.mxu0
        %v988 = vcombine.low %v778, %v779
        %v989 = vcombine.high %v778, %v779
        %v991 = vunpack.c.l.s4 1966171168
        %v992 = vunpack.c.0.s8 %v991
        %v993 = vlaneseq
        %v994 = vshrl.u32 %v993, 7
        %v995 = vsub.s32 %v992, %v994
        %v996 = vrot.slane %v988, %v995
        %v998 = vunpack.c.l.s4 1966171168
        %v999 = vunpack.c.0.s8 %v998
        %v1000 = vlaneseq
        %v1001 = vshrl.u32 %v1000, 7
        %v1002 = vsub.s32 %v999, %v1001
        %v1003 = vrot.slane %v989, %v1002
        %v1004 = vcombine.high %v996, %v996
        %v1005 = vcombine.high %v1003, %v1003
        %v1007 = vunpack.c.l.s4 1966171168
        %v1008 = vunpack.c.0.s8 %v1007
        %v1009 = vlaneseq
        %v1010 = vshrl.u32 %v1009, 7
        %v1011 = vsub.s32 %v1008, %v1010
        %v1012 = vrot.slane %v996, %v1011
        %v1014 = vunpack.c.l.s4 1966171168
        %v1015 = vunpack.c.0.s8 %v1014
        %v1016 = vlaneseq
        %v1017 = vshrl.u32 %v1016, 7
        %v1018 = vsub.s32 %v1015, %v1017
        %v1019 = vrot.slane %v1003, %v1018
        %v1021 = vunpack.c.l.s4 1966171168
        %v1022 = vunpack.c.0.s8 %v1021
        %v1023 = vlaneseq
        %v1024 = vshrl.u32 %v1023, 7
        %v1025 = vsub.s32 %v1022, %v1024
        %v1026 = vrot.slane %v1004, %v1025
        %v1028 = vunpack.c.l.s4 1966171168
        %v1029 = vunpack.c.0.s8 %v1028
        %v1030 = vlaneseq
        %v1031 = vshrl.u32 %v1030, 7
        %v1032 = vsub.s32 %v1029, %v1031
        %v1033 = vrot.slane %v1005, %v1032
        %v1034 = vcombine.high %v1012, %v1012
        %v1035 = vcombine.high %v1019, %v1019
        %v1036 = vcombine.high %v1026, %v1026
        %v1037 = vcombine.high %v1033, %v1033
        %v1038 = vcombine.low %v780, %v781
        %v1040 = vunpack.c.l.s4 1966171168
        %v1041 = vunpack.c.0.s8 %v1040
        %v1042 = vlaneseq
        %v1043 = vshrl.u32 %v1042, 7
        %v1044 = vsub.s32 %v1041, %v1043
        %v1045 = vrot.slane %v1038, %v1044
        %v1047 = vunpack.c.l.s4 1966171168
        %v1048 = vunpack.c.0.s8 %v1047
        %v1049 = vlaneseq
        %v1050 = vshrl.u32 %v1049, 7
        %v1051 = vsub.s32 %v1048, %v1050
        %v1052 = vrot.slane %v1045, %v1051
        %v1053 = vlaneseq
        %v1054 = vshrl.u32 %v1053, 7
        %v1055 = vsub.s32 0, %v1054
        %v1056 = vrot.slane %v1012, %v1055
        %v1057 = vlaneseq
        %v1058 = vshrl.u32 %v1057, 7
        %v1059 = vsub.s32 1, %v1058
        %v1060 = vrot.slane %v1012, %v1059
        %v1061 = vlaneseq
        %v1062 = vshrl.u32 %v1061, 7
        %v1063 = vsub.s32 0, %v1062
        %v1064 = vrot.slane %v1026, %v1063
        %v1065 = vlaneseq
        %v1066 = vshrl.u32 %v1065, 7
        %v1067 = vsub.s32 1, %v1066
        %v1068 = vrot.slane %v1026, %v1067
        %v1069 = vlaneseq
        %v1070 = vshrl.u32 %v1069, 7
        %v1071 = vsub.s32 0, %v1070
        %v1072 = vrot.slane %v1034, %v1071
        %v1073 = vlaneseq
        %v1074 = vshrl.u32 %v1073, 7
        %v1075 = vsub.s32 1, %v1074
        %v1076 = vrot.slane %v1034, %v1075
        %v1077 = vlaneseq
        %v1078 = vshrl.u32 %v1077, 7
        %v1079 = vsub.s32 0, %v1078
        %v1080 = vrot.slane %v1036, %v1079
        %v1081 = vlaneseq
        %v1082 = vshrl.u32 %v1081, 7
        %v1083 = vsub.s32 1, %v1082
        %v1084 = vrot.slane %v1036, %v1083
        %v1085 = vlaneseq
        %v1086 = vshrl.u32 %v1085, 7
        %v1087 = vsub.s32 0, %v1086
        %v1088 = vrot.slane %v1019, %v1087
        %v1089 = vlaneseq
        %v1090 = vshrl.u32 %v1089, 7
        %v1091 = vsub.s32 1, %v1090
        %v1092 = vrot.slane %v1019, %v1091
        %v1093 = vlaneseq
        %v1094 = vshrl.u32 %v1093, 7
        %v1095 = vsub.s32 0, %v1094
        %v1096 = vrot.slane %v1033, %v1095
        %v1097 = vlaneseq
        %v1098 = vshrl.u32 %v1097, 7
        %v1099 = vsub.s32 1, %v1098
        %v1100 = vrot.slane %v1033, %v1099
        %v1101 = vlaneseq
        %v1102 = vshrl.u32 %v1101, 7
        %v1103 = vsub.s32 0, %v1102
        %v1104 = vrot.slane %v1035, %v1103
        %v1105 = vlaneseq
        %v1106 = vshrl.u32 %v1105, 7
        %v1107 = vsub.s32 1, %v1106
        %v1108 = vrot.slane %v1035, %v1107
        %v1109 = vlaneseq
        %v1110 = vshrl.u32 %v1109, 7
        %v1111 = vsub.s32 0, %v1110
        %v1112 = vrot.slane %v1037, %v1111
        %v1113 = vlaneseq
        %v1114 = vshrl.u32 %v1113, 7
        %v1115 = vsub.s32 1, %v1114
        %v1116 = vrot.slane %v1037, %v1115
        %v1117 = vlaneseq
        %v1118 = vshrl.u32 %v1117, 7
        %v1119 = vsub.s32 0, %v1118
        %v1120 = vrot.slane %v1052, %v1119
        %v1121 = vlaneseq
        %v1122 = vshrl.u32 %v1121, 7
        %v1123 = vsub.s32 1, %v1122
        %v1124 = vrot.slane %v1052, %v1123
        %v1143 = vmul.f32 %v1056, %v514
        %v1144 = vmul.f32 %v1060, %v515
        %v1145 = vmul.f32 %v1056, %v516
        %v1146 = vmul.f32 %v1060, %v517
        %v1147 = vmul.f32 %v1064, %v518
        %v1148 = vmul.f32 %v1068, %v519
        %v1149 = vmul.f32 %v1064, %v520
        %v1150 = vmul.f32 %v1068, %v521
        %v1151 = vmul.f32 %v1072, %v522
        %v1152 = vmul.f32 %v1076, %v523
        %v1153 = vmul.f32 %v1072, %v524
        %v1154 = vmul.f32 %v1076, %v525
        %v1155 = vmul.f32 %v1080, %v526
        %v1156 = vmul.f32 %v1084, %v527
        %v1157 = vmul.f32 %v1080, %v528
        %v1158 = vmul.f32 %v1084, %v529
        %v1159 = vmul.f32 %v1088, %v530
        %v1160 = vmul.f32 %v1092, %v531
        %v1161 = vmul.f32 %v1088, %v532
        %v1162 = vmul.f32 %v1092, %v533
        %v1163 = vmul.f32 %v1096, %v534
        %v1164 = vmul.f32 %v1100, %v535
        %v1165 = vmul.f32 %v1096, %v536
        %v1166 = vmul.f32 %v1100, %v537
        %v1167 = vmul.f32 %v1104, %v538
        %v1168 = vmul.f32 %v1108, %v539
        %v1169 = vmul.f32 %v1104, %v540
        %v1170 = vmul.f32 %v1108, %v541
        %v1171 = vmul.f32 %v1112, %v542
        %v1172 = vmul.f32 %v1116, %v543
        %v1173 = vmul.f32 %v1112, %v544
        %v1174 = vmul.f32 %v1116, %v545
        %v1175 = vmul.f32 %v1120, %v546
        %v1176 = vmul.f32 %v1124, %v547
        %v1177 = vmul.f32 %v1120, %v548
        %v1178 = vmul.f32 %v1124, %v549
        %v1179 = vadd.f32 %v1143, %v1147
        %v1180 = vadd.f32 %v1179, %v1151
        %v1181 = vadd.f32 %v1180, %v1155
        %v1182 = vadd.f32 %v1181, %v1159
        %v1183 = vadd.f32 %v1182, %v1163
        %v1184 = vadd.f32 %v1183, %v1167
        %v1185 = vadd.f32 %v1184, %v1171
        %v1186 = vadd.f32 %v1185, %v1175
        %v1187 = vadd.f32 %v1144, %v1148
        %v1188 = vadd.f32 %v1187, %v1152
        %v1189 = vadd.f32 %v1188, %v1156
        %v1190 = vadd.f32 %v1189, %v1160
        %v1191 = vadd.f32 %v1190, %v1164
        %v1192 = vadd.f32 %v1191, %v1168
        %v1193 = vadd.f32 %v1192, %v1172
        %v1194 = vadd.f32 %v1193, %v1176
        %v1195 = vadd.f32 %v1145, %v1149
        %v1196 = vadd.f32 %v1195, %v1153
        %v1197 = vadd.f32 %v1196, %v1157
        %v1198 = vadd.f32 %v1197, %v1161
        %v1199 = vadd.f32 %v1198, %v1165
        %v1200 = vadd.f32 %v1199, %v1169
        %v1201 = vadd.f32 %v1200, %v1173
        %v1202 = vadd.f32 %v1201, %v1177
        %v1203 = vadd.f32 %v1146, %v1150
        %v1204 = vadd.f32 %v1203, %v1154
        %v1205 = vadd.f32 %v1204, %v1158
        %v1206 = vadd.f32 %v1205, %v1162
        %v1207 = vadd.f32 %v1206, %v1166
        %v1208 = vadd.f32 %v1207, %v1170
        %v1209 = vadd.f32 %v1208, %v1174
        %v1210 = vadd.f32 %v1209, %v1178
        %v1215 = vcombine.low %v873, %v875
        %v1216 = vcombine.high %v873, %v875
        %v1218 = vunpack.c.l.s4 1966171168
        %v1219 = vunpack.c.0.s8 %v1218
        %v1220 = vlaneseq
        %v1221 = vshrl.u32 %v1220, 7
        %v1222 = vsub.s32 %v1219, %v1221
        %v1223 = vrot.slane %v1215, %v1222
        %v1225 = vunpack.c.l.s4 1966171168
        %v1226 = vunpack.c.0.s8 %v1225
        %v1227 = vlaneseq
        %v1228 = vshrl.u32 %v1227, 7
        %v1229 = vsub.s32 %v1226, %v1228
        %v1230 = vrot.slane %v1216, %v1229
        %v1231 = vcombine.high %v1223, %v1223
        %v1232 = vcombine.high %v1230, %v1230
        %v1234 = vunpack.c.l.s4 1966171168
        %v1235 = vunpack.c.0.s8 %v1234
        %v1236 = vlaneseq
        %v1237 = vshrl.u32 %v1236, 7
        %v1238 = vsub.s32 %v1235, %v1237
        %v1239 = vrot.slane %v1223, %v1238
        %v1241 = vunpack.c.l.s4 1966171168
        %v1242 = vunpack.c.0.s8 %v1241
        %v1243 = vlaneseq
        %v1244 = vshrl.u32 %v1243, 7
        %v1245 = vsub.s32 %v1242, %v1244
        %v1246 = vrot.slane %v1230, %v1245
        %v1248 = vunpack.c.l.s4 1966171168
        %v1249 = vunpack.c.0.s8 %v1248
        %v1250 = vlaneseq
        %v1251 = vshrl.u32 %v1250, 7
        %v1252 = vsub.s32 %v1249, %v1251
        %v1253 = vrot.slane %v1231, %v1252
        %v1255 = vunpack.c.l.s4 1966171168
        %v1256 = vunpack.c.0.s8 %v1255
        %v1257 = vlaneseq
        %v1258 = vshrl.u32 %v1257, 7
        %v1259 = vsub.s32 %v1256, %v1258
        %v1260 = vrot.slane %v1232, %v1259
        %v1261 = vcombine.high %v1239, %v1239
        %v1262 = vcombine.high %v1246, %v1246
        %v1263 = vcombine.high %v1253, %v1253
        %v1264 = vcombine.high %v1260, %v1260
        %v1265 = vcombine.low %v879, %v881
        %v1267 = vunpack.c.l.s4 1966171168
        %v1268 = vunpack.c.0.s8 %v1267
        %v1269 = vlaneseq
        %v1270 = vshrl.u32 %v1269, 7
        %v1271 = vsub.s32 %v1268, %v1270
        %v1272 = vrot.slane %v1265, %v1271
        %v1274 = vunpack.c.l.s4 1966171168
        %v1275 = vunpack.c.0.s8 %v1274
        %v1276 = vlaneseq
        %v1277 = vshrl.u32 %v1276, 7
        %v1278 = vsub.s32 %v1275, %v1277
        %v1279 = vrot.slane %v1272, %v1278
        %v1280 = vlaneseq
        %v1281 = vshrl.u32 %v1280, 7
        %v1282 = vsub.s32 0, %v1281
        %v1283 = vrot.slane %v1239, %v1282
        %v1284 = vlaneseq
        %v1285 = vshrl.u32 %v1284, 7
        %v1286 = vsub.s32 1, %v1285
        %v1287 = vrot.slane %v1239, %v1286
        %v1288 = vlaneseq
        %v1289 = vshrl.u32 %v1288, 7
        %v1290 = vsub.s32 0, %v1289
        %v1291 = vrot.slane %v1253, %v1290
        %v1292 = vlaneseq
        %v1293 = vshrl.u32 %v1292, 7
        %v1294 = vsub.s32 1, %v1293
        %v1295 = vrot.slane %v1253, %v1294
        %v1296 = vlaneseq
        %v1297 = vshrl.u32 %v1296, 7
        %v1298 = vsub.s32 0, %v1297
        %v1299 = vrot.slane %v1261, %v1298
        %v1300 = vlaneseq
        %v1301 = vshrl.u32 %v1300, 7
        %v1302 = vsub.s32 1, %v1301
        %v1303 = vrot.slane %v1261, %v1302
        %v1304 = vlaneseq
        %v1305 = vshrl.u32 %v1304, 7
        %v1306 = vsub.s32 0, %v1305
        %v1307 = vrot.slane %v1263, %v1306
        %v1308 = vlaneseq
        %v1309 = vshrl.u32 %v1308, 7
        %v1310 = vsub.s32 1, %v1309
        %v1311 = vrot.slane %v1263, %v1310
        %v1312 = vlaneseq
        %v1313 = vshrl.u32 %v1312, 7
        %v1314 = vsub.s32 0, %v1313
        %v1315 = vrot.slane %v1246, %v1314
        %v1316 = vlaneseq
        %v1317 = vshrl.u32 %v1316, 7
        %v1318 = vsub.s32 1, %v1317
        %v1319 = vrot.slane %v1246, %v1318
        %v1320 = vlaneseq
        %v1321 = vshrl.u32 %v1320, 7
        %v1322 = vsub.s32 0, %v1321
        %v1323 = vrot.slane %v1260, %v1322
        %v1324 = vlaneseq
        %v1325 = vshrl.u32 %v1324, 7
        %v1326 = vsub.s32 1, %v1325
        %v1327 = vrot.slane %v1260, %v1326
        %v1328 = vlaneseq
        %v1329 = vshrl.u32 %v1328, 7
        %v1330 = vsub.s32 0, %v1329
        %v1331 = vrot.slane %v1262, %v1330
        %v1332 = vlaneseq
        %v1333 = vshrl.u32 %v1332, 7
        %v1334 = vsub.s32 1, %v1333
        %v1335 = vrot.slane %v1262, %v1334
        %v1336 = vlaneseq
        %v1337 = vshrl.u32 %v1336, 7
        %v1338 = vsub.s32 0, %v1337
        %v1339 = vrot.slane %v1264, %v1338
        %v1340 = vlaneseq
        %v1341 = vshrl.u32 %v1340, 7
        %v1342 = vsub.s32 1, %v1341
        %v1343 = vrot.slane %v1264, %v1342
        %v1344 = vlaneseq
        %v1345 = vshrl.u32 %v1344, 7
        %v1346 = vsub.s32 0, %v1345
        %v1347 = vrot.slane %v1279, %v1346
        %v1348 = vlaneseq
        %v1349 = vshrl.u32 %v1348, 7
        %v1350 = vsub.s32 1, %v1349
        %v1351 = vrot.slane %v1279, %v1350
        %v1370 = vmul.f32 %v1283, %v514
        %v1371 = vmul.f32 %v1287, %v515
        %v1372 = vmul.f32 %v1283, %v516
        %v1373 = vmul.f32 %v1287, %v517
        %v1374 = vmul.f32 %v1291, %v518
        %v1375 = vmul.f32 %v1295, %v519
        %v1376 = vmul.f32 %v1291, %v520
        %v1377 = vmul.f32 %v1295, %v521
        %v1378 = vmul.f32 %v1299, %v522
        %v1379 = vmul.f32 %v1303, %v523
        %v1380 = vmul.f32 %v1299, %v524
        %v1381 = vmul.f32 %v1303, %v525
        %v1382 = vmul.f32 %v1307, %v526
        %v1383 = vmul.f32 %v1311, %v527
        %v1384 = vmul.f32 %v1307, %v528
        %v1385 = vmul.f32 %v1311, %v529
        %v1386 = vmul.f32 %v1315, %v530
        %v1387 = vmul.f32 %v1319, %v531
        %v1388 = vmul.f32 %v1315, %v532
        %v1389 = vmul.f32 %v1319, %v533
        %v1390 = vmul.f32 %v1323, %v534
        %v1391 = vmul.f32 %v1327, %v535
        %v1392 = vmul.f32 %v1323, %v536
        %v1393 = vmul.f32 %v1327, %v537
        %v1394 = vmul.f32 %v1331, %v538
        %v1395 = vmul.f32 %v1335, %v539
        %v1396 = vmul.f32 %v1331, %v540
        %v1397 = vmul.f32 %v1335, %v541
        %v1398 = vmul.f32 %v1339, %v542
        %v1399 = vmul.f32 %v1343, %v543
        %v1400 = vmul.f32 %v1339, %v544
        %v1401 = vmul.f32 %v1343, %v545
        %v1402 = vmul.f32 %v1347, %v546
        %v1403 = vmul.f32 %v1351, %v547
        %v1404 = vmul.f32 %v1347, %v548
        %v1405 = vmul.f32 %v1351, %v549
        %v1406 = vadd.f32 %v1370, %v1374
        %v1407 = vadd.f32 %v1406, %v1378
        %v1408 = vadd.f32 %v1407, %v1382
        %v1409 = vadd.f32 %v1408, %v1386
        %v1410 = vadd.f32 %v1409, %v1390
        %v1411 = vadd.f32 %v1410, %v1394
        %v1412 = vadd.f32 %v1411, %v1398
        %v1413 = vadd.f32 %v1412, %v1402
        %v1414 = vadd.f32 %v1371, %v1375
        %v1415 = vadd.f32 %v1414, %v1379
        %v1416 = vadd.f32 %v1415, %v1383
        %v1417 = vadd.f32 %v1416, %v1387
        %v1418 = vadd.f32 %v1417, %v1391
        %v1419 = vadd.f32 %v1418, %v1395
        %v1420 = vadd.f32 %v1419, %v1399
        %v1421 = vadd.f32 %v1420, %v1403
        %v1422 = vadd.f32 %v1372, %v1376
        %v1423 = vadd.f32 %v1422, %v1380
        %v1424 = vadd.f32 %v1423, %v1384
        %v1425 = vadd.f32 %v1424, %v1388
        %v1426 = vadd.f32 %v1425, %v1392
        %v1427 = vadd.f32 %v1426, %v1396
        %v1428 = vadd.f32 %v1427, %v1400
        %v1429 = vadd.f32 %v1428, %v1404
        %v1430 = vadd.f32 %v1373, %v1377
        %v1431 = vadd.f32 %v1430, %v1381
        %v1432 = vadd.f32 %v1431, %v1385
        %v1433 = vadd.f32 %v1432, %v1389
        %v1434 = vadd.f32 %v1433, %v1393
        %v1435 = vadd.f32 %v1434, %v1397
        %v1436 = vadd.f32 %v1435, %v1401
        %v1437 = vadd.f32 %v1436, %v1405
        %v1442 = vcombine.low %v974, %v976
        %v1443 = vcombine.high %v974, %v976
        %v1445 = vunpack.c.l.s4 1966171168
        %v1446 = vunpack.c.0.s8 %v1445
        %v1447 = vlaneseq
        %v1448 = vshrl.u32 %v1447, 7
        %v1449 = vsub.s32 %v1446, %v1448
        %v1450 = vrot.slane %v1442, %v1449
        %v1452 = vunpack.c.l.s4 1966171168
        %v1453 = vunpack.c.0.s8 %v1452
        %v1454 = vlaneseq
        %v1455 = vshrl.u32 %v1454, 7
        %v1456 = vsub.s32 %v1453, %v1455
        %v1457 = vrot.slane %v1443, %v1456
        %v1458 = vcombine.high %v1450, %v1450
        %v1459 = vcombine.high %v1457, %v1457
        %v1461 = vunpack.c.l.s4 1966171168
        %v1462 = vunpack.c.0.s8 %v1461
        %v1463 = vlaneseq
        %v1464 = vshrl.u32 %v1463, 7
        %v1465 = vsub.s32 %v1462, %v1464
        %v1466 = vrot.slane %v1450, %v1465
        %v1468 = vunpack.c.l.s4 1966171168
        %v1469 = vunpack.c.0.s8 %v1468
        %v1470 = vlaneseq
        %v1471 = vshrl.u32 %v1470, 7
        %v1472 = vsub.s32 %v1469, %v1471
        %v1473 = vrot.slane %v1457, %v1472
        %v1475 = vunpack.c.l.s4 1966171168
        %v1476 = vunpack.c.0.s8 %v1475
        %v1477 = vlaneseq
        %v1478 = vshrl.u32 %v1477, 7
        %v1479 = vsub.s32 %v1476, %v1478
        %v1480 = vrot.slane %v1458, %v1479
        %v1482 = vunpack.c.l.s4 1966171168
        %v1483 = vunpack.c.0.s8 %v1482
        %v1484 = vlaneseq
        %v1485 = vshrl.u32 %v1484, 7
        %v1486 = vsub.s32 %v1483, %v1485
        %v1487 = vrot.slane %v1459, %v1486
        %v1488 = vcombine.high %v1466, %v1466
        %v1489 = vcombine.high %v1473, %v1473
        %v1490 = vcombine.high %v1480, %v1480
        %v1491 = vcombine.high %v1487, %v1487
        %v1492 = vcombine.low %v980, %v982
        %v1494 = vunpack.c.l.s4 1966171168
        %v1495 = vunpack.c.0.s8 %v1494
        %v1496 = vlaneseq
        %v1497 = vshrl.u32 %v1496, 7
        %v1498 = vsub.s32 %v1495, %v1497
        %v1499 = vrot.slane %v1492, %v1498
        %v1501 = vunpack.c.l.s4 1966171168
        %v1502 = vunpack.c.0.s8 %v1501
        %v1503 = vlaneseq
        %v1504 = vshrl.u32 %v1503, 7
        %v1505 = vsub.s32 %v1502, %v1504
        %v1506 = vrot.slane %v1499, %v1505
        %v1507 = vlaneseq
        %v1508 = vshrl.u32 %v1507, 7
        %v1509 = vsub.s32 0, %v1508
        %v1510 = vrot.slane %v1466, %v1509
        %v1511 = vlaneseq
        %v1512 = vshrl.u32 %v1511, 7
        %v1513 = vsub.s32 1, %v1512
        %v1514 = vrot.slane %v1466, %v1513
        %v1515 = vlaneseq
        %v1516 = vshrl.u32 %v1515, 7
        %v1517 = vsub.s32 0, %v1516
        %v1518 = vrot.slane %v1480, %v1517
        %v1519 = vlaneseq
        %v1520 = vshrl.u32 %v1519, 7
        %v1521 = vsub.s32 1, %v1520
        %v1522 = vrot.slane %v1480, %v1521
        %v1523 = vlaneseq
        %v1524 = vshrl.u32 %v1523, 7
        %v1525 = vsub.s32 0, %v1524
        %v1526 = vrot.slane %v1488, %v1525
        %v1527 = vlaneseq
        %v1528 = vshrl.u32 %v1527, 7
        %v1529 = vsub.s32 1, %v1528
        %v1530 = vrot.slane %v1488, %v1529
        %v1531 = vlaneseq
        %v1532 = vshrl.u32 %v1531, 7
        %v1533 = vsub.s32 0, %v1532
        %v1534 = vrot.slane %v1490, %v1533
        %v1535 = vlaneseq
        %v1536 = vshrl.u32 %v1535, 7
        %v1537 = vsub.s32 1, %v1536
        %v1538 = vrot.slane %v1490, %v1537
        %v1539 = vlaneseq
        %v1540 = vshrl.u32 %v1539, 7
        %v1541 = vsub.s32 0, %v1540
        %v1542 = vrot.slane %v1473, %v1541
        %v1543 = vlaneseq
        %v1544 = vshrl.u32 %v1543, 7
        %v1545 = vsub.s32 1, %v1544
        %v1546 = vrot.slane %v1473, %v1545
        %v1547 = vlaneseq
        %v1548 = vshrl.u32 %v1547, 7
        %v1549 = vsub.s32 0, %v1548
        %v1550 = vrot.slane %v1487, %v1549
        %v1551 = vlaneseq
        %v1552 = vshrl.u32 %v1551, 7
        %v1553 = vsub.s32 1, %v1552
        %v1554 = vrot.slane %v1487, %v1553
        %v1555 = vlaneseq
        %v1556 = vshrl.u32 %v1555, 7
        %v1557 = vsub.s32 0, %v1556
        %v1558 = vrot.slane %v1489, %v1557
        %v1559 = vlaneseq
        %v1560 = vshrl.u32 %v1559, 7
        %v1561 = vsub.s32 1, %v1560
        %v1562 = vrot.slane %v1489, %v1561
        %v1563 = vlaneseq
        %v1564 = vshrl.u32 %v1563, 7
        %v1565 = vsub.s32 0, %v1564
        %v1566 = vrot.slane %v1491, %v1565
        %v1567 = vlaneseq
        %v1568 = vshrl.u32 %v1567, 7
        %v1569 = vsub.s32 1, %v1568
        %v1570 = vrot.slane %v1491, %v1569
        %v1571 = vlaneseq
        %v1572 = vshrl.u32 %v1571, 7
        %v1573 = vsub.s32 0, %v1572
        %v1574 = vrot.slane %v1506, %v1573
        %v1575 = vlaneseq
        %v1576 = vshrl.u32 %v1575, 7
        %v1577 = vsub.s32 1, %v1576
        %v1578 = vrot.slane %v1506, %v1577
        %v1597 = vmul.f32 %v1510, %v550
        %v1598 = vmul.f32 %v1514, %v551
        %v1599 = vmul.f32 %v1510, %v552
        %v1600 = vmul.f32 %v1514, %v553
        %v1601 = vmul.f32 %v1518, %v554
        %v1602 = vmul.f32 %v1522, %v555
        %v1603 = vmul.f32 %v1518, %v556
        %v1604 = vmul.f32 %v1522, %v557
        %v1605 = vmul.f32 %v1526, %v558
        %v1606 = vmul.f32 %v1530, %v559
        %v1607 = vmul.f32 %v1526, %v560
        %v1608 = vmul.f32 %v1530, %v561
        %v1609 = vmul.f32 %v1534, %v562
        %v1610 = vmul.f32 %v1538, %v563
        %v1611 = vmul.f32 %v1534, %v564
        %v1612 = vmul.f32 %v1538, %v565
        %v1613 = vmul.f32 %v1542, %v566
        %v1614 = vmul.f32 %v1546, %v567
        %v1615 = vmul.f32 %v1542, %v568
        %v1616 = vmul.f32 %v1546, %v569
        %v1617 = vmul.f32 %v1550, %v570
        %v1618 = vmul.f32 %v1554, %v571
        %v1619 = vmul.f32 %v1550, %v572
        %v1620 = vmul.f32 %v1554, %v573
        %v1621 = vmul.f32 %v1558, %v574
        %v1622 = vmul.f32 %v1562, %v575
        %v1623 = vmul.f32 %v1558, %v576
        %v1624 = vmul.f32 %v1562, %v577
        %v1625 = vmul.f32 %v1566, %v578
        %v1626 = vmul.f32 %v1570, %v579
        %v1627 = vmul.f32 %v1566, %v580
        %v1628 = vmul.f32 %v1570, %v581
        %v1629 = vmul.f32 %v1574, %v582
        %v1630 = vmul.f32 %v1578, %v583
        %v1631 = vmul.f32 %v1574, %v584
        %v1632 = vmul.f32 %v1578, %v585
        %v1633 = vadd.f32 %v1597, %v1601
        %v1634 = vadd.f32 %v1633, %v1605
        %v1635 = vadd.f32 %v1634, %v1609
        %v1636 = vadd.f32 %v1635, %v1613
        %v1637 = vadd.f32 %v1636, %v1617
        %v1638 = vadd.f32 %v1637, %v1621
        %v1639 = vadd.f32 %v1638, %v1625
        %v1640 = vadd.f32 %v1639, %v1629
        %v1641 = vadd.f32 %v1598, %v1602
        %v1642 = vadd.f32 %v1641, %v1606
        %v1643 = vadd.f32 %v1642, %v1610
        %v1644 = vadd.f32 %v1643, %v1614
        %v1645 = vadd.f32 %v1644, %v1618
        %v1646 = vadd.f32 %v1645, %v1622
        %v1647 = vadd.f32 %v1646, %v1626
        %v1648 = vadd.f32 %v1647, %v1630
        %v1649 = vadd.f32 %v1599, %v1603
        %v1650 = vadd.f32 %v1649, %v1607
        %v1651 = vadd.f32 %v1650, %v1611
        %v1652 = vadd.f32 %v1651, %v1615
        %v1653 = vadd.f32 %v1652, %v1619
        %v1654 = vadd.f32 %v1653, %v1623
        %v1655 = vadd.f32 %v1654, %v1627
        %v1656 = vadd.f32 %v1655, %v1631
        %v1657 = vadd.f32 %v1600, %v1604
        %v1658 = vadd.f32 %v1657, %v1608
        %v1659 = vadd.f32 %v1658, %v1612
        %v1660 = vadd.f32 %v1659, %v1616
        %v1661 = vadd.f32 %v1660, %v1620
        %v1662 = vadd.f32 %v1661, %v1624
        %v1663 = vadd.f32 %v1662, %v1628
        %v1664 = vadd.f32 %v1663, %v1632
        %v1665 = vmul.f32 %v586, %v1186
        %v1666 = vmul.f32 %v587, %v1194
        %v1667 = vmul.f32 %v588, %v1202
        %v1668 = vmul.f32 %v589, %v1210
        %v1669 = vadd.f32 %v1665, %v1413
        %v1670 = vadd.f32 %v1666, %v1421
        %v1671 = vadd.f32 %v1667, %v1429
        %v1672 = vadd.f32 %v1668, %v1437
        %v1673 = vadd.f32 %v1669, %v1640
        %v1674 = vadd.f32 %v1670, %v1648
        %v1675 = vadd.f32 %v1671, %v1656
        %v1676 = vadd.f32 %v1672, %v1664
        %v1677 = vld [vmem:[%s495] sm:$0x7]
        %v1678 = vld [vmem:[%s504] sm:$0xff]
        %v1679 = vld [vmem:[%s504 + $0x8] sm:$0xff]
        %v1681 = vsel %vm599, %v1677, 0
        %1683 = vmatprep.subr.mxu0 %v1674
        %1684 = vmatpush1.msra.mxu0 %v1673
        %1685 = vmatprep.subr.mxu0 %v1676
        %1686 = vmatpush1.msra.mxu0 %v1675
        %1687 = vmatprep.subr.mxu0 0.0
        %1688 = vmatpush1.msra.mxu0 0.0
        %1689 = vmatprep.subr.mxu0 0.0
        %1690 = vmatpush1.msra.mxu0 0.0
        %1691 = vmatprep.subr.mxu0 0.0
        %1692 = vmatpush1.msra.mxu0 0.0
        %1693 = vmatprep.subr.mxu0 0.0
        %1694 = vmatpush1.msra.mxu0 0.0
        %1695 = vmatprep.subr.mxu0 0.0
        %1696 = vmatpush1.msra.mxu0 0.0
        %1697 = vmatprep.subr.mxu0 0.0
        %1698 = vmatpush1.msra.mxu0 0.0
        %1699 = vmatprep.subr.mxu0 0.0
        %1700 = vmatpush1.msra.mxu0 0.0
        %1701 = vmatprep.subr.mxu0 0.0
        %1702 = vmatpush1.msra.mxu0 0.0
        %1703 = vmatprep.subr.mxu0 0.0
        %1704 = vmatpush1.msra.mxu0 0.0
        %1705 = vmatprep.subr.mxu0 0.0
        %1706 = vmatpush1.msra.mxu0 0.0
        %1707 = vmatprep.subr.mxu0 0.0
        %1708 = vmatpush1.msra.mxu0 0.0
        %1709 = vmatprep.subr.mxu0 0.0
        %1710 = vmatpush1.msra.mxu0 0.0
        %1711 = vmatprep.subr.mxu0 0.0
        %1712 = vmatpush1.msra.mxu0 0.0
        %1713 = vmatprep.subr.mxu0 0.0
        %1714 = vmatpush1.msra.mxu0 0.0
        %1715 = vmatprep.subr.mxu0 0.0
        %1716 = vmatpush1.msra.mxu0 0.0
        %1717 = vmatprep.subr.mxu0 0.0
        %1718 = vmatpush1.msra.mxu0 0.0
        %1719 = vmatprep.subr.mxu0 0.0
        %1720 = vmatpush1.msra.mxu0 0.0
        %1721 = vmatprep.subr.mxu0 0.0
        %1722 = vmatpush1.msra.mxu0 0.0
        %1723 = vmatprep.subr.mxu0 0.0
        %1724 = vmatpush1.msra.mxu0 0.0
        %1725 = vmatprep.subr.mxu0 0.0
        %1726 = vmatpush1.msra.mxu0 0.0
        %1727 = vmatprep.subr.mxu0 0.0
        %1728 = vmatpush1.msra.mxu0 0.0
        %1729 = vmatprep.subr.mxu0 0.0
        %1730 = vmatpush1.msra.mxu0 0.0
        %1731 = vmatprep.subr.mxu0 0.0
        %1732 = vmatpush1.msra.mxu0 0.0
        %1733 = vmatprep.subr.mxu0 0.0
        %1734 = vmatpush1.msra.mxu0 0.0
        %1735 = vmatprep.subr.mxu0 0.0
        %1736 = vmatpush1.msra.mxu0 0.0
        %1737 = vmatprep.subr.mxu0 0.0
        %1738 = vmatpush1.msra.mxu0 0.0
        %1739 = vmatprep.subr.mxu0 0.0
        %1740 = vmatpush1.msra.mxu0 0.0
        %1741 = vmatprep.subr.mxu0 0.0
        %1742 = vmatpush1.msra.mxu0 0.0
        %1743 = vmatprep.subr.mxu0 0.0
        %1744 = vmatpush1.msra.mxu0 0.0
        %1745 = vmatprep.subr.mxu0 0.0
        %1746 = vmatpush1.msra.mxu0 0.0
        %1747 = vmatprep.mubr.f32.mxu0 0.0
        %1748 = vmatmul.mubr.f32.gmra.mrb[0].mxu0 %v1681
        %v1749 = vpop.f32.mrb[0].mxu0
        %v1750 = vadd.f32 0.0, %v1749
        %v1751 = vpop.f32.mrb[0].mxu0
        %v1752 = vadd.f32 0.0, %v1751
        %1753 = vdwg.mxu0
        %v1754 = vxor.u32 %v1750, 2147483648
        %v1755 = vxor.u32 %v1752, 2147483648
        %v1756 = vmul.f32 %v1754, 1.442695
        %v1757 = vpow.pop %v1756
        %v1758 = vmul.f32 %v1755, 1.442695
        %v1759 = vpow.pop %v1758
        %v1760 = vadd.f32 %v1757, 1.0
        %v1761 = vadd.f32 %v1759, 1.0
        %v1762 = vrcp.pop %v1760
        %v1763 = vmul.f32 1.0, %v1762
        %v1764 = vrcp.pop %v1761
        %v1765 = vmul.f32 1.0, %v1764
        %vm1766 = vcmask 23552
        %v1768 = vsel %vm1766, %v1678, 0
        %v1771 = vsel %vm1766, %v1679, 0
        %vm1773 = vcmask 1042432
        %v1775 = vsel %vm1773, %v1763, 0
        %v1778 = vsel %vm1773, %v1765, 0
        %1780 = vmatprep.subr.mxu0 %v1778
        %1781 = vmatpush1.msra.mxu0 %v1775
        %1782 = vmatprep.subr.mxu0 0.0
        %1783 = vmatpush1.msra.mxu0 0.0
        %1784 = vmatprep.subr.mxu0 0.0
        %1785 = vmatpush1.msra.mxu0 0.0
        %1786 = vmatprep.subr.mxu0 0.0
        %1787 = vmatpush1.msra.mxu0 0.0
        %1788 = vmatprep.subr.mxu0 0.0
        %1789 = vmatpush1.msra.mxu0 0.0
        %1790 = vmatprep.subr.mxu0 0.0
        %1791 = vmatpush1.msra.mxu0 0.0
        %1792 = vmatprep.subr.mxu0 0.0
        %1793 = vmatpush1.msra.mxu0 0.0
        %1794 = vmatprep.subr.mxu0 0.0
        %1795 = vmatpush1.msra.mxu0 0.0
        %1796 = vmatprep.subr.mxu0 0.0
        %1797 = vmatpush1.msra.mxu0 0.0
        %1798 = vmatprep.subr.mxu0 0.0
        %1799 = vmatpush1.msra.mxu0 0.0
        %1800 = vmatprep.subr.mxu0 0.0
        %1801 = vmatpush1.msra.mxu0 0.0
        %1802 = vmatprep.subr.mxu0 0.0
        %1803 = vmatpush1.msra.mxu0 0.0
        %1804 = vmatprep.subr.mxu0 0.0
        %1805 = vmatpush1.msra.mxu0 0.0
        %1806 = vmatprep.subr.mxu0 0.0
        %1807 = vmatpush1.msra.mxu0 0.0
        %1808 = vmatprep.subr.mxu0 0.0
        %1809 = vmatpush1.msra.mxu0 0.0
        %1810 = vmatprep.subr.mxu0 0.0
        %1811 = vmatpush1.msra.mxu0 0.0
        %1812 = vmatprep.subr.mxu0 0.0
        %1813 = vmatpush1.msra.mxu0 0.0
        %1814 = vmatprep.subr.mxu0 0.0
        %1815 = vmatpush1.msra.mxu0 0.0
        %1816 = vmatprep.subr.mxu0 0.0
        %1817 = vmatpush1.msra.mxu0 0.0
        %1818 = vmatprep.subr.mxu0 0.0
        %1819 = vmatpush1.msra.mxu0 0.0
        %1820 = vmatprep.subr.mxu0 0.0
        %1821 = vmatpush1.msra.mxu0 0.0
        %1822 = vmatprep.subr.mxu0 0.0
        %1823 = vmatpush1.msra.mxu0 0.0
        %1824 = vmatprep.subr.mxu0 0.0
        %1825 = vmatpush1.msra.mxu0 0.0
        %1826 = vmatprep.subr.mxu0 0.0
        %1827 = vmatpush1.msra.mxu0 0.0
        %1828 = vmatprep.subr.mxu0 0.0
        %1829 = vmatpush1.msra.mxu0 0.0
        %1830 = vmatprep.subr.mxu0 0.0
        %1831 = vmatpush1.msra.mxu0 0.0
        %1832 = vmatprep.subr.mxu0 0.0
        %1833 = vmatpush1.msra.mxu0 0.0
        %1834 = vmatprep.subr.mxu0 0.0
        %1835 = vmatpush1.msra.mxu0 0.0
        %1836 = vmatprep.subr.mxu0 0.0
        %1837 = vmatpush1.msra.mxu0 0.0
        %1838 = vmatprep.subr.mxu0 0.0
        %1839 = vmatpush1.msra.mxu0 0.0
        %1840 = vmatprep.subr.mxu0 0.0
        %1841 = vmatpush1.msra.mxu0 0.0
        %1842 = vmatprep.subr.mxu0 0.0
        %1843 = vmatpush1.msra.mxu0 0.0
        %1844 = vmatprep.mubr.f32.mxu0 0.0
        %1845 = vmatmul.mubr.f32.gmra.mrb[0].mxu0 %v1768
        %v1846 = vpop.f32.mrb[0].mxu0
        %v1847 = vadd.f32 0.0, %v1846
        %v1848 = vpop.f32.mrb[0].mxu0
        %v1849 = vadd.f32 0.0, %v1848
        %1850 = vmatprep.mubr.f32.mxu0 0.0
        %1851 = vmatmul.mubr.f32.gmra.mrb[0].mxu0 %v1771
        %v1852 = vpop.f32.mrb[0].mxu0
        %v1853 = vadd.f32 0.0, %v1852
        %v1854 = vpop.f32.mrb[0].mxu0
        %v1855 = vadd.f32 0.0, %v1854
        %1856 = vdwg.mxu0
        %v1857 = vmul.f32 %v1673, %v1847
        %v1858 = vmul.f32 %v1674, %v1849
        %v1859 = vmul.f32 %v1675, %v1853
        %v1860 = vmul.f32 %v1676, %v1855
        %1861 = vst [vmem:[%s443] sm:$0xff] %v1857
        %1862 = vst [vmem:[%s443 + $0x8] sm:$0xff] %v1858
        %1863 = vst [vmem:[%s443 + $0x10] sm:$0xff] %v1859
        %1864 = vst [vmem:[%s443 + $0x18] sm:$0xff] %v1860
        %v1865 = vmul.f32 %v1857, %v1186
        %v1866 = vmul.f32 %v1858, %v1194
        %v1867 = vmul.f32 %v1859, %v1202
        %v1868 = vmul.f32 %v1860, %v1210
        %1869 = vst [vmem:[%s513] sm:$0xff] %v1865
        %1870 = vst [vmem:[%s513 + $0x8] sm:$0xff] %v1866
        %1871 = vst [vmem:[%s513 + $0x10] sm:$0xff] %v1867
        %1872 = vst [vmem:[%s513 + $0x18] sm:$0xff] %v1868
        %s1873 = sand.u32 %s235, 1
        %s1874 = scalar_lea.sflag [#allocation3], %s1873
        %s1875 = sand.u32 %s235, 1
        %s1876 = smul.addr %s1875, 32
        %s1877 = scalar_lea.vmem [#allocation2], %s1876
        %p1878 = scmp.lt.s32.totalorder %s27, 2
        %s1879 = scalar_select %p1878, %s27, 2
        %p1880 = scmp.lt.s32.totalorder %s28, 1
        %s1881 = scalar_select %p1880, %s28, 1
        %s1882 = smul.addr %s1881, 4
        %s1883 = smul.addr %s1879, 8
        %s1884 = sadd.s32 %s1882, %s1883
        %s1885 = smul.addr %s1884, 8
        %s1886 = scalar_lea.vmem %s8, %s1885
        // Predicated region
        $region49: #{_lambda_.19} parent=47 // pred_check
          %p1887 = pneg %p245
        $region50: #{_lambda_.19} parent=47 // pred_check_branch
          %1889 = sbr.rel (%p1887) target = $region52
        $region51: #{_lambda_.19} parent=47 // pred_region
          %s1891 = ssub.s32 512, 512
          %1892 = vsyncadd %s1874, %s1891
          %s1893 = smul.addr %s28, 4
          %s1894 = smul.addr %s27, 8
          %s1895 = sadd.s32 %s1893, %s1894
          %s1896 = smul.addr %s1895, 128
          %s1897 = scalar_lea.hbm %s7, %s1896
          %s1898 = sshll.u32 %s1877, 4
          %s1899 = int_to_ptr.vmem [resolvable:$true] %s1898
          %1904 = dma.vmem_to_hbm [thread:$0]  %s1899, 512, %s1897, %s1874, 256, 256, 16
        $region52: #{_lambda_.19} parent=47 // pred_fallthru
          _
        // Predicated region
        $region53: #{_lambda_.19} parent=47 // pred_check
          %p1905 = pneg %p273
        $region54: #{_lambda_.19} parent=47 // pred_check_branch
          %1907 = sbr.rel (%p1905) target = $region56
        $region55: #{_lambda_.19} parent=47 // pred_region
          _
        $region56: #{_lambda_.19} parent=47 // pred_fallthru
          _
      $region48: #{_lambda_.19} parent=5 // pred_fallthru
        _
      %p1908 = scmp.le.s32.totalorder 2, %s18
      // Predicated region
      $region57: #{_lambda_.19} parent=5 // pred_check
        %p1909 = pneg %p1908
      $region58: #{_lambda_.19} parent=5 // pred_check_branch
        %1911 = sbr.rel (%p1909) target = $region60
      $region59: #{_lambda_.19} parent=5 // pred_region
        %s1912 = ssub.s32 %s18, 2
        // Predicated region
        $region61: #{_lambda_.19} parent=59 // pred_check
          %p1913 = pneg %p251
        $region62: #{_lambda_.19} parent=59 // pred_check_branch
          %1915 = sbr.rel (%p1913) target = $region64
        $region63: #{_lambda_.19} parent=59 // pred_region
          %s1916 = sand.u32 %s236, 1
          %s1917 = scalar_lea.sflag [#allocation3], %s1916
          %s1918 = sand.u32 %s236, 1
          %s1919 = smul.addr %s1918, 32
          %s1920 = scalar_lea.vmem [#allocation2], %s1919
          %1921 = dma.done %s1917, 512
        $region64: #{_lambda_.19} parent=59 // pred_fallthru
          _
        // Predicated region
        $region65: #{_lambda_.19} parent=59 // pred_check
          %p1922 = pneg %p279
        $region66: #{_lambda_.19} parent=59 // pred_check_branch
          %1924 = sbr.rel (%p1922) target = $region68
        $region67: #{_lambda_.19} parent=59 // pred_region
          %p1925 = scmp.lt.s32.totalorder %s29, 2
          %s1926 = scalar_select %p1925, %s29, 2
          %p1927 = scmp.lt.s32.totalorder %s30, 1
          %s1928 = scalar_select %p1927, %s30, 1
          %s1929 = smul.addr %s1928, 4
          %s1930 = smul.addr %s1926, 8
          %s1931 = sadd.s32 %s1929, %s1930
          %s1932 = smul.addr %s1931, 8
          %s1933 = scalar_lea.vmem %s8, %s1932
        $region68: #{_lambda_.19} parent=59 // pred_fallthru
          _
      $region60: #{_lambda_.19} parent=5 // pred_fallthru
        _
    $region6: #{_lambda_.19} parent=1 // loop_footer
      %s22 = sadd.s32 1, %s18
    $region7: #{_lambda_.19} parent=1 // loop_footer_branch
      %17 = sbr.rel target = $region3
    $region8: #{_lambda_.19} parent=1 // loop_exit
      _
    %1934 = vsyncpa [#allocation3], 1
    %s1935 = scalar_lea.sflag [#allocation3], 1
    %1936 = vsyncpa %s1935, 1

// kernel: _lambda_.20
$region0: #{_lambda_.20}
  #allocation0 [shape = 'u32[]', space=smem, size = 0x4, offset = 0x4, fixed_abs, tag = 'smem constant byte address 0x4 - core index']
  #allocation1 [shape = 'u32[144,128]{1,0:T(1,128)}', space=vmem, size = 0x12000, scoped, tag = 'internal scratch']
  %s0 = inlined_call_operand.vmem [shape: f32[16,48], index: 0, kind: input, shape index: {}]
  %s1 = inlined_call_operand.vmem [shape: f32[48,512], index: 1, kind: input, shape index: {}]
  %s2 = inlined_call_operand.vmem [shape: f32[16,1], index: 2, kind: input, shape index: {}]
  %s3 = inlined_call_operand.vmem [shape: f32[16,512], index: 3, kind: output, shape index: {}]
  %s4 = sld [smem:[#allocation0]]
  $region22: #{_lambda_.20} parent=0
    _
  %s6 = ssub.s32 1, %s4
  %s7 = scalar_select 0, %s6, %s4
  // Predicated region
  $region2: #{_lambda_.20} parent=0 // pred_check
    _
  $region3: #{_lambda_.20} parent=0 // pred_check_branch
    %9 = sbr.rel (0) target = $region5
  $region4: #{_lambda_.20} parent=0 // pred_region
    _
  $region5: #{_lambda_.20} parent=0 // pred_fallthru
    _
  // Predicated region
  $region6: #{_lambda_.20} parent=0 // pred_check
    _
  $region7: #{_lambda_.20} parent=0 // pred_check_branch
    %11 = sbr.rel (0) target = $region9
  $region8: #{_lambda_.20} parent=0 // pred_region
    _
  $region9: #{_lambda_.20} parent=0 // pred_fallthru
    _
  // Predicated region
  $region10: #{_lambda_.20} parent=0 // pred_check
    _
  $region11: #{_lambda_.20} parent=0 // pred_check_branch
    %13 = sbr.rel (0) target = $region13
  $region12: #{_lambda_.20} parent=0 // pred_region
    _
  $region13: #{_lambda_.20} parent=0 // pred_fallthru
    _
  %v14 = vld [vmem:[%s0] sm:$0xff]
  %v15 = vld [vmem:[%s0 + $0x8] sm:$0xff]
  %v16 = vld [vmem:[%s1] sm:$0xff]
  %v17 = vld [vmem:[%s1 + $0x8] sm:$0xff]
  %v18 = vld [vmem:[%s1 + $0x10] sm:$0xff]
  %v19 = vld [vmem:[%s1 + $0x18] sm:$0xff]
  %v20 = vld [vmem:[%s1 + $0x20] sm:$0xff]
  %v21 = vld [vmem:[%s1 + $0x28] sm:$0xff]
  %v22 = vld [vmem:[%s1 + $0x30] sm:$0xff]
  %v23 = vld [vmem:[%s1 + $0x38] sm:$0xff]
  %v24 = vld [vmem:[%s1 + $0x40] sm:$0xff]
  %v25 = vld [vmem:[%s1 + $0x48] sm:$0xff]
  %v26 = vld [vmem:[%s1 + $0x50] sm:$0xff]
  %v27 = vld [vmem:[%s1 + $0x58] sm:$0xff]
  %v28 = vld [vmem:[%s1 + $0x60] sm:$0xff]
  %v29 = vld [vmem:[%s1 + $0x68] sm:$0xff]
  %v30 = vld [vmem:[%s1 + $0x70] sm:$0xff]
  %v31 = vld [vmem:[%s1 + $0x78] sm:$0xff]
  %v32 = vld [vmem:[%s1 + $0x80] sm:$0xff]
  %v33 = vld [vmem:[%s1 + $0x88] sm:$0xff]
  %v34 = vld [vmem:[%s1 + $0x90] sm:$0xff]
  %v35 = vld [vmem:[%s1 + $0x98] sm:$0xff]
  %v36 = vld [vmem:[%s1 + $0xa0] sm:$0xff]
  %v37 = vld [vmem:[%s1 + $0xa8] sm:$0xff]
  %v38 = vld [vmem:[%s1 + $0xb0] sm:$0xff]
  %v39 = vld [vmem:[%s1 + $0xb8] sm:$0xff]
  %v40 = vld [vmem:[%s2] sm:$0xff]
  %v41 = vld [vmem:[%s2 + $0x8] sm:$0xff]
  %43 = vset.pattern.permute.xlu0 0
  %44 = vperm.xlu0 %43, %v40
  %v45 = vpop.permute.xlu0 %44
  %48 = vset.pattern.permute.xlu0 0
  %49 = vperm.xlu0 %48, %v41
  %v50 = vpop.permute.xlu0 %49
  %vm52 = vcmask 392192
  %v54 = vsel %vm52, %v14, 0
  %v57 = vsel %vm52, %v15, 0
  %59 = vmatprep.subr.mxu0 %v17
  %60 = vmatpush1.msra.mxu0 %v16
  %61 = vmatprep.subr.mxu0 %v21
  %62 = vmatpush1.msra.mxu0 %v20
  %63 = vmatprep.subr.mxu0 %v25
  %64 = vmatpush1.msra.mxu0 %v24
  %65 = vmatprep.subr.mxu0 %v29
  %66 = vmatpush1.msra.mxu0 %v28
  %67 = vmatprep.subr.mxu0 %v33
  %68 = vmatpush1.msra.mxu0 %v32
  %69 = vmatprep.subr.mxu0 %v37
  %70 = vmatpush1.msra.mxu0 %v36
  %71 = vmatprep.subr.mxu0 0.0
  %72 = vmatpush1.msra.mxu0 0.0
  %73 = vmatprep.subr.mxu0 0.0
  %74 = vmatpush1.msra.mxu0 0.0
  %75 = vmatprep.subr.mxu0 0.0
  %76 = vmatpush1.msra.mxu0 0.0
  %77 = vmatprep.subr.mxu0 0.0
  %78 = vmatpush1.msra.mxu0 0.0
  %79 = vmatprep.subr.mxu0 0.0
  %80 = vmatpush1.msra.mxu0 0.0
  %81 = vmatprep.subr.mxu0 0.0
  %82 = vmatpush1.msra.mxu0 0.0
  %83 = vmatprep.subr.mxu0 0.0
  %84 = vmatpush1.msra.mxu0 0.0
  %85 = vmatprep.subr.mxu0 0.0
  %86 = vmatpush1.msra.mxu0 0.0
  %87 = vmatprep.subr.mxu0 0.0
  %88 = vmatpush1.msra.mxu0 0.0
  %89 = vmatprep.subr.mxu0 0.0
  %90 = vmatpush1.msra.mxu0 0.0
  %91 = vmatprep.subr.mxu0 0.0
  %92 = vmatpush1.msra.mxu0 0.0
  %93 = vmatprep.subr.mxu0 0.0
  %94 = vmatpush1.msra.mxu0 0.0
  %95 = vmatprep.subr.mxu0 0.0
  %96 = vmatpush1.msra.mxu0 0.0
  %97 = vmatprep.subr.mxu0 0.0
  %98 = vmatpush1.msra.mxu0 0.0
  %99 = vmatprep.subr.mxu0 0.0
  %100 = vmatpush1.msra.mxu0 0.0
  %101 = vmatprep.subr.mxu0 0.0
  %102 = vmatpush1.msra.mxu0 0.0
  %103 = vmatprep.subr.mxu0 0.0
  %104 = vmatpush1.msra.mxu0 0.0
  %105 = vmatprep.subr.mxu0 0.0
  %106 = vmatpush1.msra.mxu0 0.0
  %107 = vmatprep.subr.mxu0 0.0
  %108 = vmatpush1.msra.mxu0 0.0
  %109 = vmatprep.subr.mxu0 0.0
  %110 = vmatpush1.msra.mxu0 0.0
  %111 = vmatprep.subr.mxu0 0.0
  %112 = vmatpush1.msra.mxu0 0.0
  %113 = vmatprep.subr.mxu0 0.0
  %114 = vmatpush1.msra.mxu0 0.0
  %115 = vmatprep.subr.mxu0 0.0
  %116 = vmatpush1.msra.mxu0 0.0
  %117 = vmatprep.subr.mxu0 0.0
  %118 = vmatpush1.msra.mxu0 0.0
  %119 = vmatprep.subr.mxu0 0.0
  %120 = vmatpush1.msra.mxu0 0.0
  %121 = vmatprep.subr.mxu0 0.0
  %122 = vmatpush1.msra.mxu0 0.0
  %123 = vmatprep.mubr.f32.mxu0 0.0
  %124 = vmatmul.mubr.f32.gmra.mrb[0].mxu0 %v54
  %v125 = vpop.f32.mrb[0].mxu0
  %v126 = vadd.f32 %v45, %v125
  %v127 = vpop.f32.mrb[0].mxu0
  %v128 = vadd.f32 %v45, %v127
  %129 = vmatprep.mubr.f32.mxu0 0.0
  %130 = vmatmul.mubr.f32.gmra.mrb[0].mxu0 %v57
  %v131 = vpop.f32.mrb[0].mxu0
  %v132 = vadd.f32 %v50, %v131
  %v133 = vpop.f32.mrb[0].mxu0
  %v134 = vadd.f32 %v50, %v133
  %135 = vdwg.mxu0
  %136 = vmatprep.subr.mxu0 %v19
  %137 = vmatpush1.msra.mxu0 %v18
  %138 = vmatprep.subr.mxu0 %v23
  %139 = vmatpush1.msra.mxu0 %v22
  %140 = vmatprep.subr.mxu0 %v27
  %141 = vmatpush1.msra.mxu0 %v26
  %142 = vmatprep.subr.mxu0 %v31
  %143 = vmatpush1.msra.mxu0 %v30
  %144 = vmatprep.subr.mxu0 %v35
  %145 = vmatpush1.msra.mxu0 %v34
  %146 = vmatprep.subr.mxu0 %v39
  %147 = vmatpush1.msra.mxu0 %v38
  %148 = vmatprep.subr.mxu0 0.0
  %149 = vmatpush1.msra.mxu0 0.0
  %150 = vmatprep.subr.mxu0 0.0
  %151 = vmatpush1.msra.mxu0 0.0
  %152 = vmatprep.subr.mxu0 0.0
  %153 = vmatpush1.msra.mxu0 0.0
  %154 = vmatprep.subr.mxu0 0.0
  %155 = vmatpush1.msra.mxu0 0.0
  %156 = vmatprep.subr.mxu0 0.0
  %157 = vmatpush1.msra.mxu0 0.0
  %158 = vmatprep.subr.mxu0 0.0
  %159 = vmatpush1.msra.mxu0 0.0
  %160 = vmatprep.subr.mxu0 0.0
  %161 = vmatpush1.msra.mxu0 0.0
  %162 = vmatprep.subr.mxu0 0.0
  %163 = vmatpush1.msra.mxu0 0.0
  %164 = vmatprep.subr.mxu0 0.0
  %165 = vmatpush1.msra.mxu0 0.0
  %166 = vmatprep.subr.mxu0 0.0
  %167 = vmatpush1.msra.mxu0 0.0
  %168 = vmatprep.subr.mxu0 0.0
  %169 = vmatpush1.msra.mxu0 0.0
  %170 = vmatprep.subr.mxu0 0.0
  %171 = vmatpush1.msra.mxu0 0.0
  %172 = vmatprep.subr.mxu0 0.0
  %173 = vmatpush1.msra.mxu0 0.0
  %174 = vmatprep.subr.mxu0 0.0
  %175 = vmatpush1.msra.mxu0 0.0
  %176 = vmatprep.subr.mxu0 0.0
  %177 = vmatpush1.msra.mxu0 0.0
  %178 = vmatprep.subr.mxu0 0.0
  %179 = vmatpush1.msra.mxu0 0.0
  %180 = vmatprep.subr.mxu0 0.0
  %181 = vmatpush1.msra.mxu0 0.0
  %182 = vmatprep.subr.mxu0 0.0
  %183 = vmatpush1.msra.mxu0 0.0
  %184 = vmatprep.subr.mxu0 0.0
  %185 = vmatpush1.msra.mxu0 0.0
  %186 = vmatprep.subr.mxu0 0.0
  %187 = vmatpush1.msra.mxu0 0.0
  %188 = vmatprep.subr.mxu0 0.0
  %189 = vmatpush1.msra.mxu0 0.0
  %190 = vmatprep.subr.mxu0 0.0
  %191 = vmatpush1.msra.mxu0 0.0
  %192 = vmatprep.subr.mxu0 0.0
  %193 = vmatpush1.msra.mxu0 0.0
  %194 = vmatprep.subr.mxu0 0.0
  %195 = vmatpush1.msra.mxu0 0.0
  %196 = vmatprep.subr.mxu0 0.0
  %197 = vmatpush1.msra.mxu0 0.0
  %198 = vmatprep.subr.mxu0 0.0
  %199 = vmatpush1.msra.mxu0 0.0
  %200 = vmatprep.mubr.f32.mxu0 0.0
  %201 = vmatmul.mubr.f32.gmra.mrb[0].mxu0 %v54
  %v202 = vpop.f32.mrb[0].mxu0
  %v203 = vadd.f32 %v45, %v202
  %v204 = vpop.f32.mrb[0].mxu0
  %v205 = vadd.f32 %v45, %v204
  %206 = vmatprep.mubr.f32.mxu0 0.0
  %207 = vmatmul.mubr.f32.gmra.mrb[0].mxu0 %v57
  %v208 = vpop.f32.mrb[0].mxu0
  %v209 = vadd.f32 %v50, %v208
  %v210 = vpop.f32.mrb[0].mxu0
  %v211 = vadd.f32 %v50, %v210
  %212 = vdwg.mxu0
  %v213 = vmax.f32 %v126, 0.0
  %v214 = vmax.f32 %v128, 0.0
  %v215 = vmax.f32 %v203, 0.0
  %v216 = vmax.f32 %v205, 0.0
  %v217 = vmax.f32 %v132, 0.0
  %v218 = vmax.f32 %v134, 0.0
  %v219 = vmax.f32 %v209, 0.0
  %v220 = vmax.f32 %v211, 0.0
  %221 = vst [vmem:[%s3] sm:$0xff] %v213
  %222 = vst [vmem:[%s3 + $0x8] sm:$0xff] %v214
  %223 = vst [vmem:[%s3 + $0x10] sm:$0xff] %v215
  %224 = vst [vmem:[%s3 + $0x18] sm:$0xff] %v216
  %225 = vst [vmem:[%s3 + $0x20] sm:$0xff] %v217
  %226 = vst [vmem:[%s3 + $0x28] sm:$0xff] %v218
  %227 = vst [vmem:[%s3 + $0x30] sm:$0xff] %v219
  %228 = vst [vmem:[%s3 + $0x38] sm:$0xff] %v220
  // Predicated region
  $region14: #{_lambda_.20} parent=0 // pred_check
    _
  $region15: #{_lambda_.20} parent=0 // pred_check_branch
    %230 = sbr.rel (0) target = $region17
  $region16: #{_lambda_.20} parent=0 // pred_region
    _
  $region17: #{_lambda_.20} parent=0 // pred_fallthru
    _
  // Predicated region
  $region18: #{_lambda_.20} parent=0 // pred_check
    _
  $region19: #{_lambda_.20} parent=0 // pred_check_branch
    %232 = sbr.rel (0) target = $region21
  $region20: #{_lambda_.20} parent=0 // pred_region
    _
  $region21: #{_lambda_.20} parent=0 // pred_fallthru
    _

// kernel: _lambda_.23
$region0: #{_lambda_.23}
  #allocation0 [shape = 'u32[]', space=smem, size = 0x4, offset = 0x4, fixed_abs, tag = 'smem constant byte address 0x4 - core index']
  #allocation1 [shape = 'u32[144,128]{1,0:T(1,128)}', space=vmem, size = 0x12000, scoped, tag = 'internal scratch']
  %s0 = inlined_call_operand.vmem [shape: f32[96,720], index: 0, kind: input, shape index: {}]
  %s1 = inlined_call_operand.vmem [shape: f32[720,128], index: 1, kind: input, shape index: {}]
  %s2 = inlined_call_operand.vmem [shape: f32[96,1], index: 2, kind: input, shape index: {}]
  %s3 = inlined_call_operand.vmem [shape: f32[96,128], index: 3, kind: output, shape index: {}]
  %s4 = sld [smem:[#allocation0]]
  $region22: #{_lambda_.23} parent=0
    _
  %s6 = ssub.s32 1, %s4
  %s7 = scalar_select 0, %s6, %s4
  // Predicated region
  $region2: #{_lambda_.23} parent=0 // pred_check
    _
  $region3: #{_lambda_.23} parent=0 // pred_check_branch
    %9 = sbr.rel (0) target = $region5
  $region4: #{_lambda_.23} parent=0 // pred_region
    _
  $region5: #{_lambda_.23} parent=0 // pred_fallthru
    _
  // Predicated region
  $region6: #{_lambda_.23} parent=0 // pred_check
    _
  $region7: #{_lambda_.23} parent=0 // pred_check_branch
    %11 = sbr.rel (0) target = $region9
  $region8: #{_lambda_.23} parent=0 // pred_region
    _
  $region9: #{_lambda_.23} parent=0 // pred_fallthru
    _
  // Predicated region
  $region10: #{_lambda_.23} parent=0 // pred_check
    _
  $region11: #{_lambda_.23} parent=0 // pred_check_branch
    %13 = sbr.rel (0) target = $region13
  $region12: #{_lambda_.23} parent=0 // pred_region
    _
  $region13: #{_lambda_.23} parent=0 // pred_fallthru
    _
  %v14 = vld [vmem:[%s0] sm:$0xff]
  %v15 = vld [vmem:[%s0 + $0x8] sm:$0xff]
  %v16 = vld [vmem:[%s0 + $0x10] sm:$0xff]
  %v17 = vld [vmem:[%s0 + $0x18] sm:$0xff]
  %v18 = vld [vmem:[%s0 + $0x20] sm:$0xff]
  %v19 = vld [vmem:[%s0 + $0x28] sm:$0xff]
  %v20 = vld [vmem:[%s0 + $0x30] sm:$0xff]
  %v21 = vld [vmem:[%s0 + $0x38] sm:$0xff]
  %v22 = vld [vmem:[%s0 + $0x40] sm:$0xff]
  %v23 = vld [vmem:[%s0 + $0x48] sm:$0xff]
  %v24 = vld [vmem:[%s0 + $0x50] sm:$0xff]
  %v25 = vld [vmem:[%s0 + $0x58] sm:$0xff]
  %v26 = vld [vmem:[%s0 + $0x60] sm:$0xff]
  %v27 = vld [vmem:[%s0 + $0x68] sm:$0xff]
  %v28 = vld [vmem:[%s0 + $0x70] sm:$0xff]
  %v29 = vld [vmem:[%s0 + $0x78] sm:$0xff]
  %v30 = vld [vmem:[%s0 + $0x80] sm:$0xff]
  %v31 = vld [vmem:[%s0 + $0x88] sm:$0xff]
  %v32 = vld [vmem:[%s0 + $0x90] sm:$0xff]
  %v33 = vld [vmem:[%s0 + $0x98] sm:$0xff]
  %v34 = vld [vmem:[%s0 + $0xa0] sm:$0xff]
  %v35 = vld [vmem:[%s0 + $0xa8] sm:$0xff]
  %v36 = vld [vmem:[%s0 + $0xb0] sm:$0xff]
  %v37 = vld [vmem:[%s0 + $0xb8] sm:$0xff]
  %v38 = vld [vmem:[%s0 + $0xc0] sm:$0xff]
  %v39 = vld [vmem:[%s0 + $0xc8] sm:$0xff]
  %v40 = vld [vmem:[%s0 + $0xd0] sm:$0xff]
  %v41 = vld [vmem:[%s0 + $0xd8] sm:$0xff]
  %v42 = vld [vmem:[%s0 + $0xe0] sm:$0xff]
  %v43 = vld [vmem:[%s0 + $0xe8] sm:$0xff]
  %v44 = vld [vmem:[%s0 + $0xf0] sm:$0xff]
  %v45 = vld [vmem:[%s0 + $0xf8] sm:$0xff]
  %v46 = vld [vmem:[%s0 + $0x100] sm:$0xff]
  %v47 = vld [vmem:[%s0 + $0x108] sm:$0xff]
  %v48 = vld [vmem:[%s0 + $0x110] sm:$0xff]
  %v49 = vld [vmem:[%s0 + $0x118] sm:$0xff]
  %v50 = vld [vmem:[%s0 + $0x120] sm:$0xff]
  %v51 = vld [vmem:[%s0 + $0x128] sm:$0xff]
  %v52 = vld [vmem:[%s0 + $0x130] sm:$0xff]
  %v53 = vld [vmem:[%s0 + $0x138] sm:$0xff]
  %v54 = vld [vmem:[%s0 + $0x140] sm:$0xff]
  %v55 = vld [vmem:[%s0 + $0x148] sm:$0xff]
  %v56 = vld [vmem:[%s0 + $0x150] sm:$0xff]
  %v57 = vld [vmem:[%s0 + $0x158] sm:$0xff]
  %v58 = vld [vmem:[%s0 + $0x160] sm:$0xff]
  %v59 = vld [vmem:[%s0 + $0x168] sm:$0xff]
  %v60 = vld [vmem:[%s0 + $0x170] sm:$0xff]
  %v61 = vld [vmem:[%s0 + $0x178] sm:$0xff]
  %v62 = vld [vmem:[%s0 + $0x180] sm:$0xff]
  %v63 = vld [vmem:[%s0 + $0x188] sm:$0xff]
  %v64 = vld [vmem:[%s0 + $0x190] sm:$0xff]
  %v65 = vld [vmem:[%s0 + $0x198] sm:$0xff]
  %v66 = vld [vmem:[%s0 + $0x1a0] sm:$0xff]
  %v67 = vld [vmem:[%s0 + $0x1a8] sm:$0xff]
  %v68 = vld [vmem:[%s0 + $0x1b0] sm:$0xff]
  %v69 = vld [vmem:[%s0 + $0x1b8] sm:$0xff]
  %v70 = vld [vmem:[%s0 + $0x1c0] sm:$0xff]
  %v71 = vld [vmem:[%s0 + $0x1c8] sm:$0xff]
  %v72 = vld [vmem:[%s0 + $0x1d0] sm:$0xff]
  %v73 = vld [vmem:[%s0 + $0x1d8] sm:$0xff]
  %v74 = vld [vmem:[%s0 + $0x1e0] sm:$0xff]
  %v75 = vld [vmem:[%s0 + $0x1e8] sm:$0xff]
  %v76 = vld [vmem:[%s0 + $0x1f0] sm:$0xff]
  %v77 = vld [vmem:[%s0 + $0x1f8] sm:$0xff]
  %v78 = vld [vmem:[%s0 + $0x200] sm:$0xff]
  %v79 = vld [vmem:[%s0 + $0x208] sm:$0xff]
  %v80 = vld [vmem:[%s0 + $0x210] sm:$0xff]
  %v81 = vld [vmem:[%s0 + $0x218] sm:$0xff]
  %v82 = vld [vmem:[%s0 + $0x220] sm:$0xff]
  %v83 = vld [vmem:[%s0 + $0x228] sm:$0xff]
  %v84 = vld [vmem:[%s0 + $0x230] sm:$0xff]
  %v85 = vld [vmem:[%s0 + $0x238] sm:$0xff]
  %v86 = vld [vmem:[%s1] sm:$0xff]
  %v87 = vld [vmem:[%s1 + $0x8] sm:$0xff]
  %v88 = vld [vmem:[%s1 + $0x10] sm:$0xff]
  %v89 = vld [vmem:[%s1 + $0x18] sm:$0xff]
  %v90 = vld [vmem:[%s1 + $0x20] sm:$0xff]
  %v91 = vld [vmem:[%s1 + $0x28] sm:$0xff]
  %v92 = vld [vmem:[%s1 + $0x30] sm:$0xff]
  %v93 = vld [vmem:[%s1 + $0x38] sm:$0xff]
  %v94 = vld [vmem:[%s1 + $0x40] sm:$0xff]
  %v95 = vld [vmem:[%s1 + $0x48] sm:$0xff]
  %v96 = vld [vmem:[%s1 + $0x50] sm:$0xff]
  %v97 = vld [vmem:[%s1 + $0x58] sm:$0xff]
  %v98 = vld [vmem:[%s1 + $0x60] sm:$0xff]
  %v99 = vld [vmem:[%s1 + $0x68] sm:$0xff]
  %v100 = vld [vmem:[%s1 + $0x70] sm:$0xff]
  %v101 = vld [vmem:[%s1 + $0x78] sm:$0xff]
  %v102 = vld [vmem:[%s1 + $0x80] sm:$0xff]
  %v103 = vld [vmem:[%s1 + $0x88] sm:$0xff]
  %v104 = vld [vmem:[%s1 + $0x90] sm:$0xff]
  %v105 = vld [vmem:[%s1 + $0x98] sm:$0xff]
  %v106 = vld [vmem:[%s1 + $0xa0] sm:$0xff]
  %v107 = vld [vmem:[%s1 + $0xa8] sm:$0xff]
  %v108 = vld [vmem:[%s1 + $0xb0] sm:$0xff]
  %v109 = vld [vmem:[%s1 + $0xb8] sm:$0xff]
  %v110 = vld [vmem:[%s1 + $0xc0] sm:$0xff]
  %v111 = vld [vmem:[%s1 + $0xc8] sm:$0xff]
  %v112 = vld [vmem:[%s1 + $0xd0] sm:$0xff]
  %v113 = vld [vmem:[%s1 + $0xd8] sm:$0xff]
  %v114 = vld [vmem:[%s1 + $0xe0] sm:$0xff]
  %v115 = vld [vmem:[%s1 + $0xe8] sm:$0xff]
  %v116 = vld [vmem:[%s1 + $0xf0] sm:$0xff]
  %v117 = vld [vmem:[%s1 + $0xf8] sm:$0xff]
  %v118 = vld [vmem:[%s1 + $0x100] sm:$0xff]
  %v119 = vld [vmem:[%s1 + $0x108] sm:$0xff]
  %v120 = vld [vmem:[%s1 + $0x110] sm:$0xff]
  %v121 = vld [vmem:[%s1 + $0x118] sm:$0xff]
  %v122 = vld [vmem:[%s1 + $0x120] sm:$0xff]
  %v123 = vld [vmem:[%s1 + $0x128] sm:$0xff]
  %v124 = vld [vmem:[%s1 + $0x130] sm:$0xff]
  %v125 = vld [vmem:[%s1 + $0x138] sm:$0xff]
  %v126 = vld [vmem:[%s1 + $0x140] sm:$0xff]
  %v127 = vld [vmem:[%s1 + $0x148] sm:$0xff]
  %v128 = vld [vmem:[%s1 + $0x150] sm:$0xff]
  %v129 = vld [vmem:[%s1 + $0x158] sm:$0xff]
  %v130 = vld [vmem:[%s1 + $0x160] sm:$0xff]
  %v131 = vld [vmem:[%s1 + $0x168] sm:$0xff]
  %v132 = vld [vmem:[%s1 + $0x170] sm:$0xff]
  %v133 = vld [vmem:[%s1 + $0x178] sm:$0xff]
  %v134 = vld [vmem:[%s1 + $0x180] sm:$0xff]
  %v135 = vld [vmem:[%s1 + $0x188] sm:$0xff]
  %v136 = vld [vmem:[%s1 + $0x190] sm:$0xff]
  %v137 = vld [vmem:[%s1 + $0x198] sm:$0xff]
  %v138 = vld [vmem:[%s1 + $0x1a0] sm:$0xff]
  %v139 = vld [vmem:[%s1 + $0x1a8] sm:$0xff]
  %v140 = vld [vmem:[%s1 + $0x1b0] sm:$0xff]
  %v141 = vld [vmem:[%s1 + $0x1b8] sm:$0xff]
  %v142 = vld [vmem:[%s1 + $0x1c0] sm:$0xff]
  %v143 = vld [vmem:[%s1 + $0x1c8] sm:$0xff]
  %v144 = vld [vmem:[%s1 + $0x1d0] sm:$0xff]
  %v145 = vld [vmem:[%s1 + $0x1d8] sm:$0xff]
  %v146 = vld [vmem:[%s1 + $0x1e0] sm:$0xff]
  %v147 = vld [vmem:[%s1 + $0x1e8] sm:$0xff]
  %v148 = vld [vmem:[%s1 + $0x1f0] sm:$0xff]
  %v149 = vld [vmem:[%s1 + $0x1f8] sm:$0xff]
  %v150 = vld [vmem:[%s1 + $0x200] sm:$0xff]
  %v151 = vld [vmem:[%s1 + $0x208] sm:$0xff]
  %v152 = vld [vmem:[%s1 + $0x210] sm:$0xff]
  %v153 = vld [vmem:[%s1 + $0x218] sm:$0xff]
  %v154 = vld [vmem:[%s1 + $0x220] sm:$0xff]
  %v155 = vld [vmem:[%s1 + $0x228] sm:$0xff]
  %v156 = vld [vmem:[%s1 + $0x230] sm:$0xff]
  %v157 = vld [vmem:[%s1 + $0x238] sm:$0xff]
  %v158 = vld [vmem:[%s1 + $0x240] sm:$0xff]
  %v159 = vld [vmem:[%s1 + $0x248] sm:$0xff]
  %v160 = vld [vmem:[%s1 + $0x250] sm:$0xff]
  %v161 = vld [vmem:[%s1 + $0x258] sm:$0xff]
  %v162 = vld [vmem:[%s1 + $0x260] sm:$0xff]
  %v163 = vld [vmem:[%s1 + $0x268] sm:$0xff]
  %v164 = vld [vmem:[%s1 + $0x270] sm:$0xff]
  %v165 = vld [vmem:[%s1 + $0x278] sm:$0xff]
  %v166 = vld [vmem:[%s1 + $0x280] sm:$0xff]
  %v167 = vld [vmem:[%s1 + $0x288] sm:$0xff]
  %v168 = vld [vmem:[%s1 + $0x290] sm:$0xff]
  %v169 = vld [vmem:[%s1 + $0x298] sm:$0xff]
  %v170 = vld [vmem:[%s1 + $0x2a0] sm:$0xff]
  %v171 = vld [vmem:[%s1 + $0x2a8] sm:$0xff]
  %v172 = vld [vmem:[%s1 + $0x2b0] sm:$0xff]
  %v173 = vld [vmem:[%s1 + $0x2b8] sm:$0xff]
  %v174 = vld [vmem:[%s1 + $0x2c0] sm:$0xff]
  %v175 = vld [vmem:[%s1 + $0x2c8] sm:$0xff]
  %v176 = vld [vmem:[%s2] sm:$0xff]
  %v177 = vld [vmem:[%s2 + $0x8] sm:$0xff]
  %v178 = vld [vmem:[%s2 + $0x10] sm:$0xff]
  %v179 = vld [vmem:[%s2 + $0x18] sm:$0xff]
  %v180 = vld [vmem:[%s2 + $0x20] sm:$0xff]
  %v181 = vld [vmem:[%s2 + $0x28] sm:$0xff]
  %v182 = vld [vmem:[%s2 + $0x30] sm:$0xff]
  %v183 = vld [vmem:[%s2 + $0x38] sm:$0xff]
  %v184 = vld [vmem:[%s2 + $0x40] sm:$0xff]
  %v185 = vld [vmem:[%s2 + $0x48] sm:$0xff]
  %v186 = vld [vmem:[%s2 + $0x50] sm:$0xff]
  %v187 = vld [vmem:[%s2 + $0x58] sm:$0xff]
  %189 = vset.pattern.permute.xlu0 0
  %190 = vperm.xlu0 %189, %v176
  %v191 = vpop.permute.xlu0 %190
  %194 = vset.pattern.permute.xlu0 0
  %195 = vperm.xlu0 %194, %v177
  %v196 = vpop.permute.xlu0 %195
  %199 = vset.pattern.permute.xlu0 0
  %200 = vperm.xlu0 %199, %v178
  %v201 = vpop.permute.xlu0 %200
  %204 = vset.pattern.permute.xlu0 0
  %205 = vperm.xlu0 %204, %v179
  %v206 = vpop.permute.xlu0 %205
  %209 = vset.pattern.permute.xlu0 0
  %210 = vperm.xlu0 %209, %v180
  %v211 = vpop.permute.xlu0 %210
  %214 = vset.pattern.permute.xlu0 0
  %215 = vperm.xlu0 %214, %v181
  %v216 = vpop.permute.xlu0 %215
  %219 = vset.pattern.permute.xlu0 0
  %220 = vperm.xlu0 %219, %v182
  %v221 = vpop.permute.xlu0 %220
  %224 = vset.pattern.permute.xlu0 0
  %225 = vperm.xlu0 %224, %v183
  %v226 = vpop.permute.xlu0 %225
  %229 = vset.pattern.permute.xlu0 0
  %230 = vperm.xlu0 %229, %v184
  %v231 = vpop.permute.xlu0 %230
  %234 = vset.pattern.permute.xlu0 0
  %235 = vperm.xlu0 %234, %v185
  %v236 = vpop.permute.xlu0 %235
  %239 = vset.pattern.permute.xlu0 0
  %240 = vperm.xlu0 %239, %v186
  %v241 = vpop.permute.xlu0 %240
  %244 = vset.pattern.permute.xlu0 0
  %245 = vperm.xlu0 %244, %v187
  %v246 = vpop.permute.xlu0 %245
  %vm248 = vcmask 654336
  %v250 = vsel %vm248, %v19, 0
  %v253 = vsel %vm248, %v25, 0
  %v256 = vsel %vm248, %v31, 0
  %v259 = vsel %vm248, %v37, 0
  %v262 = vsel %vm248, %v43, 0
  %v265 = vsel %vm248, %v49, 0
  %v268 = vsel %vm248, %v55, 0
  %v271 = vsel %vm248, %v61, 0
  %v274 = vsel %vm248, %v67, 0
  %v277 = vsel %vm248, %v73, 0
  %v280 = vsel %vm248, %v79, 0
  %v283 = vsel %vm248, %v85, 0
  %285 = vmatprep.subr.mxu0 0.0
  %286 = vmatpush1.msra.mxu0 %v86
  %287 = vmatprep.subr.mxu0 0.0
  %288 = vmatpush1.msra.mxu0 %v87
  %289 = vmatprep.subr.mxu0 0.0
  %290 = vmatpush1.msra.mxu0 %v88
  %291 = vmatprep.subr.mxu0 0.0
  %292 = vmatpush1.msra.mxu0 %v89
  %293 = vmatprep.subr.mxu0 0.0
  %294 = vmatpush1.msra.mxu0 %v90
  %295 = vmatprep.subr.mxu0 0.0
  %296 = vmatpush1.msra.mxu0 %v91
  %297 = vmatprep.subr.mxu0 0.0
  %298 = vmatpush1.msra.mxu0 %v92
  %299 = vmatprep.subr.mxu0 0.0
  %300 = vmatpush1.msra.mxu0 %v93
  %301 = vmatprep.subr.mxu0 0.0
  %302 = vmatpush1.msra.mxu0 %v94
  %303 = vmatprep.subr.mxu0 0.0
  %304 = vmatpush1.msra.mxu0 %v95
  %305 = vmatprep.subr.mxu0 0.0
  %306 = vmatpush1.msra.mxu0 %v96
  %307 = vmatprep.subr.mxu0 0.0
  %308 = vmatpush1.msra.mxu0 %v97
  %309 = vmatprep.subr.mxu0 0.0
  %310 = vmatpush1.msra.mxu0 %v98
  %311 = vmatprep.subr.mxu0 0.0
  %312 = vmatpush1.msra.mxu0 %v99
  %313 = vmatprep.subr.mxu0 0.0
  %314 = vmatpush1.msra.mxu0 %v100
  %315 = vmatprep.subr.mxu0 0.0
  %316 = vmatpush1.msra.mxu0 %v101
  %317 = vmatprep.subr.mxu0 0.0
  %318 = vmatpush1.msra.mxu0 %v102
  %319 = vmatprep.subr.mxu0 0.0
  %320 = vmatpush1.msra.mxu0 %v103
  %321 = vmatprep.subr.mxu0 0.0
  %322 = vmatpush1.msra.mxu0 %v104
  %323 = vmatprep.subr.mxu0 0.0
  %324 = vmatpush1.msra.mxu0 %v105
  %325 = vmatprep.subr.mxu0 0.0
  %326 = vmatpush1.msra.mxu0 %v106
  %327 = vmatprep.subr.mxu0 0.0
  %328 = vmatpush1.msra.mxu0 %v107
  %329 = vmatprep.subr.mxu0 0.0
  %330 = vmatpush1.msra.mxu0 %v108
  %331 = vmatprep.subr.mxu0 0.0
  %332 = vmatpush1.msra.mxu0 %v109
  %333 = vmatprep.subr.mxu0 0.0
  %334 = vmatpush1.msra.mxu0 %v110
  %335 = vmatprep.subr.mxu0 0.0
  %336 = vmatpush1.msra.mxu0 %v111
  %337 = vmatprep.subr.mxu0 0.0
  %338 = vmatpush1.msra.mxu0 %v112
  %339 = vmatprep.subr.mxu0 0.0
  %340 = vmatpush1.msra.mxu0 %v113
  %341 = vmatprep.subr.mxu0 0.0
  %342 = vmatpush1.msra.mxu0 %v114
  %343 = vmatprep.subr.mxu0 0.0
  %344 = vmatpush1.msra.mxu0 %v115
  %345 = vmatprep.subr.mxu0 0.0
  %346 = vmatpush1.msra.mxu0 %v116
  %347 = vmatprep.subr.mxu0 0.0
  %348 = vmatpush1.msra.mxu0 %v117
  %349 = vmatprep.mubr.f32.mxu0 %v15
  %350 = vmatmul.mubr.f32.gmra.mrb[0].mxu0 %v14
  %v351 = vpop.f32.mrb[0].mxu0
  %v352 = vadd.f32 %v191, %v351
  %v353 = vpop.f32.mrb[0].mxu0
  %354 = vmatprep.mubr.f32.mxu0 %v21
  %355 = vmatmul.mubr.f32.gmra.mrb[0].mxu0 %v20
  %v356 = vpop.f32.mrb[0].mxu0
  %v357 = vadd.f32 %v196, %v356
  %v358 = vpop.f32.mrb[0].mxu0
  %359 = vmatprep.mubr.f32.mxu0 %v27
  %360 = vmatmul.mubr.f32.gmra.mrb[0].mxu0 %v26
  %v361 = vpop.f32.mrb[0].mxu0
  %v362 = vadd.f32 %v201, %v361
  %v363 = vpop.f32.mrb[0].mxu0
  %364 = vmatprep.mubr.f32.mxu0 %v33
  %365 = vmatmul.mubr.f32.gmra.mrb[0].mxu0 %v32
  %v366 = vpop.f32.mrb[0].mxu0
  %v367 = vadd.f32 %v206, %v366
  %v368 = vpop.f32.mrb[0].mxu0
  %369 = vmatprep.mubr.f32.mxu0 %v39
  %370 = vmatmul.mubr.f32.gmra.mrb[0].mxu0 %v38
  %v371 = vpop.f32.mrb[0].mxu0
  %v372 = vadd.f32 %v211, %v371
  %v373 = vpop.f32.mrb[0].mxu0
  %374 = vmatprep.mubr.f32.mxu0 %v45
  %375 = vmatmul.mubr.f32.gmra.mrb[0].mxu0 %v44
  %v376 = vpop.f32.mrb[0].mxu0
  %v377 = vadd.f32 %v216, %v376
  %v378 = vpop.f32.mrb[0].mxu0
  %379 = vmatprep.mubr.f32.mxu0 %v51
  %380 = vmatmul.mubr.f32.gmra.mrb[0].mxu0 %v50
  %v381 = vpop.f32.mrb[0].mxu0
  %v382 = vadd.f32 %v221, %v381
  %v383 = vpop.f32.mrb[0].mxu0
  %384 = vmatprep.mubr.f32.mxu0 %v57
  %385 = vmatmul.mubr.f32.gmra.mrb[0].mxu0 %v56
  %v386 = vpop.f32.mrb[0].mxu0
  %v387 = vadd.f32 %v226, %v386
  %v388 = vpop.f32.mrb[0].mxu0
  %389 = vmatprep.mubr.f32.mxu0 %v63
  %390 = vmatmul.mubr.f32.gmra.mrb[0].mxu0 %v62
  %v391 = vpop.f32.mrb[0].mxu0
  %v392 = vadd.f32 %v231, %v391
  %v393 = vpop.f32.mrb[0].mxu0
  %394 = vmatprep.mubr.f32.mxu0 %v69
  %395 = vmatmul.mubr.f32.gmra.mrb[0].mxu0 %v68
  %v396 = vpop.f32.mrb[0].mxu0
  %v397 = vadd.f32 %v236, %v396
  %v398 = vpop.f32.mrb[0].mxu0
  %399 = vmatprep.mubr.f32.mxu0 %v75
  %400 = vmatmul.mubr.f32.gmra.mrb[0].mxu0 %v74
  %v401 = vpop.f32.mrb[0].mxu0
  %v402 = vadd.f32 %v241, %v401
  %v403 = vpop.f32.mrb[0].mxu0
  %404 = vmatprep.mubr.f32.mxu0 %v81
  %405 = vmatmul.mubr.f32.gmra.mrb[0].mxu0 %v80
  %v406 = vpop.f32.mrb[0].mxu0
  %v407 = vadd.f32 %v246, %v406
  %v408 = vpop.f32.mrb[0].mxu0
  %409 = vdwg.mxu0
  %410 = vmatprep.subr.mxu0 0.0
  %411 = vmatpush1.msra.mxu0 %v118
  %412 = vmatprep.subr.mxu0 0.0
  %413 = vmatpush1.msra.mxu0 %v119
  %414 = vmatprep.subr.mxu0 0.0
  %415 = vmatpush1.msra.mxu0 %v120
  %416 = vmatprep.subr.mxu0 0.0
  %417 = vmatpush1.msra.mxu0 %v121
  %418 = vmatprep.subr.mxu0 0.0
  %419 = vmatpush1.msra.mxu0 %v122
  %420 = vmatprep.subr.mxu0 0.0
  %421 = vmatpush1.msra.mxu0 %v123
  %422 = vmatprep.subr.mxu0 0.0
  %423 = vmatpush1.msra.mxu0 %v124
  %424 = vmatprep.subr.mxu0 0.0
  %425 = vmatpush1.msra.mxu0 %v125
  %426 = vmatprep.subr.mxu0 0.0
  %427 = vmatpush1.msra.mxu0 %v126
  %428 = vmatprep.subr.mxu0 0.0
  %429 = vmatpush1.msra.mxu0 %v127
  %430 = vmatprep.subr.mxu0 0.0
  %431 = vmatpush1.msra.mxu0 %v128
  %432 = vmatprep.subr.mxu0 0.0
  %433 = vmatpush1.msra.mxu0 %v129
  %434 = vmatprep.subr.mxu0 0.0
  %435 = vmatpush1.msra.mxu0 %v130
  %436 = vmatprep.subr.mxu0 0.0
  %437 = vmatpush1.msra.mxu0 %v131
  %438 = vmatprep.subr.mxu0 0.0
  %439 = vmatpush1.msra.mxu0 %v132
  %440 = vmatprep.subr.mxu0 0.0
  %441 = vmatpush1.msra.mxu0 %v133
  %442 = vmatprep.subr.mxu0 0.0
  %443 = vmatpush1.msra.mxu0 %v134
  %444 = vmatprep.subr.mxu0 0.0
  %445 = vmatpush1.msra.mxu0 %v135
  %446 = vmatprep.subr.mxu0 0.0
  %447 = vmatpush1.msra.mxu0 %v136
  %448 = vmatprep.subr.mxu0 0.0
  %449 = vmatpush1.msra.mxu0 %v137
  %450 = vmatprep.subr.mxu0 0.0
  %451 = vmatpush1.msra.mxu0 %v138
  %452 = vmatprep.subr.mxu0 0.0
  %453 = vmatpush1.msra.mxu0 %v139
  %454 = vmatprep.subr.mxu0 0.0
  %455 = vmatpush1.msra.mxu0 %v140
  %456 = vmatprep.subr.mxu0 0.0
  %457 = vmatpush1.msra.mxu0 %v141
  %458 = vmatprep.subr.mxu0 0.0
  %459 = vmatpush1.msra.mxu0 %v142
  %460 = vmatprep.subr.mxu0 0.0
  %461 = vmatpush1.msra.mxu0 %v143
  %462 = vmatprep.subr.mxu0 0.0
  %463 = vmatpush1.msra.mxu0 %v144
  %464 = vmatprep.subr.mxu0 0.0
  %465 = vmatpush1.msra.mxu0 %v145
  %466 = vmatprep.subr.mxu0 0.0
  %467 = vmatpush1.msra.mxu0 %v146
  %468 = vmatprep.subr.mxu0 0.0
  %469 = vmatpush1.msra.mxu0 %v147
  %470 = vmatprep.subr.mxu0 0.0
  %471 = vmatpush1.msra.mxu0 %v148
  %472 = vmatprep.subr.mxu0 0.0
  %473 = vmatpush1.msra.mxu0 %v149
  %474 = vmatprep.mubr.f32.mxu0 %v17
  %475 = vmatmul.mubr.f32.gmra.mrb[0].mxu0 %v16
  %v476 = vpop.f32.mrb[0].mxu0
  %v477 = vadd.f32 %v352, %v476
  %v478 = vpop.f32.mrb[0].mxu0
  %479 = vmatprep.mubr.f32.mxu0 %v23
  %480 = vmatmul.mubr.f32.gmra.mrb[0].mxu0 %v22
  %v481 = vpop.f32.mrb[0].mxu0
  %v482 = vadd.f32 %v357, %v481
  %v483 = vpop.f32.mrb[0].mxu0
  %484 = vmatprep.mubr.f32.mxu0 %v29
  %485 = vmatmul.mubr.f32.gmra.mrb[0].mxu0 %v28
  %v486 = vpop.f32.mrb[0].mxu0
  %v487 = vadd.f32 %v362, %v486
  %v488 = vpop.f32.mrb[0].mxu0
  %489 = vmatprep.mubr.f32.mxu0 %v35
  %490 = vmatmul.mubr.f32.gmra.mrb[0].mxu0 %v34
  %v491 = vpop.f32.mrb[0].mxu0
  %v492 = vadd.f32 %v367, %v491
  %v493 = vpop.f32.mrb[0].mxu0
  %494 = vmatprep.mubr.f32.mxu0 %v41
  %495 = vmatmul.mubr.f32.gmra.mrb[0].mxu0 %v40
  %v496 = vpop.f32.mrb[0].mxu0
  %v497 = vadd.f32 %v372, %v496
  %v498 = vpop.f32.mrb[0].mxu0
  %499 = vmatprep.mubr.f32.mxu0 %v47
  %500 = vmatmul.mubr.f32.gmra.mrb[0].mxu0 %v46
  %v501 = vpop.f32.mrb[0].mxu0
  %v502 = vadd.f32 %v377, %v501
  %v503 = vpop.f32.mrb[0].mxu0
  %504 = vmatprep.mubr.f32.mxu0 %v53
  %505 = vmatmul.mubr.f32.gmra.mrb[0].mxu0 %v52
  %v506 = vpop.f32.mrb[0].mxu0
  %v507 = vadd.f32 %v382, %v506
  %v508 = vpop.f32.mrb[0].mxu0
  %509 = vmatprep.mubr.f32.mxu0 %v59
  %510 = vmatmul.mubr.f32.gmra.mrb[0].mxu0 %v58
  %v511 = vpop.f32.mrb[0].mxu0
  %v512 = vadd.f32 %v387, %v511
  %v513 = vpop.f32.mrb[0].mxu0
  %514 = vmatprep.mubr.f32.mxu0 %v65
  %515 = vmatmul.mubr.f32.gmra.mrb[0].mxu0 %v64
  %v516 = vpop.f32.mrb[0].mxu0
  %v517 = vadd.f32 %v392, %v516
  %v518 = vpop.f32.mrb[0].mxu0
  %519 = vmatprep.mubr.f32.mxu0 %v71
  %520 = vmatmul.mubr.f32.gmra.mrb[0].mxu0 %v70
  %v521 = vpop.f32.mrb[0].mxu0
  %v522 = vadd.f32 %v397, %v521
  %v523 = vpop.f32.mrb[0].mxu0
  %524 = vmatprep.mubr.f32.mxu0 %v77
  %525 = vmatmul.mubr.f32.gmra.mrb[0].mxu0 %v76
  %v526 = vpop.f32.mrb[0].mxu0
  %v527 = vadd.f32 %v402, %v526
  %v528 = vpop.f32.mrb[0].mxu0
  %529 = vmatprep.mubr.f32.mxu0 %v83
  %530 = vmatmul.mubr.f32.gmra.mrb[0].mxu0 %v82
  %v531 = vpop.f32.mrb[0].mxu0
  %v532 = vadd.f32 %v407, %v531
  %v533 = vpop.f32.mrb[0].mxu0
  %534 = vdwg.mxu0
  %535 = vmatprep.subr.mxu0 0.0
  %536 = vmatpush1.msra.mxu0 %v150
  %537 = vmatprep.subr.mxu0 0.0
  %538 = vmatpush1.msra.mxu0 %v151
  %539 = vmatprep.subr.mxu0 0.0
  %540 = vmatpush1.msra.mxu0 %v152
  %541 = vmatprep.subr.mxu0 0.0
  %542 = vmatpush1.msra.mxu0 %v153
  %543 = vmatprep.subr.mxu0 0.0
  %544 = vmatpush1.msra.mxu0 %v154
  %545 = vmatprep.subr.mxu0 0.0
  %546 = vmatpush1.msra.mxu0 %v155
  %547 = vmatprep.subr.mxu0 0.0
  %548 = vmatpush1.msra.mxu0 %v156
  %549 = vmatprep.subr.mxu0 0.0
  %550 = vmatpush1.msra.mxu0 %v157
  %551 = vmatprep.subr.mxu0 0.0
  %552 = vmatpush1.msra.mxu0 %v158
  %553 = vmatprep.subr.mxu0 0.0
  %554 = vmatpush1.msra.mxu0 %v159
  %555 = vmatprep.subr.mxu0 0.0
  %556 = vmatpush1.msra.mxu0 %v160
  %557 = vmatprep.subr.mxu0 0.0
  %558 = vmatpush1.msra.mxu0 %v161
  %559 = vmatprep.subr.mxu0 0.0
  %560 = vmatpush1.msra.mxu0 %v162
  %561 = vmatprep.subr.mxu0 0.0
  %562 = vmatpush1.msra.mxu0 %v163
  %563 = vmatprep.subr.mxu0 0.0
  %564 = vmatpush1.msra.mxu0 %v164
  %565 = vmatprep.subr.mxu0 0.0
  %566 = vmatpush1.msra.mxu0 %v165
  %567 = vmatprep.subr.mxu0 0.0
  %568 = vmatpush1.msra.mxu0 %v166
  %569 = vmatprep.subr.mxu0 0.0
  %570 = vmatpush1.msra.mxu0 %v167
  %571 = vmatprep.subr.mxu0 0.0
  %572 = vmatpush1.msra.mxu0 %v168
  %573 = vmatprep.subr.mxu0 0.0
  %574 = vmatpush1.msra.mxu0 %v169
  %575 = vmatprep.subr.mxu0 0.0
  %576 = vmatpush1.msra.mxu0 %v170
  %577 = vmatprep.subr.mxu0 0.0
  %578 = vmatpush1.msra.mxu0 %v171
  %579 = vmatprep.subr.mxu0 0.0
  %580 = vmatpush1.msra.mxu0 %v172
  %581 = vmatprep.subr.mxu0 0.0
  %582 = vmatpush1.msra.mxu0 %v173
  %583 = vmatprep.subr.mxu0 0.0
  %584 = vmatpush1.msra.mxu0 %v174
  %585 = vmatprep.subr.mxu0 0.0
  %586 = vmatpush1.msra.mxu0 %v175
  %587 = vmatprep.subr.mxu0 0.0
  %588 = vmatpush1.msra.mxu0 0.0
  %589 = vmatprep.subr.mxu0 0.0
  %590 = vmatpush1.msra.mxu0 0.0
  %591 = vmatprep.subr.mxu0 0.0
  %592 = vmatpush1.msra.mxu0 0.0
  %593 = vmatprep.subr.mxu0 0.0
  %594 = vmatpush1.msra.mxu0 0.0
  %595 = vmatprep.subr.mxu0 0.0
  %596 = vmatpush1.msra.mxu0 0.0
  %597 = vmatprep.subr.mxu0 0.0
  %598 = vmatpush1.msra.mxu0 0.0
  %599 = vmatprep.mubr.f32.mxu0 %v250
  %600 = vmatmul.mubr.f32.gmra.mrb[0].mxu0 %v18
  %v601 = vpop.f32.mrb[0].mxu0
  %v602 = vadd.f32 %v477, %v601
  %v603 = vpop.f32.mrb[0].mxu0
  %604 = vmatprep.mubr.f32.mxu0 %v253
  %605 = vmatmul.mubr.f32.gmra.mrb[0].mxu0 %v24
  %v606 = vpop.f32.mrb[0].mxu0
  %v607 = vadd.f32 %v482, %v606
  %v608 = vpop.f32.mrb[0].mxu0
  %609 = vmatprep.mubr.f32.mxu0 %v256
  %610 = vmatmul.mubr.f32.gmra.mrb[0].mxu0 %v30
  %v611 = vpop.f32.mrb[0].mxu0
  %v612 = vadd.f32 %v487, %v611
  %v613 = vpop.f32.mrb[0].mxu0
  %614 = vmatprep.mubr.f32.mxu0 %v259
  %615 = vmatmul.mubr.f32.gmra.mrb[0].mxu0 %v36
  %v616 = vpop.f32.mrb[0].mxu0
  %v617 = vadd.f32 %v492, %v616
  %v618 = vpop.f32.mrb[0].mxu0
  %619 = vmatprep.mubr.f32.mxu0 %v262
  %620 = vmatmul.mubr.f32.gmra.mrb[0].mxu0 %v42
  %v621 = vpop.f32.mrb[0].mxu0
  %v622 = vadd.f32 %v497, %v621
  %v623 = vpop.f32.mrb[0].mxu0
  %624 = vmatprep.mubr.f32.mxu0 %v265
  %625 = vmatmul.mubr.f32.gmra.mrb[0].mxu0 %v48
  %v626 = vpop.f32.mrb[0].mxu0
  %v627 = vadd.f32 %v502, %v626
  %v628 = vpop.f32.mrb[0].mxu0
  %629 = vmatprep.mubr.f32.mxu0 %v268
  %630 = vmatmul.mubr.f32.gmra.mrb[0].mxu0 %v54
  %v631 = vpop.f32.mrb[0].mxu0
  %v632 = vadd.f32 %v507, %v631
  %v633 = vpop.f32.mrb[0].mxu0
  %634 = vmatprep.mubr.f32.mxu0 %v271
  %635 = vmatmul.mubr.f32.gmra.mrb[0].mxu0 %v60
  %v636 = vpop.f32.mrb[0].mxu0
  %v637 = vadd.f32 %v512, %v636
  %v638 = vpop.f32.mrb[0].mxu0
  %639 = vmatprep.mubr.f32.mxu0 %v274
  %640 = vmatmul.mubr.f32.gmra.mrb[0].mxu0 %v66
  %v641 = vpop.f32.mrb[0].mxu0
  %v642 = vadd.f32 %v517, %v641
  %v643 = vpop.f32.mrb[0].mxu0
  %644 = vmatprep.mubr.f32.mxu0 %v277
  %645 = vmatmul.mubr.f32.gmra.mrb[0].mxu0 %v72
  %v646 = vpop.f32.mrb[0].mxu0
  %v647 = vadd.f32 %v522, %v646
  %v648 = vpop.f32.mrb[0].mxu0
  %649 = vmatprep.mubr.f32.mxu0 %v280
  %650 = vmatmul.mubr.f32.gmra.mrb[0].mxu0 %v78
  %v651 = vpop.f32.mrb[0].mxu0
  %v652 = vadd.f32 %v527, %v651
  %v653 = vpop.f32.mrb[0].mxu0
  %654 = vmatprep.mubr.f32.mxu0 %v283
  %655 = vmatmul.mubr.f32.gmra.mrb[0].mxu0 %v84
  %v656 = vpop.f32.mrb[0].mxu0
  %v657 = vadd.f32 %v532, %v656
  %v658 = vpop.f32.mrb[0].mxu0
  %659 = vdwg.mxu0
  %v660 = vmax.f32 %v602, 0.0
  %v661 = vmax.f32 %v607, 0.0
  %v662 = vmax.f32 %v612, 0.0
  %v663 = vmax.f32 %v617, 0.0
  %v664 = vmax.f32 %v622, 0.0
  %v665 = vmax.f32 %v627, 0.0
  %v666 = vmax.f32 %v632, 0.0
  %v667 = vmax.f32 %v637, 0.0
  %v668 = vmax.f32 %v642, 0.0
  %v669 = vmax.f32 %v647, 0.0
  %v670 = vmax.f32 %v652, 0.0
  %v671 = vmax.f32 %v657, 0.0
  %672 = vst [vmem:[%s3] sm:$0xff] %v660
  %673 = vst [vmem:[%s3 + $0x8] sm:$0xff] %v661
  %674 = vst [vmem:[%s3 + $0x10] sm:$0xff] %v662
  %675 = vst [vmem:[%s3 + $0x18] sm:$0xff] %v663
  %676 = vst [vmem:[%s3 + $0x20] sm:$0xff] %v664
  %677 = vst [vmem:[%s3 + $0x28] sm:$0xff] %v665
  %678 = vst [vmem:[%s3 + $0x30] sm:$0xff] %v666
  %679 = vst [vmem:[%s3 + $0x38] sm:$0xff] %v667
  %680 = vst [vmem:[%s3 + $0x40] sm:$0xff] %v668
  %681 = vst [vmem:[%s3 + $0x48] sm:$0xff] %v669
  %682 = vst [vmem:[%s3 + $0x50] sm:$0xff] %v670
  %683 = vst [vmem:[%s3 + $0x58] sm:$0xff] %v671
  // Predicated region
  $region14: #{_lambda_.23} parent=0 // pred_check
    _
  $region15: #{_lambda_.23} parent=0 // pred_check_branch
    %685 = sbr.rel (0) target = $region17
  $region16: #{_lambda_.23} parent=0 // pred_region
    _
  $region17: #{_lambda_.23} parent=0 // pred_fallthru
    _
  // Predicated region
  $region18: #{_lambda_.23} parent=0 // pred_check
    _
  $region19: #{_lambda_.23} parent=0 // pred_check_branch
    %687 = sbr.rel (0) target = $region21
  $region20: #{_lambda_.23} parent=0 // pred_region
    _
  $region21: #{_lambda_.23} parent=0 // pred_fallthru
    _

// kernel: _lambda_.24
$region0: #{_lambda_.24}
  #allocation0 [shape = 'u32[]', space=smem, size = 0x4, offset = 0x4, fixed_abs, tag = 'smem constant byte address 0x4 - core index']
  #allocation1 [shape = 'u32[144,128]{1,0:T(1,128)}', space=vmem, size = 0x12000, scoped, tag = 'internal scratch']
  %s0 = inlined_call_operand.vmem [shape: f32[32,864], index: 0, kind: input, shape index: {}]
  %s1 = inlined_call_operand.vmem [shape: f32[864,128], index: 1, kind: input, shape index: {}]
  %s2 = inlined_call_operand.vmem [shape: f32[1,128], index: 2, kind: input, shape index: {}]
  %s3 = inlined_call_operand.vmem [shape: f32[32,128], index: 3, kind: output, shape index: {}]
  %s4 = sld [smem:[#allocation0]]
  $region22: #{_lambda_.24} parent=0
    _
  %s6 = ssub.s32 1, %s4
  %s7 = scalar_select 0, %s6, %s4
  // Predicated region
  $region2: #{_lambda_.24} parent=0 // pred_check
    _
  $region3: #{_lambda_.24} parent=0 // pred_check_branch
    %9 = sbr.rel (0) target = $region5
  $region4: #{_lambda_.24} parent=0 // pred_region
    _
  $region5: #{_lambda_.24} parent=0 // pred_fallthru
    _
  // Predicated region
  $region6: #{_lambda_.24} parent=0 // pred_check
    _
  $region7: #{_lambda_.24} parent=0 // pred_check_branch
    %11 = sbr.rel (0) target = $region9
  $region8: #{_lambda_.24} parent=0 // pred_region
    _
  $region9: #{_lambda_.24} parent=0 // pred_fallthru
    _
  // Predicated region
  $region10: #{_lambda_.24} parent=0 // pred_check
    _
  $region11: #{_lambda_.24} parent=0 // pred_check_branch
    %13 = sbr.rel (0) target = $region13
  $region12: #{_lambda_.24} parent=0 // pred_region
    _
  $region13: #{_lambda_.24} parent=0 // pred_fallthru
    _
  %v14 = vld [vmem:[%s0] sm:$0xff]
  %v15 = vld [vmem:[%s0 + $0x8] sm:$0xff]
  %v16 = vld [vmem:[%s0 + $0x10] sm:$0xff]
  %v17 = vld [vmem:[%s0 + $0x18] sm:$0xff]
  %v18 = vld [vmem:[%s0 + $0x20] sm:$0xff]
  %v19 = vld [vmem:[%s0 + $0x28] sm:$0xff]
  %v20 = vld [vmem:[%s0 + $0x30] sm:$0xff]
  %v21 = vld [vmem:[%s0 + $0x38] sm:$0xff]
  %v22 = vld [vmem:[%s0 + $0x40] sm:$0xff]
  %v23 = vld [vmem:[%s0 + $0x48] sm:$0xff]
  %v24 = vld [vmem:[%s0 + $0x50] sm:$0xff]
  %v25 = vld [vmem:[%s0 + $0x58] sm:$0xff]
  %v26 = vld [vmem:[%s0 + $0x60] sm:$0xff]
  %v27 = vld [vmem:[%s0 + $0x68] sm:$0xff]
  %v28 = vld [vmem:[%s0 + $0x70] sm:$0xff]
  %v29 = vld [vmem:[%s0 + $0x78] sm:$0xff]
  %v30 = vld [vmem:[%s0 + $0x80] sm:$0xff]
  %v31 = vld [vmem:[%s0 + $0x88] sm:$0xff]
  %v32 = vld [vmem:[%s0 + $0x90] sm:$0xff]
  %v33 = vld [vmem:[%s0 + $0x98] sm:$0xff]
  %v34 = vld [vmem:[%s0 + $0xa0] sm:$0xff]
  %v35 = vld [vmem:[%s0 + $0xa8] sm:$0xff]
  %v36 = vld [vmem:[%s0 + $0xb0] sm:$0xff]
  %v37 = vld [vmem:[%s0 + $0xb8] sm:$0xff]
  %v38 = vld [vmem:[%s0 + $0xc0] sm:$0xff]
  %v39 = vld [vmem:[%s0 + $0xc8] sm:$0xff]
  %v40 = vld [vmem:[%s0 + $0xd0] sm:$0xff]
  %v41 = vld [vmem:[%s0 + $0xd8] sm:$0xff]
  %v42 = vld [vmem:[%s1] sm:$0xff]
  %v43 = vld [vmem:[%s1 + $0x8] sm:$0xff]
  %v44 = vld [vmem:[%s1 + $0x10] sm:$0xff]
  %v45 = vld [vmem:[%s1 + $0x18] sm:$0xff]
  %v46 = vld [vmem:[%s1 + $0x20] sm:$0xff]
  %v47 = vld [vmem:[%s1 + $0x28] sm:$0xff]
  %v48 = vld [vmem:[%s1 + $0x30] sm:$0xff]
  %v49 = vld [vmem:[%s1 + $0x38] sm:$0xff]
  %v50 = vld [vmem:[%s1 + $0x40] sm:$0xff]
  %v51 = vld [vmem:[%s1 + $0x48] sm:$0xff]
  %v52 = vld [vmem:[%s1 + $0x50] sm:$0xff]
  %v53 = vld [vmem:[%s1 + $0x58] sm:$0xff]
  %v54 = vld [vmem:[%s1 + $0x60] sm:$0xff]
  %v55 = vld [vmem:[%s1 + $0x68] sm:$0xff]
  %v56 = vld [vmem:[%s1 + $0x70] sm:$0xff]
  %v57 = vld [vmem:[%s1 + $0x78] sm:$0xff]
  %v58 = vld [vmem:[%s1 + $0x80] sm:$0xff]
  %v59 = vld [vmem:[%s1 + $0x88] sm:$0xff]
  %v60 = vld [vmem:[%s1 + $0x90] sm:$0xff]
  %v61 = vld [vmem:[%s1 + $0x98] sm:$0xff]
  %v62 = vld [vmem:[%s1 + $0xa0] sm:$0xff]
  %v63 = vld [vmem:[%s1 + $0xa8] sm:$0xff]
  %v64 = vld [vmem:[%s1 + $0xb0] sm:$0xff]
  %v65 = vld [vmem:[%s1 + $0xb8] sm:$0xff]
  %v66 = vld [vmem:[%s1 + $0xc0] sm:$0xff]
  %v67 = vld [vmem:[%s1 + $0xc8] sm:$0xff]
  %v68 = vld [vmem:[%s1 + $0xd0] sm:$0xff]
  %v69 = vld [vmem:[%s1 + $0xd8] sm:$0xff]
  %v70 = vld [vmem:[%s1 + $0xe0] sm:$0xff]
  %v71 = vld [vmem:[%s1 + $0xe8] sm:$0xff]
  %v72 = vld [vmem:[%s1 + $0xf0] sm:$0xff]
  %v73 = vld [vmem:[%s1 + $0xf8] sm:$0xff]
  %v74 = vld [vmem:[%s1 + $0x100] sm:$0xff]
  %v75 = vld [vmem:[%s1 + $0x108] sm:$0xff]
  %v76 = vld [vmem:[%s1 + $0x110] sm:$0xff]
  %v77 = vld [vmem:[%s1 + $0x118] sm:$0xff]
  %v78 = vld [vmem:[%s1 + $0x120] sm:$0xff]
  %v79 = vld [vmem:[%s1 + $0x128] sm:$0xff]
  %v80 = vld [vmem:[%s1 + $0x130] sm:$0xff]
  %v81 = vld [vmem:[%s1 + $0x138] sm:$0xff]
  %v82 = vld [vmem:[%s1 + $0x140] sm:$0xff]
  %v83 = vld [vmem:[%s1 + $0x148] sm:$0xff]
  %v84 = vld [vmem:[%s1 + $0x150] sm:$0xff]
  %v85 = vld [vmem:[%s1 + $0x158] sm:$0xff]
  %v86 = vld [vmem:[%s1 + $0x160] sm:$0xff]
  %v87 = vld [vmem:[%s1 + $0x168] sm:$0xff]
  %v88 = vld [vmem:[%s1 + $0x170] sm:$0xff]
  %v89 = vld [vmem:[%s1 + $0x178] sm:$0xff]
  %v90 = vld [vmem:[%s1 + $0x180] sm:$0xff]
  %v91 = vld [vmem:[%s1 + $0x188] sm:$0xff]
  %v92 = vld [vmem:[%s1 + $0x190] sm:$0xff]
  %v93 = vld [vmem:[%s1 + $0x198] sm:$0xff]
  %v94 = vld [vmem:[%s1 + $0x1a0] sm:$0xff]
  %v95 = vld [vmem:[%s1 + $0x1a8] sm:$0xff]
  %v96 = vld [vmem:[%s1 + $0x1b0] sm:$0xff]
  %v97 = vld [vmem:[%s1 + $0x1b8] sm:$0xff]
  %v98 = vld [vmem:[%s1 + $0x1c0] sm:$0xff]
  %v99 = vld [vmem:[%s1 + $0x1c8] sm:$0xff]
  %v100 = vld [vmem:[%s1 + $0x1d0] sm:$0xff]
  %v101 = vld [vmem:[%s1 + $0x1d8] sm:$0xff]
  %v102 = vld [vmem:[%s1 + $0x1e0] sm:$0xff]
  %v103 = vld [vmem:[%s1 + $0x1e8] sm:$0xff]
  %v104 = vld [vmem:[%s1 + $0x1f0] sm:$0xff]
  %v105 = vld [vmem:[%s1 + $0x1f8] sm:$0xff]
  %v106 = vld [vmem:[%s1 + $0x200] sm:$0xff]
  %v107 = vld [vmem:[%s1 + $0x208] sm:$0xff]
  %v108 = vld [vmem:[%s1 + $0x210] sm:$0xff]
  %v109 = vld [vmem:[%s1 + $0x218] sm:$0xff]
  %v110 = vld [vmem:[%s1 + $0x220] sm:$0xff]
  %v111 = vld [vmem:[%s1 + $0x228] sm:$0xff]
  %v112 = vld [vmem:[%s1 + $0x230] sm:$0xff]
  %v113 = vld [vmem:[%s1 + $0x238] sm:$0xff]
  %v114 = vld [vmem:[%s1 + $0x240] sm:$0xff]
  %v115 = vld [vmem:[%s1 + $0x248] sm:$0xff]
  %v116 = vld [vmem:[%s1 + $0x250] sm:$0xff]
  %v117 = vld [vmem:[%s1 + $0x258] sm:$0xff]
  %v118 = vld [vmem:[%s1 + $0x260] sm:$0xff]
  %v119 = vld [vmem:[%s1 + $0x268] sm:$0xff]
  %v120 = vld [vmem:[%s1 + $0x270] sm:$0xff]
  %v121 = vld [vmem:[%s1 + $0x278] sm:$0xff]
  %v122 = vld [vmem:[%s1 + $0x280] sm:$0xff]
  %v123 = vld [vmem:[%s1 + $0x288] sm:$0xff]
  %v124 = vld [vmem:[%s1 + $0x290] sm:$0xff]
  %v125 = vld [vmem:[%s1 + $0x298] sm:$0xff]
  %v126 = vld [vmem:[%s1 + $0x2a0] sm:$0xff]
  %v127 = vld [vmem:[%s1 + $0x2a8] sm:$0xff]
  %v128 = vld [vmem:[%s1 + $0x2b0] sm:$0xff]
  %v129 = vld [vmem:[%s1 + $0x2b8] sm:$0xff]
  %v130 = vld [vmem:[%s1 + $0x2c0] sm:$0xff]
  %v131 = vld [vmem:[%s1 + $0x2c8] sm:$0xff]
  %v132 = vld [vmem:[%s1 + $0x2d0] sm:$0xff]
  %v133 = vld [vmem:[%s1 + $0x2d8] sm:$0xff]
  %v134 = vld [vmem:[%s1 + $0x2e0] sm:$0xff]
  %v135 = vld [vmem:[%s1 + $0x2e8] sm:$0xff]
  %v136 = vld [vmem:[%s1 + $0x2f0] sm:$0xff]
  %v137 = vld [vmem:[%s1 + $0x2f8] sm:$0xff]
  %v138 = vld [vmem:[%s1 + $0x300] sm:$0xff]
  %v139 = vld [vmem:[%s1 + $0x308] sm:$0xff]
  %v140 = vld [vmem:[%s1 + $0x310] sm:$0xff]
  %v141 = vld [vmem:[%s1 + $0x318] sm:$0xff]
  %v142 = vld [vmem:[%s1 + $0x320] sm:$0xff]
  %v143 = vld [vmem:[%s1 + $0x328] sm:$0xff]
  %v144 = vld [vmem:[%s1 + $0x330] sm:$0xff]
  %v145 = vld [vmem:[%s1 + $0x338] sm:$0xff]
  %v146 = vld [vmem:[%s1 + $0x340] sm:$0xff]
  %v147 = vld [vmem:[%s1 + $0x348] sm:$0xff]
  %v148 = vld [vmem:[%s1 + $0x350] sm:$0xff]
  %v149 = vld [vmem:[%s1 + $0x358] sm:$0xff]
  %v150 = vld [vmem:[%s2] sm:$0x1]
  %v152 = vlaneseq
  %v153 = vshrl.u32 %v152, 7
  %v154 = vsub.s32 0, %v153
  %v155 = vrot.slane %v150, %v154
  %vm157 = vcmask 785408
  %v159 = vsel %vm157, %v20, 0
  %v162 = vsel %vm157, %v27, 0
  %v165 = vsel %vm157, %v34, 0
  %v168 = vsel %vm157, %v41, 0
  %170 = vmatprep.subr.mxu0 0.0
  %171 = vmatpush1.msra.mxu0 %v42
  %172 = vmatprep.subr.mxu0 0.0
  %173 = vmatpush1.msra.mxu0 %v43
  %174 = vmatprep.subr.mxu0 0.0
  %175 = vmatpush1.msra.mxu0 %v44
  %176 = vmatprep.subr.mxu0 0.0
  %177 = vmatpush1.msra.mxu0 %v45
  %178 = vmatprep.subr.mxu0 0.0
  %179 = vmatpush1.msra.mxu0 %v46
  %180 = vmatprep.subr.mxu0 0.0
  %181 = vmatpush1.msra.mxu0 %v47
  %182 = vmatprep.subr.mxu0 0.0
  %183 = vmatpush1.msra.mxu0 %v48
  %184 = vmatprep.subr.mxu0 0.0
  %185 = vmatpush1.msra.mxu0 %v49
  %186 = vmatprep.subr.mxu0 0.0
  %187 = vmatpush1.msra.mxu0 %v50
  %188 = vmatprep.subr.mxu0 0.0
  %189 = vmatpush1.msra.mxu0 %v51
  %190 = vmatprep.subr.mxu0 0.0
  %191 = vmatpush1.msra.mxu0 %v52
  %192 = vmatprep.subr.mxu0 0.0
  %193 = vmatpush1.msra.mxu0 %v53
  %194 = vmatprep.subr.mxu0 0.0
  %195 = vmatpush1.msra.mxu0 %v54
  %196 = vmatprep.subr.mxu0 0.0
  %197 = vmatpush1.msra.mxu0 %v55
  %198 = vmatprep.subr.mxu0 0.0
  %199 = vmatpush1.msra.mxu0 %v56
  %200 = vmatprep.subr.mxu0 0.0
  %201 = vmatpush1.msra.mxu0 %v57
  %202 = vmatprep.subr.mxu0 0.0
  %203 = vmatpush1.msra.mxu0 %v58
  %204 = vmatprep.subr.mxu0 0.0
  %205 = vmatpush1.msra.mxu0 %v59
  %206 = vmatprep.subr.mxu0 0.0
  %207 = vmatpush1.msra.mxu0 %v60
  %208 = vmatprep.subr.mxu0 0.0
  %209 = vmatpush1.msra.mxu0 %v61
  %210 = vmatprep.subr.mxu0 0.0
  %211 = vmatpush1.msra.mxu0 %v62
  %212 = vmatprep.subr.mxu0 0.0
  %213 = vmatpush1.msra.mxu0 %v63
  %214 = vmatprep.subr.mxu0 0.0
  %215 = vmatpush1.msra.mxu0 %v64
  %216 = vmatprep.subr.mxu0 0.0
  %217 = vmatpush1.msra.mxu0 %v65
  %218 = vmatprep.subr.mxu0 0.0
  %219 = vmatpush1.msra.mxu0 %v66
  %220 = vmatprep.subr.mxu0 0.0
  %221 = vmatpush1.msra.mxu0 %v67
  %222 = vmatprep.subr.mxu0 0.0
  %223 = vmatpush1.msra.mxu0 %v68
  %224 = vmatprep.subr.mxu0 0.0
  %225 = vmatpush1.msra.mxu0 %v69
  %226 = vmatprep.subr.mxu0 0.0
  %227 = vmatpush1.msra.mxu0 %v70
  %228 = vmatprep.subr.mxu0 0.0
  %229 = vmatpush1.msra.mxu0 %v71
  %230 = vmatprep.subr.mxu0 0.0
  %231 = vmatpush1.msra.mxu0 %v72
  %232 = vmatprep.subr.mxu0 0.0
  %233 = vmatpush1.msra.mxu0 %v73
  %234 = vmatprep.mubr.f32.mxu0 %v15
  %235 = vmatmul.mubr.f32.gmra.mrb[0].mxu0 %v14
  %v236 = vpop.f32.mrb[0].mxu0
  %v237 = vadd.f32 %v155, %v236
  %v238 = vpop.f32.mrb[0].mxu0
  %239 = vmatprep.mubr.f32.mxu0 %v22
  %240 = vmatmul.mubr.f32.gmra.mrb[0].mxu0 %v21
  %v241 = vpop.f32.mrb[0].mxu0
  %v242 = vadd.f32 %v155, %v241
  %v243 = vpop.f32.mrb[0].mxu0
  %244 = vmatprep.mubr.f32.mxu0 %v29
  %245 = vmatmul.mubr.f32.gmra.mrb[0].mxu0 %v28
  %v246 = vpop.f32.mrb[0].mxu0
  %v247 = vadd.f32 %v155, %v246
  %v248 = vpop.f32.mrb[0].mxu0
  %249 = vmatprep.mubr.f32.mxu0 %v36
  %250 = vmatmul.mubr.f32.gmra.mrb[0].mxu0 %v35
  %v251 = vpop.f32.mrb[0].mxu0
  %v252 = vadd.f32 %v155, %v251
  %v253 = vpop.f32.mrb[0].mxu0
  %254 = vdwg.mxu0
  %255 = vmatprep.subr.mxu0 0.0
  %256 = vmatpush1.msra.mxu0 %v74
  %257 = vmatprep.subr.mxu0 0.0
  %258 = vmatpush1.msra.mxu0 %v75
  %259 = vmatprep.subr.mxu0 0.0
  %260 = vmatpush1.msra.mxu0 %v76
  %261 = vmatprep.subr.mxu0 0.0
  %262 = vmatpush1.msra.mxu0 %v77
  %263 = vmatprep.subr.mxu0 0.0
  %264 = vmatpush1.msra.mxu0 %v78
  %265 = vmatprep.subr.mxu0 0.0
  %266 = vmatpush1.msra.mxu0 %v79
  %267 = vmatprep.subr.mxu0 0.0
  %268 = vmatpush1.msra.mxu0 %v80
  %269 = vmatprep.subr.mxu0 0.0
  %270 = vmatpush1.msra.mxu0 %v81
  %271 = vmatprep.subr.mxu0 0.0
  %272 = vmatpush1.msra.mxu0 %v82
  %273 = vmatprep.subr.mxu0 0.0
  %274 = vmatpush1.msra.mxu0 %v83
  %275 = vmatprep.subr.mxu0 0.0
  %276 = vmatpush1.msra.mxu0 %v84
  %277 = vmatprep.subr.mxu0 0.0
  %278 = vmatpush1.msra.mxu0 %v85
  %279 = vmatprep.subr.mxu0 0.0
  %280 = vmatpush1.msra.mxu0 %v86
  %281 = vmatprep.subr.mxu0 0.0
  %282 = vmatpush1.msra.mxu0 %v87
  %283 = vmatprep.subr.mxu0 0.0
  %284 = vmatpush1.msra.mxu0 %v88
  %285 = vmatprep.subr.mxu0 0.0
  %286 = vmatpush1.msra.mxu0 %v89
  %287 = vmatprep.subr.mxu0 0.0
  %288 = vmatpush1.msra.mxu0 %v90
  %289 = vmatprep.subr.mxu0 0.0
  %290 = vmatpush1.msra.mxu0 %v91
  %291 = vmatprep.subr.mxu0 0.0
  %292 = vmatpush1.msra.mxu0 %v92
  %293 = vmatprep.subr.mxu0 0.0
  %294 = vmatpush1.msra.mxu0 %v93
  %295 = vmatprep.subr.mxu0 0.0
  %296 = vmatpush1.msra.mxu0 %v94
  %297 = vmatprep.subr.mxu0 0.0
  %298 = vmatpush1.msra.mxu0 %v95
  %299 = vmatprep.subr.mxu0 0.0
  %300 = vmatpush1.msra.mxu0 %v96
  %301 = vmatprep.subr.mxu0 0.0
  %302 = vmatpush1.msra.mxu0 %v97
  %303 = vmatprep.subr.mxu0 0.0
  %304 = vmatpush1.msra.mxu0 %v98
  %305 = vmatprep.subr.mxu0 0.0
  %306 = vmatpush1.msra.mxu0 %v99
  %307 = vmatprep.subr.mxu0 0.0
  %308 = vmatpush1.msra.mxu0 %v100
  %309 = vmatprep.subr.mxu0 0.0
  %310 = vmatpush1.msra.mxu0 %v101
  %311 = vmatprep.subr.mxu0 0.0
  %312 = vmatpush1.msra.mxu0 %v102
  %313 = vmatprep.subr.mxu0 0.0
  %314 = vmatpush1.msra.mxu0 %v103
  %315 = vmatprep.subr.mxu0 0.0
  %316 = vmatpush1.msra.mxu0 %v104
  %317 = vmatprep.subr.mxu0 0.0
  %318 = vmatpush1.msra.mxu0 %v105
  %319 = vmatprep.mubr.f32.mxu0 %v17
  %320 = vmatmul.mubr.f32.gmra.mrb[0].mxu0 %v16
  %v321 = vpop.f32.mrb[0].mxu0
  %v322 = vadd.f32 %v237, %v321
  %v323 = vpop.f32.mrb[0].mxu0
  %324 = vmatprep.mubr.f32.mxu0 %v24
  %325 = vmatmul.mubr.f32.gmra.mrb[0].mxu0 %v23
  %v326 = vpop.f32.mrb[0].mxu0
  %v327 = vadd.f32 %v242, %v326
  %v328 = vpop.f32.mrb[0].mxu0
  %329 = vmatprep.mubr.f32.mxu0 %v31
  %330 = vmatmul.mubr.f32.gmra.mrb[0].mxu0 %v30
  %v331 = vpop.f32.mrb[0].mxu0
  %v332 = vadd.f32 %v247, %v331
  %v333 = vpop.f32.mrb[0].mxu0
  %334 = vmatprep.mubr.f32.mxu0 %v38
  %335 = vmatmul.mubr.f32.gmra.mrb[0].mxu0 %v37
  %v336 = vpop.f32.mrb[0].mxu0
  %v337 = vadd.f32 %v252, %v336
  %v338 = vpop.f32.mrb[0].mxu0
  %339 = vdwg.mxu0
  %340 = vmatprep.subr.mxu0 0.0
  %341 = vmatpush1.msra.mxu0 %v106
  %342 = vmatprep.subr.mxu0 0.0
  %343 = vmatpush1.msra.mxu0 %v107
  %344 = vmatprep.subr.mxu0 0.0
  %345 = vmatpush1.msra.mxu0 %v108
  %346 = vmatprep.subr.mxu0 0.0
  %347 = vmatpush1.msra.mxu0 %v109
  %348 = vmatprep.subr.mxu0 0.0
  %349 = vmatpush1.msra.mxu0 %v110
  %350 = vmatprep.subr.mxu0 0.0
  %351 = vmatpush1.msra.mxu0 %v111
  %352 = vmatprep.subr.mxu0 0.0
  %353 = vmatpush1.msra.mxu0 %v112
  %354 = vmatprep.subr.mxu0 0.0
  %355 = vmatpush1.msra.mxu0 %v113
  %356 = vmatprep.subr.mxu0 0.0
  %357 = vmatpush1.msra.mxu0 %v114
  %358 = vmatprep.subr.mxu0 0.0
  %359 = vmatpush1.msra.mxu0 %v115
  %360 = vmatprep.subr.mxu0 0.0
  %361 = vmatpush1.msra.mxu0 %v116
  %362 = vmatprep.subr.mxu0 0.0
  %363 = vmatpush1.msra.mxu0 %v117
  %364 = vmatprep.subr.mxu0 0.0
  %365 = vmatpush1.msra.mxu0 %v118
  %366 = vmatprep.subr.mxu0 0.0
  %367 = vmatpush1.msra.mxu0 %v119
  %368 = vmatprep.subr.mxu0 0.0
  %369 = vmatpush1.msra.mxu0 %v120
  %370 = vmatprep.subr.mxu0 0.0
  %371 = vmatpush1.msra.mxu0 %v121
  %372 = vmatprep.subr.mxu0 0.0
  %373 = vmatpush1.msra.mxu0 %v122
  %374 = vmatprep.subr.mxu0 0.0
  %375 = vmatpush1.msra.mxu0 %v123
  %376 = vmatprep.subr.mxu0 0.0
  %377 = vmatpush1.msra.mxu0 %v124
  %378 = vmatprep.subr.mxu0 0.0
  %379 = vmatpush1.msra.mxu0 %v125
  %380 = vmatprep.subr.mxu0 0.0
  %381 = vmatpush1.msra.mxu0 %v126
  %382 = vmatprep.subr.mxu0 0.0
  %383 = vmatpush1.msra.mxu0 %v127
  %384 = vmatprep.subr.mxu0 0.0
  %385 = vmatpush1.msra.mxu0 %v128
  %386 = vmatprep.subr.mxu0 0.0
  %387 = vmatpush1.msra.mxu0 %v129
  %388 = vmatprep.subr.mxu0 0.0
  %389 = vmatpush1.msra.mxu0 %v130
  %390 = vmatprep.subr.mxu0 0.0
  %391 = vmatpush1.msra.mxu0 %v131
  %392 = vmatprep.subr.mxu0 0.0
  %393 = vmatpush1.msra.mxu0 %v132
  %394 = vmatprep.subr.mxu0 0.0
  %395 = vmatpush1.msra.mxu0 %v133
  %396 = vmatprep.subr.mxu0 0.0
  %397 = vmatpush1.msra.mxu0 %v134
  %398 = vmatprep.subr.mxu0 0.0
  %399 = vmatpush1.msra.mxu0 %v135
  %400 = vmatprep.subr.mxu0 0.0
  %401 = vmatpush1.msra.mxu0 %v136
  %402 = vmatprep.subr.mxu0 0.0
  %403 = vmatpush1.msra.mxu0 %v137
  %404 = vmatprep.mubr.f32.mxu0 %v19
  %405 = vmatmul.mubr.f32.gmra.mrb[0].mxu0 %v18
  %v406 = vpop.f32.mrb[0].mxu0
  %v407 = vadd.f32 %v322, %v406
  %v408 = vpop.f32.mrb[0].mxu0
  %409 = vmatprep.mubr.f32.mxu0 %v26
  %410 = vmatmul.mubr.f32.gmra.mrb[0].mxu0 %v25
  %v411 = vpop.f32.mrb[0].mxu0
  %v412 = vadd.f32 %v327, %v411
  %v413 = vpop.f32.mrb[0].mxu0
  %414 = vmatprep.mubr.f32.mxu0 %v33
  %415 = vmatmul.mubr.f32.gmra.mrb[0].mxu0 %v32
  %v416 = vpop.f32.mrb[0].mxu0
  %v417 = vadd.f32 %v332, %v416
  %v418 = vpop.f32.mrb[0].mxu0
  %419 = vmatprep.mubr.f32.mxu0 %v40
  %420 = vmatmul.mubr.f32.gmra.mrb[0].mxu0 %v39
  %v421 = vpop.f32.mrb[0].mxu0
  %v422 = vadd.f32 %v337, %v421
  %v423 = vpop.f32.mrb[0].mxu0
  %424 = vdwg.mxu0
  %425 = vmatprep.subr.mxu0 0.0
  %426 = vmatpush1.msra.mxu0 %v138
  %427 = vmatprep.subr.mxu0 0.0
  %428 = vmatpush1.msra.mxu0 %v139
  %429 = vmatprep.subr.mxu0 0.0
  %430 = vmatpush1.msra.mxu0 %v140
  %431 = vmatprep.subr.mxu0 0.0
  %432 = vmatpush1.msra.mxu0 %v141
  %433 = vmatprep.subr.mxu0 0.0
  %434 = vmatpush1.msra.mxu0 %v142
  %435 = vmatprep.subr.mxu0 0.0
  %436 = vmatpush1.msra.mxu0 %v143
  %437 = vmatprep.subr.mxu0 0.0
  %438 = vmatpush1.msra.mxu0 %v144
  %439 = vmatprep.subr.mxu0 0.0
  %440 = vmatpush1.msra.mxu0 %v145
  %441 = vmatprep.subr.mxu0 0.0
  %442 = vmatpush1.msra.mxu0 %v146
  %443 = vmatprep.subr.mxu0 0.0
  %444 = vmatpush1.msra.mxu0 %v147
  %445 = vmatprep.subr.mxu0 0.0
  %446 = vmatpush1.msra.mxu0 %v148
  %447 = vmatprep.subr.mxu0 0.0
  %448 = vmatpush1.msra.mxu0 %v149
  %449 = vmatprep.subr.mxu0 0.0
  %450 = vmatpush1.msra.mxu0 0.0
  %451 = vmatprep.subr.mxu0 0.0
  %452 = vmatpush1.msra.mxu0 0.0
  %453 = vmatprep.subr.mxu0 0.0
  %454 = vmatpush1.msra.mxu0 0.0
  %455 = vmatprep.subr.mxu0 0.0
  %456 = vmatpush1.msra.mxu0 0.0
  %457 = vmatprep.subr.mxu0 0.0
  %458 = vmatpush1.msra.mxu0 0.0
  %459 = vmatprep.subr.mxu0 0.0
  %460 = vmatpush1.msra.mxu0 0.0
  %461 = vmatprep.subr.mxu0 0.0
  %462 = vmatpush1.msra.mxu0 0.0
  %463 = vmatprep.subr.mxu0 0.0
  %464 = vmatpush1.msra.mxu0 0.0
  %465 = vmatprep.subr.mxu0 0.0
  %466 = vmatpush1.msra.mxu0 0.0
  %467 = vmatprep.subr.mxu0 0.0
  %468 = vmatpush1.msra.mxu0 0.0
  %469 = vmatprep.subr.mxu0 0.0
  %470 = vmatpush1.msra.mxu0 0.0
  %471 = vmatprep.subr.mxu0 0.0
  %472 = vmatpush1.msra.mxu0 0.0
  %473 = vmatprep.subr.mxu0 0.0
  %474 = vmatpush1.msra.mxu0 0.0
  %475 = vmatprep.subr.mxu0 0.0
  %476 = vmatpush1.msra.mxu0 0.0
  %477 = vmatprep.subr.mxu0 0.0
  %478 = vmatpush1.msra.mxu0 0.0
  %479 = vmatprep.subr.mxu0 0.0
  %480 = vmatpush1.msra.mxu0 0.0
  %481 = vmatprep.subr.mxu0 0.0
  %482 = vmatpush1.msra.mxu0 0.0
  %483 = vmatprep.subr.mxu0 0.0
  %484 = vmatpush1.msra.mxu0 0.0
  %485 = vmatprep.subr.mxu0 0.0
  %486 = vmatpush1.msra.mxu0 0.0
  %487 = vmatprep.subr.mxu0 0.0
  %488 = vmatpush1.msra.mxu0 0.0
  %489 = vmatprep.mubr.f32.mxu0 0.0
  %490 = vmatmul.mubr.f32.gmra.mrb[0].mxu0 %v159
  %v491 = vpop.f32.mrb[0].mxu0
  %v492 = vadd.f32 %v407, %v491
  %v493 = vpop.f32.mrb[0].mxu0
  %494 = vmatprep.mubr.f32.mxu0 0.0
  %495 = vmatmul.mubr.f32.gmra.mrb[0].mxu0 %v162
  %v496 = vpop.f32.mrb[0].mxu0
  %v497 = vadd.f32 %v412, %v496
  %v498 = vpop.f32.mrb[0].mxu0
  %499 = vmatprep.mubr.f32.mxu0 0.0
  %500 = vmatmul.mubr.f32.gmra.mrb[0].mxu0 %v165
  %v501 = vpop.f32.mrb[0].mxu0
  %v502 = vadd.f32 %v417, %v501
  %v503 = vpop.f32.mrb[0].mxu0
  %504 = vmatprep.mubr.f32.mxu0 0.0
  %505 = vmatmul.mubr.f32.gmra.mrb[0].mxu0 %v168
  %v506 = vpop.f32.mrb[0].mxu0
  %v507 = vadd.f32 %v422, %v506
  %v508 = vpop.f32.mrb[0].mxu0
  %509 = vdwg.mxu0
  %v510 = vmax.f32 %v492, 0.0
  %v511 = vmax.f32 %v497, 0.0
  %v512 = vmax.f32 %v502, 0.0
  %v513 = vmax.f32 %v507, 0.0
  %514 = vst [vmem:[%s3] sm:$0xff] %v510
  %515 = vst [vmem:[%s3 + $0x8] sm:$0xff] %v511
  %516 = vst [vmem:[%s3 + $0x10] sm:$0xff] %v512
  %517 = vst [vmem:[%s3 + $0x18] sm:$0xff] %v513
  // Predicated region
  $region14: #{_lambda_.24} parent=0 // pred_check
    _
  $region15: #{_lambda_.24} parent=0 // pred_check_branch
    %519 = sbr.rel (0) target = $region17
  $region16: #{_lambda_.24} parent=0 // pred_region
    _
  $region17: #{_lambda_.24} parent=0 // pred_fallthru
    _
  // Predicated region
  $region18: #{_lambda_.24} parent=0 // pred_check
    _
  $region19: #{_lambda_.24} parent=0 // pred_check_branch
    %521 = sbr.rel (0) target = $region21
  $region20: #{_lambda_.24} parent=0 // pred_region
    _
  $region21: #{_lambda_.24} parent=0 // pred_fallthru
    _

// kernel: _lambda_.25
$region0: #{_lambda_.25}
  #allocation0 [shape = 'u32[]', space=smem, size = 0x4, offset = 0x4, fixed_abs, tag = 'smem constant byte address 0x4 - core index']
  #allocation1 [shape = 'u32[144,128]{1,0:T(1,128)}', space=vmem, size = 0x12000, scoped, tag = 'internal scratch']
  %s0 = inlined_call_operand.vmem [shape: f32[8,1152], index: 0, kind: input, shape index: {}]
  %s1 = inlined_call_operand.vmem [shape: f32[1152,128], index: 1, kind: input, shape index: {}]
  %s2 = inlined_call_operand.vmem [shape: f32[1,128], index: 2, kind: input, shape index: {}]
  %s3 = inlined_call_operand.hbm [shape: f32[8,128], index: 3, kind: output, shape index: {}]
  %s4 = sld [smem:[#allocation0]]
  $region22: #{_lambda_.25} parent=0
    _
  %s6 = ssub.s32 1, %s4
  %s7 = scalar_select 0, %s6, %s4
  $region1: #{_lambda_.25} parent=0
    #allocation2 [shape = 'u8[4096]{0}', space=vmem, size = 0x1000, scoped, tag = 'output window, operand 0, single buffered']
    #allocation3 [shape = 's32[1]{0}', space=sflag, size = 0x4, scoped, tag = 'scoped memory for _lambda_.25']
    %8 = vsyncpa [#allocation3], 0
    // Predicated region
    $region2: #{_lambda_.25} parent=1 // pred_check
      _
    $region3: #{_lambda_.25} parent=1 // pred_check_branch
      %10 = sbr.rel (0) target = $region5
    $region4: #{_lambda_.25} parent=1 // pred_region
      _
    $region5: #{_lambda_.25} parent=1 // pred_fallthru
      _
    // Predicated region
    $region6: #{_lambda_.25} parent=1 // pred_check
      _
    $region7: #{_lambda_.25} parent=1 // pred_check_branch
      %12 = sbr.rel (0) target = $region9
    $region8: #{_lambda_.25} parent=1 // pred_region
      _
    $region9: #{_lambda_.25} parent=1 // pred_fallthru
      _
    // Predicated region
    $region10: #{_lambda_.25} parent=1 // pred_check
      _
    $region11: #{_lambda_.25} parent=1 // pred_check_branch
      %14 = sbr.rel (0) target = $region13
    $region12: #{_lambda_.25} parent=1 // pred_region
      _
    $region13: #{_lambda_.25} parent=1 // pred_fallthru
      _
    %v15 = vld [vmem:[%s0] sm:$0xff]
    %v16 = vld [vmem:[%s0 + $0x8] sm:$0xff]
    %v17 = vld [vmem:[%s0 + $0x10] sm:$0xff]
    %v18 = vld [vmem:[%s0 + $0x18] sm:$0xff]
    %v19 = vld [vmem:[%s0 + $0x20] sm:$0xff]
    %v20 = vld [vmem:[%s0 + $0x28] sm:$0xff]
    %v21 = vld [vmem:[%s0 + $0x30] sm:$0xff]
    %v22 = vld [vmem:[%s0 + $0x38] sm:$0xff]
    %v23 = vld [vmem:[%s0 + $0x40] sm:$0xff]
    %v24 = vld [vmem:[%s1] sm:$0xff]
    %v25 = vld [vmem:[%s1 + $0x8] sm:$0xff]
    %v26 = vld [vmem:[%s1 + $0x10] sm:$0xff]
    %v27 = vld [vmem:[%s1 + $0x18] sm:$0xff]
    %v28 = vld [vmem:[%s1 + $0x20] sm:$0xff]
    %v29 = vld [vmem:[%s1 + $0x28] sm:$0xff]
    %v30 = vld [vmem:[%s1 + $0x30] sm:$0xff]
    %v31 = vld [vmem:[%s1 + $0x38] sm:$0xff]
    %v32 = vld [vmem:[%s1 + $0x40] sm:$0xff]
    %v33 = vld [vmem:[%s1 + $0x48] sm:$0xff]
    %v34 = vld [vmem:[%s1 + $0x50] sm:$0xff]
    %v35 = vld [vmem:[%s1 + $0x58] sm:$0xff]
    %v36 = vld [vmem:[%s1 + $0x60] sm:$0xff]
    %v37 = vld [vmem:[%s1 + $0x68] sm:$0xff]
    %v38 = vld [vmem:[%s1 + $0x70] sm:$0xff]
    %v39 = vld [vmem:[%s1 + $0x78] sm:$0xff]
    %v40 = vld [vmem:[%s1 + $0x80] sm:$0xff]
    %v41 = vld [vmem:[%s1 + $0x88] sm:$0xff]
    %v42 = vld [vmem:[%s1 + $0x90] sm:$0xff]
    %v43 = vld [vmem:[%s1 + $0x98] sm:$0xff]
    %v44 = vld [vmem:[%s1 + $0xa0] sm:$0xff]
    %v45 = vld [vmem:[%s1 + $0xa8] sm:$0xff]
    %v46 = vld [vmem:[%s1 + $0xb0] sm:$0xff]
    %v47 = vld [vmem:[%s1 + $0xb8] sm:$0xff]
    %v48 = vld [vmem:[%s1 + $0xc0] sm:$0xff]
    %v49 = vld [vmem:[%s1 + $0xc8] sm:$0xff]
    %v50 = vld [vmem:[%s1 + $0xd0] sm:$0xff]
    %v51 = vld [vmem:[%s1 + $0xd8] sm:$0xff]
    %v52 = vld [vmem:[%s1 + $0xe0] sm:$0xff]
    %v53 = vld [vmem:[%s1 + $0xe8] sm:$0xff]
    %v54 = vld [vmem:[%s1 + $0xf0] sm:$0xff]
    %v55 = vld [vmem:[%s1 + $0xf8] sm:$0xff]
    %v56 = vld [vmem:[%s1 + $0x100] sm:$0xff]
    %v57 = vld [vmem:[%s1 + $0x108] sm:$0xff]
    %v58 = vld [vmem:[%s1 + $0x110] sm:$0xff]
    %v59 = vld [vmem:[%s1 + $0x118] sm:$0xff]
    %v60 = vld [vmem:[%s1 + $0x120] sm:$0xff]
    %v61 = vld [vmem:[%s1 + $0x128] sm:$0xff]
    %v62 = vld [vmem:[%s1 + $0x130] sm:$0xff]
    %v63 = vld [vmem:[%s1 + $0x138] sm:$0xff]
    %v64 = vld [vmem:[%s1 + $0x140] sm:$0xff]
    %v65 = vld [vmem:[%s1 + $0x148] sm:$0xff]
    %v66 = vld [vmem:[%s1 + $0x150] sm:$0xff]
    %v67 = vld [vmem:[%s1 + $0x158] sm:$0xff]
    %v68 = vld [vmem:[%s1 + $0x160] sm:$0xff]
    %v69 = vld [vmem:[%s1 + $0x168] sm:$0xff]
    %v70 = vld [vmem:[%s1 + $0x170] sm:$0xff]
    %v71 = vld [vmem:[%s1 + $0x178] sm:$0xff]
    %v72 = vld [vmem:[%s1 + $0x180] sm:$0xff]
    %v73 = vld [vmem:[%s1 + $0x188] sm:$0xff]
    %v74 = vld [vmem:[%s1 + $0x190] sm:$0xff]
    %v75 = vld [vmem:[%s1 + $0x198] sm:$0xff]
    %v76 = vld [vmem:[%s1 + $0x1a0] sm:$0xff]
    %v77 = vld [vmem:[%s1 + $0x1a8] sm:$0xff]
    %v78 = vld [vmem:[%s1 + $0x1b0] sm:$0xff]
    %v79 = vld [vmem:[%s1 + $0x1b8] sm:$0xff]
    %v80 = vld [vmem:[%s1 + $0x1c0] sm:$0xff]
    %v81 = vld [vmem:[%s1 + $0x1c8] sm:$0xff]
    %v82 = vld [vmem:[%s1 + $0x1d0] sm:$0xff]
    %v83 = vld [vmem:[%s1 + $0x1d8] sm:$0xff]
    %v84 = vld [vmem:[%s1 + $0x1e0] sm:$0xff]
    %v85 = vld [vmem:[%s1 + $0x1e8] sm:$0xff]
    %v86 = vld [vmem:[%s1 + $0x1f0] sm:$0xff]
    %v87 = vld [vmem:[%s1 + $0x1f8] sm:$0xff]
    %v88 = vld [vmem:[%s1 + $0x200] sm:$0xff]
    %v89 = vld [vmem:[%s1 + $0x208] sm:$0xff]
    %v90 = vld [vmem:[%s1 + $0x210] sm:$0xff]
    %v91 = vld [vmem:[%s1 + $0x218] sm:$0xff]
    %v92 = vld [vmem:[%s1 + $0x220] sm:$0xff]
    %v93 = vld [vmem:[%s1 + $0x228] sm:$0xff]
    %v94 = vld [vmem:[%s1 + $0x230] sm:$0xff]
    %v95 = vld [vmem:[%s1 + $0x238] sm:$0xff]
    %v96 = vld [vmem:[%s1 + $0x240] sm:$0xff]
    %v97 = vld [vmem:[%s1 + $0x248] sm:$0xff]
    %v98 = vld [vmem:[%s1 + $0x250] sm:$0xff]
    %v99 = vld [vmem:[%s1 + $0x258] sm:$0xff]
    %v100 = vld [vmem:[%s1 + $0x260] sm:$0xff]
    %v101 = vld [vmem:[%s1 + $0x268] sm:$0xff]
    %v102 = vld [vmem:[%s1 + $0x270] sm:$0xff]
    %v103 = vld [vmem:[%s1 + $0x278] sm:$0xff]
    %v104 = vld [vmem:[%s1 + $0x280] sm:$0xff]
    %v105 = vld [vmem:[%s1 + $0x288] sm:$0xff]
    %v106 = vld [vmem:[%s1 + $0x290] sm:$0xff]
    %v107 = vld [vmem:[%s1 + $0x298] sm:$0xff]
    %v108 = vld [vmem:[%s1 + $0x2a0] sm:$0xff]
    %v109 = vld [vmem:[%s1 + $0x2a8] sm:$0xff]
    %v110 = vld [vmem:[%s1 + $0x2b0] sm:$0xff]
    %v111 = vld [vmem:[%s1 + $0x2b8] sm:$0xff]
    %v112 = vld [vmem:[%s1 + $0x2c0] sm:$0xff]
    %v113 = vld [vmem:[%s1 + $0x2c8] sm:$0xff]
    %v114 = vld [vmem:[%s1 + $0x2d0] sm:$0xff]
    %v115 = vld [vmem:[%s1 + $0x2d8] sm:$0xff]
    %v116 = vld [vmem:[%s1 + $0x2e0] sm:$0xff]
    %v117 = vld [vmem:[%s1 + $0x2e8] sm:$0xff]
    %v118 = vld [vmem:[%s1 + $0x2f0] sm:$0xff]
    %v119 = vld [vmem:[%s1 + $0x2f8] sm:$0xff]
    %v120 = vld [vmem:[%s1 + $0x300] sm:$0xff]
    %v121 = vld [vmem:[%s1 + $0x308] sm:$0xff]
    %v122 = vld [vmem:[%s1 + $0x310] sm:$0xff]
    %v123 = vld [vmem:[%s1 + $0x318] sm:$0xff]
    %v124 = vld [vmem:[%s1 + $0x320] sm:$0xff]
    %v125 = vld [vmem:[%s1 + $0x328] sm:$0xff]
    %v126 = vld [vmem:[%s1 + $0x330] sm:$0xff]
    %v127 = vld [vmem:[%s1 + $0x338] sm:$0xff]
    %v128 = vld [vmem:[%s1 + $0x340] sm:$0xff]
    %v129 = vld [vmem:[%s1 + $0x348] sm:$0xff]
    %v130 = vld [vmem:[%s1 + $0x350] sm:$0xff]
    %v131 = vld [vmem:[%s1 + $0x358] sm:$0xff]
    %v132 = vld [vmem:[%s1 + $0x360] sm:$0xff]
    %v133 = vld [vmem:[%s1 + $0x368] sm:$0xff]
    %v134 = vld [vmem:[%s1 + $0x370] sm:$0xff]
    %v135 = vld [vmem:[%s1 + $0x378] sm:$0xff]
    %v136 = vld [vmem:[%s1 + $0x380] sm:$0xff]
    %v137 = vld [vmem:[%s1 + $0x388] sm:$0xff]
    %v138 = vld [vmem:[%s1 + $0x390] sm:$0xff]
    %v139 = vld [vmem:[%s1 + $0x398] sm:$0xff]
    %v140 = vld [vmem:[%s1 + $0x3a0] sm:$0xff]
    %v141 = vld [vmem:[%s1 + $0x3a8] sm:$0xff]
    %v142 = vld [vmem:[%s1 + $0x3b0] sm:$0xff]
    %v143 = vld [vmem:[%s1 + $0x3b8] sm:$0xff]
    %v144 = vld [vmem:[%s1 + $0x3c0] sm:$0xff]
    %v145 = vld [vmem:[%s1 + $0x3c8] sm:$0xff]
    %v146 = vld [vmem:[%s1 + $0x3d0] sm:$0xff]
    %v147 = vld [vmem:[%s1 + $0x3d8] sm:$0xff]
    %v148 = vld [vmem:[%s1 + $0x3e0] sm:$0xff]
    %v149 = vld [vmem:[%s1 + $0x3e8] sm:$0xff]
    %v150 = vld [vmem:[%s1 + $0x3f0] sm:$0xff]
    %v151 = vld [vmem:[%s1 + $0x3f8] sm:$0xff]
    %v152 = vld [vmem:[%s1 + $0x400] sm:$0xff]
    %v153 = vld [vmem:[%s1 + $0x408] sm:$0xff]
    %v154 = vld [vmem:[%s1 + $0x410] sm:$0xff]
    %v155 = vld [vmem:[%s1 + $0x418] sm:$0xff]
    %v156 = vld [vmem:[%s1 + $0x420] sm:$0xff]
    %v157 = vld [vmem:[%s1 + $0x428] sm:$0xff]
    %v158 = vld [vmem:[%s1 + $0x430] sm:$0xff]
    %v159 = vld [vmem:[%s1 + $0x438] sm:$0xff]
    %v160 = vld [vmem:[%s1 + $0x440] sm:$0xff]
    %v161 = vld [vmem:[%s1 + $0x448] sm:$0xff]
    %v162 = vld [vmem:[%s1 + $0x450] sm:$0xff]
    %v163 = vld [vmem:[%s1 + $0x458] sm:$0xff]
    %v164 = vld [vmem:[%s1 + $0x460] sm:$0xff]
    %v165 = vld [vmem:[%s1 + $0x468] sm:$0xff]
    %v166 = vld [vmem:[%s1 + $0x470] sm:$0xff]
    %v167 = vld [vmem:[%s1 + $0x478] sm:$0xff]
    %v168 = vld [vmem:[%s2] sm:$0x1]
    %v170 = vlaneseq
    %v171 = vshrl.u32 %v170, 7
    %v172 = vsub.s32 0, %v171
    %v173 = vrot.slane %v168, %v172
    %175 = vmatprep.subr.mxu0 0.0
    %176 = vmatpush1.msra.mxu0 %v24
    %177 = vmatprep.subr.mxu0 0.0
    %178 = vmatpush1.msra.mxu0 %v25
    %179 = vmatprep.subr.mxu0 0.0
    %180 = vmatpush1.msra.mxu0 %v26
    %181 = vmatprep.subr.mxu0 0.0
    %182 = vmatpush1.msra.mxu0 %v27
    %183 = vmatprep.subr.mxu0 0.0
    %184 = vmatpush1.msra.mxu0 %v28
    %185 = vmatprep.subr.mxu0 0.0
    %186 = vmatpush1.msra.mxu0 %v29
    %187 = vmatprep.subr.mxu0 0.0
    %188 = vmatpush1.msra.mxu0 %v30
    %189 = vmatprep.subr.mxu0 0.0
    %190 = vmatpush1.msra.mxu0 %v31
    %191 = vmatprep.subr.mxu0 0.0
    %192 = vmatpush1.msra.mxu0 %v32
    %193 = vmatprep.subr.mxu0 0.0
    %194 = vmatpush1.msra.mxu0 %v33
    %195 = vmatprep.subr.mxu0 0.0
    %196 = vmatpush1.msra.mxu0 %v34
    %197 = vmatprep.subr.mxu0 0.0
    %198 = vmatpush1.msra.mxu0 %v35
    %199 = vmatprep.subr.mxu0 0.0
    %200 = vmatpush1.msra.mxu0 %v36
    %201 = vmatprep.subr.mxu0 0.0
    %202 = vmatpush1.msra.mxu0 %v37
    %203 = vmatprep.subr.mxu0 0.0
    %204 = vmatpush1.msra.mxu0 %v38
    %205 = vmatprep.subr.mxu0 0.0
    %206 = vmatpush1.msra.mxu0 %v39
    %207 = vmatprep.subr.mxu0 0.0
    %208 = vmatpush1.msra.mxu0 %v40
    %209 = vmatprep.subr.mxu0 0.0
    %210 = vmatpush1.msra.mxu0 %v41
    %211 = vmatprep.subr.mxu0 0.0
    %212 = vmatpush1.msra.mxu0 %v42
    %213 = vmatprep.subr.mxu0 0.0
    %214 = vmatpush1.msra.mxu0 %v43
    %215 = vmatprep.subr.mxu0 0.0
    %216 = vmatpush1.msra.mxu0 %v44
    %217 = vmatprep.subr.mxu0 0.0
    %218 = vmatpush1.msra.mxu0 %v45
    %219 = vmatprep.subr.mxu0 0.0
    %220 = vmatpush1.msra.mxu0 %v46
    %221 = vmatprep.subr.mxu0 0.0
    %222 = vmatpush1.msra.mxu0 %v47
    %223 = vmatprep.subr.mxu0 0.0
    %224 = vmatpush1.msra.mxu0 %v48
    %225 = vmatprep.subr.mxu0 0.0
    %226 = vmatpush1.msra.mxu0 %v49
    %227 = vmatprep.subr.mxu0 0.0
    %228 = vmatpush1.msra.mxu0 %v50
    %229 = vmatprep.subr.mxu0 0.0
    %230 = vmatpush1.msra.mxu0 %v51
    %231 = vmatprep.subr.mxu0 0.0
    %232 = vmatpush1.msra.mxu0 %v52
    %233 = vmatprep.subr.mxu0 0.0
    %234 = vmatpush1.msra.mxu0 %v53
    %235 = vmatprep.subr.mxu0 0.0
    %236 = vmatpush1.msra.mxu0 %v54
    %237 = vmatprep.subr.mxu0 0.0
    %238 = vmatpush1.msra.mxu0 %v55
    %239 = vmatprep.mubr.f32.mxu0 %v16
    %240 = vmatmul.mubr.f32.gmra.mrb[0].mxu0 %v15
    %v241 = vpop.f32.mrb[0].mxu0
    %v242 = vadd.f32 %v173, %v241
    %v243 = vpop.f32.mrb[0].mxu0
    %244 = vdwg.mxu0
    %245 = vmatprep.subr.mxu0 0.0
    %246 = vmatpush1.msra.mxu0 %v56
    %247 = vmatprep.subr.mxu0 0.0
    %248 = vmatpush1.msra.mxu0 %v57
    %249 = vmatprep.subr.mxu0 0.0
    %250 = vmatpush1.msra.mxu0 %v58
    %251 = vmatprep.subr.mxu0 0.0
    %252 = vmatpush1.msra.mxu0 %v59
    %253 = vmatprep.subr.mxu0 0.0
    %254 = vmatpush1.msra.mxu0 %v60
    %255 = vmatprep.subr.mxu0 0.0
    %256 = vmatpush1.msra.mxu0 %v61
    %257 = vmatprep.subr.mxu0 0.0
    %258 = vmatpush1.msra.mxu0 %v62
    %259 = vmatprep.subr.mxu0 0.0
    %260 = vmatpush1.msra.mxu0 %v63
    %261 = vmatprep.subr.mxu0 0.0
    %262 = vmatpush1.msra.mxu0 %v64
    %263 = vmatprep.subr.mxu0 0.0
    %264 = vmatpush1.msra.mxu0 %v65
    %265 = vmatprep.subr.mxu0 0.0
    %266 = vmatpush1.msra.mxu0 %v66
    %267 = vmatprep.subr.mxu0 0.0
    %268 = vmatpush1.msra.mxu0 %v67
    %269 = vmatprep.subr.mxu0 0.0
    %270 = vmatpush1.msra.mxu0 %v68
    %271 = vmatprep.subr.mxu0 0.0
    %272 = vmatpush1.msra.mxu0 %v69
    %273 = vmatprep.subr.mxu0 0.0
    %274 = vmatpush1.msra.mxu0 %v70
    %275 = vmatprep.subr.mxu0 0.0
    %276 = vmatpush1.msra.mxu0 %v71
    %277 = vmatprep.subr.mxu0 0.0
    %278 = vmatpush1.msra.mxu0 %v72
    %279 = vmatprep.subr.mxu0 0.0
    %280 = vmatpush1.msra.mxu0 %v73
    %281 = vmatprep.subr.mxu0 0.0
    %282 = vmatpush1.msra.mxu0 %v74
    %283 = vmatprep.subr.mxu0 0.0
    %284 = vmatpush1.msra.mxu0 %v75
    %285 = vmatprep.subr.mxu0 0.0
    %286 = vmatpush1.msra.mxu0 %v76
    %287 = vmatprep.subr.mxu0 0.0
    %288 = vmatpush1.msra.mxu0 %v77
    %289 = vmatprep.subr.mxu0 0.0
    %290 = vmatpush1.msra.mxu0 %v78
    %291 = vmatprep.subr.mxu0 0.0
    %292 = vmatpush1.msra.mxu0 %v79
    %293 = vmatprep.subr.mxu0 0.0
    %294 = vmatpush1.msra.mxu0 %v80
    %295 = vmatprep.subr.mxu0 0.0
    %296 = vmatpush1.msra.mxu0 %v81
    %297 = vmatprep.subr.mxu0 0.0
    %298 = vmatpush1.msra.mxu0 %v82
    %299 = vmatprep.subr.mxu0 0.0
    %300 = vmatpush1.msra.mxu0 %v83
    %301 = vmatprep.subr.mxu0 0.0
    %302 = vmatpush1.msra.mxu0 %v84
    %303 = vmatprep.subr.mxu0 0.0
    %304 = vmatpush1.msra.mxu0 %v85
    %305 = vmatprep.subr.mxu0 0.0
    %306 = vmatpush1.msra.mxu0 %v86
    %307 = vmatprep.subr.mxu0 0.0
    %308 = vmatpush1.msra.mxu0 %v87
    %309 = vmatprep.mubr.f32.mxu0 %v18
    %310 = vmatmul.mubr.f32.gmra.mrb[0].mxu0 %v17
    %v311 = vpop.f32.mrb[0].mxu0
    %v312 = vadd.f32 %v242, %v311
    %v313 = vpop.f32.mrb[0].mxu0
    %314 = vdwg.mxu0
    %315 = vmatprep.subr.mxu0 0.0
    %316 = vmatpush1.msra.mxu0 %v88
    %317 = vmatprep.subr.mxu0 0.0
    %318 = vmatpush1.msra.mxu0 %v89
    %319 = vmatprep.subr.mxu0 0.0
    %320 = vmatpush1.msra.mxu0 %v90
    %321 = vmatprep.subr.mxu0 0.0
    %322 = vmatpush1.msra.mxu0 %v91
    %323 = vmatprep.subr.mxu0 0.0
    %324 = vmatpush1.msra.mxu0 %v92
    %325 = vmatprep.subr.mxu0 0.0
    %326 = vmatpush1.msra.mxu0 %v93
    %327 = vmatprep.subr.mxu0 0.0
    %328 = vmatpush1.msra.mxu0 %v94
    %329 = vmatprep.subr.mxu0 0.0
    %330 = vmatpush1.msra.mxu0 %v95
    %331 = vmatprep.subr.mxu0 0.0
    %332 = vmatpush1.msra.mxu0 %v96
    %333 = vmatprep.subr.mxu0 0.0
    %334 = vmatpush1.msra.mxu0 %v97
    %335 = vmatprep.subr.mxu0 0.0
    %336 = vmatpush1.msra.mxu0 %v98
    %337 = vmatprep.subr.mxu0 0.0
    %338 = vmatpush1.msra.mxu0 %v99
    %339 = vmatprep.subr.mxu0 0.0
    %340 = vmatpush1.msra.mxu0 %v100
    %341 = vmatprep.subr.mxu0 0.0
    %342 = vmatpush1.msra.mxu0 %v101
    %343 = vmatprep.subr.mxu0 0.0
    %344 = vmatpush1.msra.mxu0 %v102
    %345 = vmatprep.subr.mxu0 0.0
    %346 = vmatpush1.msra.mxu0 %v103
    %347 = vmatprep.subr.mxu0 0.0
    %348 = vmatpush1.msra.mxu0 %v104
    %349 = vmatprep.subr.mxu0 0.0
    %350 = vmatpush1.msra.mxu0 %v105
    %351 = vmatprep.subr.mxu0 0.0
    %352 = vmatpush1.msra.mxu0 %v106
    %353 = vmatprep.subr.mxu0 0.0
    %354 = vmatpush1.msra.mxu0 %v107
    %355 = vmatprep.subr.mxu0 0.0
    %356 = vmatpush1.msra.mxu0 %v108
    %357 = vmatprep.subr.mxu0 0.0
    %358 = vmatpush1.msra.mxu0 %v109
    %359 = vmatprep.subr.mxu0 0.0
    %360 = vmatpush1.msra.mxu0 %v110
    %361 = vmatprep.subr.mxu0 0.0
    %362 = vmatpush1.msra.mxu0 %v111
    %363 = vmatprep.subr.mxu0 0.0
    %364 = vmatpush1.msra.mxu0 %v112
    %365 = vmatprep.subr.mxu0 0.0
    %366 = vmatpush1.msra.mxu0 %v113
    %367 = vmatprep.subr.mxu0 0.0
    %368 = vmatpush1.msra.mxu0 %v114
    %369 = vmatprep.subr.mxu0 0.0
    %370 = vmatpush1.msra.mxu0 %v115
    %371 = vmatprep.subr.mxu0 0.0
    %372 = vmatpush1.msra.mxu0 %v116
    %373 = vmatprep.subr.mxu0 0.0
    %374 = vmatpush1.msra.mxu0 %v117
    %375 = vmatprep.subr.mxu0 0.0
    %376 = vmatpush1.msra.mxu0 %v118
    %377 = vmatprep.subr.mxu0 0.0
    %378 = vmatpush1.msra.mxu0 %v119
    %379 = vmatprep.mubr.f32.mxu0 %v20
    %380 = vmatmul.mubr.f32.gmra.mrb[0].mxu0 %v19
    %v381 = vpop.f32.mrb[0].mxu0
    %v382 = vadd.f32 %v312, %v381
    %v383 = vpop.f32.mrb[0].mxu0
    %384 = vdwg.mxu0
    %385 = vmatprep.subr.mxu0 0.0
    %386 = vmatpush1.msra.mxu0 %v120
    %387 = vmatprep.subr.mxu0 0.0
    %388 = vmatpush1.msra.mxu0 %v121
    %389 = vmatprep.subr.mxu0 0.0
    %390 = vmatpush1.msra.mxu0 %v122
    %391 = vmatprep.subr.mxu0 0.0
    %392 = vmatpush1.msra.mxu0 %v123
    %393 = vmatprep.subr.mxu0 0.0
    %394 = vmatpush1.msra.mxu0 %v124
    %395 = vmatprep.subr.mxu0 0.0
    %396 = vmatpush1.msra.mxu0 %v125
    %397 = vmatprep.subr.mxu0 0.0
    %398 = vmatpush1.msra.mxu0 %v126
    %399 = vmatprep.subr.mxu0 0.0
    %400 = vmatpush1.msra.mxu0 %v127
    %401 = vmatprep.subr.mxu0 0.0
    %402 = vmatpush1.msra.mxu0 %v128
    %403 = vmatprep.subr.mxu0 0.0
    %404 = vmatpush1.msra.mxu0 %v129
    %405 = vmatprep.subr.mxu0 0.0
    %406 = vmatpush1.msra.mxu0 %v130
    %407 = vmatprep.subr.mxu0 0.0
    %408 = vmatpush1.msra.mxu0 %v131
    %409 = vmatprep.subr.mxu0 0.0
    %410 = vmatpush1.msra.mxu0 %v132
    %411 = vmatprep.subr.mxu0 0.0
    %412 = vmatpush1.msra.mxu0 %v133
    %413 = vmatprep.subr.mxu0 0.0
    %414 = vmatpush1.msra.mxu0 %v134
    %415 = vmatprep.subr.mxu0 0.0
    %416 = vmatpush1.msra.mxu0 %v135
    %417 = vmatprep.subr.mxu0 0.0
    %418 = vmatpush1.msra.mxu0 %v136
    %419 = vmatprep.subr.mxu0 0.0
    %420 = vmatpush1.msra.mxu0 %v137
    %421 = vmatprep.subr.mxu0 0.0
    %422 = vmatpush1.msra.mxu0 %v138
    %423 = vmatprep.subr.mxu0 0.0
    %424 = vmatpush1.msra.mxu0 %v139
    %425 = vmatprep.subr.mxu0 0.0
    %426 = vmatpush1.msra.mxu0 %v140
    %427 = vmatprep.subr.mxu0 0.0
    %428 = vmatpush1.msra.mxu0 %v141
    %429 = vmatprep.subr.mxu0 0.0
    %430 = vmatpush1.msra.mxu0 %v142
    %431 = vmatprep.subr.mxu0 0.0
    %432 = vmatpush1.msra.mxu0 %v143
    %433 = vmatprep.subr.mxu0 0.0
    %434 = vmatpush1.msra.mxu0 %v144
    %435 = vmatprep.subr.mxu0 0.0
    %436 = vmatpush1.msra.mxu0 %v145
    %437 = vmatprep.subr.mxu0 0.0
    %438 = vmatpush1.msra.mxu0 %v146
    %439 = vmatprep.subr.mxu0 0.0
    %440 = vmatpush1.msra.mxu0 %v147
    %441 = vmatprep.subr.mxu0 0.0
    %442 = vmatpush1.msra.mxu0 %v148
    %443 = vmatprep.subr.mxu0 0.0
    %444 = vmatpush1.msra.mxu0 %v149
    %445 = vmatprep.subr.mxu0 0.0
    %446 = vmatpush1.msra.mxu0 %v150
    %447 = vmatprep.subr.mxu0 0.0
    %448 = vmatpush1.msra.mxu0 %v151
    %449 = vmatprep.mubr.f32.mxu0 %v22
    %450 = vmatmul.mubr.f32.gmra.mrb[0].mxu0 %v21
    %v451 = vpop.f32.mrb[0].mxu0
    %v452 = vadd.f32 %v382, %v451
    %v453 = vpop.f32.mrb[0].mxu0
    %454 = vdwg.mxu0
    %455 = vmatprep.subr.mxu0 0.0
    %456 = vmatpush1.msra.mxu0 %v152
    %457 = vmatprep.subr.mxu0 0.0
    %458 = vmatpush1.msra.mxu0 %v153
    %459 = vmatprep.subr.mxu0 0.0
    %460 = vmatpush1.msra.mxu0 %v154
    %461 = vmatprep.subr.mxu0 0.0
    %462 = vmatpush1.msra.mxu0 %v155
    %463 = vmatprep.subr.mxu0 0.0
    %464 = vmatpush1.msra.mxu0 %v156
    %465 = vmatprep.subr.mxu0 0.0
    %466 = vmatpush1.msra.mxu0 %v157
    %467 = vmatprep.subr.mxu0 0.0
    %468 = vmatpush1.msra.mxu0 %v158
    %469 = vmatprep.subr.mxu0 0.0
    %470 = vmatpush1.msra.mxu0 %v159
    %471 = vmatprep.subr.mxu0 0.0
    %472 = vmatpush1.msra.mxu0 %v160
    %473 = vmatprep.subr.mxu0 0.0
    %474 = vmatpush1.msra.mxu0 %v161
    %475 = vmatprep.subr.mxu0 0.0
    %476 = vmatpush1.msra.mxu0 %v162
    %477 = vmatprep.subr.mxu0 0.0
    %478 = vmatpush1.msra.mxu0 %v163
    %479 = vmatprep.subr.mxu0 0.0
    %480 = vmatpush1.msra.mxu0 %v164
    %481 = vmatprep.subr.mxu0 0.0
    %482 = vmatpush1.msra.mxu0 %v165
    %483 = vmatprep.subr.mxu0 0.0
    %484 = vmatpush1.msra.mxu0 %v166
    %485 = vmatprep.subr.mxu0 0.0
    %486 = vmatpush1.msra.mxu0 %v167
    %487 = vmatprep.subr.mxu0 0.0
    %488 = vmatpush1.msra.mxu0 0.0
    %489 = vmatprep.subr.mxu0 0.0
    %490 = vmatpush1.msra.mxu0 0.0
    %491 = vmatprep.subr.mxu0 0.0
    %492 = vmatpush1.msra.mxu0 0.0
    %493 = vmatprep.subr.mxu0 0.0
    %494 = vmatpush1.msra.mxu0 0.0
    %495 = vmatprep.subr.mxu0 0.0
    %496 = vmatpush1.msra.mxu0 0.0
    %497 = vmatprep.subr.mxu0 0.0
    %498 = vmatpush1.msra.mxu0 0.0
    %499 = vmatprep.subr.mxu0 0.0
    %500 = vmatpush1.msra.mxu0 0.0
    %501 = vmatprep.subr.mxu0 0.0
    %502 = vmatpush1.msra.mxu0 0.0
    %503 = vmatprep.subr.mxu0 0.0
    %504 = vmatpush1.msra.mxu0 0.0
    %505 = vmatprep.subr.mxu0 0.0
    %506 = vmatpush1.msra.mxu0 0.0
    %507 = vmatprep.subr.mxu0 0.0
    %508 = vmatpush1.msra.mxu0 0.0
    %509 = vmatprep.subr.mxu0 0.0
    %510 = vmatpush1.msra.mxu0 0.0
    %511 = vmatprep.subr.mxu0 0.0
    %512 = vmatpush1.msra.mxu0 0.0
    %513 = vmatprep.subr.mxu0 0.0
    %514 = vmatpush1.msra.mxu0 0.0
    %515 = vmatprep.subr.mxu0 0.0
    %516 = vmatpush1.msra.mxu0 0.0
    %517 = vmatprep.subr.mxu0 0.0
    %518 = vmatpush1.msra.mxu0 0.0
    %519 = vmatprep.mubr.f32.mxu0 0.0
    %520 = vmatmul.mubr.f32.gmra.mrb[0].mxu0 %v23
    %v521 = vpop.f32.mrb[0].mxu0
    %v522 = vadd.f32 %v452, %v521
    %v523 = vpop.f32.mrb[0].mxu0
    %524 = vdwg.mxu0
    %v525 = vmax.f32 %v522, 0.0
    %526 = vst [vmem:[#allocation2] sm:$0xff] %v525
    // Predicated region
    $region14: #{_lambda_.25} parent=1 // pred_check
      _
    $region15: #{_lambda_.25} parent=1 // pred_check_branch
      %528 = sbr.rel (0) target = $region17
    $region16: #{_lambda_.25} parent=1 // pred_region
      %s530 = ssub.s32 128, 128
      %531 = vsyncadd [#allocation3], %s530
      %s533 = sshll.u32 [#allocation2], 4
      %s534 = int_to_ptr.vmem [resolvable:$true] %s533
      %536 = dma.vmem_to_hbm [thread:$0]  %s534, 128, %s3, [#allocation3]
    $region17: #{_lambda_.25} parent=1 // pred_fallthru
      _
    // Predicated region
    $region18: #{_lambda_.25} parent=1 // pred_check
      _
    $region19: #{_lambda_.25} parent=1 // pred_check_branch
      %538 = sbr.rel (0) target = $region21
    $region20: #{_lambda_.25} parent=1 // pred_region
      %539 = dma.done [#allocation3], 128
    $region21: #{_lambda_.25} parent=1 // pred_fallthru
      _
    %540 = vsyncpa [#allocation3], 1

</llo_original>
